<compile_context>
chip_gen: v7x
topology: tpu7x:2x2x1
jax: 0.10.0
libtpu: 0.0.40
codegen_flags: <defaults>
</compile_context>

<pallas_src>
import functools
import math

import jax
import jax.numpy as jnp
from jax.experimental import pallas as pl
from jax.experimental.pallas import tpu as pltpu

_LN_EPS = 1e-5                # torch.nn.Transformer layer_norm_eps default
_NUM_CLASSES = 2              # linear_class output width
_HEAD_PAD = 128               # pad the 2-wide head output to one full lane register
_MXU_DTYPE = jnp.float32      # TODO(synk): jnp.bfloat16 on v6e/v7x at production sizes
_APPROX_SOFTMAX_RECIP = True  # pl.reciprocal(approx=True); set False for parity tests


# ----------------------------------------------------------------------------
# in-kernel math helpers (pure jnp on loaded values)
# ----------------------------------------------------------------------------
def _mm(a, b):
    return jnp.dot(a.astype(_MXU_DTYPE), b.astype(_MXU_DTYPE),
                   preferred_element_type=jnp.float32)


def _mm_nt(a, b):
    # a @ b^T (contract last dims of both).  The implicit K^T goes through the XLU;
    # accepted and documented at these sizes.
    return jax.lax.dot_general(a.astype(_MXU_DTYPE), b.astype(_MXU_DTYPE),
                               (((1,), (1,)), ((), ())),
                               preferred_element_type=jnp.float32)


def _ln(y, g, b):
    mu = jnp.mean(y, axis=-1, keepdims=True)
    var = jnp.mean(jnp.square(y - mu), axis=-1, keepdims=True)
    return (y - mu) * jax.lax.rsqrt(var + _LN_EPS) * g + b


def _softmax_rows(s):
    m = jnp.max(s, axis=-1, keepdims=True)
    p = jnp.exp(s - m)
    denom = jnp.sum(p, axis=-1, keepdims=True)
    if _APPROX_SOFTMAX_RECIP:
        return p * pl.reciprocal(denom, approx=True)
    return p / denom


def _attn_out_block(x_res, q, k, v, wo, bo, g, be, nheads, dh):
    """LayerNorm(x_res + MultiHeadAttention(q,k,v) @ wo + bo).

    Each head's (Lq,dh) result is pushed directly through the matching (dh,D) row
    slice of the out-projection and accumulated -- no lane-axis concatenate and no
    3-D reshapes.  The softmax scale is already folded into the q projection.
    """
    acc = x_res + bo
    for h in range(nheads):          # static unroll; nheads is small (see TODO above)
        sl = slice(h * dh, (h + 1) * dh)
        s = _mm_nt(q[:, sl], k[:, sl])            # (Lq, Lk)
        p = _softmax_rows(s)
        oh = _mm(p, v[:, sl])                     # (Lq, dh)
        acc = acc + _mm(oh, wo[sl, :])            # fused out-projection slice
    return _ln(acc, g, be)


# ----------------------------------------------------------------------------
# BlockSpec helpers for the (batch, layer) grids
# ----------------------------------------------------------------------------
def _per_layer_spec(shape):
    """Stacked (n_layers, *shape) weight, streamed along the layer grid axis."""
    zeros = (0,) * len(shape)
    return pl.BlockSpec((1,) + tuple(shape), lambda b, l: (l,) + zeros)


def _shared_spec(shape):
    """Weight shared across the whole (batch, layer) grid (stays resident)."""
    zeros = (0,) * len(shape)
    return pl.BlockSpec(tuple(shape), lambda b, l: zeros)


# ----------------------------------------------------------------------------
# Kernel 1: input_proj (1x1 conv) + pos add + attention_map + attention_score
# ----------------------------------------------------------------------------
def _src_map_kernel(x_ref, w_ref, b_ref, pos_ref, src_ref, map_ref, score_ref,
                    *, inv_sqrt_d):
    src = _mm(x_ref[0], w_ref[...]) + b_ref[...] + pos_ref[...]       # (HW, D)
    src_ref[0] = src
    s = _mm_nt(src, src)                                              # src @ src^T
    map_ref[0] = s
    score_ref[0] = jnp.sum(s, axis=0, keepdims=True) * inv_sqrt_d     # (1, HW)


def pallas_src_and_map(x_hwc, w, b, pos, d):
    batch, hw, c = x_hwc.shape
    kern = functools.partial(_src_map_kernel, inv_sqrt_d=1.0 / math.sqrt(d))
    return pl.pallas_call(
        kern,
        out_shape=(jax.ShapeDtypeStruct((batch, hw, d), jnp.float32),
                   jax.ShapeDtypeStruct((batch, hw, hw), jnp.float32),
                   jax.ShapeDtypeStruct((batch, 1, hw), jnp.float32)),
        grid=(batch,),
        in_specs=[pl.BlockSpec((1, hw, c), lambda i: (i, 0, 0)),
                  pl.BlockSpec((c, d), lambda i: (0, 0)),
                  pl.BlockSpec((1, d), lambda i: (0, 0)),
                  pl.BlockSpec((hw, d), lambda i: (0, 0))],
        out_specs=(pl.BlockSpec((1, hw, d), lambda i: (i, 0, 0)),
                   pl.BlockSpec((1, hw, hw), lambda i: (i, 0, 0)),
                   pl.BlockSpec((1, 1, hw), lambda i: (i, 0, 0))),
        compiler_params=pltpu.CompilerParams(dimension_semantics=("parallel",)),
    )(x_hwc, w, b.reshape(1, d), pos)


# ----------------------------------------------------------------------------
# Kernel 2: full encoder stack (+ final encoder LayerNorm), grid = (B, n_enc)
# ----------------------------------------------------------------------------
def _enc_stack_kernel(src_ref, w_qkv_ref, b_qkv_ref, wo_ref, bo_ref,
                      w1_ref, b1_ref, w2_ref, b2_ref, ln_g_ref, ln_b_ref,
                      en_g_ref, en_b_ref, mem_ref, x_carry, *, nheads):
    l = pl.program_id(1)
    n_layers = pl.num_programs(1)

    @pl.when(l == 0)
    def _():
        x_carry[...] = src_ref[0]          # layer-carry initialized with src

    x = x_carry[...]                       # (HW, D)
    d = x.shape[-1]
    dh = d // nheads
    ln_g, ln_b = ln_g_ref[0], ln_b_ref[0]  # (2, D)

    # self-attention block: fused QKV projection + per-head attention + out-proj + LN
    qkv = _mm(x, w_qkv_ref[0]) + b_qkv_ref[0]
    x = _attn_out_block(x, qkv[:, :d], qkv[:, d:2 * d], qkv[:, 2 * d:],
                        wo_ref[0], bo_ref[0], ln_g[0:1], ln_b[0:1], nheads, dh)

    # FFN block (hidden never leaves VMEM) + residual + LN
    hid = jnp.maximum(_mm(x, w1_ref[0]) + b1_ref[0], 0.0)
    x = _ln(x + _mm(hid, w2_ref[0]) + b2_ref[0], ln_g[1:2], ln_b[1:2])

    @pl.when(l < n_layers - 1)
    def _():
        x_carry[...] = x

    @pl.when(l == n_layers - 1)
    def _():
        mem_ref[0] = _ln(x, en_g_ref[...], en_b_ref[...])   # nn.Transformer enc norm


def pallas_encoder_stack(src, p, nheads):
    batch, hw, d = src.shape
    n_layers = p["w_qkv"].shape[0]
    dff = p["w1"].shape[-1]
    kern = functools.partial(_enc_stack_kernel, nheads=nheads)
    return pl.pallas_call(
        kern,
        out_shape=jax.ShapeDtypeStruct((batch, hw, d), jnp.float32),
        grid=(batch, n_layers),
        in_specs=[
            pl.BlockSpec((1, hw, d), lambda b, l: (b, 0, 0)),   # src (resident per b)
            _per_layer_spec((d, 3 * d)), _per_layer_spec((1, 3 * d)),
            _per_layer_spec((d, d)), _per_layer_spec((1, d)),
            _per_layer_spec((d, dff)), _per_layer_spec((1, dff)),
            _per_layer_spec((dff, d)), _per_layer_spec((1, d)),
            _per_layer_spec((2, d)), _per_layer_spec((2, d)),
            _shared_spec((1, d)), _shared_spec((1, d)),
        ],
        out_specs=pl.BlockSpec((1, hw, d), lambda b, l: (b, 0, 0)),
        scratch_shapes=[pltpu.VMEM((hw, d), jnp.float32)],
        compiler_params=pltpu.CompilerParams(
            dimension_semantics=("parallel", "arbitrary")),
    )(src, p["w_qkv"], p["b_qkv"], p["wo"], p["bo"],
      p["w1"], p["b1"], p["w2"], p["b2"], p["ln_g"], p["ln_b"],
      p["norm_g"].reshape(1, d), p["norm_b"].reshape(1, d))


# ----------------------------------------------------------------------------
# Kernel 3: full decoder stack + final norm + class-MLP head, grid = (B, n_dec)
# ----------------------------------------------------------------------------
def _dec_stack_kernel(mem_ref, qe_ref,
                      sa_w_qkv_ref, sa_b_qkv_ref, sa_wo_ref, sa_bo_ref,
                      ca_w_q_ref, ca_b_q_ref, ca_w_kv_ref, ca_b_kv_ref,
                      ca_wo_ref, ca_bo_ref, w1_ref, b1_ref, w2_ref, b2_ref,
                      ln_g_ref, ln_b_ref, dn_g_ref, dn_b_ref,
                      cw1_ref, cb1_ref, cw2_ref, cb2_ref, cw3_ref, cb3_ref,
                      h_ref, hh_ref, tgt_carry, *, nheads):
    l = pl.program_id(1)
    n_layers = pl.num_programs(1)

    @pl.when(l == 0)
    def _():
        tgt_carry[...] = qe_ref[...]       # tgt = query_embed (same for every batch)

    tgt = tgt_carry[...]                   # (Q, D)
    mem = mem_ref[0]                       # (HW, D) encoder memory (resident per b)
    d = tgt.shape[-1]
    dh = d // nheads
    ln_g, ln_b = ln_g_ref[0], ln_b_ref[0]  # (3, D)

    # decoder self-attention (fused QKV projection)
    qkv = _mm(tgt, sa_w_qkv_ref[0]) + sa_b_qkv_ref[0]
    tgt = _attn_out_block(tgt, qkv[:, :d], qkv[:, d:2 * d], qkv[:, 2 * d:],
                          sa_wo_ref[0], sa_bo_ref[0], ln_g[0:1], ln_b[0:1],
                          nheads, dh)

    # cross-attention on encoder memory (fused K|V projection)
    qc = _mm(tgt, ca_w_q_ref[0]) + ca_b_q_ref[0]
    kv = _mm(mem, ca_w_kv_ref[0]) + ca_b_kv_ref[0]
    tgt = _attn_out_block(tgt, qc, kv[:, :d], kv[:, d:],
                          ca_wo_ref[0], ca_bo_ref[0], ln_g[1:2], ln_b[1:2],
                          nheads, dh)

    # FFN block
    hid = jnp.maximum(_mm(tgt, w1_ref[0]) + b1_ref[0], 0.0)
    tgt = _ln(tgt + _mm(hid, w2_ref[0]) + b2_ref[0], ln_g[2:3], ln_b[2:3])

    @pl.when(l < n_layers - 1)
    def _():
        tgt_carry[...] = tgt

    @pl.when(l == n_layers - 1)
    def _():
        hn = _ln(tgt, dn_g_ref[...], dn_b_ref[...])     # nn.Transformer dec norm
        h_ref[0] = hn
        # 3-layer class MLP head fused in; output lane-padded to 128 (sliced outside)
        t = jnp.maximum(_mm(hn, cw1_ref[...]) + cb1_ref[...], 0.0)
        t = jnp.maximum(_mm(t, cw2_ref[...]) + cb2_ref[...], 0.0)
        hh_ref[0] = _mm(t, cw3_ref[...]) + cb3_ref[...]


def pallas_decoder_stack_head(mem, query_embed, p, head, nheads):
    batch, hw, d = mem.shape
    n_q = query_embed.shape[0]
    n_layers = p["sa_w_qkv"].shape[0]
    dff = p["w1"].shape[-1]
    kern = functools.partial(_dec_stack_kernel, nheads=nheads)
    return pl.pallas_call(
        kern,
        out_shape=(jax.ShapeDtypeStruct((batch, n_q, d), jnp.float32),
                   jax.ShapeDtypeStruct((batch, n_q, _HEAD_PAD), jnp.float32)),
        grid=(batch, n_layers),
        in_specs=[
            pl.BlockSpec((1, hw, d), lambda b, l: (b, 0, 0)),   # encoder memory
            _shared_spec((n_q, d)),                              # query_embed
            _per_layer_spec((d, 3 * d)), _per_layer_spec((1, 3 * d)),
            _per_layer_spec((d, d)), _per_layer_spec((1, d)),
            _per_layer_spec((d, d)), _per_layer_spec((1, d)),
            _per_layer_spec((d, 2 * d)), _per_layer_spec((1, 2 * d)),
            _per_layer_spec((d, d)), _per_layer_spec((1, d)),
            _per_layer_spec((d, dff)), _per_layer_spec((1, dff)),
            _per_layer_spec((dff, d)), _per_layer_spec((1, d)),
            _per_layer_spec((3, d)), _per_layer_spec((3, d)),
            _shared_spec((1, d)), _shared_spec((1, d)),
            _shared_spec((d, d)), _shared_spec((1, d)),
            _shared_spec((d, d)), _shared_spec((1, d)),
            _shared_spec((d, _HEAD_PAD)), _shared_spec((1, _HEAD_PAD)),
        ],
        out_specs=(pl.BlockSpec((1, n_q, d), lambda b, l: (b, 0, 0)),
                   pl.BlockSpec((1, n_q, _HEAD_PAD), lambda b, l: (b, 0, 0))),
        scratch_shapes=[pltpu.VMEM((n_q, d), jnp.float32)],
        compiler_params=pltpu.CompilerParams(
            dimension_semantics=("parallel", "arbitrary")),
    )(mem, query_embed,
      p["sa_w_qkv"], p["sa_b_qkv"], p["sa_wo"], p["sa_bo"],
      p["ca_w_q"], p["ca_b_q"], p["ca_w_kv"], p["ca_b_kv"],
      p["ca_wo"], p["ca_bo"], p["w1"], p["b1"], p["w2"], p["b2"],
      p["ln_g"], p["ln_b"],
      p["norm_g"].reshape(1, d), p["norm_b"].reshape(1, d),
      head["w1"], head["b1"], head["w2"], head["b2"], head["w3"], head["b3"])


# ----------------------------------------------------------------------------
# Model glue (plain JAX around the three Pallas kernels)
# ----------------------------------------------------------------------------
def sine_pos_embed(h, w, d_model, temperature=10000.0):
    """PositionEmbeddingSine (normalize=False, all-valid mask) as a (HW, D) table."""
    npf = d_model // 2
    y_embed = jnp.arange(1, h + 1, dtype=jnp.float32)   # cumsum of ones over rows
    x_embed = jnp.arange(1, w + 1, dtype=jnp.float32)   # cumsum of ones over cols
    dim_t = jnp.arange(npf, dtype=jnp.float32)
    dim_t = temperature ** (2.0 * jnp.floor(dim_t / 2.0) / npf)

    def interleave(p):                                   # p: (L, npf)
        s = jnp.sin(p[:, 0::2])
        c = jnp.cos(p[:, 1::2])
        return jnp.stack([s, c], axis=-1).reshape(p.shape[0], -1)

    pos_y = interleave(y_embed[:, None] / dim_t)         # (H, npf)
    pos_x = interleave(x_embed[:, None] / dim_t)         # (W, npf)
    pos = jnp.concatenate([
        jnp.broadcast_to(pos_y[:, None, :], (h, w, npf)),
        jnp.broadcast_to(pos_x[None, :, :], (h, w, npf)),
    ], axis=-1)                                          # (H, W, D) channel-last
    return pos.reshape(h * w, d_model)


def detr_forward(params, x, nheads):
    """x: NCHW (B, C, H, W).  Returns (attention_map, attention_score, h, hh)."""
    batch, c, h, w = x.shape
    d = params["query_embed"].shape[1]
    hw = h * w

    pos = sine_pos_embed(h, w, d)
    x_hwc = x.transpose(0, 2, 3, 1).reshape(batch, hw, c)        # NCHW -> (B, HW, C)

    # kernel 1: 1x1 conv + pos add + attention_map/score (all fused, one launch)
    src, amap, ascore = pallas_src_and_map(
        x_hwc, params["proj_w"], params["proj_b"], pos, d)

    # kernel 2: whole encoder stack + final encoder LayerNorm
    mem = pallas_encoder_stack(src, params["enc"], nheads)

    # kernel 3: whole decoder stack + final decoder LayerNorm + class-MLP head
    h_out, hh_pad = pallas_decoder_stack_head(
        mem, params["query_embed"], params["dec"], params["head"], nheads)

    return amap, ascore.reshape(batch, hw), h_out, hh_pad[:, :, :_NUM_CLASSES]


# ----------------------------------------------------------------------------
# Deterministic parameter initialization (stacked per-layer weights)
# ----------------------------------------------------------------------------
def _init_linear(key, fan_in, fan_out):
    k1, k2 = jax.random.split(key)
    w = jax.random.normal(k1, (fan_in, fan_out), jnp.float32) / math.sqrt(fan_in)
    b = jax.random.normal(k2, (fan_out,), jnp.float32) * 0.01
    return w, b


def _init_enc_stack(key, n_layers, d, dff, nheads):
    scale = 1.0 / math.sqrt(d // nheads)     # softmax scale folded into q projection
    cols = {k: [] for k in ["w_qkv", "b_qkv", "wo", "bo", "w1", "b1", "w2", "b2"]}
    for i in range(n_layers):
        ks = jax.random.split(jax.random.fold_in(key, i), 4)
        w, b = _init_linear(ks[0], d, 3 * d)
        w = w.at[:, :d].multiply(scale)
        b = b.at[:d].multiply(scale)
        cols["w_qkv"].append(w); cols["b_qkv"].append(b.reshape(1, 3 * d))
        w, b = _init_linear(ks[1], d, d)
        cols["wo"].append(w); cols["bo"].append(b.reshape(1, d))
        w, b = _init_linear(ks[2], d, dff)
        cols["w1"].append(w); cols["b1"].append(b.reshape(1, dff))
        w, b = _init_linear(ks[3], dff, d)
        cols["w2"].append(w); cols["b2"].append(b.reshape(1, d))
    out = {k: jnp.stack(v) for k, v in cols.items()}
    out["ln_g"] = jnp.ones((n_layers, 2, d), jnp.float32)
    out["ln_b"] = jnp.zeros((n_layers, 2, d), jnp.float32)
    out["norm_g"] = jnp.ones((d,), jnp.float32)
    out["norm_b"] = jnp.zeros((d,), jnp.float32)
    return out


def _init_dec_stack(key, n_layers, d, dff, nheads):
    scale = 1.0 / math.sqrt(d // nheads)
    names = ["sa_w_qkv", "sa_b_qkv", "sa_wo", "sa_bo", "ca_w_q", "ca_b_q",
             "ca_w_kv", "ca_b_kv", "ca_wo", "ca_bo", "w1", "b1", "w2", "b2"]
    cols = {k: [] for k in names}
    for i in range(n_layers):
        ks = jax.random.split(jax.random.fold_in(key, i), 7)
        w, b = _init_linear(ks[0], d, 3 * d)
        w = w.at[:, :d].multiply(scale)
        b = b.at[:d].multiply(scale)
        cols["sa_w_qkv"].append(w); cols["sa_b_qkv"].append(b.reshape(1, 3 * d))
        w, b = _init_linear(ks[1], d, d)
        cols["sa_wo"].append(w); cols["sa_bo"].append(b.reshape(1, d))
        w, b = _init_linear(ks[2], d, d)
        cols["ca_w_q"].append(w * scale); cols["ca_b_q"].append((b * scale).reshape(1, d))
        w, b = _init_linear(ks[3], d, 2 * d)
        cols["ca_w_kv"].append(w); cols["ca_b_kv"].append(b.reshape(1, 2 * d))
        w, b = _init_linear(ks[4], d, d)
        cols["ca_wo"].append(w); cols["ca_bo"].append(b.reshape(1, d))
        w, b = _init_linear(ks[5], d, dff)
        cols["w1"].append(w); cols["b1"].append(b.reshape(1, dff))
        w, b = _init_linear(ks[6], dff, d)
        cols["w2"].append(w); cols["b2"].append(b.reshape(1, d))
    out = {k: jnp.stack(v) for k, v in cols.items()}
    out["ln_g"] = jnp.ones((n_layers, 3, d), jnp.float32)
    out["ln_b"] = jnp.zeros((n_layers, 3, d), jnp.float32)
    out["norm_g"] = jnp.ones((d,), jnp.float32)
    out["norm_b"] = jnp.zeros((d,), jnp.float32)
    return out


def _init_head(key, d):
    k1, k2, k3 = jax.random.split(key, 3)
    w1, b1 = _init_linear(k1, d, d)
    w2, b2 = _init_linear(k2, d, d)
    w3, b3 = _init_linear(k3, d, _NUM_CLASSES)
    # lane-pad the 2-wide class head to 128 (avoids masked partial stores); the
    # wrapper slices the output back to _NUM_CLASSES.
    w3p = jnp.zeros((d, _HEAD_PAD), jnp.float32).at[:, :_NUM_CLASSES].set(w3)
    b3p = jnp.zeros((1, _HEAD_PAD), jnp.float32).at[:, :_NUM_CLASSES].set(
        b3.reshape(1, _NUM_CLASSES))
    return dict(w1=w1, b1=b1.reshape(1, d), w2=w2, b2=b2.reshape(1, d),
                w3=w3p, b3=b3p)


def init_params(key, num_voters, in_ch, hidden_dim, dim_feedforward, n_enc, n_dec,
                nheads):
    k_proj, k_query, k_enc, k_dec, k_head = jax.random.split(key, 5)
    proj_w, proj_b = _init_linear(k_proj, in_ch, hidden_dim)       # 1x1 conv
    query_embed = jax.random.normal(k_query, (num_voters, hidden_dim), jnp.float32)
    # NOTE: kp_embed exists in the PyTorch module but is unused by forward -> omitted.
    return dict(
        proj_w=proj_w, proj_b=proj_b, query_embed=query_embed,
        enc=_init_enc_stack(k_enc, n_enc, hidden_dim, dim_feedforward, nheads),
        dec=_init_dec_stack(k_dec, n_dec, hidden_dim, dim_feedforward, nheads),
        head=_init_head(k_head, hidden_dim),
    )


# ----------------------------------------------------------------------------
if __name__ == "__main__":
    # Small config: 64 input channels, 8x8 feature map, hidden=32, 4 heads,
    # 2 encoder + 2 decoder layers, 16 queries.
    B, C, H, W = 2, 64, 8, 8
    HIDDEN, NHEADS, DFF = 32, 4, 64
    N_ENC, N_DEC, NUM_VOTERS = 2, 2, 16

    key = jax.random.PRNGKey(0)
    k_in, k_par = jax.random.split(key)
    x = jax.random.normal(k_in, (B, C, H, W), jnp.float32)          # NCHW like PyTorch
    params = init_params(k_par, NUM_VOTERS, C, HIDDEN, DFF, N_ENC, N_DEC, NHEADS)

    fwd = jax.jit(functools.partial(detr_forward, nheads=NHEADS))
    amap, ascore, h_out, hh = fwd(params, x)
    jax.block_until_ready((amap, ascore, h_out, hh))

    assert amap.shape == (B, H * W, H * W)
    assert ascore.shape == (B, H * W)
    assert h_out.shape == (B, NUM_VOTERS, HIDDEN)
    assert hh.shape == (B, NUM_VOTERS, 2)
    for t in (amap, ascore, h_out, hh):
        assert bool(jnp.all(jnp.isfinite(t)))
    print("KERNEL_OK")
</pallas_src>

<mosaic_0001>
module attributes {stable_mosaic.version = 11 : i64} {
  func.func @_src_map_kernel(%arg0: i32, %arg1: memref<1x64x64xf32, #tpu.memory_space<vmem>>, %arg2: memref<64x32xf32, #tpu.memory_space<vmem>>, %arg3: memref<1x32xf32, #tpu.memory_space<vmem>>, %arg4: memref<64x32xf32, #tpu.memory_space<vmem>>, %arg5: memref<1x64x32xf32, #tpu.memory_space<vmem>>, %arg6: memref<1x64x64xf32, #tpu.memory_space<vmem>>, %arg7: memref<1x1x64xf32, #tpu.memory_space<vmem>>) attributes {dimension_semantics = [#tpu.dimension_semantics<parallel>], iteration_bounds = array<i64: 2>, scalar_prefetch = 0 : i64, scratch_operands = 0 : i64, tpu.core_type = #tpu.core_type<tc>, window_params = [{transform_indices = @transform_0, window_bounds = array<i64: 1, 64, 64>}, {pipeline_mode = #tpu.pipeline_mode<synchronous>, transform_indices = @transform_1, window_bounds = array<i64: 64, 32>}, {pipeline_mode = #tpu.pipeline_mode<synchronous>, transform_indices = @transform_2, window_bounds = array<i64: 1, 32>}, {pipeline_mode = #tpu.pipeline_mode<synchronous>, transform_indices = @transform_3, window_bounds = array<i64: 64, 32>}, {transform_indices = @transform_4, window_bounds = array<i64: 1, 64, 32>}, {transform_indices = @transform_5, window_bounds = array<i64: 1, 64, 64>}, {transform_indices = @transform_6, window_bounds = array<i64: 1, 1, 64>}]} {
    %c0 = arith.constant 0 : index
    %c0_0 = arith.constant 0 : index
    %c0_1 = arith.constant 0 : index
    %0 = vector.load %arg1[%c0, %c0_0, %c0_1] : memref<1x64x64xf32, #tpu.memory_space<vmem>>, vector<1x64x64xf32>
    %1 = vector.shape_cast %0 : vector<1x64x64xf32> to vector<64x64xf32>
    %c0_2 = arith.constant 0 : index
    %c0_3 = arith.constant 0 : index
    %2 = vector.load %arg2[%c0_2, %c0_3] : memref<64x32xf32, #tpu.memory_space<vmem>>, vector<64x32xf32>
    %cst = arith.constant dense<0.000000e+00> : vector<64x32xf32>
    %3 = tpu.matmul %1, %2, %cst {dimension_numbers = #tpu.dot_dimension_numbers<[1], [0], [0], [1], [0, 0, 1, 1], [], []>} : vector<64x64xf32>, vector<64x32xf32>, vector<64x32xf32> -> vector<64x32xf32>
    %c0_4 = arith.constant 0 : index
    %c0_5 = arith.constant 0 : index
    %4 = vector.load %arg3[%c0_4, %c0_5] : memref<1x32xf32, #tpu.memory_space<vmem>>, vector<1x32xf32>
    %5 = vector.broadcast %4 : vector<1x32xf32> to vector<64x32xf32>
    %6 = arith.addf %3, %5 : vector<64x32xf32>
    %c0_6 = arith.constant 0 : index
    %c0_7 = arith.constant 0 : index
    %7 = vector.load %arg4[%c0_6, %c0_7] : memref<64x32xf32, #tpu.memory_space<vmem>>, vector<64x32xf32>
    %8 = arith.addf %6, %7 : vector<64x32xf32>
    %c0_8 = arith.constant 0 : index
    %c0_9 = arith.constant 0 : index
    %c0_10 = arith.constant 0 : index
    %9 = vector.load %arg5[%c0_8, %c0_9, %c0_10] : memref<1x64x32xf32, #tpu.memory_space<vmem>>, vector<1x64x32xf32>
    %10 = vector.shape_cast %9 : vector<1x64x32xf32> to vector<64x32xf32>
    %11 = vector.shape_cast %8 : vector<64x32xf32> to vector<1x64x32xf32>
    tpu.vector_store %arg5[%c0_8, %c0_9, %c0_10], %11 {strides = array<i32>} : memref<1x64x32xf32, #tpu.memory_space<vmem>>, vector<1x64x32xf32>,
    %cst_11 = arith.constant dense<0.000000e+00> : vector<64x64xf32>
    %12 = tpu.matmul %8, %8, %cst_11 {dimension_numbers = #tpu.dot_dimension_numbers<[1], [1], [0], [0], [0, 0, 1, 0], [], []>} : vector<64x32xf32>, vector<64x32xf32>, vector<64x64xf32> -> vector<64x64xf32>
    %c0_12 = arith.constant 0 : index
    %c0_13 = arith.constant 0 : index
    %c0_14 = arith.constant 0 : index
    %13 = vector.load %arg6[%c0_12, %c0_13, %c0_14] : memref<1x64x64xf32, #tpu.memory_space<vmem>>, vector<1x64x64xf32>
    %14 = vector.shape_cast %13 : vector<1x64x64xf32> to vector<64x64xf32>
    %15 = vector.shape_cast %12 : vector<64x64xf32> to vector<1x64x64xf32>
    tpu.vector_store %arg6[%c0_12, %c0_13, %c0_14], %15 {strides = array<i32>} : memref<1x64x64xf32, #tpu.memory_space<vmem>>, vector<1x64x64xf32>,
    %cst_15 = arith.constant dense<0.000000e+00> : vector<64xf32>
    %16 = vector.multi_reduction <add>, %12, %cst_15 [0] : vector<64x64xf32> to vector<64xf32>
    %17 = vector.shape_cast %16 : vector<64xf32> to vector<1x64xf32>
    %cst_16 = arith.constant 0.176776692 : f32
    %18 = vector.broadcast %cst_16 : f32 to vector<1x64xf32>
    %19 = arith.mulf %17, %18 : vector<1x64xf32>
    %c0_17 = arith.constant 0 : index
    %c0_18 = arith.constant 0 : index
    %c0_19 = arith.constant 0 : index
    %20 = vector.load %arg7[%c0_17, %c0_18, %c0_19] : memref<1x1x64xf32, #tpu.memory_space<vmem>>, vector<1x1x64xf32>
    %21 = vector.shape_cast %20 : vector<1x1x64xf32> to vector<1x64xf32>
    %22 = vector.shape_cast %19 : vector<1x64xf32> to vector<1x1x64xf32>
    tpu.vector_store %arg7[%c0_17, %c0_18, %c0_19], %22 {strides = array<i32>} : memref<1x1x64xf32, #tpu.memory_space<vmem>>, vector<1x1x64xf32>,
    return
  }
  func.func @transform_0(%arg0: i32) -> (i32, i32, i32) {
    %c0_i32 = arith.constant 0 : i32
    %c0_i32_0 = arith.constant 0 : i32
    %c0_i32_1 = arith.constant 0 : i32
    return %arg0, %c0_i32, %c0_i32_0 : i32, i32, i32
  }
  func.func @transform_1(%arg0: i32) -> (i32, i32) {
    %c0_i32 = arith.constant 0 : i32
    %c0_i32_0 = arith.constant 0 : i32
    %c0_i32_1 = arith.constant 0 : i32
    return %c0_i32, %c0_i32_0 : i32, i32
  }
  func.func @transform_2(%arg0: i32) -> (i32, i32) {
    %c0_i32 = arith.constant 0 : i32
    %c0_i32_0 = arith.constant 0 : i32
    %c0_i32_1 = arith.constant 0 : i32
    return %c0_i32, %c0_i32_0 : i32, i32
  }
  func.func @transform_3(%arg0: i32) -> (i32, i32) {
    %c0_i32 = arith.constant 0 : i32
    %c0_i32_0 = arith.constant 0 : i32
    %c0_i32_1 = arith.constant 0 : i32
    return %c0_i32, %c0_i32_0 : i32, i32
  }
  func.func @transform_4(%arg0: i32) -> (i32, i32, i32) {
    %c0_i32 = arith.constant 0 : i32
    %c0_i32_0 = arith.constant 0 : i32
    %c0_i32_1 = arith.constant 0 : i32
    return %arg0, %c0_i32, %c0_i32_0 : i32, i32, i32
  }
  func.func @transform_5(%arg0: i32) -> (i32, i32, i32) {
    %c0_i32 = arith.constant 0 : i32
    %c0_i32_0 = arith.constant 0 : i32
    %c0_i32_1 = arith.constant 0 : i32
    return %arg0, %c0_i32, %c0_i32_0 : i32, i32, i32
  }
  func.func @transform_6(%arg0: i32) -> (i32, i32, i32) {
    %c0_i32 = arith.constant 0 : i32
    %c0_i32_0 = arith.constant 0 : i32
    %c0_i32_1 = arith.constant 0 : i32
    return %arg0, %c0_i32, %c0_i32_0 : i32, i32, i32
  }
}

module attributes {stable_mosaic.version = 11 : i64} {
  func.func @_enc_stack_kernel(%arg0: i32, %arg1: i32, %arg2: memref<1x64x32xf32, #tpu.memory_space<vmem>>, %arg3: memref<1x32x96xf32, #tpu.memory_space<vmem>>, %arg4: memref<1x1x96xf32, #tpu.memory_space<vmem>>, %arg5: memref<1x32x32xf32, #tpu.memory_space<vmem>>, %arg6: memref<1x1x32xf32, #tpu.memory_space<vmem>>, %arg7: memref<1x32x64xf32, #tpu.memory_space<vmem>>, %arg8: memref<1x1x64xf32, #tpu.memory_space<vmem>>, %arg9: memref<1x64x32xf32, #tpu.memory_space<vmem>>, %arg10: memref<1x1x32xf32, #tpu.memory_space<vmem>>, %arg11: memref<1x2x32xf32, #tpu.memory_space<vmem>>, %arg12: memref<1x2x32xf32, #tpu.memory_space<vmem>>, %arg13: memref<1x32xf32, #tpu.memory_space<vmem>>, %arg14: memref<1x32xf32, #tpu.memory_space<vmem>>, %arg15: memref<1x64x32xf32, #tpu.memory_space<vmem>>, %arg16: memref<64x32xf32, #tpu.memory_space<vmem>>) attributes {dimension_semantics = [#tpu.dimension_semantics<parallel>, #tpu.dimension_semantics<arbitrary>], iteration_bounds = array<i64: 2, 2>, scalar_prefetch = 0 : i64, scratch_operands = 1 : i64, tpu.core_type = #tpu.core_type<tc>, window_params = [{transform_indices = @transform_0, window_bounds = array<i64: 1, 64, 32>}, {transform_indices = @transform_1, window_bounds = array<i64: 1, 32, 96>}, {transform_indices = @transform_2, window_bounds = array<i64: 1, 1, 96>}, {transform_indices = @transform_3, window_bounds = array<i64: 1, 32, 32>}, {transform_indices = @transform_4, window_bounds = array<i64: 1, 1, 32>}, {transform_indices = @transform_5, window_bounds = array<i64: 1, 32, 64>}, {transform_indices = @transform_6, window_bounds = array<i64: 1, 1, 64>}, {transform_indices = @transform_7, window_bounds = array<i64: 1, 64, 32>}, {transform_indices = @transform_8, window_bounds = array<i64: 1, 1, 32>}, {transform_indices = @transform_9, window_bounds = array<i64: 1, 2, 32>}, {transform_indices = @transform_10, window_bounds = array<i64: 1, 2, 32>}, {pipeline_mode = #tpu.pipeline_mode<synchronous>, transform_indices = @transform_11, window_bounds = array<i64: 1, 32>}, {pipeline_mode = #tpu.pipeline_mode<synchronous>, transform_indices = @transform_12, window_bounds = array<i64: 1, 32>}, {transform_indices = @transform_13, window_bounds = array<i64: 1, 64, 32>}]} {
    %c0_i32 = arith.constant 0 : i32
    %0 = arith.cmpi eq, %arg1, %c0_i32 : i32
    %1 = arith.extui %0 : i1 to i32
    %c0_i32_0 = arith.constant 0 : i32
    %2 = arith.cmpi ne, %1, %c0_i32_0 : i32
    scf.if %2 {
      %c0_68 = arith.constant 0 : index
      %c0_69 = arith.constant 0 : index
      %c0_70 = arith.constant 0 : index
      %167 = vector.load %arg2[%c0_68, %c0_69, %c0_70] : memref<1x64x32xf32, #tpu.memory_space<vmem>>, vector<1x64x32xf32>
      %168 = vector.shape_cast %167 : vector<1x64x32xf32> to vector<64x32xf32>
      %c0_71 = arith.constant 0 : index
      %c0_72 = arith.constant 0 : index
      %169 = vector.load %arg16[%c0_71, %c0_72] : memref<64x32xf32, #tpu.memory_space<vmem>>, vector<64x32xf32>
      tpu.vector_store %arg16[%c0_71, %c0_72], %168 {strides = array<i32>} : memref<64x32xf32, #tpu.memory_space<vmem>>, vector<64x32xf32>,
    } else {
    }
    %c0 = arith.constant 0 : index
    %c0_1 = arith.constant 0 : index
    %3 = vector.load %arg16[%c0, %c0_1] : memref<64x32xf32, #tpu.memory_space<vmem>>, vector<64x32xf32>
    %c0_2 = arith.constant 0 : index
    %c0_3 = arith.constant 0 : index
    %c0_4 = arith.constant 0 : index
    %4 = vector.load %arg11[%c0_2, %c0_3, %c0_4] : memref<1x2x32xf32, #tpu.memory_space<vmem>>, vector<1x2x32xf32>
    %5 = vector.shape_cast %4 : vector<1x2x32xf32> to vector<2x32xf32>
    %c0_5 = arith.constant 0 : index
    %c0_6 = arith.constant 0 : index
    %c0_7 = arith.constant 0 : index
    %6 = vector.load %arg12[%c0_5, %c0_6, %c0_7] : memref<1x2x32xf32, #tpu.memory_space<vmem>>, vector<1x2x32xf32>
    %7 = vector.shape_cast %6 : vector<1x2x32xf32> to vector<2x32xf32>
    %c0_8 = arith.constant 0 : index
    %c0_9 = arith.constant 0 : index
    %c0_10 = arith.constant 0 : index
    %8 = vector.load %arg3[%c0_8, %c0_9, %c0_10] : memref<1x32x96xf32, #tpu.memory_space<vmem>>, vector<1x32x96xf32>
    %9 = vector.shape_cast %8 : vector<1x32x96xf32> to vector<32x96xf32>
    %cst = arith.constant dense<0.000000e+00> : vector<64x96xf32>
    %10 = tpu.matmul %3, %9, %cst {dimension_numbers = #tpu.dot_dimension_numbers<[1], [0], [0], [1], [0, 0, 1, 1], [], []>} : vector<64x32xf32>, vector<32x96xf32>, vector<64x96xf32> -> vector<64x96xf32>
    %c0_11 = arith.constant 0 : index
    %c0_12 = arith.constant 0 : index
    %c0_13 = arith.constant 0 : index
    %11 = vector.load %arg4[%c0_11, %c0_12, %c0_13] : memref<1x1x96xf32, #tpu.memory_space<vmem>>, vector<1x1x96xf32>
    %12 = vector.shape_cast %11 : vector<1x1x96xf32> to vector<1x96xf32>
    %13 = vector.broadcast %12 : vector<1x96xf32> to vector<64x96xf32>
    %14 = arith.addf %10, %13 : vector<64x96xf32>
    %15 = vector.extract_strided_slice %14 {offsets = [0, 0], sizes = [64, 32], strides = [1, 1]} : vector<64x96xf32> to vector<64x32xf32>
    %16 = vector.extract_strided_slice %14 {offsets = [0, 32], sizes = [64, 32], strides = [1, 1]} : vector<64x96xf32> to vector<64x32xf32>
    %17 = vector.extract_strided_slice %14 {offsets = [0, 64], sizes = [64, 32], strides = [1, 1]} : vector<64x96xf32> to vector<64x32xf32>
    %c0_14 = arith.constant 0 : index
    %c0_15 = arith.constant 0 : index
    %c0_16 = arith.constant 0 : index
    %18 = vector.load %arg5[%c0_14, %c0_15, %c0_16] : memref<1x32x32xf32, #tpu.memory_space<vmem>>, vector<1x32x32xf32>
    %19 = vector.shape_cast %18 : vector<1x32x32xf32> to vector<32x32xf32>
    %c0_17 = arith.constant 0 : index
    %c0_18 = arith.constant 0 : index
    %c0_19 = arith.constant 0 : index
    %20 = vector.load %arg6[%c0_17, %c0_18, %c0_19] : memref<1x1x32xf32, #tpu.memory_space<vmem>>, vector<1x1x32xf32>
    %21 = vector.shape_cast %20 : vector<1x1x32xf32> to vector<1x32xf32>
    %22 = vector.extract_strided_slice %5 {offsets = [0, 0], sizes = [1, 32], strides = [1, 1]} : vector<2x32xf32> to vector<1x32xf32>
    %23 = vector.extract_strided_slice %7 {offsets = [0, 0], sizes = [1, 32], strides = [1, 1]} : vector<2x32xf32> to vector<1x32xf32>
    %24 = vector.broadcast %21 : vector<1x32xf32> to vector<64x32xf32>
    %25 = arith.addf %3, %24 : vector<64x32xf32>
    %26 = vector.extract_strided_slice %15 {offsets = [0, 0], sizes = [64, 8], strides = [1, 1]} : vector<64x32xf32> to vector<64x8xf32>
    %27 = vector.extract_strided_slice %16 {offsets = [0, 0], sizes = [64, 8], strides = [1, 1]} : vector<64x32xf32> to vector<64x8xf32>
    %cst_20 = arith.constant dense<0.000000e+00> : vector<64x64xf32>
    %28 = tpu.matmul %26, %27, %cst_20 {dimension_numbers = #tpu.dot_dimension_numbers<[1], [1], [0], [0], [0, 0, 1, 0], [], []>} : vector<64x8xf32>, vector<64x8xf32>, vector<64x64xf32> -> vector<64x64xf32>
    %cst_21 = arith.constant dense<0xFF800000> : vector<64xf32>
    %29 = vector.multi_reduction <maximumf>, %28, %cst_21 [1] : vector<64x64xf32> to vector<64xf32>
    %30 = vector.shape_cast %29 : vector<64xf32> to vector<64x1xf32>
    %31 = vector.broadcast %30 : vector<64x1xf32> to vector<64x64xf32>
    %32 = arith.subf %28, %31 : vector<64x64xf32>
    %33 = math.exp %32 : vector<64x64xf32>
    %cst_22 = arith.constant dense<0.000000e+00> : vector<64xf32>
    %34 = vector.multi_reduction <add>, %33, %cst_22 [1] : vector<64x64xf32> to vector<64xf32>
    %35 = vector.shape_cast %34 : vector<64xf32> to vector<64x1xf32>
    %36 = tpu.reciprocal %35 {approx = true} : vector<64x1xf32> -> vector<64x1xf32>
    %37 = vector.broadcast %36 : vector<64x1xf32> to vector<64x64xf32>
    %38 = arith.mulf %33, %37 : vector<64x64xf32>
    %39 = vector.extract_strided_slice %17 {offsets = [0, 0], sizes = [64, 8], strides = [1, 1]} : vector<64x32xf32> to vector<64x8xf32>
    %cst_23 = arith.constant dense<0.000000e+00> : vector<64x8xf32>
    %40 = tpu.matmul %38, %39, %cst_23 {dimension_numbers = #tpu.dot_dimension_numbers<[1], [0], [0], [1], [0, 0, 1, 1], [], []>} : vector<64x64xf32>, vector<64x8xf32>, vector<64x8xf32> -> vector<64x8xf32>
    %41 = vector.extract_strided_slice %19 {offsets = [0, 0], sizes = [8, 32], strides = [1, 1]} : vector<32x32xf32> to vector<8x32xf32>
    %cst_24 = arith.constant dense<0.000000e+00> : vector<64x32xf32>
    %42 = tpu.matmul %40, %41, %cst_24 {dimension_numbers = #tpu.dot_dimension_numbers<[1], [0], [0], [1], [0, 0, 1, 1], [], []>} : vector<64x8xf32>, vector<8x32xf32>, vector<64x32xf32> -> vector<64x32xf32>
    %43 = arith.addf %25, %42 : vector<64x32xf32>
    %44 = vector.extract_strided_slice %15 {offsets = [0, 8], sizes = [64, 8], strides = [1, 1]} : vector<64x32xf32> to vector<64x8xf32>
    %45 = vector.extract_strided_slice %16 {offsets = [0, 8], sizes = [64, 8], strides = [1, 1]} : vector<64x32xf32> to vector<64x8xf32>
    %cst_25 = arith.constant dense<0.000000e+00> : vector<64x64xf32>
    %46 = tpu.matmul %44, %45, %cst_25 {dimension_numbers = #tpu.dot_dimension_numbers<[1], [1], [0], [0], [0, 0, 1, 0], [], []>} : vector<64x8xf32>, vector<64x8xf32>, vector<64x64xf32> -> vector<64x64xf32>
    %cst_26 = arith.constant dense<0xFF800000> : vector<64xf32>
    %47 = vector.multi_reduction <maximumf>, %46, %cst_26 [1] : vector<64x64xf32> to vector<64xf32>
    %48 = vector.shape_cast %47 : vector<64xf32> to vector<64x1xf32>
    %49 = vector.broadcast %48 : vector<64x1xf32> to vector<64x64xf32>
    %50 = arith.subf %46, %49 : vector<64x64xf32>
    %51 = math.exp %50 : vector<64x64xf32>
    %cst_27 = arith.constant dense<0.000000e+00> : vector<64xf32>
    %52 = vector.multi_reduction <add>, %51, %cst_27 [1] : vector<64x64xf32> to vector<64xf32>
    %53 = vector.shape_cast %52 : vector<64xf32> to vector<64x1xf32>
    %54 = tpu.reciprocal %53 {approx = true} : vector<64x1xf32> -> vector<64x1xf32>
    %55 = vector.broadcast %54 : vector<64x1xf32> to vector<64x64xf32>
    %56 = arith.mulf %51, %55 : vector<64x64xf32>
    %57 = vector.extract_strided_slice %17 {offsets = [0, 8], sizes = [64, 8], strides = [1, 1]} : vector<64x32xf32> to vector<64x8xf32>
    %cst_28 = arith.constant dense<0.000000e+00> : vector<64x8xf32>
    %58 = tpu.matmul %56, %57, %cst_28 {dimension_numbers = #tpu.dot_dimension_numbers<[1], [0], [0], [1], [0, 0, 1, 1], [], []>} : vector<64x64xf32>, vector<64x8xf32>, vector<64x8xf32> -> vector<64x8xf32>
    %59 = vector.extract_strided_slice %19 {offsets = [8, 0], sizes = [8, 32], strides = [1, 1]} : vector<32x32xf32> to vector<8x32xf32>
    %cst_29 = arith.constant dense<0.000000e+00> : vector<64x32xf32>
    %60 = tpu.matmul %58, %59, %cst_29 {dimension_numbers = #tpu.dot_dimension_numbers<[1], [0], [0], [1], [0, 0, 1, 1], [], []>} : vector<64x8xf32>, vector<8x32xf32>, vector<64x32xf32> -> vector<64x32xf32>
    %61 = arith.addf %43, %60 : vector<64x32xf32>
    %62 = vector.extract_strided_slice %15 {offsets = [0, 16], sizes = [64, 8], strides = [1, 1]} : vector<64x32xf32> to vector<64x8xf32>
    %63 = vector.extract_strided_slice %16 {offsets = [0, 16], sizes = [64, 8], strides = [1, 1]} : vector<64x32xf32> to vector<64x8xf32>
    %cst_30 = arith.constant dense<0.000000e+00> : vector<64x64xf32>
    %64 = tpu.matmul %62, %63, %cst_30 {dimension_numbers = #tpu.dot_dimension_numbers<[1], [1], [0], [0], [0, 0, 1, 0], [], []>} : vector<64x8xf32>, vector<64x8xf32>, vector<64x64xf32> -> vector<64x64xf32>
    %cst_31 = arith.constant dense<0xFF800000> : vector<64xf32>
    %65 = vector.multi_reduction <maximumf>, %64, %cst_31 [1] : vector<64x64xf32> to vector<64xf32>
    %66 = vector.shape_cast %65 : vector<64xf32> to vector<64x1xf32>
    %67 = vector.broadcast %66 : vector<64x1xf32> to vector<64x64xf32>
    %68 = arith.subf %64, %67 : vector<64x64xf32>
    %69 = math.exp %68 : vector<64x64xf32>
    %cst_32 = arith.constant dense<0.000000e+00> : vector<64xf32>
    %70 = vector.multi_reduction <add>, %69, %cst_32 [1] : vector<64x64xf32> to vector<64xf32>
    %71 = vector.shape_cast %70 : vector<64xf32> to vector<64x1xf32>
    %72 = tpu.reciprocal %71 {approx = true} : vector<64x1xf32> -> vector<64x1xf32>
    %73 = vector.broadcast %72 : vector<64x1xf32> to vector<64x64xf32>
    %74 = arith.mulf %69, %73 : vector<64x64xf32>
    %75 = vector.extract_strided_slice %17 {offsets = [0, 16], sizes = [64, 8], strides = [1, 1]} : vector<64x32xf32> to vector<64x8xf32>
    %cst_33 = arith.constant dense<0.000000e+00> : vector<64x8xf32>
    %76 = tpu.matmul %74, %75, %cst_33 {dimension_numbers = #tpu.dot_dimension_numbers<[1], [0], [0], [1], [0, 0, 1, 1], [], []>} : vector<64x64xf32>, vector<64x8xf32>, vector<64x8xf32> -> vector<64x8xf32>
    %77 = vector.extract_strided_slice %19 {offsets = [16, 0], sizes = [8, 32], strides = [1, 1]} : vector<32x32xf32> to vector<8x32xf32>
    %cst_34 = arith.constant dense<0.000000e+00> : vector<64x32xf32>
    %78 = tpu.matmul %76, %77, %cst_34 {dimension_numbers = #tpu.dot_dimension_numbers<[1], [0], [0], [1], [0, 0, 1, 1], [], []>} : vector<64x8xf32>, vector<8x32xf32>, vector<64x32xf32> -> vector<64x32xf32>
    %79 = arith.addf %61, %78 : vector<64x32xf32>
    %80 = vector.extract_strided_slice %15 {offsets = [0, 24], sizes = [64, 8], strides = [1, 1]} : vector<64x32xf32> to vector<64x8xf32>
    %81 = vector.extract_strided_slice %16 {offsets = [0, 24], sizes = [64, 8], strides = [1, 1]} : vector<64x32xf32> to vector<64x8xf32>
    %cst_35 = arith.constant dense<0.000000e+00> : vector<64x64xf32>
    %82 = tpu.matmul %80, %81, %cst_35 {dimension_numbers = #tpu.dot_dimension_numbers<[1], [1], [0], [0], [0, 0, 1, 0], [], []>} : vector<64x8xf32>, vector<64x8xf32>, vector<64x64xf32> -> vector<64x64xf32>
    %cst_36 = arith.constant dense<0xFF800000> : vector<64xf32>
    %83 = vector.multi_reduction <maximumf>, %82, %cst_36 [1] : vector<64x64xf32> to vector<64xf32>
    %84 = vector.shape_cast %83 : vector<64xf32> to vector<64x1xf32>
    %85 = vector.broadcast %84 : vector<64x1xf32> to vector<64x64xf32>
    %86 = arith.subf %82, %85 : vector<64x64xf32>
    %87 = math.exp %86 : vector<64x64xf32>
    %cst_37 = arith.constant dense<0.000000e+00> : vector<64xf32>
    %88 = vector.multi_reduction <add>, %87, %cst_37 [1] : vector<64x64xf32> to vector<64xf32>
    %89 = vector.shape_cast %88 : vector<64xf32> to vector<64x1xf32>
    %90 = tpu.reciprocal %89 {approx = true} : vector<64x1xf32> -> vector<64x1xf32>
    %91 = vector.broadcast %90 : vector<64x1xf32> to vector<64x64xf32>
    %92 = arith.mulf %87, %91 : vector<64x64xf32>
    %93 = vector.extract_strided_slice %17 {offsets = [0, 24], sizes = [64, 8], strides = [1, 1]} : vector<64x32xf32> to vector<64x8xf32>
    %cst_38 = arith.constant dense<0.000000e+00> : vector<64x8xf32>
    %94 = tpu.matmul %92, %93, %cst_38 {dimension_numbers = #tpu.dot_dimension_numbers<[1], [0], [0], [1], [0, 0, 1, 1], [], []>} : vector<64x64xf32>, vector<64x8xf32>, vector<64x8xf32> -> vector<64x8xf32>
    %95 = vector.extract_strided_slice %19 {offsets = [24, 0], sizes = [8, 32], strides = [1, 1]} : vector<32x32xf32> to vector<8x32xf32>
    %cst_39 = arith.constant dense<0.000000e+00> : vector<64x32xf32>
    %96 = tpu.matmul %94, %95, %cst_39 {dimension_numbers = #tpu.dot_dimension_numbers<[1], [0], [0], [1], [0, 0, 1, 1], [], []>} : vector<64x8xf32>, vector<8x32xf32>, vector<64x32xf32> -> vector<64x32xf32>
    %97 = arith.addf %79, %96 : vector<64x32xf32>
    %cst_40 = arith.constant dense<0.000000e+00> : vector<64xf32>
    %98 = vector.multi_reduction <add>, %97, %cst_40 [1] : vector<64x32xf32> to vector<64xf32>
    %99 = vector.shape_cast %98 : vector<64xf32> to vector<64x1xf32>
    %cst_41 = arith.constant 3.200000e+01 : f32
    %100 = vector.broadcast %cst_41 : f32 to vector<64x1xf32>
    %101 = arith.divf %99, %100 : vector<64x1xf32>
    %102 = vector.broadcast %101 : vector<64x1xf32> to vector<64x32xf32>
    %103 = arith.subf %97, %102 : vector<64x32xf32>
    %104 = arith.mulf %103, %103 : vector<64x32xf32>
    %cst_42 = arith.constant dense<0.000000e+00> : vector<64xf32>
    %105 = vector.multi_reduction <add>, %104, %cst_42 [1] : vector<64x32xf32> to vector<64xf32>
    %106 = vector.shape_cast %105 : vector<64xf32> to vector<64x1xf32>
    %cst_43 = arith.constant 3.200000e+01 : f32
    %107 = vector.broadcast %cst_43 : f32 to vector<64x1xf32>
    %108 = arith.divf %106, %107 : vector<64x1xf32>
    %109 = vector.broadcast %101 : vector<64x1xf32> to vector<64x32xf32>
    %110 = arith.subf %97, %109 : vector<64x32xf32>
    %cst_44 = arith.constant 9.99999974E-6 : f32
    %111 = vector.broadcast %cst_44 : f32 to vector<64x1xf32>
    %112 = arith.addf %108, %111 : vector<64x1xf32>
    %113 = math.rsqrt %112 : vector<64x1xf32>
    %114 = vector.broadcast %113 : vector<64x1xf32> to vector<64x32xf32>
    %115 = arith.mulf %110, %114 : vector<64x32xf32>
    %116 = vector.broadcast %22 : vector<1x32xf32> to vector<64x32xf32>
    %117 = arith.mulf %115, %116 : vector<64x32xf32>
    %118 = vector.broadcast %23 : vector<1x32xf32> to vector<64x32xf32>
    %119 = arith.addf %117, %118 : vector<64x32xf32>
    %c0_45 = arith.constant 0 : index
    %c0_46 = arith.constant 0 : index
    %c0_47 = arith.constant 0 : index
    %120 = vector.load %arg7[%c0_45, %c0_46, %c0_47] : memref<1x32x64xf32, #tpu.memory_space<vmem>>, vector<1x32x64xf32>
    %121 = vector.shape_cast %120 : vector<1x32x64xf32> to vector<32x64xf32>
    %cst_48 = arith.constant dense<0.000000e+00> : vector<64x64xf32>
    %122 = tpu.matmul %119, %121, %cst_48 {dimension_numbers = #tpu.dot_dimension_numbers<[1], [0], [0], [1], [0, 0, 1, 1], [], []>} : vector<64x32xf32>, vector<32x64xf32>, vector<64x64xf32> -> vector<64x64xf32>
    %c0_49 = arith.constant 0 : index
    %c0_50 = arith.constant 0 : index
    %c0_51 = arith.constant 0 : index
    %123 = vector.load %arg8[%c0_49, %c0_50, %c0_51] : memref<1x1x64xf32, #tpu.memory_space<vmem>>, vector<1x1x64xf32>
    %124 = vector.shape_cast %123 : vector<1x1x64xf32> to vector<1x64xf32>
    %125 = vector.broadcast %124 : vector<1x64xf32> to vector<64x64xf32>
    %126 = arith.addf %122, %125 : vector<64x64xf32>
    %cst_52 = arith.constant 0.000000e+00 : f32
    %127 = vector.broadcast %cst_52 : f32 to vector<64x64xf32>
    %128 = arith.maximumf %126, %127 : vector<64x64xf32>
    %c0_53 = arith.constant 0 : index
    %c0_54 = arith.constant 0 : index
    %c0_55 = arith.constant 0 : index
    %129 = vector.load %arg9[%c0_53, %c0_54, %c0_55] : memref<1x64x32xf32, #tpu.memory_space<vmem>>, vector<1x64x32xf32>
    %130 = vector.shape_cast %129 : vector<1x64x32xf32> to vector<64x32xf32>
    %cst_56 = arith.constant dense<0.000000e+00> : vector<64x32xf32>
    %131 = tpu.matmul %128, %130, %cst_56 {dimension_numbers = #tpu.dot_dimension_numbers<[1], [0], [0], [1], [0, 0, 1, 1], [], []>} : vector<64x64xf32>, vector<64x32xf32>, vector<64x32xf32> -> vector<64x32xf32>
    %132 = arith.addf %119, %131 : vector<64x32xf32>
    %c0_57 = arith.constant 0 : index
    %c0_58 = arith.constant 0 : index
    %c0_59 = arith.constant 0 : index
    %133 = vector.load %arg10[%c0_57, %c0_58, %c0_59] : memref<1x1x32xf32, #tpu.memory_space<vmem>>, vector<1x1x32xf32>
    %134 = vector.shape_cast %133 : vector<1x1x32xf32> to vector<1x32xf32>
    %135 = vector.broadcast %134 : vector<1x32xf32> to vector<64x32xf32>
    %136 = arith.addf %132, %135 : vector<64x32xf32>
    %137 = vector.extract_strided_slice %5 {offsets = [1, 0], sizes = [1, 32], strides = [1, 1]} : vector<2x32xf32> to vector<1x32xf32>
    %138 = vector.extract_strided_slice %7 {offsets = [1, 0], sizes = [1, 32], strides = [1, 1]} : vector<2x32xf32> to vector<1x32xf32>
    %cst_60 = arith.constant dense<0.000000e+00> : vector<64xf32>
    %139 = vector.multi_reduction <add>, %136, %cst_60 [1] : vector<64x32xf32> to vector<64xf32>
    %140 = vector.shape_cast %139 : vector<64xf32> to vector<64x1xf32>
    %cst_61 = arith.constant 3.200000e+01 : f32
    %141 = vector.broadcast %cst_61 : f32 to vector<64x1xf32>
    %142 = arith.divf %140, %141 : vector<64x1xf32>
    %143 = vector.broadcast %142 : vector<64x1xf32> to vector<64x32xf32>
    %144 = arith.subf %136, %143 : vector<64x32xf32>
    %145 = arith.mulf %144, %144 : vector<64x32xf32>
    %cst_62 = arith.constant dense<0.000000e+00> : vector<64xf32>
    %146 = vector.multi_reduction <add>, %145, %cst_62 [1] : vector<64x32xf32> to vector<64xf32>
    %147 = vector.shape_cast %146 : vector<64xf32> to vector<64x1xf32>
    %cst_63 = arith.constant 3.200000e+01 : f32
    %148 = vector.broadcast %cst_63 : f32 to vector<64x1xf32>
    %149 = arith.divf %147, %148 : vector<64x1xf32>
    %150 = vector.broadcast %142 : vector<64x1xf32> to vector<64x32xf32>
    %151 = arith.subf %136, %150 : vector<64x32xf32>
    %cst_64 = arith.constant 9.99999974E-6 : f32
    %152 = vector.broadcast %cst_64 : f32 to vector<64x1xf32>
    %153 = arith.addf %149, %152 : vector<64x1xf32>
    %154 = math.rsqrt %153 : vector<64x1xf32>
    %155 = vector.broadcast %154 : vector<64x1xf32> to vector<64x32xf32>
    %156 = arith.mulf %151, %155 : vector<64x32xf32>
    %157 = vector.broadcast %137 : vector<1x32xf32> to vector<64x32xf32>
    %158 = arith.mulf %156, %157 : vector<64x32xf32>
    %159 = vector.broadcast %138 : vector<1x32xf32> to vector<64x32xf32>
    %160 = arith.addf %158, %159 : vector<64x32xf32>
    %c1_i32 = arith.constant 1 : i32
    %161 = arith.cmpi slt, %arg1, %c1_i32 : i32
    %162 = arith.extui %161 : i1 to i32
    %c0_i32_65 = arith.constant 0 : i32
    %163 = arith.cmpi ne, %162, %c0_i32_65 : i32
    scf.if %163 {
      %c0_68 = arith.constant 0 : index
      %c0_69 = arith.constant 0 : index
      %167 = vector.load %arg16[%c0_68, %c0_69] : memref<64x32xf32, #tpu.memory_space<vmem>>, vector<64x32xf32>
      tpu.vector_store %arg16[%c0_68, %c0_69], %160 {strides = array<i32>} : memref<64x32xf32, #tpu.memory_space<vmem>>, vector<64x32xf32>,
    } else {
    }
    %c1_i32_66 = arith.constant 1 : i32
    %164 = arith.cmpi eq, %arg1, %c1_i32_66 : i32
    %165 = arith.extui %164 : i1 to i32
    %c0_i32_67 = arith.constant 0 : i32
    %166 = arith.cmpi ne, %165, %c0_i32_67 : i32
    scf.if %166 {
      %c0_68 = arith.constant 0 : index
      %c0_69 = arith.constant 0 : index
      %167 = vector.load %arg13[%c0_68, %c0_69] : memref<1x32xf32, #tpu.memory_space<vmem>>, vector<1x32xf32>
      %c0_70 = arith.constant 0 : index
      %c0_71 = arith.constant 0 : index
      %168 = vector.load %arg14[%c0_70, %c0_71] : memref<1x32xf32, #tpu.memory_space<vmem>>, vector<1x32xf32>
      %cst_72 = arith.constant dense<0.000000e+00> : vector<64xf32>
      %169 = vector.multi_reduction <add>, %160, %cst_72 [1] : vector<64x32xf32> to vector<64xf32>
      %170 = vector.shape_cast %169 : vector<64xf32> to vector<64x1xf32>
      %cst_73 = arith.constant 3.200000e+01 : f32
      %171 = vector.broadcast %cst_73 : f32 to vector<64x1xf32>
      %172 = arith.divf %170, %171 : vector<64x1xf32>
      %173 = vector.broadcast %172 : vector<64x1xf32> to vector<64x32xf32>
      %174 = arith.subf %160, %173 : vector<64x32xf32>
      %175 = arith.mulf %174, %174 : vector<64x32xf32>
      %cst_74 = arith.constant dense<0.000000e+00> : vector<64xf32>
      %176 = vector.multi_reduction <add>, %175, %cst_74 [1] : vector<64x32xf32> to vector<64xf32>
      %177 = vector.shape_cast %176 : vector<64xf32> to vector<64x1xf32>
      %cst_75 = arith.constant 3.200000e+01 : f32
      %178 = vector.broadcast %cst_75 : f32 to vector<64x1xf32>
      %179 = arith.divf %177, %178 : vector<64x1xf32>
      %180 = vector.broadcast %172 : vector<64x1xf32> to vector<64x32xf32>
      %181 = arith.subf %160, %180 : vector<64x32xf32>
      %cst_76 = arith.constant 9.99999974E-6 : f32
      %182 = vector.broadcast %cst_76 : f32 to vector<64x1xf32>
      %183 = arith.addf %179, %182 : vector<64x1xf32>
      %184 = math.rsqrt %183 : vector<64x1xf32>
      %185 = vector.broadcast %184 : vector<64x1xf32> to vector<64x32xf32>
      %186 = arith.mulf %181, %185 : vector<64x32xf32>
      %187 = vector.broadcast %167 : vector<1x32xf32> to vector<64x32xf32>
      %188 = arith.mulf %186, %187 : vector<64x32xf32>
      %189 = vector.broadcast %168 : vector<1x32xf32> to vector<64x32xf32>
      %190 = arith.addf %188, %189 : vector<64x32xf32>
      %c0_77 = arith.constant 0 : index
      %c0_78 = arith.constant 0 : index
      %c0_79 = arith.constant 0 : index
      %191 = vector.load %arg15[%c0_77, %c0_78, %c0_79] : memref<1x64x32xf32, #tpu.memory_space<vmem>>, vector<1x64x32xf32>
      %192 = vector.shape_cast %191 : vector<1x64x32xf32> to vector<64x32xf32>
      %193 = vector.shape_cast %190 : vector<64x32xf32> to vector<1x64x32xf32>
      tpu.vector_store %arg15[%c0_77, %c0_78, %c0_79], %193 {strides = array<i32>} : memref<1x64x32xf32, #tpu.memory_space<vmem>>, vector<1x64x32xf32>,
    } else {
    }
    return
  }
  func.func @transform_0(%arg0: i32, %arg1: i32) -> (i32, i32, i32) {
    %c0_i32 = arith.constant 0 : i32
    %c0_i32_0 = arith.constant 0 : i32
    %c0_i32_1 = arith.constant 0 : i32
    return %arg0, %c0_i32, %c0_i32_0 : i32, i32, i32
  }
  func.func @transform_1(%arg0: i32, %arg1: i32) -> (i32, i32, i32) {
    %c0_i32 = arith.constant 0 : i32
    %c0_i32_0 = arith.constant 0 : i32
    %c0_i32_1 = arith.constant 0 : i32
    return %arg1, %c0_i32, %c0_i32_0 : i32, i32, i32
  }
  func.func @transform_2(%arg0: i32, %arg1: i32) -> (i32, i32, i32) {
    %c0_i32 = arith.constant 0 : i32
    %c0_i32_0 = arith.constant 0 : i32
    %c0_i32_1 = arith.constant 0 : i32
    return %arg1, %c0_i32, %c0_i32_0 : i32, i32, i32
  }
  func.func @transform_3(%arg0: i32, %arg1: i32) -> (i32, i32, i32) {
    %c0_i32 = arith.constant 0 : i32
    %c0_i32_0 = arith.constant 0 : i32
    %c0_i32_1 = arith.constant 0 : i32
    return %arg1, %c0_i32, %c0_i32_0 : i32, i32, i32
  }
  func.func @transform_4(%arg0: i32, %arg1: i32) -> (i32, i32, i32) {
    %c0_i32 = arith.constant 0 : i32
    %c0_i32_0 = arith.constant 0 : i32
    %c0_i32_1 = arith.constant 0 : i32
    return %arg1, %c0_i32, %c0_i32_0 : i32, i32, i32
  }
  func.func @transform_5(%arg0: i32, %arg1: i32) -> (i32, i32, i32) {
    %c0_i32 = arith.constant 0 : i32
    %c0_i32_0 = arith.constant 0 : i32
    %c0_i32_1 = arith.constant 0 : i32
    return %arg1, %c0_i32, %c0_i32_0 : i32, i32, i32
  }
  func.func @transform_6(%arg0: i32, %arg1: i32) -> (i32, i32, i32) {
    %c0_i32 = arith.constant 0 : i32
    %c0_i32_0 = arith.constant 0 : i32
    %c0_i32_1 = arith.constant 0 : i32
    return %arg1, %c0_i32, %c0_i32_0 : i32, i32, i32
  }
  func.func @transform_7(%arg0: i32, %arg1: i32) -> (i32, i32, i32) {
    %c0_i32 = arith.constant 0 : i32
    %c0_i32_0 = arith.constant 0 : i32
    %c0_i32_1 = arith.constant 0 : i32
    return %arg1, %c0_i32, %c0_i32_0 : i32, i32, i32
  }
  func.func @transform_8(%arg0: i32, %arg1: i32) -> (i32, i32, i32) {
    %c0_i32 = arith.constant 0 : i32
    %c0_i32_0 = arith.constant 0 : i32
    %c0_i32_1 = arith.constant 0 : i32
    return %arg1, %c0_i32, %c0_i32_0 : i32, i32, i32
  }
  func.func @transform_9(%arg0: i32, %arg1: i32) -> (i32, i32, i32) {
    %c0_i32 = arith.constant 0 : i32
    %c0_i32_0 = arith.constant 0 : i32
    %c0_i32_1 = arith.constant 0 : i32
    return %arg1, %c0_i32, %c0_i32_0 : i32, i32, i32
  }
  func.func @transform_10(%arg0: i32, %arg1: i32) -> (i32, i32, i32) {
    %c0_i32 = arith.constant 0 : i32
    %c0_i32_0 = arith.constant 0 : i32
    %c0_i32_1 = arith.constant 0 : i32
    return %arg1, %c0_i32, %c0_i32_0 : i32, i32, i32
  }
  func.func @transform_11(%arg0: i32, %arg1: i32) -> (i32, i32) {
    %c0_i32 = arith.constant 0 : i32
    %c0_i32_0 = arith.constant 0 : i32
    %c0_i32_1 = arith.constant 0 : i32
    return %c0_i32, %c0_i32_0 : i32, i32
  }
  func.func @transform_12(%arg0: i32, %arg1: i32) -> (i32, i32) {
    %c0_i32 = arith.constant 0 : i32
    %c0_i32_0 = arith.constant 0 : i32
    %c0_i32_1 = arith.constant 0 : i32
    return %c0_i32, %c0_i32_0 : i32, i32
  }
  func.func @transform_13(%arg0: i32, %arg1: i32) -> (i32, i32, i32) {
    %c0_i32 = arith.constant 0 : i32
    %c0_i32_0 = arith.constant 0 : i32
    %c0_i32_1 = arith.constant 0 : i32
    return %arg0, %c0_i32, %c0_i32_0 : i32, i32, i32
  }
}

module attributes {stable_mosaic.version = 11 : i64} {
  func.func @_dec_stack_kernel(%arg0: i32, %arg1: i32, %arg2: memref<1x64x32xf32, #tpu.memory_space<vmem>>, %arg3: memref<16x32xf32, #tpu.memory_space<vmem>>, %arg4: memref<1x32x96xf32, #tpu.memory_space<vmem>>, %arg5: memref<1x1x96xf32, #tpu.memory_space<vmem>>, %arg6: memref<1x32x32xf32, #tpu.memory_space<vmem>>, %arg7: memref<1x1x32xf32, #tpu.memory_space<vmem>>, %arg8: memref<1x32x32xf32, #tpu.memory_space<vmem>>, %arg9: memref<1x1x32xf32, #tpu.memory_space<vmem>>, %arg10: memref<1x32x64xf32, #tpu.memory_space<vmem>>, %arg11: memref<1x1x64xf32, #tpu.memory_space<vmem>>, %arg12: memref<1x32x32xf32, #tpu.memory_space<vmem>>, %arg13: memref<1x1x32xf32, #tpu.memory_space<vmem>>, %arg14: memref<1x32x64xf32, #tpu.memory_space<vmem>>, %arg15: memref<1x1x64xf32, #tpu.memory_space<vmem>>, %arg16: memref<1x64x32xf32, #tpu.memory_space<vmem>>, %arg17: memref<1x1x32xf32, #tpu.memory_space<vmem>>, %arg18: memref<1x3x32xf32, #tpu.memory_space<vmem>>, %arg19: memref<1x3x32xf32, #tpu.memory_space<vmem>>, %arg20: memref<1x32xf32, #tpu.memory_space<vmem>>, %arg21: memref<1x32xf32, #tpu.memory_space<vmem>>, %arg22: memref<32x32xf32, #tpu.memory_space<vmem>>, %arg23: memref<1x32xf32, #tpu.memory_space<vmem>>, %arg24: memref<32x32xf32, #tpu.memory_space<vmem>>, %arg25: memref<1x32xf32, #tpu.memory_space<vmem>>, %arg26: memref<32x128xf32, #tpu.memory_space<vmem>>, %arg27: memref<1x128xf32, #tpu.memory_space<vmem>>, %arg28: memref<1x16x32xf32, #tpu.memory_space<vmem>>, %arg29: memref<1x16x128xf32, #tpu.memory_space<vmem>>, %arg30: memref<16x32xf32, #tpu.memory_space<vmem>>) attributes {dimension_semantics = [#tpu.dimension_semantics<parallel>, #tpu.dimension_semantics<arbitrary>], iteration_bounds = array<i64: 2, 2>, scalar_prefetch = 0 : i64, scratch_operands = 1 : i64, tpu.core_type = #tpu.core_type<tc>, window_params = [{transform_indices = @transform_0, window_bounds = array<i64: 1, 64, 32>}, {pipeline_mode = #tpu.pipeline_mode<synchronous>, transform_indices = @transform_1, window_bounds = array<i64: 16, 32>}, {transform_indices = @transform_2, window_bounds = array<i64: 1, 32, 96>}, {transform_indices = @transform_3, window_bounds = array<i64: 1, 1, 96>}, {transform_indices = @transform_4, window_bounds = array<i64: 1, 32, 32>}, {transform_indices = @transform_5, window_bounds = array<i64: 1, 1, 32>}, {transform_indices = @transform_6, window_bounds = array<i64: 1, 32, 32>}, {transform_indices = @transform_7, window_bounds = array<i64: 1, 1, 32>}, {transform_indices = @transform_8, window_bounds = array<i64: 1, 32, 64>}, {transform_indices = @transform_9, window_bounds = array<i64: 1, 1, 64>}, {transform_indices = @transform_10, window_bounds = array<i64: 1, 32, 32>}, {transform_indices = @transform_11, window_bounds = array<i64: 1, 1, 32>}, {transform_indices = @transform_12, window_bounds = array<i64: 1, 32, 64>}, {transform_indices = @transform_13, window_bounds = array<i64: 1, 1, 64>}, {transform_indices = @transform_14, window_bounds = array<i64: 1, 64, 32>}, {transform_indices = @transform_15, window_bounds = array<i64: 1, 1, 32>}, {transform_indices = @transform_16, window_bounds = array<i64: 1, 3, 32>}, {transform_indices = @transform_17, window_bounds = array<i64: 1, 3, 32>}, {pipeline_mode = #tpu.pipeline_mode<synchronous>, transform_indices = @transform_18, window_bounds = array<i64: 1, 32>}, {pipeline_mode = #tpu.pipeline_mode<synchronous>, transform_indices = @transform_19, window_bounds = array<i64: 1, 32>}, {pipeline_mode = #tpu.pipeline_mode<synchronous>, transform_indices = @transform_20, window_bounds = array<i64: 32, 32>}, {pipeline_mode = #tpu.pipeline_mode<synchronous>, transform_indices = @transform_21, window_bounds = array<i64: 1, 32>}, {pipeline_mode = #tpu.pipeline_mode<synchronous>, transform_indices = @transform_22, window_bounds = array<i64: 32, 32>}, {pipeline_mode = #tpu.pipeline_mode<synchronous>, transform_indices = @transform_23, window_bounds = array<i64: 1, 32>}, {pipeline_mode = #tpu.pipeline_mode<synchronous>, transform_indices = @transform_24, window_bounds = array<i64: 32, 128>}, {pipeline_mode = #tpu.pipeline_mode<synchronous>, transform_indices = @transform_25, window_bounds = array<i64: 1, 128>}, {transform_indices = @transform_26, window_bounds = array<i64: 1, 16, 32>}, {transform_indices = @transform_27, window_bounds = array<i64: 1, 16, 128>}]} {
    %c0_i32 = arith.constant 0 : i32
    %0 = arith.cmpi eq, %arg1, %c0_i32 : i32
    %1 = arith.extui %0 : i1 to i32
    %c0_i32_0 = arith.constant 0 : i32
    %2 = arith.cmpi ne, %1, %c0_i32_0 : i32
    scf.if %2 {
      %c0_116 = arith.constant 0 : index
      %c0_117 = arith.constant 0 : index
      %287 = vector.load %arg3[%c0_116, %c0_117] : memref<16x32xf32, #tpu.memory_space<vmem>>, vector<16x32xf32>
      %c0_118 = arith.constant 0 : index
      %c0_119 = arith.constant 0 : index
      %288 = vector.load %arg30[%c0_118, %c0_119] : memref<16x32xf32, #tpu.memory_space<vmem>>, vector<16x32xf32>
      tpu.vector_store %arg30[%c0_118, %c0_119], %287 {strides = array<i32>} : memref<16x32xf32, #tpu.memory_space<vmem>>, vector<16x32xf32>,
    } else {
    }
    %c0 = arith.constant 0 : index
    %c0_1 = arith.constant 0 : index
    %3 = vector.load %arg30[%c0, %c0_1] : memref<16x32xf32, #tpu.memory_space<vmem>>, vector<16x32xf32>
    %c0_2 = arith.constant 0 : index
    %c0_3 = arith.constant 0 : index
    %c0_4 = arith.constant 0 : index
    %4 = vector.load %arg2[%c0_2, %c0_3, %c0_4] : memref<1x64x32xf32, #tpu.memory_space<vmem>>, vector<1x64x32xf32>
    %5 = vector.shape_cast %4 : vector<1x64x32xf32> to vector<64x32xf32>
    %c0_5 = arith.constant 0 : index
    %c0_6 = arith.constant 0 : index
    %c0_7 = arith.constant 0 : index
    %6 = vector.load %arg18[%c0_5, %c0_6, %c0_7] : memref<1x3x32xf32, #tpu.memory_space<vmem>>, vector<1x3x32xf32>
    %7 = vector.shape_cast %6 : vector<1x3x32xf32> to vector<3x32xf32>
    %c0_8 = arith.constant 0 : index
    %c0_9 = arith.constant 0 : index
    %c0_10 = arith.constant 0 : index
    %8 = vector.load %arg19[%c0_8, %c0_9, %c0_10] : memref<1x3x32xf32, #tpu.memory_space<vmem>>, vector<1x3x32xf32>
    %9 = vector.shape_cast %8 : vector<1x3x32xf32> to vector<3x32xf32>
    %c0_11 = arith.constant 0 : index
    %c0_12 = arith.constant 0 : index
    %c0_13 = arith.constant 0 : index
    %10 = vector.load %arg4[%c0_11, %c0_12, %c0_13] : memref<1x32x96xf32, #tpu.memory_space<vmem>>, vector<1x32x96xf32>
    %11 = vector.shape_cast %10 : vector<1x32x96xf32> to vector<32x96xf32>
    %cst = arith.constant dense<0.000000e+00> : vector<16x96xf32>
    %12 = tpu.matmul %3, %11, %cst {dimension_numbers = #tpu.dot_dimension_numbers<[1], [0], [0], [1], [0, 0, 1, 1], [], []>} : vector<16x32xf32>, vector<32x96xf32>, vector<16x96xf32> -> vector<16x96xf32>
    %c0_14 = arith.constant 0 : index
    %c0_15 = arith.constant 0 : index
    %c0_16 = arith.constant 0 : index
    %13 = vector.load %arg5[%c0_14, %c0_15, %c0_16] : memref<1x1x96xf32, #tpu.memory_space<vmem>>, vector<1x1x96xf32>
    %14 = vector.shape_cast %13 : vector<1x1x96xf32> to vector<1x96xf32>
    %15 = vector.broadcast %14 : vector<1x96xf32> to vector<16x96xf32>
    %16 = arith.addf %12, %15 : vector<16x96xf32>
    %17 = vector.extract_strided_slice %16 {offsets = [0, 0], sizes = [16, 32], strides = [1, 1]} : vector<16x96xf32> to vector<16x32xf32>
    %18 = vector.extract_strided_slice %16 {offsets = [0, 32], sizes = [16, 32], strides = [1, 1]} : vector<16x96xf32> to vector<16x32xf32>
    %19 = vector.extract_strided_slice %16 {offsets = [0, 64], sizes = [16, 32], strides = [1, 1]} : vector<16x96xf32> to vector<16x32xf32>
    %c0_17 = arith.constant 0 : index
    %c0_18 = arith.constant 0 : index
    %c0_19 = arith.constant 0 : index
    %20 = vector.load %arg6[%c0_17, %c0_18, %c0_19] : memref<1x32x32xf32, #tpu.memory_space<vmem>>, vector<1x32x32xf32>
    %21 = vector.shape_cast %20 : vector<1x32x32xf32> to vector<32x32xf32>
    %c0_20 = arith.constant 0 : index
    %c0_21 = arith.constant 0 : index
    %c0_22 = arith.constant 0 : index
    %22 = vector.load %arg7[%c0_20, %c0_21, %c0_22] : memref<1x1x32xf32, #tpu.memory_space<vmem>>, vector<1x1x32xf32>
    %23 = vector.shape_cast %22 : vector<1x1x32xf32> to vector<1x32xf32>
    %24 = vector.extract_strided_slice %7 {offsets = [0, 0], sizes = [1, 32], strides = [1, 1]} : vector<3x32xf32> to vector<1x32xf32>
    %25 = vector.extract_strided_slice %9 {offsets = [0, 0], sizes = [1, 32], strides = [1, 1]} : vector<3x32xf32> to vector<1x32xf32>
    %26 = vector.broadcast %23 : vector<1x32xf32> to vector<16x32xf32>
    %27 = arith.addf %3, %26 : vector<16x32xf32>
    %28 = vector.extract_strided_slice %17 {offsets = [0, 0], sizes = [16, 8], strides = [1, 1]} : vector<16x32xf32> to vector<16x8xf32>
    %29 = vector.extract_strided_slice %18 {offsets = [0, 0], sizes = [16, 8], strides = [1, 1]} : vector<16x32xf32> to vector<16x8xf32>
    %cst_23 = arith.constant dense<0.000000e+00> : vector<16x16xf32>
    %30 = tpu.matmul %28, %29, %cst_23 {dimension_numbers = #tpu.dot_dimension_numbers<[1], [1], [0], [0], [0, 0, 1, 0], [], []>} : vector<16x8xf32>, vector<16x8xf32>, vector<16x16xf32> -> vector<16x16xf32>
    %cst_24 = arith.constant dense<0xFF800000> : vector<16xf32>
    %31 = vector.multi_reduction <maximumf>, %30, %cst_24 [1] : vector<16x16xf32> to vector<16xf32>
    %32 = vector.shape_cast %31 : vector<16xf32> to vector<16x1xf32>
    %33 = vector.broadcast %32 : vector<16x1xf32> to vector<16x16xf32>
    %34 = arith.subf %30, %33 : vector<16x16xf32>
    %35 = math.exp %34 : vector<16x16xf32>
    %cst_25 = arith.constant dense<0.000000e+00> : vector<16xf32>
    %36 = vector.multi_reduction <add>, %35, %cst_25 [1] : vector<16x16xf32> to vector<16xf32>
    %37 = vector.shape_cast %36 : vector<16xf32> to vector<16x1xf32>
    %38 = tpu.reciprocal %37 {approx = true} : vector<16x1xf32> -> vector<16x1xf32>
    %39 = vector.broadcast %38 : vector<16x1xf32> to vector<16x16xf32>
    %40 = arith.mulf %35, %39 : vector<16x16xf32>
    %41 = vector.extract_strided_slice %19 {offsets = [0, 0], sizes = [16, 8], strides = [1, 1]} : vector<16x32xf32> to vector<16x8xf32>
    %cst_26 = arith.constant dense<0.000000e+00> : vector<16x8xf32>
    %42 = tpu.matmul %40, %41, %cst_26 {dimension_numbers = #tpu.dot_dimension_numbers<[1], [0], [0], [1], [0, 0, 1, 1], [], []>} : vector<16x16xf32>, vector<16x8xf32>, vector<16x8xf32> -> vector<16x8xf32>
    %43 = vector.extract_strided_slice %21 {offsets = [0, 0], sizes = [8, 32], strides = [1, 1]} : vector<32x32xf32> to vector<8x32xf32>
    %cst_27 = arith.constant dense<0.000000e+00> : vector<16x32xf32>
    %44 = tpu.matmul %42, %43, %cst_27 {dimension_numbers = #tpu.dot_dimension_numbers<[1], [0], [0], [1], [0, 0, 1, 1], [], []>} : vector<16x8xf32>, vector<8x32xf32>, vector<16x32xf32> -> vector<16x32xf32>
    %45 = arith.addf %27, %44 : vector<16x32xf32>
    %46 = vector.extract_strided_slice %17 {offsets = [0, 8], sizes = [16, 8], strides = [1, 1]} : vector<16x32xf32> to vector<16x8xf32>
    %47 = vector.extract_strided_slice %18 {offsets = [0, 8], sizes = [16, 8], strides = [1, 1]} : vector<16x32xf32> to vector<16x8xf32>
    %cst_28 = arith.constant dense<0.000000e+00> : vector<16x16xf32>
    %48 = tpu.matmul %46, %47, %cst_28 {dimension_numbers = #tpu.dot_dimension_numbers<[1], [1], [0], [0], [0, 0, 1, 0], [], []>} : vector<16x8xf32>, vector<16x8xf32>, vector<16x16xf32> -> vector<16x16xf32>
    %cst_29 = arith.constant dense<0xFF800000> : vector<16xf32>
    %49 = vector.multi_reduction <maximumf>, %48, %cst_29 [1] : vector<16x16xf32> to vector<16xf32>
    %50 = vector.shape_cast %49 : vector<16xf32> to vector<16x1xf32>
    %51 = vector.broadcast %50 : vector<16x1xf32> to vector<16x16xf32>
    %52 = arith.subf %48, %51 : vector<16x16xf32>
    %53 = math.exp %52 : vector<16x16xf32>
    %cst_30 = arith.constant dense<0.000000e+00> : vector<16xf32>
    %54 = vector.multi_reduction <add>, %53, %cst_30 [1] : vector<16x16xf32> to vector<16xf32>
    %55 = vector.shape_cast %54 : vector<16xf32> to vector<16x1xf32>
    %56 = tpu.reciprocal %55 {approx = true} : vector<16x1xf32> -> vector<16x1xf32>
    %57 = vector.broadcast %56 : vector<16x1xf32> to vector<16x16xf32>
    %58 = arith.mulf %53, %57 : vector<16x16xf32>
    %59 = vector.extract_strided_slice %19 {offsets = [0, 8], sizes = [16, 8], strides = [1, 1]} : vector<16x32xf32> to vector<16x8xf32>
    %cst_31 = arith.constant dense<0.000000e+00> : vector<16x8xf32>
    %60 = tpu.matmul %58, %59, %cst_31 {dimension_numbers = #tpu.dot_dimension_numbers<[1], [0], [0], [1], [0, 0, 1, 1], [], []>} : vector<16x16xf32>, vector<16x8xf32>, vector<16x8xf32> -> vector<16x8xf32>
    %61 = vector.extract_strided_slice %21 {offsets = [8, 0], sizes = [8, 32], strides = [1, 1]} : vector<32x32xf32> to vector<8x32xf32>
    %cst_32 = arith.constant dense<0.000000e+00> : vector<16x32xf32>
    %62 = tpu.matmul %60, %61, %cst_32 {dimension_numbers = #tpu.dot_dimension_numbers<[1], [0], [0], [1], [0, 0, 1, 1], [], []>} : vector<16x8xf32>, vector<8x32xf32>, vector<16x32xf32> -> vector<16x32xf32>
    %63 = arith.addf %45, %62 : vector<16x32xf32>
    %64 = vector.extract_strided_slice %17 {offsets = [0, 16], sizes = [16, 8], strides = [1, 1]} : vector<16x32xf32> to vector<16x8xf32>
    %65 = vector.extract_strided_slice %18 {offsets = [0, 16], sizes = [16, 8], strides = [1, 1]} : vector<16x32xf32> to vector<16x8xf32>
    %cst_33 = arith.constant dense<0.000000e+00> : vector<16x16xf32>
    %66 = tpu.matmul %64, %65, %cst_33 {dimension_numbers = #tpu.dot_dimension_numbers<[1], [1], [0], [0], [0, 0, 1, 0], [], []>} : vector<16x8xf32>, vector<16x8xf32>, vector<16x16xf32> -> vector<16x16xf32>
    %cst_34 = arith.constant dense<0xFF800000> : vector<16xf32>
    %67 = vector.multi_reduction <maximumf>, %66, %cst_34 [1] : vector<16x16xf32> to vector<16xf32>
    %68 = vector.shape_cast %67 : vector<16xf32> to vector<16x1xf32>
    %69 = vector.broadcast %68 : vector<16x1xf32> to vector<16x16xf32>
    %70 = arith.subf %66, %69 : vector<16x16xf32>
    %71 = math.exp %70 : vector<16x16xf32>
    %cst_35 = arith.constant dense<0.000000e+00> : vector<16xf32>
    %72 = vector.multi_reduction <add>, %71, %cst_35 [1] : vector<16x16xf32> to vector<16xf32>
    %73 = vector.shape_cast %72 : vector<16xf32> to vector<16x1xf32>
    %74 = tpu.reciprocal %73 {approx = true} : vector<16x1xf32> -> vector<16x1xf32>
    %75 = vector.broadcast %74 : vector<16x1xf32> to vector<16x16xf32>
    %76 = arith.mulf %71, %75 : vector<16x16xf32>
    %77 = vector.extract_strided_slice %19 {offsets = [0, 16], sizes = [16, 8], strides = [1, 1]} : vector<16x32xf32> to vector<16x8xf32>
    %cst_36 = arith.constant dense<0.000000e+00> : vector<16x8xf32>
    %78 = tpu.matmul %76, %77, %cst_36 {dimension_numbers = #tpu.dot_dimension_numbers<[1], [0], [0], [1], [0, 0, 1, 1], [], []>} : vector<16x16xf32>, vector<16x8xf32>, vector<16x8xf32> -> vector<16x8xf32>
    %79 = vector.extract_strided_slice %21 {offsets = [16, 0], sizes = [8, 32], strides = [1, 1]} : vector<32x32xf32> to vector<8x32xf32>
    %cst_37 = arith.constant dense<0.000000e+00> : vector<16x32xf32>
    %80 = tpu.matmul %78, %79, %cst_37 {dimension_numbers = #tpu.dot_dimension_numbers<[1], [0], [0], [1], [0, 0, 1, 1], [], []>} : vector<16x8xf32>, vector<8x32xf32>, vector<16x32xf32> -> vector<16x32xf32>
    %81 = arith.addf %63, %80 : vector<16x32xf32>
    %82 = vector.extract_strided_slice %17 {offsets = [0, 24], sizes = [16, 8], strides = [1, 1]} : vector<16x32xf32> to vector<16x8xf32>
    %83 = vector.extract_strided_slice %18 {offsets = [0, 24], sizes = [16, 8], strides = [1, 1]} : vector<16x32xf32> to vector<16x8xf32>
    %cst_38 = arith.constant dense<0.000000e+00> : vector<16x16xf32>
    %84 = tpu.matmul %82, %83, %cst_38 {dimension_numbers = #tpu.dot_dimension_numbers<[1], [1], [0], [0], [0, 0, 1, 0], [], []>} : vector<16x8xf32>, vector<16x8xf32>, vector<16x16xf32> -> vector<16x16xf32>
    %cst_39 = arith.constant dense<0xFF800000> : vector<16xf32>
    %85 = vector.multi_reduction <maximumf>, %84, %cst_39 [1] : vector<16x16xf32> to vector<16xf32>
    %86 = vector.shape_cast %85 : vector<16xf32> to vector<16x1xf32>
    %87 = vector.broadcast %86 : vector<16x1xf32> to vector<16x16xf32>
    %88 = arith.subf %84, %87 : vector<16x16xf32>
    %89 = math.exp %88 : vector<16x16xf32>
    %cst_40 = arith.constant dense<0.000000e+00> : vector<16xf32>
    %90 = vector.multi_reduction <add>, %89, %cst_40 [1] : vector<16x16xf32> to vector<16xf32>
    %91 = vector.shape_cast %90 : vector<16xf32> to vector<16x1xf32>
    %92 = tpu.reciprocal %91 {approx = true} : vector<16x1xf32> -> vector<16x1xf32>
    %93 = vector.broadcast %92 : vector<16x1xf32> to vector<16x16xf32>
    %94 = arith.mulf %89, %93 : vector<16x16xf32>
    %95 = vector.extract_strided_slice %19 {offsets = [0, 24], sizes = [16, 8], strides = [1, 1]} : vector<16x32xf32> to vector<16x8xf32>
    %cst_41 = arith.constant dense<0.000000e+00> : vector<16x8xf32>
    %96 = tpu.matmul %94, %95, %cst_41 {dimension_numbers = #tpu.dot_dimension_numbers<[1], [0], [0], [1], [0, 0, 1, 1], [], []>} : vector<16x16xf32>, vector<16x8xf32>, vector<16x8xf32> -> vector<16x8xf32>
    %97 = vector.extract_strided_slice %21 {offsets = [24, 0], sizes = [8, 32], strides = [1, 1]} : vector<32x32xf32> to vector<8x32xf32>
    %cst_42 = arith.constant dense<0.000000e+00> : vector<16x32xf32>
    %98 = tpu.matmul %96, %97, %cst_42 {dimension_numbers = #tpu.dot_dimension_numbers<[1], [0], [0], [1], [0, 0, 1, 1], [], []>} : vector<16x8xf32>, vector<8x32xf32>, vector<16x32xf32> -> vector<16x32xf32>
    %99 = arith.addf %81, %98 : vector<16x32xf32>
    %cst_43 = arith.constant dense<0.000000e+00> : vector<16xf32>
    %100 = vector.multi_reduction <add>, %99, %cst_43 [1] : vector<16x32xf32> to vector<16xf32>
    %101 = vector.shape_cast %100 : vector<16xf32> to vector<16x1xf32>
    %cst_44 = arith.constant 3.200000e+01 : f32
    %102 = vector.broadcast %cst_44 : f32 to vector<16x1xf32>
    %103 = arith.divf %101, %102 : vector<16x1xf32>
    %104 = vector.broadcast %103 : vector<16x1xf32> to vector<16x32xf32>
    %105 = arith.subf %99, %104 : vector<16x32xf32>
    %106 = arith.mulf %105, %105 : vector<16x32xf32>
    %cst_45 = arith.constant dense<0.000000e+00> : vector<16xf32>
    %107 = vector.multi_reduction <add>, %106, %cst_45 [1] : vector<16x32xf32> to vector<16xf32>
    %108 = vector.shape_cast %107 : vector<16xf32> to vector<16x1xf32>
    %cst_46 = arith.constant 3.200000e+01 : f32
    %109 = vector.broadcast %cst_46 : f32 to vector<16x1xf32>
    %110 = arith.divf %108, %109 : vector<16x1xf32>
    %111 = vector.broadcast %103 : vector<16x1xf32> to vector<16x32xf32>
    %112 = arith.subf %99, %111 : vector<16x32xf32>
    %cst_47 = arith.constant 9.99999974E-6 : f32
    %113 = vector.broadcast %cst_47 : f32 to vector<16x1xf32>
    %114 = arith.addf %110, %113 : vector<16x1xf32>
    %115 = math.rsqrt %114 : vector<16x1xf32>
    %116 = vector.broadcast %115 : vector<16x1xf32> to vector<16x32xf32>
    %117 = arith.mulf %112, %116 : vector<16x32xf32>
    %118 = vector.broadcast %24 : vector<1x32xf32> to vector<16x32xf32>
    %119 = arith.mulf %117, %118 : vector<16x32xf32>
    %120 = vector.broadcast %25 : vector<1x32xf32> to vector<16x32xf32>
    %121 = arith.addf %119, %120 : vector<16x32xf32>
    %c0_48 = arith.constant 0 : index
    %c0_49 = arith.constant 0 : index
    %c0_50 = arith.constant 0 : index
    %122 = vector.load %arg8[%c0_48, %c0_49, %c0_50] : memref<1x32x32xf32, #tpu.memory_space<vmem>>, vector<1x32x32xf32>
    %123 = vector.shape_cast %122 : vector<1x32x32xf32> to vector<32x32xf32>
    %cst_51 = arith.constant dense<0.000000e+00> : vector<16x32xf32>
    %124 = tpu.matmul %121, %123, %cst_51 {dimension_numbers = #tpu.dot_dimension_numbers<[1], [0], [0], [1], [0, 0, 1, 1], [], []>} : vector<16x32xf32>, vector<32x32xf32>, vector<16x32xf32> -> vector<16x32xf32>
    %c0_52 = arith.constant 0 : index
    %c0_53 = arith.constant 0 : index
    %c0_54 = arith.constant 0 : index
    %125 = vector.load %arg9[%c0_52, %c0_53, %c0_54] : memref<1x1x32xf32, #tpu.memory_space<vmem>>, vector<1x1x32xf32>
    %126 = vector.shape_cast %125 : vector<1x1x32xf32> to vector<1x32xf32>
    %127 = vector.broadcast %126 : vector<1x32xf32> to vector<16x32xf32>
    %128 = arith.addf %124, %127 : vector<16x32xf32>
    %c0_55 = arith.constant 0 : index
    %c0_56 = arith.constant 0 : index
    %c0_57 = arith.constant 0 : index
    %129 = vector.load %arg10[%c0_55, %c0_56, %c0_57] : memref<1x32x64xf32, #tpu.memory_space<vmem>>, vector<1x32x64xf32>
    %130 = vector.shape_cast %129 : vector<1x32x64xf32> to vector<32x64xf32>
    %cst_58 = arith.constant dense<0.000000e+00> : vector<64x64xf32>
    %131 = tpu.matmul %5, %130, %cst_58 {dimension_numbers = #tpu.dot_dimension_numbers<[1], [0], [0], [1], [0, 0, 1, 1], [], []>} : vector<64x32xf32>, vector<32x64xf32>, vector<64x64xf32> -> vector<64x64xf32>
    %c0_59 = arith.constant 0 : index
    %c0_60 = arith.constant 0 : index
    %c0_61 = arith.constant 0 : index
    %132 = vector.load %arg11[%c0_59, %c0_60, %c0_61] : memref<1x1x64xf32, #tpu.memory_space<vmem>>, vector<1x1x64xf32>
    %133 = vector.shape_cast %132 : vector<1x1x64xf32> to vector<1x64xf32>
    %134 = vector.broadcast %133 : vector<1x64xf32> to vector<64x64xf32>
    %135 = arith.addf %131, %134 : vector<64x64xf32>
    %136 = vector.extract_strided_slice %135 {offsets = [0, 0], sizes = [64, 32], strides = [1, 1]} : vector<64x64xf32> to vector<64x32xf32>
    %137 = vector.extract_strided_slice %135 {offsets = [0, 32], sizes = [64, 32], strides = [1, 1]} : vector<64x64xf32> to vector<64x32xf32>
    %c0_62 = arith.constant 0 : index
    %c0_63 = arith.constant 0 : index
    %c0_64 = arith.constant 0 : index
    %138 = vector.load %arg12[%c0_62, %c0_63, %c0_64] : memref<1x32x32xf32, #tpu.memory_space<vmem>>, vector<1x32x32xf32>
    %139 = vector.shape_cast %138 : vector<1x32x32xf32> to vector<32x32xf32>
    %c0_65 = arith.constant 0 : index
    %c0_66 = arith.constant 0 : index
    %c0_67 = arith.constant 0 : index
    %140 = vector.load %arg13[%c0_65, %c0_66, %c0_67] : memref<1x1x32xf32, #tpu.memory_space<vmem>>, vector<1x1x32xf32>
    %141 = vector.shape_cast %140 : vector<1x1x32xf32> to vector<1x32xf32>
    %142 = vector.extract_strided_slice %7 {offsets = [1, 0], sizes = [1, 32], strides = [1, 1]} : vector<3x32xf32> to vector<1x32xf32>
    %143 = vector.extract_strided_slice %9 {offsets = [1, 0], sizes = [1, 32], strides = [1, 1]} : vector<3x32xf32> to vector<1x32xf32>
    %144 = vector.broadcast %141 : vector<1x32xf32> to vector<16x32xf32>
    %145 = arith.addf %121, %144 : vector<16x32xf32>
    %146 = vector.extract_strided_slice %128 {offsets = [0, 0], sizes = [16, 8], strides = [1, 1]} : vector<16x32xf32> to vector<16x8xf32>
    %147 = vector.extract_strided_slice %136 {offsets = [0, 0], sizes = [64, 8], strides = [1, 1]} : vector<64x32xf32> to vector<64x8xf32>
    %cst_68 = arith.constant dense<0.000000e+00> : vector<16x64xf32>
    %148 = tpu.matmul %146, %147, %cst_68 {dimension_numbers = #tpu.dot_dimension_numbers<[1], [1], [0], [0], [0, 0, 1, 0], [], []>} : vector<16x8xf32>, vector<64x8xf32>, vector<16x64xf32> -> vector<16x64xf32>
    %cst_69 = arith.constant dense<0xFF800000> : vector<16xf32>
    %149 = vector.multi_reduction <maximumf>, %148, %cst_69 [1] : vector<16x64xf32> to vector<16xf32>
    %150 = vector.shape_cast %149 : vector<16xf32> to vector<16x1xf32>
    %151 = vector.broadcast %150 : vector<16x1xf32> to vector<16x64xf32>
    %152 = arith.subf %148, %151 : vector<16x64xf32>
    %153 = math.exp %152 : vector<16x64xf32>
    %cst_70 = arith.constant dense<0.000000e+00> : vector<16xf32>
    %154 = vector.multi_reduction <add>, %153, %cst_70 [1] : vector<16x64xf32> to vector<16xf32>
    %155 = vector.shape_cast %154 : vector<16xf32> to vector<16x1xf32>
    %156 = tpu.reciprocal %155 {approx = true} : vector<16x1xf32> -> vector<16x1xf32>
    %157 = vector.broadcast %156 : vector<16x1xf32> to vector<16x64xf32>
    %158 = arith.mulf %153, %157 : vector<16x64xf32>
    %159 = vector.extract_strided_slice %137 {offsets = [0, 0], sizes = [64, 8], strides = [1, 1]} : vector<64x32xf32> to vector<64x8xf32>
    %cst_71 = arith.constant dense<0.000000e+00> : vector<16x8xf32>
    %160 = tpu.matmul %158, %159, %cst_71 {dimension_numbers = #tpu.dot_dimension_numbers<[1], [0], [0], [1], [0, 0, 1, 1], [], []>} : vector<16x64xf32>, vector<64x8xf32>, vector<16x8xf32> -> vector<16x8xf32>
    %161 = vector.extract_strided_slice %139 {offsets = [0, 0], sizes = [8, 32], strides = [1, 1]} : vector<32x32xf32> to vector<8x32xf32>
    %cst_72 = arith.constant dense<0.000000e+00> : vector<16x32xf32>
    %162 = tpu.matmul %160, %161, %cst_72 {dimension_numbers = #tpu.dot_dimension_numbers<[1], [0], [0], [1], [0, 0, 1, 1], [], []>} : vector<16x8xf32>, vector<8x32xf32>, vector<16x32xf32> -> vector<16x32xf32>
    %163 = arith.addf %145, %162 : vector<16x32xf32>
    %164 = vector.extract_strided_slice %128 {offsets = [0, 8], sizes = [16, 8], strides = [1, 1]} : vector<16x32xf32> to vector<16x8xf32>
    %165 = vector.extract_strided_slice %136 {offsets = [0, 8], sizes = [64, 8], strides = [1, 1]} : vector<64x32xf32> to vector<64x8xf32>
    %cst_73 = arith.constant dense<0.000000e+00> : vector<16x64xf32>
    %166 = tpu.matmul %164, %165, %cst_73 {dimension_numbers = #tpu.dot_dimension_numbers<[1], [1], [0], [0], [0, 0, 1, 0], [], []>} : vector<16x8xf32>, vector<64x8xf32>, vector<16x64xf32> -> vector<16x64xf32>
    %cst_74 = arith.constant dense<0xFF800000> : vector<16xf32>
    %167 = vector.multi_reduction <maximumf>, %166, %cst_74 [1] : vector<16x64xf32> to vector<16xf32>
    %168 = vector.shape_cast %167 : vector<16xf32> to vector<16x1xf32>
    %169 = vector.broadcast %168 : vector<16x1xf32> to vector<16x64xf32>
    %170 = arith.subf %166, %169 : vector<16x64xf32>
    %171 = math.exp %170 : vector<16x64xf32>
    %cst_75 = arith.constant dense<0.000000e+00> : vector<16xf32>
    %172 = vector.multi_reduction <add>, %171, %cst_75 [1] : vector<16x64xf32> to vector<16xf32>
    %173 = vector.shape_cast %172 : vector<16xf32> to vector<16x1xf32>
    %174 = tpu.reciprocal %173 {approx = true} : vector<16x1xf32> -> vector<16x1xf32>
    %175 = vector.broadcast %174 : vector<16x1xf32> to vector<16x64xf32>
    %176 = arith.mulf %171, %175 : vector<16x64xf32>
    %177 = vector.extract_strided_slice %137 {offsets = [0, 8], sizes = [64, 8], strides = [1, 1]} : vector<64x32xf32> to vector<64x8xf32>
    %cst_76 = arith.constant dense<0.000000e+00> : vector<16x8xf32>
    %178 = tpu.matmul %176, %177, %cst_76 {dimension_numbers = #tpu.dot_dimension_numbers<[1], [0], [0], [1], [0, 0, 1, 1], [], []>} : vector<16x64xf32>, vector<64x8xf32>, vector<16x8xf32> -> vector<16x8xf32>
    %179 = vector.extract_strided_slice %139 {offsets = [8, 0], sizes = [8, 32], strides = [1, 1]} : vector<32x32xf32> to vector<8x32xf32>
    %cst_77 = arith.constant dense<0.000000e+00> : vector<16x32xf32>
    %180 = tpu.matmul %178, %179, %cst_77 {dimension_numbers = #tpu.dot_dimension_numbers<[1], [0], [0], [1], [0, 0, 1, 1], [], []>} : vector<16x8xf32>, vector<8x32xf32>, vector<16x32xf32> -> vector<16x32xf32>
    %181 = arith.addf %163, %180 : vector<16x32xf32>
    %182 = vector.extract_strided_slice %128 {offsets = [0, 16], sizes = [16, 8], strides = [1, 1]} : vector<16x32xf32> to vector<16x8xf32>
    %183 = vector.extract_strided_slice %136 {offsets = [0, 16], sizes = [64, 8], strides = [1, 1]} : vector<64x32xf32> to vector<64x8xf32>
    %cst_78 = arith.constant dense<0.000000e+00> : vector<16x64xf32>
    %184 = tpu.matmul %182, %183, %cst_78 {dimension_numbers = #tpu.dot_dimension_numbers<[1], [1], [0], [0], [0, 0, 1, 0], [], []>} : vector<16x8xf32>, vector<64x8xf32>, vector<16x64xf32> -> vector<16x64xf32>
    %cst_79 = arith.constant dense<0xFF800000> : vector<16xf32>
    %185 = vector.multi_reduction <maximumf>, %184, %cst_79 [1] : vector<16x64xf32> to vector<16xf32>
    %186 = vector.shape_cast %185 : vector<16xf32> to vector<16x1xf32>
    %187 = vector.broadcast %186 : vector<16x1xf32> to vector<16x64xf32>
    %188 = arith.subf %184, %187 : vector<16x64xf32>
    %189 = math.exp %188 : vector<16x64xf32>
    %cst_80 = arith.constant dense<0.000000e+00> : vector<16xf32>
    %190 = vector.multi_reduction <add>, %189, %cst_80 [1] : vector<16x64xf32> to vector<16xf32>
    %191 = vector.shape_cast %190 : vector<16xf32> to vector<16x1xf32>
    %192 = tpu.reciprocal %191 {approx = true} : vector<16x1xf32> -> vector<16x1xf32>
    %193 = vector.broadcast %192 : vector<16x1xf32> to vector<16x64xf32>
    %194 = arith.mulf %189, %193 : vector<16x64xf32>
    %195 = vector.extract_strided_slice %137 {offsets = [0, 16], sizes = [64, 8], strides = [1, 1]} : vector<64x32xf32> to vector<64x8xf32>
    %cst_81 = arith.constant dense<0.000000e+00> : vector<16x8xf32>
    %196 = tpu.matmul %194, %195, %cst_81 {dimension_numbers = #tpu.dot_dimension_numbers<[1], [0], [0], [1], [0, 0, 1, 1], [], []>} : vector<16x64xf32>, vector<64x8xf32>, vector<16x8xf32> -> vector<16x8xf32>
    %197 = vector.extract_strided_slice %139 {offsets = [16, 0], sizes = [8, 32], strides = [1, 1]} : vector<32x32xf32> to vector<8x32xf32>
    %cst_82 = arith.constant dense<0.000000e+00> : vector<16x32xf32>
    %198 = tpu.matmul %196, %197, %cst_82 {dimension_numbers = #tpu.dot_dimension_numbers<[1], [0], [0], [1], [0, 0, 1, 1], [], []>} : vector<16x8xf32>, vector<8x32xf32>, vector<16x32xf32> -> vector<16x32xf32>
    %199 = arith.addf %181, %198 : vector<16x32xf32>
    %200 = vector.extract_strided_slice %128 {offsets = [0, 24], sizes = [16, 8], strides = [1, 1]} : vector<16x32xf32> to vector<16x8xf32>
    %201 = vector.extract_strided_slice %136 {offsets = [0, 24], sizes = [64, 8], strides = [1, 1]} : vector<64x32xf32> to vector<64x8xf32>
    %cst_83 = arith.constant dense<0.000000e+00> : vector<16x64xf32>
    %202 = tpu.matmul %200, %201, %cst_83 {dimension_numbers = #tpu.dot_dimension_numbers<[1], [1], [0], [0], [0, 0, 1, 0], [], []>} : vector<16x8xf32>, vector<64x8xf32>, vector<16x64xf32> -> vector<16x64xf32>
    %cst_84 = arith.constant dense<0xFF800000> : vector<16xf32>
    %203 = vector.multi_reduction <maximumf>, %202, %cst_84 [1] : vector<16x64xf32> to vector<16xf32>
    %204 = vector.shape_cast %203 : vector<16xf32> to vector<16x1xf32>
    %205 = vector.broadcast %204 : vector<16x1xf32> to vector<16x64xf32>
    %206 = arith.subf %202, %205 : vector<16x64xf32>
    %207 = math.exp %206 : vector<16x64xf32>
    %cst_85 = arith.constant dense<0.000000e+00> : vector<16xf32>
    %208 = vector.multi_reduction <add>, %207, %cst_85 [1] : vector<16x64xf32> to vector<16xf32>
    %209 = vector.shape_cast %208 : vector<16xf32> to vector<16x1xf32>
    %210 = tpu.reciprocal %209 {approx = true} : vector<16x1xf32> -> vector<16x1xf32>
    %211 = vector.broadcast %210 : vector<16x1xf32> to vector<16x64xf32>
    %212 = arith.mulf %207, %211 : vector<16x64xf32>
    %213 = vector.extract_strided_slice %137 {offsets = [0, 24], sizes = [64, 8], strides = [1, 1]} : vector<64x32xf32> to vector<64x8xf32>
    %cst_86 = arith.constant dense<0.000000e+00> : vector<16x8xf32>
    %214 = tpu.matmul %212, %213, %cst_86 {dimension_numbers = #tpu.dot_dimension_numbers<[1], [0], [0], [1], [0, 0, 1, 1], [], []>} : vector<16x64xf32>, vector<64x8xf32>, vector<16x8xf32> -> vector<16x8xf32>
    %215 = vector.extract_strided_slice %139 {offsets = [24, 0], sizes = [8, 32], strides = [1, 1]} : vector<32x32xf32> to vector<8x32xf32>
    %cst_87 = arith.constant dense<0.000000e+00> : vector<16x32xf32>
    %216 = tpu.matmul %214, %215, %cst_87 {dimension_numbers = #tpu.dot_dimension_numbers<[1], [0], [0], [1], [0, 0, 1, 1], [], []>} : vector<16x8xf32>, vector<8x32xf32>, vector<16x32xf32> -> vector<16x32xf32>
    %217 = arith.addf %199, %216 : vector<16x32xf32>
    %cst_88 = arith.constant dense<0.000000e+00> : vector<16xf32>
    %218 = vector.multi_reduction <add>, %217, %cst_88 [1] : vector<16x32xf32> to vector<16xf32>
    %219 = vector.shape_cast %218 : vector<16xf32> to vector<16x1xf32>
    %cst_89 = arith.constant 3.200000e+01 : f32
    %220 = vector.broadcast %cst_89 : f32 to vector<16x1xf32>
    %221 = arith.divf %219, %220 : vector<16x1xf32>
    %222 = vector.broadcast %221 : vector<16x1xf32> to vector<16x32xf32>
    %223 = arith.subf %217, %222 : vector<16x32xf32>
    %224 = arith.mulf %223, %223 : vector<16x32xf32>
    %cst_90 = arith.constant dense<0.000000e+00> : vector<16xf32>
    %225 = vector.multi_reduction <add>, %224, %cst_90 [1] : vector<16x32xf32> to vector<16xf32>
    %226 = vector.shape_cast %225 : vector<16xf32> to vector<16x1xf32>
    %cst_91 = arith.constant 3.200000e+01 : f32
    %227 = vector.broadcast %cst_91 : f32 to vector<16x1xf32>
    %228 = arith.divf %226, %227 : vector<16x1xf32>
    %229 = vector.broadcast %221 : vector<16x1xf32> to vector<16x32xf32>
    %230 = arith.subf %217, %229 : vector<16x32xf32>
    %cst_92 = arith.constant 9.99999974E-6 : f32
    %231 = vector.broadcast %cst_92 : f32 to vector<16x1xf32>
    %232 = arith.addf %228, %231 : vector<16x1xf32>
    %233 = math.rsqrt %232 : vector<16x1xf32>
    %234 = vector.broadcast %233 : vector<16x1xf32> to vector<16x32xf32>
    %235 = arith.mulf %230, %234 : vector<16x32xf32>
    %236 = vector.broadcast %142 : vector<1x32xf32> to vector<16x32xf32>
    %237 = arith.mulf %235, %236 : vector<16x32xf32>
    %238 = vector.broadcast %143 : vector<1x32xf32> to vector<16x32xf32>
    %239 = arith.addf %237, %238 : vector<16x32xf32>
    %c0_93 = arith.constant 0 : index
    %c0_94 = arith.constant 0 : index
    %c0_95 = arith.constant 0 : index
    %240 = vector.load %arg14[%c0_93, %c0_94, %c0_95] : memref<1x32x64xf32, #tpu.memory_space<vmem>>, vector<1x32x64xf32>
    %241 = vector.shape_cast %240 : vector<1x32x64xf32> to vector<32x64xf32>
    %cst_96 = arith.constant dense<0.000000e+00> : vector<16x64xf32>
    %242 = tpu.matmul %239, %241, %cst_96 {dimension_numbers = #tpu.dot_dimension_numbers<[1], [0], [0], [1], [0, 0, 1, 1], [], []>} : vector<16x32xf32>, vector<32x64xf32>, vector<16x64xf32> -> vector<16x64xf32>
    %c0_97 = arith.constant 0 : index
    %c0_98 = arith.constant 0 : index
    %c0_99 = arith.constant 0 : index
    %243 = vector.load %arg15[%c0_97, %c0_98, %c0_99] : memref<1x1x64xf32, #tpu.memory_space<vmem>>, vector<1x1x64xf32>
    %244 = vector.shape_cast %243 : vector<1x1x64xf32> to vector<1x64xf32>
    %245 = vector.broadcast %244 : vector<1x64xf32> to vector<16x64xf32>
    %246 = arith.addf %242, %245 : vector<16x64xf32>
    %cst_100 = arith.constant 0.000000e+00 : f32
    %247 = vector.broadcast %cst_100 : f32 to vector<16x64xf32>
    %248 = arith.maximumf %246, %247 : vector<16x64xf32>
    %c0_101 = arith.constant 0 : index
    %c0_102 = arith.constant 0 : index
    %c0_103 = arith.constant 0 : index
    %249 = vector.load %arg16[%c0_101, %c0_102, %c0_103] : memref<1x64x32xf32, #tpu.memory_space<vmem>>, vector<1x64x32xf32>
    %250 = vector.shape_cast %249 : vector<1x64x32xf32> to vector<64x32xf32>
    %cst_104 = arith.constant dense<0.000000e+00> : vector<16x32xf32>
    %251 = tpu.matmul %248, %250, %cst_104 {dimension_numbers = #tpu.dot_dimension_numbers<[1], [0], [0], [1], [0, 0, 1, 1], [], []>} : vector<16x64xf32>, vector<64x32xf32>, vector<16x32xf32> -> vector<16x32xf32>
    %252 = arith.addf %239, %251 : vector<16x32xf32>
    %c0_105 = arith.constant 0 : index
    %c0_106 = arith.constant 0 : index
    %c0_107 = arith.constant 0 : index
    %253 = vector.load %arg17[%c0_105, %c0_106, %c0_107] : memref<1x1x32xf32, #tpu.memory_space<vmem>>, vector<1x1x32xf32>
    %254 = vector.shape_cast %253 : vector<1x1x32xf32> to vector<1x32xf32>
    %255 = vector.broadcast %254 : vector<1x32xf32> to vector<16x32xf32>
    %256 = arith.addf %252, %255 : vector<16x32xf32>
    %257 = vector.extract_strided_slice %7 {offsets = [2, 0], sizes = [1, 32], strides = [1, 1]} : vector<3x32xf32> to vector<1x32xf32>
    %258 = vector.extract_strided_slice %9 {offsets = [2, 0], sizes = [1, 32], strides = [1, 1]} : vector<3x32xf32> to vector<1x32xf32>
    %cst_108 = arith.constant dense<0.000000e+00> : vector<16xf32>
    %259 = vector.multi_reduction <add>, %256, %cst_108 [1] : vector<16x32xf32> to vector<16xf32>
    %260 = vector.shape_cast %259 : vector<16xf32> to vector<16x1xf32>
    %cst_109 = arith.constant 3.200000e+01 : f32
    %261 = vector.broadcast %cst_109 : f32 to vector<16x1xf32>
    %262 = arith.divf %260, %261 : vector<16x1xf32>
    %263 = vector.broadcast %262 : vector<16x1xf32> to vector<16x32xf32>
    %264 = arith.subf %256, %263 : vector<16x32xf32>
    %265 = arith.mulf %264, %264 : vector<16x32xf32>
    %cst_110 = arith.constant dense<0.000000e+00> : vector<16xf32>
    %266 = vector.multi_reduction <add>, %265, %cst_110 [1] : vector<16x32xf32> to vector<16xf32>
    %267 = vector.shape_cast %266 : vector<16xf32> to vector<16x1xf32>
    %cst_111 = arith.constant 3.200000e+01 : f32
    %268 = vector.broadcast %cst_111 : f32 to vector<16x1xf32>
    %269 = arith.divf %267, %268 : vector<16x1xf32>
    %270 = vector.broadcast %262 : vector<16x1xf32> to vector<16x32xf32>
    %271 = arith.subf %256, %270 : vector<16x32xf32>
    %cst_112 = arith.constant 9.99999974E-6 : f32
    %272 = vector.broadcast %cst_112 : f32 to vector<16x1xf32>
    %273 = arith.addf %269, %272 : vector<16x1xf32>
    %274 = math.rsqrt %273 : vector<16x1xf32>
    %275 = vector.broadcast %274 : vector<16x1xf32> to vector<16x32xf32>
    %276 = arith.mulf %271, %275 : vector<16x32xf32>
    %277 = vector.broadcast %257 : vector<1x32xf32> to vector<16x32xf32>
    %278 = arith.mulf %276, %277 : vector<16x32xf32>
    %279 = vector.broadcast %258 : vector<1x32xf32> to vector<16x32xf32>
    %280 = arith.addf %278, %279 : vector<16x32xf32>
    %c1_i32 = arith.constant 1 : i32
    %281 = arith.cmpi slt, %arg1, %c1_i32 : i32
    %282 = arith.extui %281 : i1 to i32
    %c0_i32_113 = arith.constant 0 : i32
    %283 = arith.cmpi ne, %282, %c0_i32_113 : i32
    scf.if %283 {
      %c0_116 = arith.constant 0 : index
      %c0_117 = arith.constant 0 : index
      %287 = vector.load %arg30[%c0_116, %c0_117] : memref<16x32xf32, #tpu.memory_space<vmem>>, vector<16x32xf32>
      tpu.vector_store %arg30[%c0_116, %c0_117], %280 {strides = array<i32>} : memref<16x32xf32, #tpu.memory_space<vmem>>, vector<16x32xf32>,
    } else {
    }
    %c1_i32_114 = arith.constant 1 : i32
    %284 = arith.cmpi eq, %arg1, %c1_i32_114 : i32
    %285 = arith.extui %284 : i1 to i32
    %c0_i32_115 = arith.constant 0 : i32
    %286 = arith.cmpi ne, %285, %c0_i32_115 : i32
    scf.if %286 {
      %c0_116 = arith.constant 0 : index
      %c0_117 = arith.constant 0 : index
      %287 = vector.load %arg20[%c0_116, %c0_117] : memref<1x32xf32, #tpu.memory_space<vmem>>, vector<1x32xf32>
      %c0_118 = arith.constant 0 : index
      %c0_119 = arith.constant 0 : index
      %288 = vector.load %arg21[%c0_118, %c0_119] : memref<1x32xf32, #tpu.memory_space<vmem>>, vector<1x32xf32>
      %cst_120 = arith.constant dense<0.000000e+00> : vector<16xf32>
      %289 = vector.multi_reduction <add>, %280, %cst_120 [1] : vector<16x32xf32> to vector<16xf32>
      %290 = vector.shape_cast %289 : vector<16xf32> to vector<16x1xf32>
      %cst_121 = arith.constant 3.200000e+01 : f32
      %291 = vector.broadcast %cst_121 : f32 to vector<16x1xf32>
      %292 = arith.divf %290, %291 : vector<16x1xf32>
      %293 = vector.broadcast %292 : vector<16x1xf32> to vector<16x32xf32>
      %294 = arith.subf %280, %293 : vector<16x32xf32>
      %295 = arith.mulf %294, %294 : vector<16x32xf32>
      %cst_122 = arith.constant dense<0.000000e+00> : vector<16xf32>
      %296 = vector.multi_reduction <add>, %295, %cst_122 [1] : vector<16x32xf32> to vector<16xf32>
      %297 = vector.shape_cast %296 : vector<16xf32> to vector<16x1xf32>
      %cst_123 = arith.constant 3.200000e+01 : f32
      %298 = vector.broadcast %cst_123 : f32 to vector<16x1xf32>
      %299 = arith.divf %297, %298 : vector<16x1xf32>
      %300 = vector.broadcast %292 : vector<16x1xf32> to vector<16x32xf32>
      %301 = arith.subf %280, %300 : vector<16x32xf32>
      %cst_124 = arith.constant 9.99999974E-6 : f32
      %302 = vector.broadcast %cst_124 : f32 to vector<16x1xf32>
      %303 = arith.addf %299, %302 : vector<16x1xf32>
      %304 = math.rsqrt %303 : vector<16x1xf32>
      %305 = vector.broadcast %304 : vector<16x1xf32> to vector<16x32xf32>
      %306 = arith.mulf %301, %305 : vector<16x32xf32>
      %307 = vector.broadcast %287 : vector<1x32xf32> to vector<16x32xf32>
      %308 = arith.mulf %306, %307 : vector<16x32xf32>
      %309 = vector.broadcast %288 : vector<1x32xf32> to vector<16x32xf32>
      %310 = arith.addf %308, %309 : vector<16x32xf32>
      %c0_125 = arith.constant 0 : index
      %c0_126 = arith.constant 0 : index
      %c0_127 = arith.constant 0 : index
      %311 = vector.load %arg28[%c0_125, %c0_126, %c0_127] : memref<1x16x32xf32, #tpu.memory_space<vmem>>, vector<1x16x32xf32>
      %312 = vector.shape_cast %311 : vector<1x16x32xf32> to vector<16x32xf32>
      %313 = vector.shape_cast %310 : vector<16x32xf32> to vector<1x16x32xf32>
      tpu.vector_store %arg28[%c0_125, %c0_126, %c0_127], %313 {strides = array<i32>} : memref<1x16x32xf32, #tpu.memory_space<vmem>>, vector<1x16x32xf32>,
      %c0_128 = arith.constant 0 : index
      %c0_129 = arith.constant 0 : index
      %314 = vector.load %arg22[%c0_128, %c0_129] : memref<32x32xf32, #tpu.memory_space<vmem>>, vector<32x32xf32>
      %cst_130 = arith.constant dense<0.000000e+00> : vector<16x32xf32>
      %315 = tpu.matmul %310, %314, %cst_130 {dimension_numbers = #tpu.dot_dimension_numbers<[1], [0], [0], [1], [0, 0, 1, 1], [], []>} : vector<16x32xf32>, vector<32x32xf32>, vector<16x32xf32> -> vector<16x32xf32>
      %c0_131 = arith.constant 0 : index
      %c0_132 = arith.constant 0 : index
      %316 = vector.load %arg23[%c0_131, %c0_132] : memref<1x32xf32, #tpu.memory_space<vmem>>, vector<1x32xf32>
      %317 = vector.broadcast %316 : vector<1x32xf32> to vector<16x32xf32>
      %318 = arith.addf %315, %317 : vector<16x32xf32>
      %cst_133 = arith.constant 0.000000e+00 : f32
      %319 = vector.broadcast %cst_133 : f32 to vector<16x32xf32>
      %320 = arith.maximumf %318, %319 : vector<16x32xf32>
      %c0_134 = arith.constant 0 : index
      %c0_135 = arith.constant 0 : index
      %321 = vector.load %arg24[%c0_134, %c0_135] : memref<32x32xf32, #tpu.memory_space<vmem>>, vector<32x32xf32>
      %cst_136 = arith.constant dense<0.000000e+00> : vector<16x32xf32>
      %322 = tpu.matmul %320, %321, %cst_136 {dimension_numbers = #tpu.dot_dimension_numbers<[1], [0], [0], [1], [0, 0, 1, 1], [], []>} : vector<16x32xf32>, vector<32x32xf32>, vector<16x32xf32> -> vector<16x32xf32>
      %c0_137 = arith.constant 0 : index
      %c0_138 = arith.constant 0 : index
      %323 = vector.load %arg25[%c0_137, %c0_138] : memref<1x32xf32, #tpu.memory_space<vmem>>, vector<1x32xf32>
      %324 = vector.broadcast %323 : vector<1x32xf32> to vector<16x32xf32>
      %325 = arith.addf %322, %324 : vector<16x32xf32>
      %cst_139 = arith.constant 0.000000e+00 : f32
      %326 = vector.broadcast %cst_139 : f32 to vector<16x32xf32>
      %327 = arith.maximumf %325, %326 : vector<16x32xf32>
      %c0_140 = arith.constant 0 : index
      %c0_141 = arith.constant 0 : index
      %328 = vector.load %arg26[%c0_140, %c0_141] : memref<32x128xf32, #tpu.memory_space<vmem>>, vector<32x128xf32>
      %cst_142 = arith.constant dense<0.000000e+00> : vector<16x128xf32>
      %329 = tpu.matmul %327, %328, %cst_142 {dimension_numbers = #tpu.dot_dimension_numbers<[1], [0], [0], [1], [0, 0, 1, 1], [], []>} : vector<16x32xf32>, vector<32x128xf32>, vector<16x128xf32> -> vector<16x128xf32>
      %c0_143 = arith.constant 0 : index
      %c0_144 = arith.constant 0 : index
      %330 = vector.load %arg27[%c0_143, %c0_144] : memref<1x128xf32, #tpu.memory_space<vmem>>, vector<1x128xf32>
      %331 = vector.broadcast %330 : vector<1x128xf32> to vector<16x128xf32>
      %332 = arith.addf %329, %331 : vector<16x128xf32>
      %c0_145 = arith.constant 0 : index
      %c0_146 = arith.constant 0 : index
      %c0_147 = arith.constant 0 : index
      %333 = vector.load %arg29[%c0_145, %c0_146, %c0_147] : memref<1x16x128xf32, #tpu.memory_space<vmem>>, vector<1x16x128xf32>
      %334 = vector.shape_cast %333 : vector<1x16x128xf32> to vector<16x128xf32>
      %335 = vector.shape_cast %332 : vector<16x128xf32> to vector<1x16x128xf32>
      tpu.vector_store %arg29[%c0_145, %c0_146, %c0_147], %335 {strides = array<i32>} : memref<1x16x128xf32, #tpu.memory_space<vmem>>, vector<1x16x128xf32>,
    } else {
    }
    return
  }
  func.func @transform_0(%arg0: i32, %arg1: i32) -> (i32, i32, i32) {
    %c0_i32 = arith.constant 0 : i32
    %c0_i32_0 = arith.constant 0 : i32
    %c0_i32_1 = arith.constant 0 : i32
    return %arg0, %c0_i32, %c0_i32_0 : i32, i32, i32
  }
  func.func @transform_1(%arg0: i32, %arg1: i32) -> (i32, i32) {
    %c0_i32 = arith.constant 0 : i32
    %c0_i32_0 = arith.constant 0 : i32
    %c0_i32_1 = arith.constant 0 : i32
    return %c0_i32, %c0_i32_0 : i32, i32
  }
  func.func @transform_2(%arg0: i32, %arg1: i32) -> (i32, i32, i32) {
    %c0_i32 = arith.constant 0 : i32
    %c0_i32_0 = arith.constant 0 : i32
    %c0_i32_1 = arith.constant 0 : i32
    return %arg1, %c0_i32, %c0_i32_0 : i32, i32, i32
  }
  func.func @transform_3(%arg0: i32, %arg1: i32) -> (i32, i32, i32) {
    %c0_i32 = arith.constant 0 : i32
    %c0_i32_0 = arith.constant 0 : i32
    %c0_i32_1 = arith.constant 0 : i32
    return %arg1, %c0_i32, %c0_i32_0 : i32, i32, i32
  }
  func.func @transform_4(%arg0: i32, %arg1: i32) -> (i32, i32, i32) {
    %c0_i32 = arith.constant 0 : i32
    %c0_i32_0 = arith.constant 0 : i32
    %c0_i32_1 = arith.constant 0 : i32
    return %arg1, %c0_i32, %c0_i32_0 : i32, i32, i32
  }
  func.func @transform_5(%arg0: i32, %arg1: i32) -> (i32, i32, i32) {
    %c0_i32 = arith.constant 0 : i32
    %c0_i32_0 = arith.constant 0 : i32
    %c0_i32_1 = arith.constant 0 : i32
    return %arg1, %c0_i32, %c0_i32_0 : i32, i32, i32
  }
  func.func @transform_6(%arg0: i32, %arg1: i32) -> (i32, i32, i32) {
    %c0_i32 = arith.constant 0 : i32
    %c0_i32_0 = arith.constant 0 : i32
    %c0_i32_1 = arith.constant 0 : i32
    return %arg1, %c0_i32, %c0_i32_0 : i32, i32, i32
  }
  func.func @transform_7(%arg0: i32, %arg1: i32) -> (i32, i32, i32) {
    %c0_i32 = arith.constant 0 : i32
    %c0_i32_0 = arith.constant 0 : i32
    %c0_i32_1 = arith.constant 0 : i32
    return %arg1, %c0_i32, %c0_i32_0 : i32, i32, i32
  }
  func.func @transform_8(%arg0: i32, %arg1: i32) -> (i32, i32, i32) {
    %c0_i32 = arith.constant 0 : i32
    %c0_i32_0 = arith.constant 0 : i32
    %c0_i32_1 = arith.constant 0 : i32
    return %arg1, %c0_i32, %c0_i32_0 : i32, i32, i32
  }
  func.func @transform_9(%arg0: i32, %arg1: i32) -> (i32, i32, i32) {
    %c0_i32 = arith.constant 0 : i32
    %c0_i32_0 = arith.constant 0 : i32
    %c0_i32_1 = arith.constant 0 : i32
    return %arg1, %c0_i32, %c0_i32_0 : i32, i32, i32
  }
  func.func @transform_10(%arg0: i32, %arg1: i32) -> (i32, i32, i32) {
    %c0_i32 = arith.constant 0 : i32
    %c0_i32_0 = arith.constant 0 : i32
    %c0_i32_1 = arith.constant 0 : i32
    return %arg1, %c0_i32, %c0_i32_0 : i32, i32, i32
  }
  func.func @transform_11(%arg0: i32, %arg1: i32) -> (i32, i32, i32) {
    %c0_i32 = arith.constant 0 : i32
    %c0_i32_0 = arith.constant 0 : i32
    %c0_i32_1 = arith.constant 0 : i32
    return %arg1, %c0_i32, %c0_i32_0 : i32, i32, i32
  }
  func.func @transform_12(%arg0: i32, %arg1: i32) -> (i32, i32, i32) {
    %c0_i32 = arith.constant 0 : i32
    %c0_i32_0 = arith.constant 0 : i32
    %c0_i32_1 = arith.constant 0 : i32
    return %arg1, %c0_i32, %c0_i32_0 : i32, i32, i32
  }
  func.func @transform_13(%arg0: i32, %arg1: i32) -> (i32, i32, i32) {
    %c0_i32 = arith.constant 0 : i32
    %c0_i32_0 = arith.constant 0 : i32
    %c0_i32_1 = arith.constant 0 : i32
    return %arg1, %c0_i32, %c0_i32_0 : i32, i32, i32
  }
  func.func @transform_14(%arg0: i32, %arg1: i32) -> (i32, i32, i32) {
    %c0_i32 = arith.constant 0 : i32
    %c0_i32_0 = arith.constant 0 : i32
    %c0_i32_1 = arith.constant 0 : i32
    return %arg1, %c0_i32, %c0_i32_0 : i32, i32, i32
  }
  func.func @transform_15(%arg0: i32, %arg1: i32) -> (i32, i32, i32) {
    %c0_i32 = arith.constant 0 : i32
    %c0_i32_0 = arith.constant 0 : i32
    %c0_i32_1 = arith.constant 0 : i32
    return %arg1, %c0_i32, %c0_i32_0 : i32, i32, i32
  }
  func.func @transform_16(%arg0: i32, %arg1: i32) -> (i32, i32, i32) {
    %c0_i32 = arith.constant 0 : i32
    %c0_i32_0 = arith.constant 0 : i32
    %c0_i32_1 = arith.constant 0 : i32
    return %arg1, %c0_i32, %c0_i32_0 : i32, i32, i32
  }
  func.func @transform_17(%arg0: i32, %arg1: i32) -> (i32, i32, i32) {
    %c0_i32 = arith.constant 0 : i32
    %c0_i32_0 = arith.constant 0 : i32
    %c0_i32_1 = arith.constant 0 : i32
    return %arg1, %c0_i32, %c0_i32_0 : i32, i32, i32
  }
  func.func @transform_18(%arg0: i32, %arg1: i32) -> (i32, i32) {
    %c0_i32 = arith.constant 0 : i32
    %c0_i32_0 = arith.constant 0 : i32
    %c0_i32_1 = arith.constant 0 : i32
    return %c0_i32, %c0_i32_0 : i32, i32
  }
  func.func @transform_19(%arg0: i32, %arg1: i32) -> (i32, i32) {
    %c0_i32 = arith.constant 0 : i32
    %c0_i32_0 = arith.constant 0 : i32
    %c0_i32_1 = arith.constant 0 : i32
    return %c0_i32, %c0_i32_0 : i32, i32
  }
  func.func @transform_20(%arg0: i32, %arg1: i32) -> (i32, i32) {
    %c0_i32 = arith.constant 0 : i32
    %c0_i32_0 = arith.constant 0 : i32
    %c0_i32_1 = arith.constant 0 : i32
    return %c0_i32, %c0_i32_0 : i32, i32
  }
  func.func @transform_21(%arg0: i32, %arg1: i32) -> (i32, i32) {
    %c0_i32 = arith.constant 0 : i32
    %c0_i32_0 = arith.constant 0 : i32
    %c0_i32_1 = arith.constant 0 : i32
    return %c0_i32, %c0_i32_0 : i32, i32
  }
  func.func @transform_22(%arg0: i32, %arg1: i32) -> (i32, i32) {
    %c0_i32 = arith.constant 0 : i32
    %c0_i32_0 = arith.constant 0 : i32
    %c0_i32_1 = arith.constant 0 : i32
    return %c0_i32, %c0_i32_0 : i32, i32
  }
  func.func @transform_23(%arg0: i32, %arg1: i32) -> (i32, i32) {
    %c0_i32 = arith.constant 0 : i32
    %c0_i32_0 = arith.constant 0 : i32
    %c0_i32_1 = arith.constant 0 : i32
    return %c0_i32, %c0_i32_0 : i32, i32
  }
  func.func @transform_24(%arg0: i32, %arg1: i32) -> (i32, i32) {
    %c0_i32 = arith.constant 0 : i32
    %c0_i32_0 = arith.constant 0 : i32
    %c0_i32_1 = arith.constant 0 : i32
    return %c0_i32, %c0_i32_0 : i32, i32
  }
  func.func @transform_25(%arg0: i32, %arg1: i32) -> (i32, i32) {
    %c0_i32 = arith.constant 0 : i32
    %c0_i32_0 = arith.constant 0 : i32
    %c0_i32_1 = arith.constant 0 : i32
    return %c0_i32, %c0_i32_0 : i32, i32
  }
  func.func @transform_26(%arg0: i32, %arg1: i32) -> (i32, i32, i32) {
    %c0_i32 = arith.constant 0 : i32
    %c0_i32_0 = arith.constant 0 : i32
    %c0_i32_1 = arith.constant 0 : i32
    return %arg0, %c0_i32, %c0_i32_0 : i32, i32, i32
  }
  func.func @transform_27(%arg0: i32, %arg1: i32) -> (i32, i32, i32) {
    %c0_i32 = arith.constant 0 : i32
    %c0_i32_0 = arith.constant 0 : i32
    %c0_i32_1 = arith.constant 0 : i32
    return %arg0, %c0_i32, %c0_i32_0 : i32, i32, i32
  }
}

</mosaic_0001>

<llo_original>
// kernel: detr_forward.3
$region0: #{detr_forward.3}
  #allocation0 [shape = 'u32[]', space=smem, size = 0x4, offset = 0x4, fixed_abs, tag = 'smem constant byte address 0x4 - core index']
  #allocation1 [shape = 'u32[144,128]{1,0:T(1,128)}', space=vmem, size = 0x12000, scoped, tag = 'internal scratch']
  %s0 = inlined_call_operand.vmem [shape: f32[2,64,64], index: 0, kind: input, shape index: {}]
  %s1 = inlined_call_operand.vmem [shape: f32[64,32], index: 1, kind: input, shape index: {}]
  %s2 = inlined_call_operand.vmem [shape: f32[1,32], index: 2, kind: input, shape index: {}]
  %s3 = inlined_call_operand.vmem [shape: f32[64,32], index: 3, kind: input, shape index: {}]
  %s4 = inlined_call_operand.vmem [shape: f32[2,64,32], index: 4, kind: output, shape index: {0}]
  %s5 = inlined_call_operand.hbm [shape: f32[2,64,64], index: 5, kind: output, shape index: {1}]
  %s6 = inlined_call_operand.hbm [shape: f32[2,1,64], index: 6, kind: output, shape index: {2}]
  %7 = xla_tuple %s4, %s5, %s6
  %s8 = sld [smem:[#allocation0]]
  $region65: #{detr_forward.3} parent=0
    _
  %s10 = ssub.s32 1, %s8
  %s11 = scalar_select 0, %s10, %s8
  $region1: #{detr_forward.3} parent=0
    #allocation2 [shape = 'u8[65536]{0}', space=vmem, size = 0x10000, scoped, tag = 'output window, operand 1']
    #allocation3 [shape = 's32[2]{0}', space=sflag, size = 0x8, scoped, tag = 'scoped memory for detr_forward.3']
    #allocation4 [shape = 'u8[1024]{0}', space=vmem, size = 0x400, scoped, tag = 'output window, operand 2']
    #allocation5 [shape = 's32[2]{0}', space=sflag, size = 0x8, scoped, tag = 'scoped memory for detr_forward.3']
    %12 = vsyncpa [#allocation3], 0
    %s13 = scalar_lea.sflag [#allocation3], 1
    %14 = vsyncpa %s13, 0
    %15 = vsyncpa [#allocation5], 0
    %s16 = scalar_lea.sflag [#allocation5], 1
    %17 = vsyncpa %s16, 0
    loop: start=0, step=1, limit=4
    $region2: #{detr_forward.3} parent=1 // loop_pre_header
      _
    $region3: #{detr_forward.3} parent=1 // loop_header
      %s19 = sphi 0, %s23
      %p20 = scmp.ge.s32.totalorder %s19, 4
      %s29 = sphi 0, %s31
      %s32 = sphi 0, %s29
      %s33 = sphi 0, %s32
      %s49 = sphi 0, %s33
      %s53 = sphi 0, %s53
      %s55 = sphi 0, %s53
      %s56 = sphi 0, %s55
      %s70 = sphi 0, %s56
      %s74 = sphi 0, %s74
      %s76 = sphi 0, %s74
      %s77 = sphi 0, %s76
      %s91 = sphi 0, %s77
      %s95 = sphi 0, %s95
      %s97 = sphi 0, %s95
      %s98 = sphi 0, %s97
      %s112 = sphi 0, %s98
      %s118 = sphi 0, %s120
      %s121 = sphi 0, %s118
      %s122 = sphi 0, %s121
      %s138 = sphi 0, %s122
      %s144 = sphi 0, %s146
      %s147 = sphi 0, %s144
      %s148 = sphi 0, %s147
      %s164 = sphi 0, %s148
      %s170 = sphi 0, %s172
      %s173 = sphi 0, %s170
      %s174 = sphi 0, %s173
      %s190 = sphi 0, %s174
    $region4: #{detr_forward.3} parent=1 // loop_header_branch
      %22 = sbr.rel (%p20) target = $region8
    $region5: #{detr_forward.3} parent=1 // loop_body
      %s24 = ssub.s32 %s19, 1
      %s25 = ssub.s32 %s19, 2
      %s26 = sadd.s32 %s19, 1
      %s27 = ssub.s32 %s19, %s26
      %p28 = scmp.eq.s32.totalorder %s27, 0
      %s30 = sadd.s32 %s29, 1
      %s31 = scalar_select %p28, %s29, %s30
      %p34 = pneg %p28
      %p35 = scmp.eq.s32.totalorder %s19, 1
      %p36 = por %p34, %p35
      %p37 = scmp.ne.s32.totalorder %s29, %s32
      %p38 = scmp.eq.s32.totalorder %s19, 0
      %p39 = por %p37, %p38
      %p40 = scmp.ne.s32.totalorder %s29, %s32
      %p41 = scmp.eq.s32.totalorder %s24, 1
      %p42 = por %p40, %p41
      %p43 = scmp.ne.s32.totalorder %s32, %s33
      %p44 = scmp.eq.s32.totalorder %s24, 0
      %p45 = por %p43, %p44
      %p46 = scmp.ne.s32.totalorder %s32, %s33
      %p47 = scmp.eq.s32.totalorder %s25, 1
      %p48 = por %p46, %p47
      %p50 = scmp.ne.s32.totalorder %s33, %s49
      %p51 = scmp.eq.s32.totalorder %s25, 0
      %p52 = por %p50, %p51
      %s54 = sadd.s32 %s53, 1
      %p57 = scmp.eq.s32.totalorder %s19, 1
      %p58 = scmp.ne.s32.totalorder %s53, %s55
      %p59 = scmp.eq.s32.totalorder %s19, 0
      %p60 = por %p58, %p59
      %p61 = scmp.ne.s32.totalorder %s53, %s55
      %p62 = scmp.eq.s32.totalorder %s24, 1
      %p63 = por %p61, %p62
      %p64 = scmp.ne.s32.totalorder %s55, %s56
      %p65 = scmp.eq.s32.totalorder %s24, 0
      %p66 = por %p64, %p65
      %p67 = scmp.ne.s32.totalorder %s55, %s56
      %p68 = scmp.eq.s32.totalorder %s25, 1
      %p69 = por %p67, %p68
      %p71 = scmp.ne.s32.totalorder %s56, %s70
      %p72 = scmp.eq.s32.totalorder %s25, 0
      %p73 = por %p71, %p72
      %s75 = sadd.s32 %s74, 1
      %p78 = scmp.eq.s32.totalorder %s19, 1
      %p79 = scmp.ne.s32.totalorder %s74, %s76
      %p80 = scmp.eq.s32.totalorder %s19, 0
      %p81 = por %p79, %p80
      %p82 = scmp.ne.s32.totalorder %s74, %s76
      %p83 = scmp.eq.s32.totalorder %s24, 1
      %p84 = por %p82, %p83
      %p85 = scmp.ne.s32.totalorder %s76, %s77
      %p86 = scmp.eq.s32.totalorder %s24, 0
      %p87 = por %p85, %p86
      %p88 = scmp.ne.s32.totalorder %s76, %s77
      %p89 = scmp.eq.s32.totalorder %s25, 1
      %p90 = por %p88, %p89
      %p92 = scmp.ne.s32.totalorder %s77, %s91
      %p93 = scmp.eq.s32.totalorder %s25, 0
      %p94 = por %p92, %p93
      %s96 = sadd.s32 %s95, 1
      %p99 = scmp.eq.s32.totalorder %s19, 1
      %p100 = scmp.ne.s32.totalorder %s95, %s97
      %p101 = scmp.eq.s32.totalorder %s19, 0
      %p102 = por %p100, %p101
      %p103 = scmp.ne.s32.totalorder %s95, %s97
      %p104 = scmp.eq.s32.totalorder %s24, 1
      %p105 = por %p103, %p104
      %p106 = scmp.ne.s32.totalorder %s97, %s98
      %p107 = scmp.eq.s32.totalorder %s24, 0
      %p108 = por %p106, %p107
      %p109 = scmp.ne.s32.totalorder %s97, %s98
      %p110 = scmp.eq.s32.totalorder %s25, 1
      %p111 = por %p109, %p110
      %p113 = scmp.ne.s32.totalorder %s98, %s112
      %p114 = scmp.eq.s32.totalorder %s25, 0
      %p115 = por %p113, %p114
      %s116 = ssub.s32 %s19, %s26
      %p117 = scmp.eq.s32.totalorder %s116, 0
      %s119 = sadd.s32 %s118, 1
      %s120 = scalar_select %p117, %s118, %s119
      %p123 = pneg %p117
      %p124 = scmp.eq.s32.totalorder %s19, 1
      %p125 = por %p123, %p124
      %p126 = scmp.ne.s32.totalorder %s118, %s121
      %p127 = scmp.eq.s32.totalorder %s19, 0
      %p128 = por %p126, %p127
      %p129 = scmp.ne.s32.totalorder %s118, %s121
      %p130 = scmp.eq.s32.totalorder %s24, 1
      %p131 = por %p129, %p130
      %p132 = scmp.ne.s32.totalorder %s121, %s122
      %p133 = scmp.eq.s32.totalorder %s24, 0
      %p134 = por %p132, %p133
      %p135 = scmp.ne.s32.totalorder %s121, %s122
      %p136 = scmp.eq.s32.totalorder %s25, 1
      %p137 = por %p135, %p136
      %p139 = scmp.ne.s32.totalorder %s122, %s138
      %p140 = scmp.eq.s32.totalorder %s25, 0
      %p141 = por %p139, %p140
      %s142 = ssub.s32 %s19, %s26
      %p143 = scmp.eq.s32.totalorder %s142, 0
      %s145 = sadd.s32 %s144, 1
      %s146 = scalar_select %p143, %s144, %s145
      %p149 = pneg %p143
      %p150 = scmp.eq.s32.totalorder %s19, 1
      %p151 = por %p149, %p150
      %p152 = scmp.ne.s32.totalorder %s144, %s147
      %p153 = scmp.eq.s32.totalorder %s19, 0
      %p154 = por %p152, %p153
      %p155 = scmp.ne.s32.totalorder %s144, %s147
      %p156 = scmp.eq.s32.totalorder %s24, 1
      %p157 = por %p155, %p156
      %p158 = scmp.ne.s32.totalorder %s147, %s148
      %p159 = scmp.eq.s32.totalorder %s24, 0
      %p160 = por %p158, %p159
      %p161 = scmp.ne.s32.totalorder %s147, %s148
      %p162 = scmp.eq.s32.totalorder %s25, 1
      %p163 = por %p161, %p162
      %p165 = scmp.ne.s32.totalorder %s148, %s164
      %p166 = scmp.eq.s32.totalorder %s25, 0
      %p167 = por %p165, %p166
      %s168 = ssub.s32 %s19, %s26
      %p169 = scmp.eq.s32.totalorder %s168, 0
      %s171 = sadd.s32 %s170, 1
      %s172 = scalar_select %p169, %s170, %s171
      %p175 = pneg %p169
      %p176 = scmp.eq.s32.totalorder %s19, 1
      %p177 = por %p175, %p176
      %p178 = scmp.ne.s32.totalorder %s170, %s173
      %p179 = scmp.eq.s32.totalorder %s19, 0
      %p180 = por %p178, %p179
      %p181 = scmp.ne.s32.totalorder %s170, %s173
      %p182 = scmp.eq.s32.totalorder %s24, 1
      %p183 = por %p181, %p182
      %p184 = scmp.ne.s32.totalorder %s173, %s174
      %p185 = scmp.eq.s32.totalorder %s24, 0
      %p186 = por %p184, %p185
      %p187 = scmp.ne.s32.totalorder %s173, %s174
      %p188 = scmp.eq.s32.totalorder %s25, 1
      %p189 = por %p187, %p188
      %p191 = scmp.ne.s32.totalorder %s174, %s190
      %p192 = scmp.eq.s32.totalorder %s25, 0
      %p193 = por %p191, %p192
      %p194 = scmp.le.s32.totalorder 1, %s19
      %p195 = scmp.lt.s32.totalorder %s19, 3
      %p196 = pnand %p194, %p195
      %p197 = pneg %p196
      // Predicated region
      $region9: #{detr_forward.3} parent=5 // pred_check
        _
      $region10: #{detr_forward.3} parent=5 // pred_check_branch
        %199 = sbr.rel (%p196) target = $region12
      $region11: #{detr_forward.3} parent=5 // pred_region
        %s200 = ssub.s32 %s19, 1
        // Predicated region
        $region13: #{detr_forward.3} parent=11 // pred_check
          %p201 = pneg %p66
        $region14: #{detr_forward.3} parent=11 // pred_check_branch
          %203 = sbr.rel (%p201) target = $region16
        $region15: #{detr_forward.3} parent=11 // pred_region
          _
        $region16: #{detr_forward.3} parent=11 // pred_fallthru
          _
        // Predicated region
        $region17: #{detr_forward.3} parent=11 // pred_check
          %p204 = pneg %p87
        $region18: #{detr_forward.3} parent=11 // pred_check_branch
          %206 = sbr.rel (%p204) target = $region20
        $region19: #{detr_forward.3} parent=11 // pred_region
          _
        $region20: #{detr_forward.3} parent=11 // pred_fallthru
          _
        // Predicated region
        $region21: #{detr_forward.3} parent=11 // pred_check
          %p207 = pneg %p108
        $region22: #{detr_forward.3} parent=11 // pred_check_branch
          %209 = sbr.rel (%p207) target = $region24
        $region23: #{detr_forward.3} parent=11 // pred_region
          _
        $region24: #{detr_forward.3} parent=11 // pred_fallthru
          _
      $region12: #{detr_forward.3} parent=5 // pred_fallthru
        _
      %p210 = scmp.lt.s32.totalorder %s19, 2
      // Predicated region
      $region25: #{detr_forward.3} parent=5 // pred_check
        %p211 = pneg %p210
      $region26: #{detr_forward.3} parent=5 // pred_check_branch
        %213 = sbr.rel (%p211) target = $region28
      $region27: #{detr_forward.3} parent=5 // pred_region
        // Predicated region
        $region29: #{detr_forward.3} parent=27 // pred_check
          %p214 = pneg %p39
        $region30: #{detr_forward.3} parent=27 // pred_check_branch
          %216 = sbr.rel (%p214) target = $region32
        $region31: #{detr_forward.3} parent=27 // pred_region
          %p217 = scmp.lt.s32.totalorder %s19, 1
          %s218 = scalar_select %p217, %s19, 1
          %s219 = smul.addr %s218, 8
          %s220 = smul.addr %s219, 8
          %s221 = scalar_lea.vmem %s0, %s220
        $region32: #{detr_forward.3} parent=27 // pred_fallthru
          _
      $region28: #{detr_forward.3} parent=5 // pred_fallthru
        _
      %p222 = scmp.le.s32.totalorder 1, %s19
      %p223 = scmp.lt.s32.totalorder %s19, 3
      %p224 = pnand %p222, %p223
      %p225 = pneg %p224
      // Predicated region
      $region33: #{detr_forward.3} parent=5 // pred_check
        _
      $region34: #{detr_forward.3} parent=5 // pred_check_branch
        %227 = sbr.rel (%p224) target = $region36
      $region35: #{detr_forward.3} parent=5 // pred_region
        %s228 = ssub.s32 %s19, 1
        %p229 = scmp.lt.s32.totalorder %s24, 1
        %s230 = scalar_select %p229, %s24, 1
        %s231 = smul.addr %s230, 8
        %s232 = smul.addr %s231, 8
        %s233 = scalar_lea.vmem %s0, %s232
        %p234 = pneg %p45
        %p235 = pneg %p42
        %p236 = pneg %p66
        %p237 = pneg %p63
        %p238 = pneg %p87
        %p239 = pneg %p84
        %p240 = pneg %p108
        %p241 = pneg %p105
        %p242 = pneg %p134
        %p243 = pneg %p131
        %p244 = scmp.lt.s32.totalorder %s24, 1
        %s245 = scalar_select %p244, %s24, 1
        %s246 = smul.addr %s245, 8
        %s247 = smul.addr %s246, 8
        %s248 = scalar_lea.vmem %s4, %s247
        %p249 = pneg %p160
        %p250 = pneg %p157
        %s251 = sand.u32 %s147, 1
        %s252 = scalar_lea.sflag [#allocation3], %s251
        %s253 = sand.u32 %s147, 1
        %s254 = smul.addr %s253, 64
        %s255 = scalar_lea.vmem [#allocation2], %s254
        %p256 = pneg %p186
        %p257 = pneg %p183
        %s258 = sand.u32 %s173, 1
        %s259 = scalar_lea.sflag [#allocation5], %s258
        %s260 = sand.u32 %s173, 1
        %s261 = scalar_lea.vmem [#allocation4], %s260
        %p262 = scmp.lt.s32.totalorder %s24, 1
        %s263 = scalar_select %p262, %s24, 1
        %s264 = smul.addr %s263, 8
        %s265 = smul.addr %s264, 8
        %s266 = scalar_lea.vmem %s0, %s265
        %p267 = scmp.lt.s32.totalorder %s24, 1
        %s268 = scalar_select %p267, %s24, 1
        %s269 = smul.addr %s268, 8
        %s270 = smul.addr %s269, 8
        %s271 = scalar_lea.vmem %s4, %s270
        %v272 = vld [vmem:[%s266] sm:$0xff]
        %v273 = vld [vmem:[%s266 + $0x8] sm:$0xff]
        %v274 = vld [vmem:[%s266 + $0x10] sm:$0xff]
        %v275 = vld [vmem:[%s266 + $0x18] sm:$0xff]
        %v276 = vld [vmem:[%s266 + $0x20] sm:$0xff]
        %v277 = vld [vmem:[%s266 + $0x28] sm:$0xff]
        %v278 = vld [vmem:[%s266 + $0x30] sm:$0xff]
        %v279 = vld [vmem:[%s266 + $0x38] sm:$0xff]
        %v280 = vld [vmem:[%s1] sm:$0xff]
        %v281 = vld [vmem:[%s1 + $0x8] sm:$0xff]
        %v282 = vld [vmem:[%s1 + $0x10] sm:$0xff]
        %v283 = vld [vmem:[%s1 + $0x18] sm:$0xff]
        %v284 = vld [vmem:[%s1 + $0x20] sm:$0xff]
        %v285 = vld [vmem:[%s1 + $0x28] sm:$0xff]
        %v286 = vld [vmem:[%s1 + $0x30] sm:$0xff]
        %v287 = vld [vmem:[%s1 + $0x38] sm:$0xff]
        %v288 = vld [vmem:[%s2] sm:$0x1]
        %v290 = vlaneseq
        %v291 = vshrl.u32 %v290, 7
        %v292 = vsub.s32 0, %v291
        %v293 = vrot.slane %v288, %v292
        %vm295 = vcmask 523264
        %v297 = vsel %vm295, %v272, 0
        %v300 = vsel %vm295, %v273, 0
        %v303 = vsel %vm295, %v274, 0
        %v306 = vsel %vm295, %v275, 0
        %v309 = vsel %vm295, %v276, 0
        %v312 = vsel %vm295, %v277, 0
        %v315 = vsel %vm295, %v278, 0
        %v318 = vsel %vm295, %v279, 0
        %320 = vmatprep.subr.mxu0 0.0
        %321 = vmatpush1.msra.mxu0 %v280
        %322 = vmatprep.subr.mxu0 0.0
        %323 = vmatpush1.msra.mxu0 %v281
        %324 = vmatprep.subr.mxu0 0.0
        %325 = vmatpush1.msra.mxu0 %v282
        %326 = vmatprep.subr.mxu0 0.0
        %327 = vmatpush1.msra.mxu0 %v283
        %328 = vmatprep.subr.mxu0 0.0
        %329 = vmatpush1.msra.mxu0 %v284
        %330 = vmatprep.subr.mxu0 0.0
        %331 = vmatpush1.msra.mxu0 %v285
        %332 = vmatprep.subr.mxu0 0.0
        %333 = vmatpush1.msra.mxu0 %v286
        %334 = vmatprep.subr.mxu0 0.0
        %335 = vmatpush1.msra.mxu0 %v287
        %336 = vmatprep.subr.mxu0 0.0
        %337 = vmatpush1.msra.mxu0 0.0
        %338 = vmatprep.subr.mxu0 0.0
        %339 = vmatpush1.msra.mxu0 0.0
        %340 = vmatprep.subr.mxu0 0.0
        %341 = vmatpush1.msra.mxu0 0.0
        %342 = vmatprep.subr.mxu0 0.0
        %343 = vmatpush1.msra.mxu0 0.0
        %344 = vmatprep.subr.mxu0 0.0
        %345 = vmatpush1.msra.mxu0 0.0
        %346 = vmatprep.subr.mxu0 0.0
        %347 = vmatpush1.msra.mxu0 0.0
        %348 = vmatprep.subr.mxu0 0.0
        %349 = vmatpush1.msra.mxu0 0.0
        %350 = vmatprep.subr.mxu0 0.0
        %351 = vmatpush1.msra.mxu0 0.0
        %352 = vmatprep.subr.mxu0 0.0
        %353 = vmatpush1.msra.mxu0 0.0
        %354 = vmatprep.subr.mxu0 0.0
        %355 = vmatpush1.msra.mxu0 0.0
        %356 = vmatprep.subr.mxu0 0.0
        %357 = vmatpush1.msra.mxu0 0.0
        %358 = vmatprep.subr.mxu0 0.0
        %359 = vmatpush1.msra.mxu0 0.0
        %360 = vmatprep.subr.mxu0 0.0
        %361 = vmatpush1.msra.mxu0 0.0
        %362 = vmatprep.subr.mxu0 0.0
        %363 = vmatpush1.msra.mxu0 0.0
        %364 = vmatprep.subr.mxu0 0.0
        %365 = vmatpush1.msra.mxu0 0.0
        %366 = vmatprep.subr.mxu0 0.0
        %367 = vmatpush1.msra.mxu0 0.0
        %368 = vmatprep.subr.mxu0 0.0
        %369 = vmatpush1.msra.mxu0 0.0
        %370 = vmatprep.subr.mxu0 0.0
        %371 = vmatpush1.msra.mxu0 0.0
        %372 = vmatprep.subr.mxu0 0.0
        %373 = vmatpush1.msra.mxu0 0.0
        %374 = vmatprep.subr.mxu0 0.0
        %375 = vmatpush1.msra.mxu0 0.0
        %376 = vmatprep.subr.mxu0 0.0
        %377 = vmatpush1.msra.mxu0 0.0
        %378 = vmatprep.subr.mxu0 0.0
        %379 = vmatpush1.msra.mxu0 0.0
        %380 = vmatprep.subr.mxu0 0.0
        %381 = vmatpush1.msra.mxu0 0.0
        %382 = vmatprep.subr.mxu0 0.0
        %383 = vmatpush1.msra.mxu0 0.0
        %384 = vmatprep.mubr.f32.mxu0 0.0
        %385 = vmatmul.mubr.f32.gmra.mrb[0].mxu0 %v297
        %v386 = vpop.f32.mrb[0].mxu0
        %v387 = vadd.f32 %v293, %v386
        %v388 = vpop.f32.mrb[0].mxu0
        %389 = vmatprep.mubr.f32.mxu0 0.0
        %390 = vmatmul.mubr.f32.gmra.mrb[0].mxu0 %v300
        %v391 = vpop.f32.mrb[0].mxu0
        %v392 = vadd.f32 %v293, %v391
        %v393 = vpop.f32.mrb[0].mxu0
        %394 = vmatprep.mubr.f32.mxu0 0.0
        %395 = vmatmul.mubr.f32.gmra.mrb[0].mxu0 %v303
        %v396 = vpop.f32.mrb[0].mxu0
        %v397 = vadd.f32 %v293, %v396
        %v398 = vpop.f32.mrb[0].mxu0
        %399 = vmatprep.mubr.f32.mxu0 0.0
        %400 = vmatmul.mubr.f32.gmra.mrb[0].mxu0 %v306
        %v401 = vpop.f32.mrb[0].mxu0
        %v402 = vadd.f32 %v293, %v401
        %v403 = vpop.f32.mrb[0].mxu0
        %404 = vmatprep.mubr.f32.mxu0 0.0
        %405 = vmatmul.mubr.f32.gmra.mrb[0].mxu0 %v309
        %v406 = vpop.f32.mrb[0].mxu0
        %v407 = vadd.f32 %v293, %v406
        %v408 = vpop.f32.mrb[0].mxu0
        %409 = vmatprep.mubr.f32.mxu0 0.0
        %410 = vmatmul.mubr.f32.gmra.mrb[0].mxu0 %v312
        %v411 = vpop.f32.mrb[0].mxu0
        %v412 = vadd.f32 %v293, %v411
        %v413 = vpop.f32.mrb[0].mxu0
        %414 = vmatprep.mubr.f32.mxu0 0.0
        %415 = vmatmul.mubr.f32.gmra.mrb[0].mxu0 %v315
        %v416 = vpop.f32.mrb[0].mxu0
        %v417 = vadd.f32 %v293, %v416
        %v418 = vpop.f32.mrb[0].mxu0
        %419 = vmatprep.mubr.f32.mxu0 0.0
        %420 = vmatmul.mubr.f32.gmra.mrb[0].mxu0 %v318
        %v421 = vpop.f32.mrb[0].mxu0
        %v422 = vadd.f32 %v293, %v421
        %v423 = vpop.f32.mrb[0].mxu0
        %424 = vdwg.mxu0
        %v425 = vld [vmem:[%s3] sm:$0xff]
        %v426 = vld [vmem:[%s3 + $0x8] sm:$0xff]
        %v427 = vld [vmem:[%s3 + $0x10] sm:$0xff]
        %v428 = vld [vmem:[%s3 + $0x18] sm:$0xff]
        %v429 = vld [vmem:[%s3 + $0x20] sm:$0xff]
        %v430 = vld [vmem:[%s3 + $0x28] sm:$0xff]
        %v431 = vld [vmem:[%s3 + $0x30] sm:$0xff]
        %v432 = vld [vmem:[%s3 + $0x38] sm:$0xff]
        %v433 = vadd.f32 %v387, %v425
        %v434 = vadd.f32 %v392, %v426
        %v435 = vadd.f32 %v397, %v427
        %v436 = vadd.f32 %v402, %v428
        %v437 = vadd.f32 %v407, %v429
        %v438 = vadd.f32 %v412, %v430
        %v439 = vadd.f32 %v417, %v431
        %v440 = vadd.f32 %v422, %v432
        %vm441 = vcmask 261120
        %442 = vst.msk [vmem:[%s271] sm:$0xff] %vm441, %v433
        %443 = vst.msk [vmem:[%s271 + $0x8] sm:$0xff] %vm441, %v434
        %444 = vst.msk [vmem:[%s271 + $0x10] sm:$0xff] %vm441, %v435
        %445 = vst.msk [vmem:[%s271 + $0x18] sm:$0xff] %vm441, %v436
        %446 = vst.msk [vmem:[%s271 + $0x20] sm:$0xff] %vm441, %v437
        %447 = vst.msk [vmem:[%s271 + $0x28] sm:$0xff] %vm441, %v438
        %448 = vst.msk [vmem:[%s271 + $0x30] sm:$0xff] %vm441, %v439
        %449 = vst.msk [vmem:[%s271 + $0x38] sm:$0xff] %vm441, %v440
        %v451 = vsel %vm441, %v433, 0
        %v454 = vsel %vm441, %v434, 0
        %v457 = vsel %vm441, %v435, 0
        %v460 = vsel %vm441, %v436, 0
        %v463 = vsel %vm441, %v437, 0
        %v466 = vsel %vm441, %v438, 0
        %v469 = vsel %vm441, %v439, 0
        %v472 = vsel %vm441, %v440, 0
        %474 = vmatprep.subr.mxu0 0.0
        %475 = vmatpush1.xpose.msra.mxu0 %v451
        %476 = vmatprep.subr.mxu0 0.0
        %477 = vmatpush1.xpose.msra.mxu0 %v454
        %478 = vmatprep.subr.mxu0 0.0
        %479 = vmatpush1.xpose.msra.mxu0 %v457
        %480 = vmatprep.subr.mxu0 0.0
        %481 = vmatpush1.xpose.msra.mxu0 %v460
        %482 = vmatprep.subr.mxu0 0.0
        %483 = vmatpush1.xpose.msra.mxu0 %v463
        %484 = vmatprep.subr.mxu0 0.0
        %485 = vmatpush1.xpose.msra.mxu0 %v466
        %486 = vmatprep.subr.mxu0 0.0
        %487 = vmatpush1.xpose.msra.mxu0 %v469
        %488 = vmatprep.subr.mxu0 0.0
        %489 = vmatpush1.xpose.msra.mxu0 %v472
        %490 = vmatprep.subr.mxu0 0.0
        %491 = vmatpush1.xpose.msra.mxu0 0.0
        %492 = vmatprep.subr.mxu0 0.0
        %493 = vmatpush1.xpose.msra.mxu0 0.0
        %494 = vmatprep.subr.mxu0 0.0
        %495 = vmatpush1.xpose.msra.mxu0 0.0
        %496 = vmatprep.subr.mxu0 0.0
        %497 = vmatpush1.xpose.msra.mxu0 0.0
        %498 = vmatprep.subr.mxu0 0.0
        %499 = vmatpush1.xpose.msra.mxu0 0.0
        %500 = vmatprep.subr.mxu0 0.0
        %501 = vmatpush1.xpose.msra.mxu0 0.0
        %502 = vmatprep.subr.mxu0 0.0
        %503 = vmatpush1.xpose.msra.mxu0 0.0
        %504 = vmatprep.subr.mxu0 0.0
        %505 = vmatpush1.xpose.msra.mxu0 0.0
        %506 = vmatprep.subr.mxu0 0.0
        %507 = vmatpush1.xpose.msra.mxu0 0.0
        %508 = vmatprep.subr.mxu0 0.0
        %509 = vmatpush1.xpose.msra.mxu0 0.0
        %510 = vmatprep.subr.mxu0 0.0
        %511 = vmatpush1.xpose.msra.mxu0 0.0
        %512 = vmatprep.subr.mxu0 0.0
        %513 = vmatpush1.xpose.msra.mxu0 0.0
        %514 = vmatprep.subr.mxu0 0.0
        %515 = vmatpush1.xpose.msra.mxu0 0.0
        %516 = vmatprep.subr.mxu0 0.0
        %517 = vmatpush1.xpose.msra.mxu0 0.0
        %518 = vmatprep.subr.mxu0 0.0
        %519 = vmatpush1.xpose.msra.mxu0 0.0
        %520 = vmatprep.subr.mxu0 0.0
        %521 = vmatpush1.xpose.msra.mxu0 0.0
        %522 = vmatprep.subr.mxu0 0.0
        %523 = vmatpush1.xpose.msra.mxu0 0.0
        %524 = vmatprep.subr.mxu0 0.0
        %525 = vmatpush1.xpose.msra.mxu0 0.0
        %526 = vmatprep.subr.mxu0 0.0
        %527 = vmatpush1.xpose.msra.mxu0 0.0
        %528 = vmatprep.subr.mxu0 0.0
        %529 = vmatpush1.xpose.msra.mxu0 0.0
        %530 = vmatprep.subr.mxu0 0.0
        %531 = vmatpush1.xpose.msra.mxu0 0.0
        %532 = vmatprep.subr.mxu0 0.0
        %533 = vmatpush1.xpose.msra.mxu0 0.0
        %534 = vmatprep.subr.mxu0 0.0
        %535 = vmatpush1.xpose.msra.mxu0 0.0
        %536 = vmatprep.subr.mxu0 0.0
        %537 = vmatpush1.xpose.msra.mxu0 0.0
        %538 = vmatprep.mubr.f32.mxu0 0.0
        %539 = vmatmul.mubr.f32.gmra.mrb[0].mxu0 %v451
        %v540 = vpop.f32.mrb[0].mxu0
        %v541 = vadd.f32 0.0, %v540
        %v542 = vpop.f32.mrb[0].mxu0
        %543 = vmatprep.mubr.f32.mxu0 0.0
        %544 = vmatmul.mubr.f32.gmra.mrb[0].mxu0 %v454
        %v545 = vpop.f32.mrb[0].mxu0
        %v546 = vadd.f32 0.0, %v545
        %v547 = vpop.f32.mrb[0].mxu0
        %548 = vmatprep.mubr.f32.mxu0 0.0
        %549 = vmatmul.mubr.f32.gmra.mrb[0].mxu0 %v457
        %v550 = vpop.f32.mrb[0].mxu0
        %v551 = vadd.f32 0.0, %v550
        %v552 = vpop.f32.mrb[0].mxu0
        %553 = vmatprep.mubr.f32.mxu0 0.0
        %554 = vmatmul.mubr.f32.gmra.mrb[0].mxu0 %v460
        %v555 = vpop.f32.mrb[0].mxu0
        %v556 = vadd.f32 0.0, %v555
        %v557 = vpop.f32.mrb[0].mxu0
        %558 = vmatprep.mubr.f32.mxu0 0.0
        %559 = vmatmul.mubr.f32.gmra.mrb[0].mxu0 %v463
        %v560 = vpop.f32.mrb[0].mxu0
        %v561 = vadd.f32 0.0, %v560
        %v562 = vpop.f32.mrb[0].mxu0
        %563 = vmatprep.mubr.f32.mxu0 0.0
        %564 = vmatmul.mubr.f32.gmra.mrb[0].mxu0 %v466
        %v565 = vpop.f32.mrb[0].mxu0
        %v566 = vadd.f32 0.0, %v565
        %v567 = vpop.f32.mrb[0].mxu0
        %568 = vmatprep.mubr.f32.mxu0 0.0
        %569 = vmatmul.mubr.f32.gmra.mrb[0].mxu0 %v469
        %v570 = vpop.f32.mrb[0].mxu0
        %v571 = vadd.f32 0.0, %v570
        %v572 = vpop.f32.mrb[0].mxu0
        %573 = vmatprep.mubr.f32.mxu0 0.0
        %574 = vmatmul.mubr.f32.gmra.mrb[0].mxu0 %v472
        %v575 = vpop.f32.mrb[0].mxu0
        %v576 = vadd.f32 0.0, %v575
        %v577 = vpop.f32.mrb[0].mxu0
        %578 = vdwg.mxu0
        %579 = vst.msk [vmem:[%s255] sm:$0xff] %vm295, %v541
        %580 = vst.msk [vmem:[%s255 + $0x8] sm:$0xff] %vm295, %v546
        %581 = vst.msk [vmem:[%s255 + $0x10] sm:$0xff] %vm295, %v551
        %582 = vst.msk [vmem:[%s255 + $0x18] sm:$0xff] %vm295, %v556
        %583 = vst.msk [vmem:[%s255 + $0x20] sm:$0xff] %vm295, %v561
        %584 = vst.msk [vmem:[%s255 + $0x28] sm:$0xff] %vm295, %v566
        %585 = vst.msk [vmem:[%s255 + $0x30] sm:$0xff] %vm295, %v571
        %586 = vst.msk [vmem:[%s255 + $0x38] sm:$0xff] %vm295, %v576
        %v587 = vsel %vm295, %v541, 0.0
        %v588 = vsel %vm295, %v546, 0.0
        %v589 = vadd.f32 %v587, %v588
        %v590 = vsel %vm295, %v551, 0.0
        %v591 = vadd.f32 %v589, %v590
        %v592 = vsel %vm295, %v556, 0.0
        %v593 = vadd.f32 %v591, %v592
        %v594 = vsel %vm295, %v561, 0.0
        %v595 = vadd.f32 %v593, %v594
        %v596 = vsel %vm295, %v566, 0.0
        %v597 = vadd.f32 %v595, %v596
        %v598 = vsel %vm295, %v571, 0.0
        %v599 = vadd.f32 %v597, %v598
        %v600 = vsel %vm295, %v576, 0.0
        %v601 = vadd.f32 %v599, %v600
        %v602 = vrot.slane %v601, 4
        %v603 = vadd.f32 %v601, %v602
        %v604 = vrot.slane %v603, 2
        %v605 = vadd.f32 %v603, %v604
        %v606 = vrot.slane %v605, 1
        %v607 = vadd.f32 %v605, %v606
        %v608 = vmul.f32 %v607, 0.17677669
        %vm609 = vcmask 516096
        %610 = vst.msk [vmem:[%s261] sm:$0x1] %vm609, %v608
        %p611 = scmp.lt.s32.totalorder %s24, 1
        %s612 = scalar_select %p611, %s24, 1
        %s613 = smul.addr %s612, 8
        %s614 = smul.addr %s613, 8
        %s615 = scalar_lea.vmem %s4, %s614
        %s616 = sand.u32 %s147, 1
        %s617 = scalar_lea.sflag [#allocation3], %s616
        %s618 = sand.u32 %s147, 1
        %s619 = smul.addr %s618, 64
        %s620 = scalar_lea.vmem [#allocation2], %s619
        %s621 = sand.u32 %s173, 1
        %s622 = scalar_lea.sflag [#allocation5], %s621
        %s623 = sand.u32 %s173, 1
        %s624 = scalar_lea.vmem [#allocation4], %s623
        // Predicated region
        $region37: #{detr_forward.3} parent=35 // pred_check
          %p625 = pneg %p131
        $region38: #{detr_forward.3} parent=35 // pred_check_branch
          %627 = sbr.rel (%p625) target = $region40
        $region39: #{detr_forward.3} parent=35 // pred_region
          _
        $region40: #{detr_forward.3} parent=35 // pred_fallthru
          _
        // Predicated region
        $region41: #{detr_forward.3} parent=35 // pred_check
          %p628 = pneg %p157
        $region42: #{detr_forward.3} parent=35 // pred_check_branch
          %630 = sbr.rel (%p628) target = $region44
        $region43: #{detr_forward.3} parent=35 // pred_region
          %s632 = ssub.s32 1024, 1024
          %633 = vsyncadd %s617, %s632
          %s634 = smul.addr %s24, 8
          %s635 = smul.addr %s634, 128
          %s636 = scalar_lea.hbm %s5, %s635
          %s637 = sshll.u32 %s620, 4
          %s638 = int_to_ptr.vmem [resolvable:$true] %s637
          %643 = dma.vmem_to_hbm [thread:$0]  %s638, 1024, %s636, %s617, 128, 128, 8
        $region44: #{detr_forward.3} parent=35 // pred_fallthru
          _
        // Predicated region
        $region45: #{detr_forward.3} parent=35 // pred_check
          %p644 = pneg %p183
        $region46: #{detr_forward.3} parent=35 // pred_check_branch
          %646 = sbr.rel (%p644) target = $region48
        $region47: #{detr_forward.3} parent=35 // pred_region
          %s648 = ssub.s32 16, 16
          %649 = vsyncadd %s622, %s648
          %s650 = smul.addr %s24, 16
          %s651 = scalar_lea.hbm %s6, %s650
          %s653 = sshll.u32 %s624, 4
          %s654 = int_to_ptr.vmem [resolvable:$true] %s653
          %656 = dma.vmem_to_hbm [thread:$0]  %s654, 16, %s651, %s622
        $region48: #{detr_forward.3} parent=35 // pred_fallthru
          _
      $region36: #{detr_forward.3} parent=5 // pred_fallthru
        _
      %p657 = scmp.le.s32.totalorder 2, %s19
      // Predicated region
      $region49: #{detr_forward.3} parent=5 // pred_check
        %p658 = pneg %p657
      $region50: #{detr_forward.3} parent=5 // pred_check_branch
        %660 = sbr.rel (%p658) target = $region52
      $region51: #{detr_forward.3} parent=5 // pred_region
        %s661 = ssub.s32 %s19, 2
        // Predicated region
        $region53: #{detr_forward.3} parent=51 // pred_check
          %p662 = pneg %p137
        $region54: #{detr_forward.3} parent=51 // pred_check_branch
          %664 = sbr.rel (%p662) target = $region56
        $region55: #{detr_forward.3} parent=51 // pred_region
          %p665 = scmp.lt.s32.totalorder %s25, 1
          %s666 = scalar_select %p665, %s25, 1
          %s667 = smul.addr %s666, 8
          %s668 = smul.addr %s667, 8
          %s669 = scalar_lea.vmem %s4, %s668
        $region56: #{detr_forward.3} parent=51 // pred_fallthru
          _
        // Predicated region
        $region57: #{detr_forward.3} parent=51 // pred_check
          %p670 = pneg %p163
        $region58: #{detr_forward.3} parent=51 // pred_check_branch
          %672 = sbr.rel (%p670) target = $region60
        $region59: #{detr_forward.3} parent=51 // pred_region
          %s673 = sand.u32 %s148, 1
          %s674 = scalar_lea.sflag [#allocation3], %s673
          %s675 = sand.u32 %s148, 1
          %s676 = smul.addr %s675, 64
          %s677 = scalar_lea.vmem [#allocation2], %s676
          %678 = dma.done %s674, 1024
        $region60: #{detr_forward.3} parent=51 // pred_fallthru
          _
        // Predicated region
        $region61: #{detr_forward.3} parent=51 // pred_check
          %p679 = pneg %p189
        $region62: #{detr_forward.3} parent=51 // pred_check_branch
          %681 = sbr.rel (%p679) target = $region64
        $region63: #{detr_forward.3} parent=51 // pred_region
          %s682 = sand.u32 %s174, 1
          %s683 = scalar_lea.sflag [#allocation5], %s682
          %s684 = sand.u32 %s174, 1
          %s685 = scalar_lea.vmem [#allocation4], %s684
          %686 = dma.done %s683, 16
        $region64: #{detr_forward.3} parent=51 // pred_fallthru
          _
      $region52: #{detr_forward.3} parent=5 // pred_fallthru
        _
    $region6: #{detr_forward.3} parent=1 // loop_footer
      %s23 = sadd.s32 1, %s19
    $region7: #{detr_forward.3} parent=1 // loop_footer_branch
      %18 = sbr.rel target = $region3
    $region8: #{detr_forward.3} parent=1 // loop_exit
      _
    %687 = vsyncpa [#allocation3], 1
    %s688 = scalar_lea.sflag [#allocation3], 1
    %689 = vsyncpa %s688, 1
    %690 = vsyncpa [#allocation5], 1
    %s691 = scalar_lea.sflag [#allocation5], 1
    %692 = vsyncpa %s691, 1

// kernel: detr_forward.4
$region0: #{detr_forward.4}
  #allocation0 [shape = 'u32[]', space=smem, size = 0x4, offset = 0x4, fixed_abs, tag = 'smem constant byte address 0x4 - core index']
  #allocation1 [shape = 'u32[144,128]{1,0:T(1,128)}', space=vmem, size = 0x12000, scoped, tag = 'internal scratch']
  #allocation2 [shape = 'f32[64,32]{1,0:T(8,128)}', space=vmem, size = 0x8000, scoped, tag = 'scratch operand']
  %s0 = inlined_call_operand.vmem [shape: f32[2,64,32], index: 0, kind: input, shape index: {}]
  %s1 = inlined_call_operand.vmem [shape: f32[2,32,96], index: 1, kind: input, shape index: {}]
  %s2 = inlined_call_operand.vmem [shape: f32[2,1,96], index: 2, kind: input, shape index: {}]
  %s3 = inlined_call_operand.vmem [shape: f32[2,32,32], index: 3, kind: input, shape index: {}]
  %s4 = inlined_call_operand.vmem [shape: f32[2,1,32], index: 4, kind: input, shape index: {}]
  %s5 = inlined_call_operand.vmem [shape: f32[2,32,64], index: 5, kind: input, shape index: {}]
  %s6 = inlined_call_operand.vmem [shape: f32[2,1,64], index: 6, kind: input, shape index: {}]
  %s7 = inlined_call_operand.vmem [shape: f32[2,64,32], index: 7, kind: input, shape index: {}]
  %s8 = inlined_call_operand.vmem [shape: f32[2,1,32], index: 8, kind: input, shape index: {}]
  %s9 = inlined_call_operand.vmem [shape: f32[2,2,32], index: 9, kind: input, shape index: {}]
  %s10 = inlined_call_operand.vmem [shape: f32[2,2,32], index: 10, kind: input, shape index: {}]
  %s11 = inlined_call_operand.vmem [shape: f32[1,32], index: 11, kind: input, shape index: {}]
  %s12 = inlined_call_operand.vmem [shape: f32[1,32], index: 12, kind: input, shape index: {}]
  %s13 = inlined_call_operand.vmem [shape: f32[2,64,32], index: 13, kind: output, shape index: {}]
  %s14 = sld [smem:[#allocation0]]
  $region97: #{detr_forward.4} parent=0
    _
  %s16 = ssub.s32 1, %s14
  %s17 = scalar_select 0, %s16, %s14
  loop: start=0, step=1, limit=6
  $region2: #{detr_forward.4} parent=0 // loop_pre_header
    _
  $region3: #{detr_forward.4} parent=0 // loop_header
    %s19 = sphi 0, %s23
    %p20 = scmp.ge.s32.totalorder %s19, 6
    %s26 = sphi 0, %s38
    %s27 = sphi 0, %s34
    %s28 = sphi 0, %s26
    %s29 = sphi 0, %s27
    %s30 = sphi 0, %s28
    %s31 = sphi 0, %s29
    %s41 = sphi 0, %s43
    %s44 = sphi 0, %s41
    %s45 = sphi 0, %s44
    %s61 = sphi 0, %s45
    %s67 = sphi 0, %s69
    %s70 = sphi 0, %s67
    %s71 = sphi 0, %s70
    %s87 = sphi 0, %s71
    %s93 = sphi 0, %s95
    %s96 = sphi 0, %s93
    %s97 = sphi 0, %s96
    %s113 = sphi 0, %s97
    %s119 = sphi 0, %s121
    %s122 = sphi 0, %s119
    %s123 = sphi 0, %s122
    %s139 = sphi 0, %s123
    %s145 = sphi 0, %s147
    %s148 = sphi 0, %s145
    %s149 = sphi 0, %s148
    %s165 = sphi 0, %s149
    %s171 = sphi 0, %s173
    %s174 = sphi 0, %s171
    %s175 = sphi 0, %s174
    %s191 = sphi 0, %s175
    %s197 = sphi 0, %s199
    %s200 = sphi 0, %s197
    %s201 = sphi 0, %s200
    %s217 = sphi 0, %s201
    %s223 = sphi 0, %s225
    %s226 = sphi 0, %s223
    %s227 = sphi 0, %s226
    %s243 = sphi 0, %s227
    %s249 = sphi 0, %s251
    %s252 = sphi 0, %s249
    %s253 = sphi 0, %s252
    %s269 = sphi 0, %s253
    %s275 = sphi 0, %s277
    %s278 = sphi 0, %s275
    %s279 = sphi 0, %s278
    %s295 = sphi 0, %s279
    %s301 = sphi 0, %s303
    %s304 = sphi 0, %s301
    %s305 = sphi 0, %s304
    %s321 = sphi 0, %s305
    %s325 = sphi 0, %s325
    %s327 = sphi 0, %s325
    %s328 = sphi 0, %s327
    %s342 = sphi 0, %s328
    %s346 = sphi 0, %s346
    %s348 = sphi 0, %s346
    %s349 = sphi 0, %s348
    %s363 = sphi 0, %s349
    %s369 = sphi 0, %s371
    %s372 = sphi 0, %s369
    %s373 = sphi 0, %s372
    %s389 = sphi 0, %s373
  $region4: #{detr_forward.4} parent=0 // loop_header_branch
    %22 = sbr.rel (%p20) target = $region8
  $region5: #{detr_forward.4} parent=0 // loop_body
    %s24 = ssub.s32 %s19, 1
    %s25 = ssub.s32 %s19, 2
    %s32 = sadd.s32 1, %s27
    %p33 = scmp.ge.s32.totalorder %s32, 2
    %s34 = scalar_select %p33, 0, %s32
    %s35 = sadd.s32 1, %s26
    %s36 = scalar_select %p33, %s35, %s26
    %p37 = scmp.ge.s32.totalorder %s36, 2
    %s38 = scalar_select %p37, 0, %s36
    %s39 = ssub.s32 %s26, %s38
    %p40 = scmp.eq.s32.totalorder %s39, 0
    %s42 = sadd.s32 %s41, 1
    %s43 = scalar_select %p40, %s41, %s42
    %p46 = pneg %p40
    %p47 = scmp.eq.s32.totalorder %s19, 3
    %p48 = por %p46, %p47
    %p49 = scmp.ne.s32.totalorder %s41, %s44
    %p50 = scmp.eq.s32.totalorder %s19, 0
    %p51 = por %p49, %p50
    %p52 = scmp.ne.s32.totalorder %s41, %s44
    %p53 = scmp.eq.s32.totalorder %s24, 3
    %p54 = por %p52, %p53
    %p55 = scmp.ne.s32.totalorder %s44, %s45
    %p56 = scmp.eq.s32.totalorder %s24, 0
    %p57 = por %p55, %p56
    %p58 = scmp.ne.s32.totalorder %s44, %s45
    %p59 = scmp.eq.s32.totalorder %s25, 3
    %p60 = por %p58, %p59
    %p62 = scmp.ne.s32.totalorder %s45, %s61
    %p63 = scmp.eq.s32.totalorder %s25, 0
    %p64 = por %p62, %p63
    %s65 = ssub.s32 %s27, %s34
    %p66 = scmp.eq.s32.totalorder %s65, 0
    %s68 = sadd.s32 %s67, 1
    %s69 = scalar_select %p66, %s67, %s68
    %p72 = pneg %p66
    %p73 = scmp.eq.s32.totalorder %s19, 3
    %p74 = por %p72, %p73
    %p75 = scmp.ne.s32.totalorder %s67, %s70
    %p76 = scmp.eq.s32.totalorder %s19, 0
    %p77 = por %p75, %p76
    %p78 = scmp.ne.s32.totalorder %s67, %s70
    %p79 = scmp.eq.s32.totalorder %s24, 3
    %p80 = por %p78, %p79
    %p81 = scmp.ne.s32.totalorder %s70, %s71
    %p82 = scmp.eq.s32.totalorder %s24, 0
    %p83 = por %p81, %p82
    %p84 = scmp.ne.s32.totalorder %s70, %s71
    %p85 = scmp.eq.s32.totalorder %s25, 3
    %p86 = por %p84, %p85
    %p88 = scmp.ne.s32.totalorder %s71, %s87
    %p89 = scmp.eq.s32.totalorder %s25, 0
    %p90 = por %p88, %p89
    %s91 = ssub.s32 %s27, %s34
    %p92 = scmp.eq.s32.totalorder %s91, 0
    %s94 = sadd.s32 %s93, 1
    %s95 = scalar_select %p92, %s93, %s94
    %p98 = pneg %p92
    %p99 = scmp.eq.s32.totalorder %s19, 3
    %p100 = por %p98, %p99
    %p101 = scmp.ne.s32.totalorder %s93, %s96
    %p102 = scmp.eq.s32.totalorder %s19, 0
    %p103 = por %p101, %p102
    %p104 = scmp.ne.s32.totalorder %s93, %s96
    %p105 = scmp.eq.s32.totalorder %s24, 3
    %p106 = por %p104, %p105
    %p107 = scmp.ne.s32.totalorder %s96, %s97
    %p108 = scmp.eq.s32.totalorder %s24, 0
    %p109 = por %p107, %p108
    %p110 = scmp.ne.s32.totalorder %s96, %s97
    %p111 = scmp.eq.s32.totalorder %s25, 3
    %p112 = por %p110, %p111
    %p114 = scmp.ne.s32.totalorder %s97, %s113
    %p115 = scmp.eq.s32.totalorder %s25, 0
    %p116 = por %p114, %p115
    %s117 = ssub.s32 %s27, %s34
    %p118 = scmp.eq.s32.totalorder %s117, 0
    %s120 = sadd.s32 %s119, 1
    %s121 = scalar_select %p118, %s119, %s120
    %p124 = pneg %p118
    %p125 = scmp.eq.s32.totalorder %s19, 3
    %p126 = por %p124, %p125
    %p127 = scmp.ne.s32.totalorder %s119, %s122
    %p128 = scmp.eq.s32.totalorder %s19, 0
    %p129 = por %p127, %p128
    %p130 = scmp.ne.s32.totalorder %s119, %s122
    %p131 = scmp.eq.s32.totalorder %s24, 3
    %p132 = por %p130, %p131
    %p133 = scmp.ne.s32.totalorder %s122, %s123
    %p134 = scmp.eq.s32.totalorder %s24, 0
    %p135 = por %p133, %p134
    %p136 = scmp.ne.s32.totalorder %s122, %s123
    %p137 = scmp.eq.s32.totalorder %s25, 3
    %p138 = por %p136, %p137
    %p140 = scmp.ne.s32.totalorder %s123, %s139
    %p141 = scmp.eq.s32.totalorder %s25, 0
    %p142 = por %p140, %p141
    %s143 = ssub.s32 %s27, %s34
    %p144 = scmp.eq.s32.totalorder %s143, 0
    %s146 = sadd.s32 %s145, 1
    %s147 = scalar_select %p144, %s145, %s146
    %p150 = pneg %p144
    %p151 = scmp.eq.s32.totalorder %s19, 3
    %p152 = por %p150, %p151
    %p153 = scmp.ne.s32.totalorder %s145, %s148
    %p154 = scmp.eq.s32.totalorder %s19, 0
    %p155 = por %p153, %p154
    %p156 = scmp.ne.s32.totalorder %s145, %s148
    %p157 = scmp.eq.s32.totalorder %s24, 3
    %p158 = por %p156, %p157
    %p159 = scmp.ne.s32.totalorder %s148, %s149
    %p160 = scmp.eq.s32.totalorder %s24, 0
    %p161 = por %p159, %p160
    %p162 = scmp.ne.s32.totalorder %s148, %s149
    %p163 = scmp.eq.s32.totalorder %s25, 3
    %p164 = por %p162, %p163
    %p166 = scmp.ne.s32.totalorder %s149, %s165
    %p167 = scmp.eq.s32.totalorder %s25, 0
    %p168 = por %p166, %p167
    %s169 = ssub.s32 %s27, %s34
    %p170 = scmp.eq.s32.totalorder %s169, 0
    %s172 = sadd.s32 %s171, 1
    %s173 = scalar_select %p170, %s171, %s172
    %p176 = pneg %p170
    %p177 = scmp.eq.s32.totalorder %s19, 3
    %p178 = por %p176, %p177
    %p179 = scmp.ne.s32.totalorder %s171, %s174
    %p180 = scmp.eq.s32.totalorder %s19, 0
    %p181 = por %p179, %p180
    %p182 = scmp.ne.s32.totalorder %s171, %s174
    %p183 = scmp.eq.s32.totalorder %s24, 3
    %p184 = por %p182, %p183
    %p185 = scmp.ne.s32.totalorder %s174, %s175
    %p186 = scmp.eq.s32.totalorder %s24, 0
    %p187 = por %p185, %p186
    %p188 = scmp.ne.s32.totalorder %s174, %s175
    %p189 = scmp.eq.s32.totalorder %s25, 3
    %p190 = por %p188, %p189
    %p192 = scmp.ne.s32.totalorder %s175, %s191
    %p193 = scmp.eq.s32.totalorder %s25, 0
    %p194 = por %p192, %p193
    %s195 = ssub.s32 %s27, %s34
    %p196 = scmp.eq.s32.totalorder %s195, 0
    %s198 = sadd.s32 %s197, 1
    %s199 = scalar_select %p196, %s197, %s198
    %p202 = pneg %p196
    %p203 = scmp.eq.s32.totalorder %s19, 3
    %p204 = por %p202, %p203
    %p205 = scmp.ne.s32.totalorder %s197, %s200
    %p206 = scmp.eq.s32.totalorder %s19, 0
    %p207 = por %p205, %p206
    %p208 = scmp.ne.s32.totalorder %s197, %s200
    %p209 = scmp.eq.s32.totalorder %s24, 3
    %p210 = por %p208, %p209
    %p211 = scmp.ne.s32.totalorder %s200, %s201
    %p212 = scmp.eq.s32.totalorder %s24, 0
    %p213 = por %p211, %p212
    %p214 = scmp.ne.s32.totalorder %s200, %s201
    %p215 = scmp.eq.s32.totalorder %s25, 3
    %p216 = por %p214, %p215
    %p218 = scmp.ne.s32.totalorder %s201, %s217
    %p219 = scmp.eq.s32.totalorder %s25, 0
    %p220 = por %p218, %p219
    %s221 = ssub.s32 %s27, %s34
    %p222 = scmp.eq.s32.totalorder %s221, 0
    %s224 = sadd.s32 %s223, 1
    %s225 = scalar_select %p222, %s223, %s224
    %p228 = pneg %p222
    %p229 = scmp.eq.s32.totalorder %s19, 3
    %p230 = por %p228, %p229
    %p231 = scmp.ne.s32.totalorder %s223, %s226
    %p232 = scmp.eq.s32.totalorder %s19, 0
    %p233 = por %p231, %p232
    %p234 = scmp.ne.s32.totalorder %s223, %s226
    %p235 = scmp.eq.s32.totalorder %s24, 3
    %p236 = por %p234, %p235
    %p237 = scmp.ne.s32.totalorder %s226, %s227
    %p238 = scmp.eq.s32.totalorder %s24, 0
    %p239 = por %p237, %p238
    %p240 = scmp.ne.s32.totalorder %s226, %s227
    %p241 = scmp.eq.s32.totalorder %s25, 3
    %p242 = por %p240, %p241
    %p244 = scmp.ne.s32.totalorder %s227, %s243
    %p245 = scmp.eq.s32.totalorder %s25, 0
    %p246 = por %p244, %p245
    %s247 = ssub.s32 %s27, %s34
    %p248 = scmp.eq.s32.totalorder %s247, 0
    %s250 = sadd.s32 %s249, 1
    %s251 = scalar_select %p248, %s249, %s250
    %p254 = pneg %p248
    %p255 = scmp.eq.s32.totalorder %s19, 3
    %p256 = por %p254, %p255
    %p257 = scmp.ne.s32.totalorder %s249, %s252
    %p258 = scmp.eq.s32.totalorder %s19, 0
    %p259 = por %p257, %p258
    %p260 = scmp.ne.s32.totalorder %s249, %s252
    %p261 = scmp.eq.s32.totalorder %s24, 3
    %p262 = por %p260, %p261
    %p263 = scmp.ne.s32.totalorder %s252, %s253
    %p264 = scmp.eq.s32.totalorder %s24, 0
    %p265 = por %p263, %p264
    %p266 = scmp.ne.s32.totalorder %s252, %s253
    %p267 = scmp.eq.s32.totalorder %s25, 3
    %p268 = por %p266, %p267
    %p270 = scmp.ne.s32.totalorder %s253, %s269
    %p271 = scmp.eq.s32.totalorder %s25, 0
    %p272 = por %p270, %p271
    %s273 = ssub.s32 %s27, %s34
    %p274 = scmp.eq.s32.totalorder %s273, 0
    %s276 = sadd.s32 %s275, 1
    %s277 = scalar_select %p274, %s275, %s276
    %p280 = pneg %p274
    %p281 = scmp.eq.s32.totalorder %s19, 3
    %p282 = por %p280, %p281
    %p283 = scmp.ne.s32.totalorder %s275, %s278
    %p284 = scmp.eq.s32.totalorder %s19, 0
    %p285 = por %p283, %p284
    %p286 = scmp.ne.s32.totalorder %s275, %s278
    %p287 = scmp.eq.s32.totalorder %s24, 3
    %p288 = por %p286, %p287
    %p289 = scmp.ne.s32.totalorder %s278, %s279
    %p290 = scmp.eq.s32.totalorder %s24, 0
    %p291 = por %p289, %p290
    %p292 = scmp.ne.s32.totalorder %s278, %s279
    %p293 = scmp.eq.s32.totalorder %s25, 3
    %p294 = por %p292, %p293
    %p296 = scmp.ne.s32.totalorder %s279, %s295
    %p297 = scmp.eq.s32.totalorder %s25, 0
    %p298 = por %p296, %p297
    %s299 = ssub.s32 %s27, %s34
    %p300 = scmp.eq.s32.totalorder %s299, 0
    %s302 = sadd.s32 %s301, 1
    %s303 = scalar_select %p300, %s301, %s302
    %p306 = pneg %p300
    %p307 = scmp.eq.s32.totalorder %s19, 3
    %p308 = por %p306, %p307
    %p309 = scmp.ne.s32.totalorder %s301, %s304
    %p310 = scmp.eq.s32.totalorder %s19, 0
    %p311 = por %p309, %p310
    %p312 = scmp.ne.s32.totalorder %s301, %s304
    %p313 = scmp.eq.s32.totalorder %s24, 3
    %p314 = por %p312, %p313
    %p315 = scmp.ne.s32.totalorder %s304, %s305
    %p316 = scmp.eq.s32.totalorder %s24, 0
    %p317 = por %p315, %p316
    %p318 = scmp.ne.s32.totalorder %s304, %s305
    %p319 = scmp.eq.s32.totalorder %s25, 3
    %p320 = por %p318, %p319
    %p322 = scmp.ne.s32.totalorder %s305, %s321
    %p323 = scmp.eq.s32.totalorder %s25, 0
    %p324 = por %p322, %p323
    %s326 = sadd.s32 %s325, 1
    %p329 = scmp.eq.s32.totalorder %s19, 3
    %p330 = scmp.ne.s32.totalorder %s325, %s327
    %p331 = scmp.eq.s32.totalorder %s19, 0
    %p332 = por %p330, %p331
    %p333 = scmp.ne.s32.totalorder %s325, %s327
    %p334 = scmp.eq.s32.totalorder %s24, 3
    %p335 = por %p333, %p334
    %p336 = scmp.ne.s32.totalorder %s327, %s328
    %p337 = scmp.eq.s32.totalorder %s24, 0
    %p338 = por %p336, %p337
    %p339 = scmp.ne.s32.totalorder %s327, %s328
    %p340 = scmp.eq.s32.totalorder %s25, 3
    %p341 = por %p339, %p340
    %p343 = scmp.ne.s32.totalorder %s328, %s342
    %p344 = scmp.eq.s32.totalorder %s25, 0
    %p345 = por %p343, %p344
    %s347 = sadd.s32 %s346, 1
    %p350 = scmp.eq.s32.totalorder %s19, 3
    %p351 = scmp.ne.s32.totalorder %s346, %s348
    %p352 = scmp.eq.s32.totalorder %s19, 0
    %p353 = por %p351, %p352
    %p354 = scmp.ne.s32.totalorder %s346, %s348
    %p355 = scmp.eq.s32.totalorder %s24, 3
    %p356 = por %p354, %p355
    %p357 = scmp.ne.s32.totalorder %s348, %s349
    %p358 = scmp.eq.s32.totalorder %s24, 0
    %p359 = por %p357, %p358
    %p360 = scmp.ne.s32.totalorder %s348, %s349
    %p361 = scmp.eq.s32.totalorder %s25, 3
    %p362 = por %p360, %p361
    %p364 = scmp.ne.s32.totalorder %s349, %s363
    %p365 = scmp.eq.s32.totalorder %s25, 0
    %p366 = por %p364, %p365
    %s367 = ssub.s32 %s26, %s38
    %p368 = scmp.eq.s32.totalorder %s367, 0
    %s370 = sadd.s32 %s369, 1
    %s371 = scalar_select %p368, %s369, %s370
    %p374 = pneg %p368
    %p375 = scmp.eq.s32.totalorder %s19, 3
    %p376 = por %p374, %p375
    %p377 = scmp.ne.s32.totalorder %s369, %s372
    %p378 = scmp.eq.s32.totalorder %s19, 0
    %p379 = por %p377, %p378
    %p380 = scmp.ne.s32.totalorder %s369, %s372
    %p381 = scmp.eq.s32.totalorder %s24, 3
    %p382 = por %p380, %p381
    %p383 = scmp.ne.s32.totalorder %s372, %s373
    %p384 = scmp.eq.s32.totalorder %s24, 0
    %p385 = por %p383, %p384
    %p386 = scmp.ne.s32.totalorder %s372, %s373
    %p387 = scmp.eq.s32.totalorder %s25, 3
    %p388 = por %p386, %p387
    %p390 = scmp.ne.s32.totalorder %s373, %s389
    %p391 = scmp.eq.s32.totalorder %s25, 0
    %p392 = por %p390, %p391
    %p393 = scmp.le.s32.totalorder 1, %s19
    %p394 = scmp.lt.s32.totalorder %s19, 5
    %p395 = pnand %p393, %p394
    %p396 = pneg %p395
    // Predicated region
    $region9: #{detr_forward.4} parent=5 // pred_check
      _
    $region10: #{detr_forward.4} parent=5 // pred_check_branch
      %398 = sbr.rel (%p395) target = $region12
    $region11: #{detr_forward.4} parent=5 // pred_region
      %s399 = ssub.s32 %s19, 1
      // Predicated region
      $region13: #{detr_forward.4} parent=11 // pred_check
        %p400 = pneg %p338
      $region14: #{detr_forward.4} parent=11 // pred_check_branch
        %402 = sbr.rel (%p400) target = $region16
      $region15: #{detr_forward.4} parent=11 // pred_region
        _
      $region16: #{detr_forward.4} parent=11 // pred_fallthru
        _
      // Predicated region
      $region17: #{detr_forward.4} parent=11 // pred_check
        %p403 = pneg %p359
      $region18: #{detr_forward.4} parent=11 // pred_check_branch
        %405 = sbr.rel (%p403) target = $region20
      $region19: #{detr_forward.4} parent=11 // pred_region
        _
      $region20: #{detr_forward.4} parent=11 // pred_fallthru
        _
    $region12: #{detr_forward.4} parent=5 // pred_fallthru
      _
    %p406 = scmp.lt.s32.totalorder %s19, 4
    // Predicated region
    $region21: #{detr_forward.4} parent=5 // pred_check
      %p407 = pneg %p406
    $region22: #{detr_forward.4} parent=5 // pred_check_branch
      %409 = sbr.rel (%p407) target = $region24
    $region23: #{detr_forward.4} parent=5 // pred_region
      // Predicated region
      $region25: #{detr_forward.4} parent=23 // pred_check
        %p410 = pneg %p51
      $region26: #{detr_forward.4} parent=23 // pred_check_branch
        %412 = sbr.rel (%p410) target = $region28
      $region27: #{detr_forward.4} parent=23 // pred_region
        %p413 = scmp.lt.s32.totalorder %s26, 1
        %s414 = scalar_select %p413, %s26, 1
        %s415 = smul.addr %s414, 8
        %s416 = smul.addr %s415, 8
        %s417 = scalar_lea.vmem %s0, %s416
      $region28: #{detr_forward.4} parent=23 // pred_fallthru
        _
      // Predicated region
      $region29: #{detr_forward.4} parent=23 // pred_check
        %p418 = pneg %p77
      $region30: #{detr_forward.4} parent=23 // pred_check_branch
        %420 = sbr.rel (%p418) target = $region32
      $region31: #{detr_forward.4} parent=23 // pred_region
        %p421 = scmp.lt.s32.totalorder %s27, 1
        %s422 = scalar_select %p421, %s27, 1
        %s423 = smul.addr %s422, 4
        %s424 = smul.addr %s423, 8
        %s425 = scalar_lea.vmem %s1, %s424
      $region32: #{detr_forward.4} parent=23 // pred_fallthru
        _
      // Predicated region
      $region33: #{detr_forward.4} parent=23 // pred_check
        %p426 = pneg %p103
      $region34: #{detr_forward.4} parent=23 // pred_check_branch
        %428 = sbr.rel (%p426) target = $region36
      $region35: #{detr_forward.4} parent=23 // pred_region
        %p429 = scmp.lt.s32.totalorder %s27, 1
        %s430 = scalar_select %p429, %s27, 1
        %s431 = scalar_lea.vmem %s2, %s430
      $region36: #{detr_forward.4} parent=23 // pred_fallthru
        _
      // Predicated region
      $region37: #{detr_forward.4} parent=23 // pred_check
        %p432 = pneg %p129
      $region38: #{detr_forward.4} parent=23 // pred_check_branch
        %434 = sbr.rel (%p432) target = $region40
      $region39: #{detr_forward.4} parent=23 // pred_region
        %p435 = scmp.lt.s32.totalorder %s27, 1
        %s436 = scalar_select %p435, %s27, 1
        %s437 = smul.addr %s436, 4
        %s438 = smul.addr %s437, 8
        %s439 = scalar_lea.vmem %s3, %s438
      $region40: #{detr_forward.4} parent=23 // pred_fallthru
        _
      // Predicated region
      $region41: #{detr_forward.4} parent=23 // pred_check
        %p440 = pneg %p155
      $region42: #{detr_forward.4} parent=23 // pred_check_branch
        %442 = sbr.rel (%p440) target = $region44
      $region43: #{detr_forward.4} parent=23 // pred_region
        %p443 = scmp.lt.s32.totalorder %s27, 1
        %s444 = scalar_select %p443, %s27, 1
        %s445 = scalar_lea.vmem %s4, %s444
      $region44: #{detr_forward.4} parent=23 // pred_fallthru
        _
      // Predicated region
      $region45: #{detr_forward.4} parent=23 // pred_check
        %p446 = pneg %p181
      $region46: #{detr_forward.4} parent=23 // pred_check_branch
        %448 = sbr.rel (%p446) target = $region48
      $region47: #{detr_forward.4} parent=23 // pred_region
        %p449 = scmp.lt.s32.totalorder %s27, 1
        %s450 = scalar_select %p449, %s27, 1
        %s451 = smul.addr %s450, 4
        %s452 = smul.addr %s451, 8
        %s453 = scalar_lea.vmem %s5, %s452
      $region48: #{detr_forward.4} parent=23 // pred_fallthru
        _
      // Predicated region
      $region49: #{detr_forward.4} parent=23 // pred_check
        %p454 = pneg %p207
      $region50: #{detr_forward.4} parent=23 // pred_check_branch
        %456 = sbr.rel (%p454) target = $region52
      $region51: #{detr_forward.4} parent=23 // pred_region
        %p457 = scmp.lt.s32.totalorder %s27, 1
        %s458 = scalar_select %p457, %s27, 1
        %s459 = scalar_lea.vmem %s6, %s458
      $region52: #{detr_forward.4} parent=23 // pred_fallthru
        _
      // Predicated region
      $region53: #{detr_forward.4} parent=23 // pred_check
        %p460 = pneg %p233
      $region54: #{detr_forward.4} parent=23 // pred_check_branch
        %462 = sbr.rel (%p460) target = $region56
      $region55: #{detr_forward.4} parent=23 // pred_region
        %p463 = scmp.lt.s32.totalorder %s27, 1
        %s464 = scalar_select %p463, %s27, 1
        %s465 = smul.addr %s464, 8
        %s466 = smul.addr %s465, 8
        %s467 = scalar_lea.vmem %s7, %s466
      $region56: #{detr_forward.4} parent=23 // pred_fallthru
        _
      // Predicated region
      $region57: #{detr_forward.4} parent=23 // pred_check
        %p468 = pneg %p259
      $region58: #{detr_forward.4} parent=23 // pred_check_branch
        %470 = sbr.rel (%p468) target = $region60
      $region59: #{detr_forward.4} parent=23 // pred_region
        %p471 = scmp.lt.s32.totalorder %s27, 1
        %s472 = scalar_select %p471, %s27, 1
        %s473 = scalar_lea.vmem %s8, %s472
      $region60: #{detr_forward.4} parent=23 // pred_fallthru
        _
      // Predicated region
      $region61: #{detr_forward.4} parent=23 // pred_check
        %p474 = pneg %p285
      $region62: #{detr_forward.4} parent=23 // pred_check_branch
        %476 = sbr.rel (%p474) target = $region64
      $region63: #{detr_forward.4} parent=23 // pred_region
        %p477 = scmp.lt.s32.totalorder %s27, 1
        %s478 = scalar_select %p477, %s27, 1
        %s479 = smul.addr %s478, 2
        %s480 = scalar_lea.vmem %s9, %s479
      $region64: #{detr_forward.4} parent=23 // pred_fallthru
        _
      // Predicated region
      $region65: #{detr_forward.4} parent=23 // pred_check
        %p481 = pneg %p311
      $region66: #{detr_forward.4} parent=23 // pred_check_branch
        %483 = sbr.rel (%p481) target = $region68
      $region67: #{detr_forward.4} parent=23 // pred_region
        %p484 = scmp.lt.s32.totalorder %s27, 1
        %s485 = scalar_select %p484, %s27, 1
        %s486 = smul.addr %s485, 2
        %s487 = scalar_lea.vmem %s10, %s486
      $region68: #{detr_forward.4} parent=23 // pred_fallthru
        _
    $region24: #{detr_forward.4} parent=5 // pred_fallthru
      _
    %p488 = scmp.le.s32.totalorder 1, %s19
    %p489 = scmp.lt.s32.totalorder %s19, 5
    %p490 = pnand %p488, %p489
    %p491 = pneg %p490
    // Predicated region
    $region69: #{detr_forward.4} parent=5 // pred_check
      _
    $region70: #{detr_forward.4} parent=5 // pred_check_branch
      %493 = sbr.rel (%p490) target = $region72
    $region71: #{detr_forward.4} parent=5 // pred_region
      %s494 = ssub.s32 %s19, 1
      %p495 = scmp.lt.s32.totalorder %s28, 1
      %s496 = scalar_select %p495, %s28, 1
      %s497 = smul.addr %s496, 8
      %s498 = smul.addr %s497, 8
      %s499 = scalar_lea.vmem %s0, %s498
      %p500 = pneg %p57
      %p501 = pneg %p54
      %p502 = scmp.lt.s32.totalorder %s29, 1
      %s503 = scalar_select %p502, %s29, 1
      %s504 = smul.addr %s503, 4
      %s505 = smul.addr %s504, 8
      %s506 = scalar_lea.vmem %s1, %s505
      %p507 = pneg %p83
      %p508 = pneg %p80
      %p509 = scmp.lt.s32.totalorder %s29, 1
      %s510 = scalar_select %p509, %s29, 1
      %s511 = scalar_lea.vmem %s2, %s510
      %p512 = pneg %p109
      %p513 = pneg %p106
      %p514 = scmp.lt.s32.totalorder %s29, 1
      %s515 = scalar_select %p514, %s29, 1
      %s516 = smul.addr %s515, 4
      %s517 = smul.addr %s516, 8
      %s518 = scalar_lea.vmem %s3, %s517
      %p519 = pneg %p135
      %p520 = pneg %p132
      %p521 = scmp.lt.s32.totalorder %s29, 1
      %s522 = scalar_select %p521, %s29, 1
      %s523 = scalar_lea.vmem %s4, %s522
      %p524 = pneg %p161
      %p525 = pneg %p158
      %p526 = scmp.lt.s32.totalorder %s29, 1
      %s527 = scalar_select %p526, %s29, 1
      %s528 = smul.addr %s527, 4
      %s529 = smul.addr %s528, 8
      %s530 = scalar_lea.vmem %s5, %s529
      %p531 = pneg %p187
      %p532 = pneg %p184
      %p533 = scmp.lt.s32.totalorder %s29, 1
      %s534 = scalar_select %p533, %s29, 1
      %s535 = scalar_lea.vmem %s6, %s534
      %p536 = pneg %p213
      %p537 = pneg %p210
      %p538 = scmp.lt.s32.totalorder %s29, 1
      %s539 = scalar_select %p538, %s29, 1
      %s540 = smul.addr %s539, 8
      %s541 = smul.addr %s540, 8
      %s542 = scalar_lea.vmem %s7, %s541
      %p543 = pneg %p239
      %p544 = pneg %p236
      %p545 = scmp.lt.s32.totalorder %s29, 1
      %s546 = scalar_select %p545, %s29, 1
      %s547 = scalar_lea.vmem %s8, %s546
      %p548 = pneg %p265
      %p549 = pneg %p262
      %p550 = scmp.lt.s32.totalorder %s29, 1
      %s551 = scalar_select %p550, %s29, 1
      %s552 = smul.addr %s551, 2
      %s553 = scalar_lea.vmem %s9, %s552
      %p554 = pneg %p291
      %p555 = pneg %p288
      %p556 = scmp.lt.s32.totalorder %s29, 1
      %s557 = scalar_select %p556, %s29, 1
      %s558 = smul.addr %s557, 2
      %s559 = scalar_lea.vmem %s10, %s558
      %p560 = pneg %p317
      %p561 = pneg %p314
      %p562 = pneg %p338
      %p563 = pneg %p335
      %p564 = pneg %p359
      %p565 = pneg %p356
      %p566 = pneg %p385
      %p567 = pneg %p382
      %p568 = scmp.lt.s32.totalorder %s28, 1
      %s569 = scalar_select %p568, %s28, 1
      %s570 = smul.addr %s569, 8
      %s571 = smul.addr %s570, 8
      %s572 = scalar_lea.vmem %s13, %s571
      %p573 = scmp.lt.s32.totalorder %s28, 1
      %s574 = scalar_select %p573, %s28, 1
      %s575 = smul.addr %s574, 8
      %s576 = smul.addr %s575, 8
      %s577 = scalar_lea.vmem %s0, %s576
      %p578 = scmp.lt.s32.totalorder %s29, 1
      %s579 = scalar_select %p578, %s29, 1
      %s580 = smul.addr %s579, 4
      %s581 = smul.addr %s580, 8
      %s582 = scalar_lea.vmem %s1, %s581
      %p583 = scmp.lt.s32.totalorder %s29, 1
      %s584 = scalar_select %p583, %s29, 1
      %s585 = scalar_lea.vmem %s2, %s584
      %p586 = scmp.lt.s32.totalorder %s29, 1
      %s587 = scalar_select %p586, %s29, 1
      %s588 = smul.addr %s587, 4
      %s589 = smul.addr %s588, 8
      %s590 = scalar_lea.vmem %s3, %s589
      %p591 = scmp.lt.s32.totalorder %s29, 1
      %s592 = scalar_select %p591, %s29, 1
      %s593 = scalar_lea.vmem %s4, %s592
      %p594 = scmp.lt.s32.totalorder %s29, 1
      %s595 = scalar_select %p594, %s29, 1
      %s596 = smul.addr %s595, 4
      %s597 = smul.addr %s596, 8
      %s598 = scalar_lea.vmem %s5, %s597
      %p599 = scmp.lt.s32.totalorder %s29, 1
      %s600 = scalar_select %p599, %s29, 1
      %s601 = scalar_lea.vmem %s6, %s600
      %p602 = scmp.lt.s32.totalorder %s29, 1
      %s603 = scalar_select %p602, %s29, 1
      %s604 = smul.addr %s603, 8
      %s605 = smul.addr %s604, 8
      %s606 = scalar_lea.vmem %s7, %s605
      %p607 = scmp.lt.s32.totalorder %s29, 1
      %s608 = scalar_select %p607, %s29, 1
      %s609 = scalar_lea.vmem %s8, %s608
      %p610 = scmp.lt.s32.totalorder %s29, 1
      %s611 = scalar_select %p610, %s29, 1
      %s612 = smul.addr %s611, 2
      %s613 = scalar_lea.vmem %s9, %s612
      %p614 = scmp.lt.s32.totalorder %s29, 1
      %s615 = scalar_select %p614, %s29, 1
      %s616 = smul.addr %s615, 2
      %s617 = scalar_lea.vmem %s10, %s616
      %p618 = scmp.lt.s32.totalorder %s28, 1
      %s619 = scalar_select %p618, %s28, 1
      %s620 = smul.addr %s619, 8
      %s621 = smul.addr %s620, 8
      %s622 = scalar_lea.vmem %s13, %s621
      %p623 = scmp.eq.s32.totalorder %s29, 0
      // Predicated region
      $region73: #{detr_forward.4} parent=71 // pred_check
        %p624 = pneg %p623
      $region74: #{detr_forward.4} parent=71 // pred_check_branch
        %626 = sbr.rel (%p624) target = $region76
      $region75: #{detr_forward.4} parent=71 // pred_region
        %v627 = vld [vmem:[%s577] sm:$0xff]
        %v628 = vld [vmem:[%s577 + $0x8] sm:$0xff]
        %v629 = vld [vmem:[%s577 + $0x10] sm:$0xff]
        %v630 = vld [vmem:[%s577 + $0x18] sm:$0xff]
        %v631 = vld [vmem:[%s577 + $0x20] sm:$0xff]
        %v632 = vld [vmem:[%s577 + $0x28] sm:$0xff]
        %v633 = vld [vmem:[%s577 + $0x30] sm:$0xff]
        %v634 = vld [vmem:[%s577 + $0x38] sm:$0xff]
        %vm635 = vcmask 261120
        %636 = vst.msk [vmem:[#allocation2] sm:$0xff] %vm635, %v627
        %637 = vst.msk [vmem:[#allocation2 + $0x8] sm:$0xff] %vm635, %v628
        %638 = vst.msk [vmem:[#allocation2 + $0x10] sm:$0xff] %vm635, %v629
        %639 = vst.msk [vmem:[#allocation2 + $0x18] sm:$0xff] %vm635, %v630
        %640 = vst.msk [vmem:[#allocation2 + $0x20] sm:$0xff] %vm635, %v631
        %641 = vst.msk [vmem:[#allocation2 + $0x28] sm:$0xff] %vm635, %v632
        %642 = vst.msk [vmem:[#allocation2 + $0x30] sm:$0xff] %vm635, %v633
        %643 = vst.msk [vmem:[#allocation2 + $0x38] sm:$0xff] %vm635, %v634
      $region76: #{detr_forward.4} parent=71 // pred_fallthru
        _
      %v644 = vld [vmem:[#allocation2] sm:$0xff]
      %v645 = vld [vmem:[#allocation2 + $0x8] sm:$0xff]
      %v646 = vld [vmem:[#allocation2 + $0x10] sm:$0xff]
      %v647 = vld [vmem:[#allocation2 + $0x18] sm:$0xff]
      %v648 = vld [vmem:[#allocation2 + $0x20] sm:$0xff]
      %v649 = vld [vmem:[#allocation2 + $0x28] sm:$0xff]
      %v650 = vld [vmem:[#allocation2 + $0x30] sm:$0xff]
      %v651 = vld [vmem:[#allocation2 + $0x38] sm:$0xff]
      %v652 = vld [vmem:[%s613] sm:$0x3]
      %v653 = vld [vmem:[%s617] sm:$0x3]
      %v654 = vld [vmem:[%s582] sm:$0xff]
      %v655 = vld [vmem:[%s582 + $0x8] sm:$0xff]
      %v656 = vld [vmem:[%s582 + $0x10] sm:$0xff]
      %v657 = vld [vmem:[%s582 + $0x18] sm:$0xff]
      %v658 = vld [vmem:[%s585] sm:$0x1]
      %v660 = vlaneseq
      %v661 = vshrl.u32 %v660, 7
      %v662 = vsub.s32 0, %v661
      %v663 = vrot.slane %v658, %v662
      %vm665 = vcmask 261120
      %v667 = vsel %vm665, %v644, 0
      %v670 = vsel %vm665, %v645, 0
      %v673 = vsel %vm665, %v646, 0
      %v676 = vsel %vm665, %v647, 0
      %v679 = vsel %vm665, %v648, 0
      %v682 = vsel %vm665, %v649, 0
      %v685 = vsel %vm665, %v650, 0
      %v688 = vsel %vm665, %v651, 0
      %690 = vmatprep.subr.mxu0 0.0
      %691 = vmatpush1.msra.mxu0 %v654
      %692 = vmatprep.subr.mxu0 0.0
      %693 = vmatpush1.msra.mxu0 %v655
      %694 = vmatprep.subr.mxu0 0.0
      %695 = vmatpush1.msra.mxu0 %v656
      %696 = vmatprep.subr.mxu0 0.0
      %697 = vmatpush1.msra.mxu0 %v657
      %698 = vmatprep.subr.mxu0 0.0
      %699 = vmatpush1.msra.mxu0 0.0
      %700 = vmatprep.subr.mxu0 0.0
      %701 = vmatpush1.msra.mxu0 0.0
      %702 = vmatprep.subr.mxu0 0.0
      %703 = vmatpush1.msra.mxu0 0.0
      %704 = vmatprep.subr.mxu0 0.0
      %705 = vmatpush1.msra.mxu0 0.0
      %706 = vmatprep.subr.mxu0 0.0
      %707 = vmatpush1.msra.mxu0 0.0
      %708 = vmatprep.subr.mxu0 0.0
      %709 = vmatpush1.msra.mxu0 0.0
      %710 = vmatprep.subr.mxu0 0.0
      %711 = vmatpush1.msra.mxu0 0.0
      %712 = vmatprep.subr.mxu0 0.0
      %713 = vmatpush1.msra.mxu0 0.0
      %714 = vmatprep.subr.mxu0 0.0
      %715 = vmatpush1.msra.mxu0 0.0
      %716 = vmatprep.subr.mxu0 0.0
      %717 = vmatpush1.msra.mxu0 0.0
      %718 = vmatprep.subr.mxu0 0.0
      %719 = vmatpush1.msra.mxu0 0.0
      %720 = vmatprep.subr.mxu0 0.0
      %721 = vmatpush1.msra.mxu0 0.0
      %722 = vmatprep.subr.mxu0 0.0
      %723 = vmatpush1.msra.mxu0 0.0
      %724 = vmatprep.subr.mxu0 0.0
      %725 = vmatpush1.msra.mxu0 0.0
      %726 = vmatprep.subr.mxu0 0.0
      %727 = vmatpush1.msra.mxu0 0.0
      %728 = vmatprep.subr.mxu0 0.0
      %729 = vmatpush1.msra.mxu0 0.0
      %730 = vmatprep.subr.mxu0 0.0
      %731 = vmatpush1.msra.mxu0 0.0
      %732 = vmatprep.subr.mxu0 0.0
      %733 = vmatpush1.msra.mxu0 0.0
      %734 = vmatprep.subr.mxu0 0.0
      %735 = vmatpush1.msra.mxu0 0.0
      %736 = vmatprep.subr.mxu0 0.0
      %737 = vmatpush1.msra.mxu0 0.0
      %738 = vmatprep.subr.mxu0 0.0
      %739 = vmatpush1.msra.mxu0 0.0
      %740 = vmatprep.subr.mxu0 0.0
      %741 = vmatpush1.msra.mxu0 0.0
      %742 = vmatprep.subr.mxu0 0.0
      %743 = vmatpush1.msra.mxu0 0.0
      %744 = vmatprep.subr.mxu0 0.0
      %745 = vmatpush1.msra.mxu0 0.0
      %746 = vmatprep.subr.mxu0 0.0
      %747 = vmatpush1.msra.mxu0 0.0
      %748 = vmatprep.subr.mxu0 0.0
      %749 = vmatpush1.msra.mxu0 0.0
      %750 = vmatprep.subr.mxu0 0.0
      %751 = vmatpush1.msra.mxu0 0.0
      %752 = vmatprep.subr.mxu0 0.0
      %753 = vmatpush1.msra.mxu0 0.0
      %754 = vmatprep.mubr.f32.mxu0 0.0
      %755 = vmatmul.mubr.f32.gmra.mrb[0].mxu0 %v667
      %v756 = vpop.f32.mrb[0].mxu0
      %v757 = vadd.f32 %v663, %v756
      %v758 = vpop.f32.mrb[0].mxu0
      %759 = vmatprep.mubr.f32.mxu0 0.0
      %760 = vmatmul.mubr.f32.gmra.mrb[0].mxu0 %v670
      %v761 = vpop.f32.mrb[0].mxu0
      %v762 = vadd.f32 %v663, %v761
      %v763 = vpop.f32.mrb[0].mxu0
      %764 = vmatprep.mubr.f32.mxu0 0.0
      %765 = vmatmul.mubr.f32.gmra.mrb[0].mxu0 %v673
      %v766 = vpop.f32.mrb[0].mxu0
      %v767 = vadd.f32 %v663, %v766
      %v768 = vpop.f32.mrb[0].mxu0
      %769 = vmatprep.mubr.f32.mxu0 0.0
      %770 = vmatmul.mubr.f32.gmra.mrb[0].mxu0 %v676
      %v771 = vpop.f32.mrb[0].mxu0
      %v772 = vadd.f32 %v663, %v771
      %v773 = vpop.f32.mrb[0].mxu0
      %774 = vmatprep.mubr.f32.mxu0 0.0
      %775 = vmatmul.mubr.f32.gmra.mrb[0].mxu0 %v679
      %v776 = vpop.f32.mrb[0].mxu0
      %v777 = vadd.f32 %v663, %v776
      %v778 = vpop.f32.mrb[0].mxu0
      %779 = vmatprep.mubr.f32.mxu0 0.0
      %780 = vmatmul.mubr.f32.gmra.mrb[0].mxu0 %v682
      %v781 = vpop.f32.mrb[0].mxu0
      %v782 = vadd.f32 %v663, %v781
      %v783 = vpop.f32.mrb[0].mxu0
      %784 = vmatprep.mubr.f32.mxu0 0.0
      %785 = vmatmul.mubr.f32.gmra.mrb[0].mxu0 %v685
      %v786 = vpop.f32.mrb[0].mxu0
      %v787 = vadd.f32 %v663, %v786
      %v788 = vpop.f32.mrb[0].mxu0
      %789 = vmatprep.mubr.f32.mxu0 0.0
      %790 = vmatmul.mubr.f32.gmra.mrb[0].mxu0 %v688
      %v791 = vpop.f32.mrb[0].mxu0
      %v792 = vadd.f32 %v663, %v791
      %v793 = vpop.f32.mrb[0].mxu0
      %794 = vdwg.mxu0
      %v795 = vld [vmem:[%s590] sm:$0xff]
      %v796 = vld [vmem:[%s590 + $0x8] sm:$0xff]
      %v797 = vld [vmem:[%s590 + $0x10] sm:$0xff]
      %v798 = vld [vmem:[%s590 + $0x18] sm:$0xff]
      %v799 = vld [vmem:[%s593] sm:$0x1]
      %v801 = vlaneseq
      %v802 = vshrl.u32 %v801, 7
      %v803 = vsub.s32 0, %v802
      %v804 = vrot.slane %v799, %v803
      %v806 = vadd.f32 %v644, %v804
      %v807 = vadd.f32 %v645, %v804
      %v808 = vadd.f32 %v646, %v804
      %v809 = vadd.f32 %v647, %v804
      %v810 = vadd.f32 %v648, %v804
      %v811 = vadd.f32 %v649, %v804
      %v812 = vadd.f32 %v650, %v804
      %v813 = vadd.f32 %v651, %v804
      %822 = vrot.lane.b32.xlu0 %v757, 96
      %v823 = vpop.permute.xlu0 %822
      %824 = vrot.lane.b32.xlu0 %v762, 96
      %v825 = vpop.permute.xlu0 %824
      %826 = vrot.lane.b32.xlu0 %v767, 96
      %v827 = vpop.permute.xlu0 %826
      %828 = vrot.lane.b32.xlu0 %v772, 96
      %v829 = vpop.permute.xlu0 %828
      %830 = vrot.lane.b32.xlu0 %v777, 96
      %v831 = vpop.permute.xlu0 %830
      %832 = vrot.lane.b32.xlu0 %v782, 96
      %v833 = vpop.permute.xlu0 %832
      %834 = vrot.lane.b32.xlu0 %v787, 96
      %v835 = vpop.permute.xlu0 %834
      %836 = vrot.lane.b32.xlu0 %v792, 96
      %v837 = vpop.permute.xlu0 %836
      %vm838 = vcmask 64512
      %v839 = vsel %vm838, %v757, 0
      %v841 = vsel %vm838, %v762, 0
      %v843 = vsel %vm838, %v767, 0
      %v845 = vsel %vm838, %v772, 0
      %v847 = vsel %vm838, %v777, 0
      %v849 = vsel %vm838, %v782, 0
      %v851 = vsel %vm838, %v787, 0
      %v853 = vsel %vm838, %v792, 0
      %v855 = vsel %vm838, %v823, 0
      %v857 = vsel %vm838, %v825, 0
      %v859 = vsel %vm838, %v827, 0
      %v861 = vsel %vm838, %v829, 0
      %v863 = vsel %vm838, %v831, 0
      %v865 = vsel %vm838, %v833, 0
      %v867 = vsel %vm838, %v835, 0
      %v869 = vsel %vm838, %v837, 0
      %871 = vmatprep.subr.mxu0 0.0
      %872 = vmatpush1.xpose.msra.mxu0 %v855
      %873 = vmatprep.subr.mxu0 0.0
      %874 = vmatpush1.xpose.msra.mxu0 %v857
      %875 = vmatprep.subr.mxu0 0.0
      %876 = vmatpush1.xpose.msra.mxu0 %v859
      %877 = vmatprep.subr.mxu0 0.0
      %878 = vmatpush1.xpose.msra.mxu0 %v861
      %879 = vmatprep.subr.mxu0 0.0
      %880 = vmatpush1.xpose.msra.mxu0 %v863
      %881 = vmatprep.subr.mxu0 0.0
      %882 = vmatpush1.xpose.msra.mxu0 %v865
      %883 = vmatprep.subr.mxu0 0.0
      %884 = vmatpush1.xpose.msra.mxu0 %v867
      %885 = vmatprep.subr.mxu0 0.0
      %886 = vmatpush1.xpose.msra.mxu0 %v869
      %887 = vmatprep.subr.mxu0 0.0
      %888 = vmatpush1.xpose.msra.mxu0 0.0
      %889 = vmatprep.subr.mxu0 0.0
      %890 = vmatpush1.xpose.msra.mxu0 0.0
      %891 = vmatprep.subr.mxu0 0.0
      %892 = vmatpush1.xpose.msra.mxu0 0.0
      %893 = vmatprep.subr.mxu0 0.0
      %894 = vmatpush1.xpose.msra.mxu0 0.0
      %895 = vmatprep.subr.mxu0 0.0
      %896 = vmatpush1.xpose.msra.mxu0 0.0
      %897 = vmatprep.subr.mxu0 0.0
      %898 = vmatpush1.xpose.msra.mxu0 0.0
      %899 = vmatprep.subr.mxu0 0.0
      %900 = vmatpush1.xpose.msra.mxu0 0.0
      %901 = vmatprep.subr.mxu0 0.0
      %902 = vmatpush1.xpose.msra.mxu0 0.0
      %903 = vmatprep.subr.mxu0 0.0
      %904 = vmatpush1.xpose.msra.mxu0 0.0
      %905 = vmatprep.subr.mxu0 0.0
      %906 = vmatpush1.xpose.msra.mxu0 0.0
      %907 = vmatprep.subr.mxu0 0.0
      %908 = vmatpush1.xpose.msra.mxu0 0.0
      %909 = vmatprep.subr.mxu0 0.0
      %910 = vmatpush1.xpose.msra.mxu0 0.0
      %911 = vmatprep.subr.mxu0 0.0
      %912 = vmatpush1.xpose.msra.mxu0 0.0
      %913 = vmatprep.subr.mxu0 0.0
      %914 = vmatpush1.xpose.msra.mxu0 0.0
      %915 = vmatprep.subr.mxu0 0.0
      %916 = vmatpush1.xpose.msra.mxu0 0.0
      %917 = vmatprep.subr.mxu0 0.0
      %918 = vmatpush1.xpose.msra.mxu0 0.0
      %919 = vmatprep.subr.mxu0 0.0
      %920 = vmatpush1.xpose.msra.mxu0 0.0
      %921 = vmatprep.subr.mxu0 0.0
      %922 = vmatpush1.xpose.msra.mxu0 0.0
      %923 = vmatprep.subr.mxu0 0.0
      %924 = vmatpush1.xpose.msra.mxu0 0.0
      %925 = vmatprep.subr.mxu0 0.0
      %926 = vmatpush1.xpose.msra.mxu0 0.0
      %927 = vmatprep.subr.mxu0 0.0
      %928 = vmatpush1.xpose.msra.mxu0 0.0
      %929 = vmatprep.subr.mxu0 0.0
      %930 = vmatpush1.xpose.msra.mxu0 0.0
      %931 = vmatprep.subr.mxu0 0.0
      %932 = vmatpush1.xpose.msra.mxu0 0.0
      %933 = vmatprep.subr.mxu0 0.0
      %934 = vmatpush1.xpose.msra.mxu0 0.0
      %935 = vmatprep.mubr.f32.mxu0 0.0
      %936 = vmatmul.mubr.f32.gmra.mrb[0].mxu0 %v839
      %v937 = vpop.f32.mrb[0].mxu0
      %v938 = vadd.f32 0.0, %v937
      %v939 = vpop.f32.mrb[0].mxu0
      %940 = vmatprep.mubr.f32.mxu0 0.0
      %941 = vmatmul.mubr.f32.gmra.mrb[0].mxu0 %v841
      %v942 = vpop.f32.mrb[0].mxu0
      %v943 = vadd.f32 0.0, %v942
      %v944 = vpop.f32.mrb[0].mxu0
      %945 = vmatprep.mubr.f32.mxu0 0.0
      %946 = vmatmul.mubr.f32.gmra.mrb[0].mxu0 %v843
      %v947 = vpop.f32.mrb[0].mxu0
      %v948 = vadd.f32 0.0, %v947
      %v949 = vpop.f32.mrb[0].mxu0
      %950 = vmatprep.mubr.f32.mxu0 0.0
      %951 = vmatmul.mubr.f32.gmra.mrb[0].mxu0 %v845
      %v952 = vpop.f32.mrb[0].mxu0
      %v953 = vadd.f32 0.0, %v952
      %v954 = vpop.f32.mrb[0].mxu0
      %955 = vmatprep.mubr.f32.mxu0 0.0
      %956 = vmatmul.mubr.f32.gmra.mrb[0].mxu0 %v847
      %v957 = vpop.f32.mrb[0].mxu0
      %v958 = vadd.f32 0.0, %v957
      %v959 = vpop.f32.mrb[0].mxu0
      %960 = vmatprep.mubr.f32.mxu0 0.0
      %961 = vmatmul.mubr.f32.gmra.mrb[0].mxu0 %v849
      %v962 = vpop.f32.mrb[0].mxu0
      %v963 = vadd.f32 0.0, %v962
      %v964 = vpop.f32.mrb[0].mxu0
      %965 = vmatprep.mubr.f32.mxu0 0.0
      %966 = vmatmul.mubr.f32.gmra.mrb[0].mxu0 %v851
      %v967 = vpop.f32.mrb[0].mxu0
      %v968 = vadd.f32 0.0, %v967
      %v969 = vpop.f32.mrb[0].mxu0
      %970 = vmatprep.mubr.f32.mxu0 0.0
      %971 = vmatmul.mubr.f32.gmra.mrb[0].mxu0 %v853
      %v972 = vpop.f32.mrb[0].mxu0
      %v973 = vadd.f32 0.0, %v972
      %v974 = vpop.f32.mrb[0].mxu0
      %975 = vdwg.mxu0
      %vm976 = vcmask 523264
      %v977 = vsel %vm976, %v938, -inf
      %978 = vmax.xlane.f32.xlu0 %v977
      %v979 = vpop.xlane.xlu0 %978
      %v980 = vsel %vm976, %v943, -inf
      %981 = vmax.xlane.f32.xlu0 %v980
      %v982 = vpop.xlane.xlu0 %981
      %v983 = vsel %vm976, %v948, -inf
      %984 = vmax.xlane.f32.xlu0 %v983
      %v985 = vpop.xlane.xlu0 %984
      %v986 = vsel %vm976, %v953, -inf
      %987 = vmax.xlane.f32.xlu0 %v986
      %v988 = vpop.xlane.xlu0 %987
      %v989 = vsel %vm976, %v958, -inf
      %990 = vmax.xlane.f32.xlu0 %v989
      %v991 = vpop.xlane.xlu0 %990
      %v992 = vsel %vm976, %v963, -inf
      %993 = vmax.xlane.f32.xlu0 %v992
      %v994 = vpop.xlane.xlu0 %993
      %v995 = vsel %vm976, %v968, -inf
      %996 = vmax.xlane.f32.xlu0 %v995
      %v997 = vpop.xlane.xlu0 %996
      %v998 = vsel %vm976, %v973, -inf
      %999 = vmax.xlane.f32.xlu0 %v998
      %v1000 = vpop.xlane.xlu0 %999
      %v1001 = vsub.f32 %v938, %v979
      %v1002 = vsub.f32 %v943, %v982
      %v1003 = vsub.f32 %v948, %v985
      %v1004 = vsub.f32 %v953, %v988
      %v1005 = vsub.f32 %v958, %v991
      %v1006 = vsub.f32 %v963, %v994
      %v1007 = vsub.f32 %v968, %v997
      %v1008 = vsub.f32 %v973, %v1000
      %v1009 = vmul.f32 %v1001, 1.442695
      %v1010 = vpow.pop %v1009
      %v1011 = vmul.f32 %v1002, 1.442695
      %v1012 = vpow.pop %v1011
      %v1013 = vmul.f32 %v1003, 1.442695
      %v1014 = vpow.pop %v1013
      %v1015 = vmul.f32 %v1004, 1.442695
      %v1016 = vpow.pop %v1015
      %v1017 = vmul.f32 %v1005, 1.442695
      %v1018 = vpow.pop %v1017
      %v1019 = vmul.f32 %v1006, 1.442695
      %v1020 = vpow.pop %v1019
      %v1021 = vmul.f32 %v1007, 1.442695
      %v1022 = vpow.pop %v1021
      %v1023 = vmul.f32 %v1008, 1.442695
      %v1024 = vpow.pop %v1023
      %v1025 = vsel %vm976, %v1010, 0.0
      %1026 = vadd.xlane.f32.xlu0 %v1025
      %v1027 = vpop.xlane.xlu0 %1026
      %v1028 = vsel %vm976, %v1012, 0.0
      %1029 = vadd.xlane.f32.xlu0 %v1028
      %v1030 = vpop.xlane.xlu0 %1029
      %v1031 = vsel %vm976, %v1014, 0.0
      %1032 = vadd.xlane.f32.xlu0 %v1031
      %v1033 = vpop.xlane.xlu0 %1032
      %v1034 = vsel %vm976, %v1016, 0.0
      %1035 = vadd.xlane.f32.xlu0 %v1034
      %v1036 = vpop.xlane.xlu0 %1035
      %v1037 = vsel %vm976, %v1018, 0.0
      %1038 = vadd.xlane.f32.xlu0 %v1037
      %v1039 = vpop.xlane.xlu0 %1038
      %v1040 = vsel %vm976, %v1020, 0.0
      %1041 = vadd.xlane.f32.xlu0 %v1040
      %v1042 = vpop.xlane.xlu0 %1041
      %v1043 = vsel %vm976, %v1022, 0.0
      %1044 = vadd.xlane.f32.xlu0 %v1043
      %v1045 = vpop.xlane.xlu0 %1044
      %v1046 = vsel %vm976, %v1024, 0.0
      %1047 = vadd.xlane.f32.xlu0 %v1046
      %v1048 = vpop.xlane.xlu0 %1047
      %v1049 = vrcp.pop %v1027
      %v1050 = vrcp.pop %v1030
      %v1051 = vrcp.pop %v1033
      %v1052 = vrcp.pop %v1036
      %v1053 = vrcp.pop %v1039
      %v1054 = vrcp.pop %v1042
      %v1055 = vrcp.pop %v1045
      %v1056 = vrcp.pop %v1048
      %v1057 = vmul.f32 %v1010, %v1049
      %v1058 = vmul.f32 %v1012, %v1050
      %v1059 = vmul.f32 %v1014, %v1051
      %v1060 = vmul.f32 %v1016, %v1052
      %v1061 = vmul.f32 %v1018, %v1053
      %v1062 = vmul.f32 %v1020, %v1054
      %v1063 = vmul.f32 %v1022, %v1055
      %v1064 = vmul.f32 %v1024, %v1056
      %1065 = vrot.lane.b32.xlu0 %v757, 64
      %v1066 = vpop.permute.xlu0 %1065
      %1067 = vrot.lane.b32.xlu0 %v762, 64
      %v1068 = vpop.permute.xlu0 %1067
      %1069 = vrot.lane.b32.xlu0 %v767, 64
      %v1070 = vpop.permute.xlu0 %1069
      %1071 = vrot.lane.b32.xlu0 %v772, 64
      %v1072 = vpop.permute.xlu0 %1071
      %1073 = vrot.lane.b32.xlu0 %v777, 64
      %v1074 = vpop.permute.xlu0 %1073
      %1075 = vrot.lane.b32.xlu0 %v782, 64
      %v1076 = vpop.permute.xlu0 %1075
      %1077 = vrot.lane.b32.xlu0 %v787, 64
      %v1078 = vpop.permute.xlu0 %1077
      %1079 = vrot.lane.b32.xlu0 %v792, 64
      %v1080 = vpop.permute.xlu0 %1079
      %v1090 = vsel %vm976, %v1057, 0
      %v1093 = vsel %vm976, %v1058, 0
      %v1096 = vsel %vm976, %v1059, 0
      %v1099 = vsel %vm976, %v1060, 0
      %v1102 = vsel %vm976, %v1061, 0
      %v1105 = vsel %vm976, %v1062, 0
      %v1108 = vsel %vm976, %v1063, 0
      %v1111 = vsel %vm976, %v1064, 0
      %1113 = vmatprep.subr.mxu0 0.0
      %1114 = vmatpush1.msra.mxu0 %v1066
      %1115 = vmatprep.subr.mxu0 0.0
      %1116 = vmatpush1.msra.mxu0 %v1068
      %1117 = vmatprep.subr.mxu0 0.0
      %1118 = vmatpush1.msra.mxu0 %v1070
      %1119 = vmatprep.subr.mxu0 0.0
      %1120 = vmatpush1.msra.mxu0 %v1072
      %1121 = vmatprep.subr.mxu0 0.0
      %1122 = vmatpush1.msra.mxu0 %v1074
      %1123 = vmatprep.subr.mxu0 0.0
      %1124 = vmatpush1.msra.mxu0 %v1076
      %1125 = vmatprep.subr.mxu0 0.0
      %1126 = vmatpush1.msra.mxu0 %v1078
      %1127 = vmatprep.subr.mxu0 0.0
      %1128 = vmatpush1.msra.mxu0 %v1080
      %1129 = vmatprep.subr.mxu0 0.0
      %1130 = vmatpush1.msra.mxu0 0.0
      %1131 = vmatprep.subr.mxu0 0.0
      %1132 = vmatpush1.msra.mxu0 0.0
      %1133 = vmatprep.subr.mxu0 0.0
      %1134 = vmatpush1.msra.mxu0 0.0
      %1135 = vmatprep.subr.mxu0 0.0
      %1136 = vmatpush1.msra.mxu0 0.0
      %1137 = vmatprep.subr.mxu0 0.0
      %1138 = vmatpush1.msra.mxu0 0.0
      %1139 = vmatprep.subr.mxu0 0.0
      %1140 = vmatpush1.msra.mxu0 0.0
      %1141 = vmatprep.subr.mxu0 0.0
      %1142 = vmatpush1.msra.mxu0 0.0
      %1143 = vmatprep.subr.mxu0 0.0
      %1144 = vmatpush1.msra.mxu0 0.0
      %1145 = vmatprep.subr.mxu0 0.0
      %1146 = vmatpush1.msra.mxu0 0.0
      %1147 = vmatprep.subr.mxu0 0.0
      %1148 = vmatpush1.msra.mxu0 0.0
      %1149 = vmatprep.subr.mxu0 0.0
      %1150 = vmatpush1.msra.mxu0 0.0
      %1151 = vmatprep.subr.mxu0 0.0
      %1152 = vmatpush1.msra.mxu0 0.0
      %1153 = vmatprep.subr.mxu0 0.0
      %1154 = vmatpush1.msra.mxu0 0.0
      %1155 = vmatprep.subr.mxu0 0.0
      %1156 = vmatpush1.msra.mxu0 0.0
      %1157 = vmatprep.subr.mxu0 0.0
      %1158 = vmatpush1.msra.mxu0 0.0
      %1159 = vmatprep.subr.mxu0 0.0
      %1160 = vmatpush1.msra.mxu0 0.0
      %1161 = vmatprep.subr.mxu0 0.0
      %1162 = vmatpush1.msra.mxu0 0.0
      %1163 = vmatprep.subr.mxu0 0.0
      %1164 = vmatpush1.msra.mxu0 0.0
      %1165 = vmatprep.subr.mxu0 0.0
      %1166 = vmatpush1.msra.mxu0 0.0
      %1167 = vmatprep.subr.mxu0 0.0
      %1168 = vmatpush1.msra.mxu0 0.0
      %1169 = vmatprep.subr.mxu0 0.0
      %1170 = vmatpush1.msra.mxu0 0.0
      %1171 = vmatprep.subr.mxu0 0.0
      %1172 = vmatpush1.msra.mxu0 0.0
      %1173 = vmatprep.subr.mxu0 0.0
      %1174 = vmatpush1.msra.mxu0 0.0
      %1175 = vmatprep.subr.mxu0 0.0
      %1176 = vmatpush1.msra.mxu0 0.0
      %1177 = vmatprep.mubr.f32.mxu0 0.0
      %1178 = vmatmul.mubr.f32.gmra.mrb[0].mxu0 %v1090
      %v1179 = vpop.f32.mrb[0].mxu0
      %v1180 = vadd.f32 0.0, %v1179
      %v1181 = vpop.f32.mrb[0].mxu0
      %1182 = vmatprep.mubr.f32.mxu0 0.0
      %1183 = vmatmul.mubr.f32.gmra.mrb[0].mxu0 %v1093
      %v1184 = vpop.f32.mrb[0].mxu0
      %v1185 = vadd.f32 0.0, %v1184
      %v1186 = vpop.f32.mrb[0].mxu0
      %1187 = vmatprep.mubr.f32.mxu0 0.0
      %1188 = vmatmul.mubr.f32.gmra.mrb[0].mxu0 %v1096
      %v1189 = vpop.f32.mrb[0].mxu0
      %v1190 = vadd.f32 0.0, %v1189
      %v1191 = vpop.f32.mrb[0].mxu0
      %1192 = vmatprep.mubr.f32.mxu0 0.0
      %1193 = vmatmul.mubr.f32.gmra.mrb[0].mxu0 %v1099
      %v1194 = vpop.f32.mrb[0].mxu0
      %v1195 = vadd.f32 0.0, %v1194
      %v1196 = vpop.f32.mrb[0].mxu0
      %1197 = vmatprep.mubr.f32.mxu0 0.0
      %1198 = vmatmul.mubr.f32.gmra.mrb[0].mxu0 %v1102
      %v1199 = vpop.f32.mrb[0].mxu0
      %v1200 = vadd.f32 0.0, %v1199
      %v1201 = vpop.f32.mrb[0].mxu0
      %1202 = vmatprep.mubr.f32.mxu0 0.0
      %1203 = vmatmul.mubr.f32.gmra.mrb[0].mxu0 %v1105
      %v1204 = vpop.f32.mrb[0].mxu0
      %v1205 = vadd.f32 0.0, %v1204
      %v1206 = vpop.f32.mrb[0].mxu0
      %1207 = vmatprep.mubr.f32.mxu0 0.0
      %1208 = vmatmul.mubr.f32.gmra.mrb[0].mxu0 %v1108
      %v1209 = vpop.f32.mrb[0].mxu0
      %v1210 = vadd.f32 0.0, %v1209
      %v1211 = vpop.f32.mrb[0].mxu0
      %1212 = vmatprep.mubr.f32.mxu0 0.0
      %1213 = vmatmul.mubr.f32.gmra.mrb[0].mxu0 %v1111
      %v1214 = vpop.f32.mrb[0].mxu0
      %v1215 = vadd.f32 0.0, %v1214
      %v1216 = vpop.f32.mrb[0].mxu0
      %1217 = vdwg.mxu0
      %v1219 = vsel %vm838, %v1180, 0
      %v1222 = vsel %vm838, %v1185, 0
      %v1225 = vsel %vm838, %v1190, 0
      %v1228 = vsel %vm838, %v1195, 0
      %v1231 = vsel %vm838, %v1200, 0
      %v1234 = vsel %vm838, %v1205, 0
      %v1237 = vsel %vm838, %v1210, 0
      %v1240 = vsel %vm838, %v1215, 0
      %1242 = vmatprep.subr.mxu0 0.0
      %1243 = vmatpush1.msra.mxu0 %v795
      %1244 = vmatprep.subr.mxu0 0.0
      %1245 = vmatpush1.msra.mxu0 0.0
      %1246 = vmatprep.subr.mxu0 0.0
      %1247 = vmatpush1.msra.mxu0 0.0
      %1248 = vmatprep.subr.mxu0 0.0
      %1249 = vmatpush1.msra.mxu0 0.0
      %1250 = vmatprep.subr.mxu0 0.0
      %1251 = vmatpush1.msra.mxu0 0.0
      %1252 = vmatprep.subr.mxu0 0.0
      %1253 = vmatpush1.msra.mxu0 0.0
      %1254 = vmatprep.subr.mxu0 0.0
      %1255 = vmatpush1.msra.mxu0 0.0
      %1256 = vmatprep.subr.mxu0 0.0
      %1257 = vmatpush1.msra.mxu0 0.0
      %1258 = vmatprep.subr.mxu0 0.0
      %1259 = vmatpush1.msra.mxu0 0.0
      %1260 = vmatprep.subr.mxu0 0.0
      %1261 = vmatpush1.msra.mxu0 0.0
      %1262 = vmatprep.subr.mxu0 0.0
      %1263 = vmatpush1.msra.mxu0 0.0
      %1264 = vmatprep.subr.mxu0 0.0
      %1265 = vmatpush1.msra.mxu0 0.0
      %1266 = vmatprep.subr.mxu0 0.0
      %1267 = vmatpush1.msra.mxu0 0.0
      %1268 = vmatprep.subr.mxu0 0.0
      %1269 = vmatpush1.msra.mxu0 0.0
      %1270 = vmatprep.subr.mxu0 0.0
      %1271 = vmatpush1.msra.mxu0 0.0
      %1272 = vmatprep.subr.mxu0 0.0
      %1273 = vmatpush1.msra.mxu0 0.0
      %1274 = vmatprep.subr.mxu0 0.0
      %1275 = vmatpush1.msra.mxu0 0.0
      %1276 = vmatprep.subr.mxu0 0.0
      %1277 = vmatpush1.msra.mxu0 0.0
      %1278 = vmatprep.subr.mxu0 0.0
      %1279 = vmatpush1.msra.mxu0 0.0
      %1280 = vmatprep.subr.mxu0 0.0
      %1281 = vmatpush1.msra.mxu0 0.0
      %1282 = vmatprep.subr.mxu0 0.0
      %1283 = vmatpush1.msra.mxu0 0.0
      %1284 = vmatprep.subr.mxu0 0.0
      %1285 = vmatpush1.msra.mxu0 0.0
      %1286 = vmatprep.subr.mxu0 0.0
      %1287 = vmatpush1.msra.mxu0 0.0
      %1288 = vmatprep.subr.mxu0 0.0
      %1289 = vmatpush1.msra.mxu0 0.0
      %1290 = vmatprep.subr.mxu0 0.0
      %1291 = vmatpush1.msra.mxu0 0.0
      %1292 = vmatprep.subr.mxu0 0.0
      %1293 = vmatpush1.msra.mxu0 0.0
      %1294 = vmatprep.subr.mxu0 0.0
      %1295 = vmatpush1.msra.mxu0 0.0
      %1296 = vmatprep.subr.mxu0 0.0
      %1297 = vmatpush1.msra.mxu0 0.0
      %1298 = vmatprep.subr.mxu0 0.0
      %1299 = vmatpush1.msra.mxu0 0.0
      %1300 = vmatprep.subr.mxu0 0.0
      %1301 = vmatpush1.msra.mxu0 0.0
      %1302 = vmatprep.subr.mxu0 0.0
      %1303 = vmatpush1.msra.mxu0 0.0
      %1304 = vmatprep.subr.mxu0 0.0
      %1305 = vmatpush1.msra.mxu0 0.0
      %1306 = vmatprep.mubr.f32.mxu0 0.0
      %1307 = vmatmul.mubr.f32.gmra.mrb[0].mxu0 %v1219
      %v1308 = vpop.f32.mrb[0].mxu0
      %v1309 = vadd.f32 0.0, %v1308
      %v1310 = vpop.f32.mrb[0].mxu0
      %1311 = vmatprep.mubr.f32.mxu0 0.0
      %1312 = vmatmul.mubr.f32.gmra.mrb[0].mxu0 %v1222
      %v1313 = vpop.f32.mrb[0].mxu0
      %v1314 = vadd.f32 0.0, %v1313
      %v1315 = vpop.f32.mrb[0].mxu0
      %1316 = vmatprep.mubr.f32.mxu0 0.0
      %1317 = vmatmul.mubr.f32.gmra.mrb[0].mxu0 %v1225
      %v1318 = vpop.f32.mrb[0].mxu0
      %v1319 = vadd.f32 0.0, %v1318
      %v1320 = vpop.f32.mrb[0].mxu0
      %1321 = vmatprep.mubr.f32.mxu0 0.0
      %1322 = vmatmul.mubr.f32.gmra.mrb[0].mxu0 %v1228
      %v1323 = vpop.f32.mrb[0].mxu0
      %v1324 = vadd.f32 0.0, %v1323
      %v1325 = vpop.f32.mrb[0].mxu0
      %1326 = vmatprep.mubr.f32.mxu0 0.0
      %1327 = vmatmul.mubr.f32.gmra.mrb[0].mxu0 %v1231
      %v1328 = vpop.f32.mrb[0].mxu0
      %v1329 = vadd.f32 0.0, %v1328
      %v1330 = vpop.f32.mrb[0].mxu0
      %1331 = vmatprep.mubr.f32.mxu0 0.0
      %1332 = vmatmul.mubr.f32.gmra.mrb[0].mxu0 %v1234
      %v1333 = vpop.f32.mrb[0].mxu0
      %v1334 = vadd.f32 0.0, %v1333
      %v1335 = vpop.f32.mrb[0].mxu0
      %1336 = vmatprep.mubr.f32.mxu0 0.0
      %1337 = vmatmul.mubr.f32.gmra.mrb[0].mxu0 %v1237
      %v1338 = vpop.f32.mrb[0].mxu0
      %v1339 = vadd.f32 0.0, %v1338
      %v1340 = vpop.f32.mrb[0].mxu0
      %1341 = vmatprep.mubr.f32.mxu0 0.0
      %1342 = vmatmul.mubr.f32.gmra.mrb[0].mxu0 %v1240
      %v1343 = vpop.f32.mrb[0].mxu0
      %v1344 = vadd.f32 0.0, %v1343
      %v1345 = vpop.f32.mrb[0].mxu0
      %1346 = vdwg.mxu0
      %v1347 = vadd.f32 %v806, %v1309
      %v1348 = vadd.f32 %v807, %v1314
      %v1349 = vadd.f32 %v808, %v1319
      %v1350 = vadd.f32 %v809, %v1324
      %v1351 = vadd.f32 %v810, %v1329
      %v1352 = vadd.f32 %v811, %v1334
      %v1353 = vadd.f32 %v812, %v1339
      %v1354 = vadd.f32 %v813, %v1344
      %1355 = vrot.lane.b32.xlu0 %v757, 120
      %v1356 = vpop.permute.xlu0 %1355
      %1357 = vrot.lane.b32.xlu0 %v762, 120
      %v1358 = vpop.permute.xlu0 %1357
      %1359 = vrot.lane.b32.xlu0 %v767, 120
      %v1360 = vpop.permute.xlu0 %1359
      %1361 = vrot.lane.b32.xlu0 %v772, 120
      %v1362 = vpop.permute.xlu0 %1361
      %1363 = vrot.lane.b32.xlu0 %v777, 120
      %v1364 = vpop.permute.xlu0 %1363
      %1365 = vrot.lane.b32.xlu0 %v782, 120
      %v1366 = vpop.permute.xlu0 %1365
      %1367 = vrot.lane.b32.xlu0 %v787, 120
      %v1368 = vpop.permute.xlu0 %1367
      %1369 = vrot.lane.b32.xlu0 %v792, 120
      %v1370 = vpop.permute.xlu0 %1369
      %1371 = vrot.lane.b32.xlu0 %v757, 88
      %v1372 = vpop.permute.xlu0 %1371
      %1373 = vrot.lane.b32.xlu0 %v762, 88
      %v1374 = vpop.permute.xlu0 %1373
      %1375 = vrot.lane.b32.xlu0 %v767, 88
      %v1376 = vpop.permute.xlu0 %1375
      %1377 = vrot.lane.b32.xlu0 %v772, 88
      %v1378 = vpop.permute.xlu0 %1377
      %1379 = vrot.lane.b32.xlu0 %v777, 88
      %v1380 = vpop.permute.xlu0 %1379
      %1381 = vrot.lane.b32.xlu0 %v782, 88
      %v1382 = vpop.permute.xlu0 %1381
      %1383 = vrot.lane.b32.xlu0 %v787, 88
      %v1384 = vpop.permute.xlu0 %1383
      %1385 = vrot.lane.b32.xlu0 %v792, 88
      %v1386 = vpop.permute.xlu0 %1385
      %v1387 = vsel %vm838, %v1356, 0
      %v1389 = vsel %vm838, %v1358, 0
      %v1391 = vsel %vm838, %v1360, 0
      %v1393 = vsel %vm838, %v1362, 0
      %v1395 = vsel %vm838, %v1364, 0
      %v1397 = vsel %vm838, %v1366, 0
      %v1399 = vsel %vm838, %v1368, 0
      %v1401 = vsel %vm838, %v1370, 0
      %v1403 = vsel %vm838, %v1372, 0
      %v1405 = vsel %vm838, %v1374, 0
      %v1407 = vsel %vm838, %v1376, 0
      %v1409 = vsel %vm838, %v1378, 0
      %v1411 = vsel %vm838, %v1380, 0
      %v1413 = vsel %vm838, %v1382, 0
      %v1415 = vsel %vm838, %v1384, 0
      %v1417 = vsel %vm838, %v1386, 0
      %1419 = vmatprep.subr.mxu0 0.0
      %1420 = vmatpush1.xpose.msra.mxu0 %v1403
      %1421 = vmatprep.subr.mxu0 0.0
      %1422 = vmatpush1.xpose.msra.mxu0 %v1405
      %1423 = vmatprep.subr.mxu0 0.0
      %1424 = vmatpush1.xpose.msra.mxu0 %v1407
      %1425 = vmatprep.subr.mxu0 0.0
      %1426 = vmatpush1.xpose.msra.mxu0 %v1409
      %1427 = vmatprep.subr.mxu0 0.0
      %1428 = vmatpush1.xpose.msra.mxu0 %v1411
      %1429 = vmatprep.subr.mxu0 0.0
      %1430 = vmatpush1.xpose.msra.mxu0 %v1413
      %1431 = vmatprep.subr.mxu0 0.0
      %1432 = vmatpush1.xpose.msra.mxu0 %v1415
      %1433 = vmatprep.subr.mxu0 0.0
      %1434 = vmatpush1.xpose.msra.mxu0 %v1417
      %1435 = vmatprep.subr.mxu0 0.0
      %1436 = vmatpush1.xpose.msra.mxu0 0.0
      %1437 = vmatprep.subr.mxu0 0.0
      %1438 = vmatpush1.xpose.msra.mxu0 0.0
      %1439 = vmatprep.subr.mxu0 0.0
      %1440 = vmatpush1.xpose.msra.mxu0 0.0
      %1441 = vmatprep.subr.mxu0 0.0
      %1442 = vmatpush1.xpose.msra.mxu0 0.0
      %1443 = vmatprep.subr.mxu0 0.0
      %1444 = vmatpush1.xpose.msra.mxu0 0.0
      %1445 = vmatprep.subr.mxu0 0.0
      %1446 = vmatpush1.xpose.msra.mxu0 0.0
      %1447 = vmatprep.subr.mxu0 0.0
      %1448 = vmatpush1.xpose.msra.mxu0 0.0
      %1449 = vmatprep.subr.mxu0 0.0
      %1450 = vmatpush1.xpose.msra.mxu0 0.0
      %1451 = vmatprep.subr.mxu0 0.0
      %1452 = vmatpush1.xpose.msra.mxu0 0.0
      %1453 = vmatprep.subr.mxu0 0.0
      %1454 = vmatpush1.xpose.msra.mxu0 0.0
      %1455 = vmatprep.subr.mxu0 0.0
      %1456 = vmatpush1.xpose.msra.mxu0 0.0
      %1457 = vmatprep.subr.mxu0 0.0
      %1458 = vmatpush1.xpose.msra.mxu0 0.0
      %1459 = vmatprep.subr.mxu0 0.0
      %1460 = vmatpush1.xpose.msra.mxu0 0.0
      %1461 = vmatprep.subr.mxu0 0.0
      %1462 = vmatpush1.xpose.msra.mxu0 0.0
      %1463 = vmatprep.subr.mxu0 0.0
      %1464 = vmatpush1.xpose.msra.mxu0 0.0
      %1465 = vmatprep.subr.mxu0 0.0
      %1466 = vmatpush1.xpose.msra.mxu0 0.0
      %1467 = vmatprep.subr.mxu0 0.0
      %1468 = vmatpush1.xpose.msra.mxu0 0.0
      %1469 = vmatprep.subr.mxu0 0.0
      %1470 = vmatpush1.xpose.msra.mxu0 0.0
      %1471 = vmatprep.subr.mxu0 0.0
      %1472 = vmatpush1.xpose.msra.mxu0 0.0
      %1473 = vmatprep.subr.mxu0 0.0
      %1474 = vmatpush1.xpose.msra.mxu0 0.0
      %1475 = vmatprep.subr.mxu0 0.0
      %1476 = vmatpush1.xpose.msra.mxu0 0.0
      %1477 = vmatprep.subr.mxu0 0.0
      %1478 = vmatpush1.xpose.msra.mxu0 0.0
      %1479 = vmatprep.subr.mxu0 0.0
      %1480 = vmatpush1.xpose.msra.mxu0 0.0
      %1481 = vmatprep.subr.mxu0 0.0
      %1482 = vmatpush1.xpose.msra.mxu0 0.0
      %1483 = vmatprep.mubr.f32.mxu0 0.0
      %1484 = vmatmul.mubr.f32.gmra.mrb[0].mxu0 %v1387
      %v1485 = vpop.f32.mrb[0].mxu0
      %v1486 = vadd.f32 0.0, %v1485
      %v1487 = vpop.f32.mrb[0].mxu0
      %1488 = vmatprep.mubr.f32.mxu0 0.0
      %1489 = vmatmul.mubr.f32.gmra.mrb[0].mxu0 %v1389
      %v1490 = vpop.f32.mrb[0].mxu0
      %v1491 = vadd.f32 0.0, %v1490
      %v1492 = vpop.f32.mrb[0].mxu0
      %1493 = vmatprep.mubr.f32.mxu0 0.0
      %1494 = vmatmul.mubr.f32.gmra.mrb[0].mxu0 %v1391
      %v1495 = vpop.f32.mrb[0].mxu0
      %v1496 = vadd.f32 0.0, %v1495
      %v1497 = vpop.f32.mrb[0].mxu0
      %1498 = vmatprep.mubr.f32.mxu0 0.0
      %1499 = vmatmul.mubr.f32.gmra.mrb[0].mxu0 %v1393
      %v1500 = vpop.f32.mrb[0].mxu0
      %v1501 = vadd.f32 0.0, %v1500
      %v1502 = vpop.f32.mrb[0].mxu0
      %1503 = vmatprep.mubr.f32.mxu0 0.0
      %1504 = vmatmul.mubr.f32.gmra.mrb[0].mxu0 %v1395
      %v1505 = vpop.f32.mrb[0].mxu0
      %v1506 = vadd.f32 0.0, %v1505
      %v1507 = vpop.f32.mrb[0].mxu0
      %1508 = vmatprep.mubr.f32.mxu0 0.0
      %1509 = vmatmul.mubr.f32.gmra.mrb[0].mxu0 %v1397
      %v1510 = vpop.f32.mrb[0].mxu0
      %v1511 = vadd.f32 0.0, %v1510
      %v1512 = vpop.f32.mrb[0].mxu0
      %1513 = vmatprep.mubr.f32.mxu0 0.0
      %1514 = vmatmul.mubr.f32.gmra.mrb[0].mxu0 %v1399
      %v1515 = vpop.f32.mrb[0].mxu0
      %v1516 = vadd.f32 0.0, %v1515
      %v1517 = vpop.f32.mrb[0].mxu0
      %1518 = vmatprep.mubr.f32.mxu0 0.0
      %1519 = vmatmul.mubr.f32.gmra.mrb[0].mxu0 %v1401
      %v1520 = vpop.f32.mrb[0].mxu0
      %v1521 = vadd.f32 0.0, %v1520
      %v1522 = vpop.f32.mrb[0].mxu0
      %1523 = vdwg.mxu0
      %v1524 = vsel %vm976, %v1486, -inf
      %1525 = vmax.xlane.f32.xlu0 %v1524
      %v1526 = vpop.xlane.xlu0 %1525
      %v1527 = vsel %vm976, %v1491, -inf
      %1528 = vmax.xlane.f32.xlu0 %v1527
      %v1529 = vpop.xlane.xlu0 %1528
      %v1530 = vsel %vm976, %v1496, -inf
      %1531 = vmax.xlane.f32.xlu0 %v1530
      %v1532 = vpop.xlane.xlu0 %1531
      %v1533 = vsel %vm976, %v1501, -inf
      %1534 = vmax.xlane.f32.xlu0 %v1533
      %v1535 = vpop.xlane.xlu0 %1534
      %v1536 = vsel %vm976, %v1506, -inf
      %1537 = vmax.xlane.f32.xlu0 %v1536
      %v1538 = vpop.xlane.xlu0 %1537
      %v1539 = vsel %vm976, %v1511, -inf
      %1540 = vmax.xlane.f32.xlu0 %v1539
      %v1541 = vpop.xlane.xlu0 %1540
      %v1542 = vsel %vm976, %v1516, -inf
      %1543 = vmax.xlane.f32.xlu0 %v1542
      %v1544 = vpop.xlane.xlu0 %1543
      %v1545 = vsel %vm976, %v1521, -inf
      %1546 = vmax.xlane.f32.xlu0 %v1545
      %v1547 = vpop.xlane.xlu0 %1546
      %v1548 = vsub.f32 %v1486, %v1526
      %v1549 = vsub.f32 %v1491, %v1529
      %v1550 = vsub.f32 %v1496, %v1532
      %v1551 = vsub.f32 %v1501, %v1535
      %v1552 = vsub.f32 %v1506, %v1538
      %v1553 = vsub.f32 %v1511, %v1541
      %v1554 = vsub.f32 %v1516, %v1544
      %v1555 = vsub.f32 %v1521, %v1547
      %v1556 = vmul.f32 %v1548, 1.442695
      %v1557 = vpow.pop %v1556
      %v1558 = vmul.f32 %v1549, 1.442695
      %v1559 = vpow.pop %v1558
      %v1560 = vmul.f32 %v1550, 1.442695
      %v1561 = vpow.pop %v1560
      %v1562 = vmul.f32 %v1551, 1.442695
      %v1563 = vpow.pop %v1562
      %v1564 = vmul.f32 %v1552, 1.442695
      %v1565 = vpow.pop %v1564
      %v1566 = vmul.f32 %v1553, 1.442695
      %v1567 = vpow.pop %v1566
      %v1568 = vmul.f32 %v1554, 1.442695
      %v1569 = vpow.pop %v1568
      %v1570 = vmul.f32 %v1555, 1.442695
      %v1571 = vpow.pop %v1570
      %v1572 = vsel %vm976, %v1557, 0.0
      %1573 = vadd.xlane.f32.xlu0 %v1572
      %v1574 = vpop.xlane.xlu0 %1573
      %v1575 = vsel %vm976, %v1559, 0.0
      %1576 = vadd.xlane.f32.xlu0 %v1575
      %v1577 = vpop.xlane.xlu0 %1576
      %v1578 = vsel %vm976, %v1561, 0.0
      %1579 = vadd.xlane.f32.xlu0 %v1578
      %v1580 = vpop.xlane.xlu0 %1579
      %v1581 = vsel %vm976, %v1563, 0.0
      %1582 = vadd.xlane.f32.xlu0 %v1581
      %v1583 = vpop.xlane.xlu0 %1582
      %v1584 = vsel %vm976, %v1565, 0.0
      %1585 = vadd.xlane.f32.xlu0 %v1584
      %v1586 = vpop.xlane.xlu0 %1585
      %v1587 = vsel %vm976, %v1567, 0.0
      %1588 = vadd.xlane.f32.xlu0 %v1587
      %v1589 = vpop.xlane.xlu0 %1588
      %v1590 = vsel %vm976, %v1569, 0.0
      %1591 = vadd.xlane.f32.xlu0 %v1590
      %v1592 = vpop.xlane.xlu0 %1591
      %v1593 = vsel %vm976, %v1571, 0.0
      %1594 = vadd.xlane.f32.xlu0 %v1593
      %v1595 = vpop.xlane.xlu0 %1594
      %v1596 = vrcp.pop %v1574
      %v1597 = vrcp.pop %v1577
      %v1598 = vrcp.pop %v1580
      %v1599 = vrcp.pop %v1583
      %v1600 = vrcp.pop %v1586
      %v1601 = vrcp.pop %v1589
      %v1602 = vrcp.pop %v1592
      %v1603 = vrcp.pop %v1595
      %v1604 = vmul.f32 %v1557, %v1596
      %v1605 = vmul.f32 %v1559, %v1597
      %v1606 = vmul.f32 %v1561, %v1598
      %v1607 = vmul.f32 %v1563, %v1599
      %v1608 = vmul.f32 %v1565, %v1600
      %v1609 = vmul.f32 %v1567, %v1601
      %v1610 = vmul.f32 %v1569, %v1602
      %v1611 = vmul.f32 %v1571, %v1603
      %1612 = vrot.lane.b32.xlu0 %v757, 56
      %v1613 = vpop.permute.xlu0 %1612
      %1614 = vrot.lane.b32.xlu0 %v762, 56
      %v1615 = vpop.permute.xlu0 %1614
      %1616 = vrot.lane.b32.xlu0 %v767, 56
      %v1617 = vpop.permute.xlu0 %1616
      %1618 = vrot.lane.b32.xlu0 %v772, 56
      %v1619 = vpop.permute.xlu0 %1618
      %1620 = vrot.lane.b32.xlu0 %v777, 56
      %v1621 = vpop.permute.xlu0 %1620
      %1622 = vrot.lane.b32.xlu0 %v782, 56
      %v1623 = vpop.permute.xlu0 %1622
      %1624 = vrot.lane.b32.xlu0 %v787, 56
      %v1625 = vpop.permute.xlu0 %1624
      %1626 = vrot.lane.b32.xlu0 %v792, 56
      %v1627 = vpop.permute.xlu0 %1626
      %v1637 = vsel %vm976, %v1604, 0
      %v1640 = vsel %vm976, %v1605, 0
      %v1643 = vsel %vm976, %v1606, 0
      %v1646 = vsel %vm976, %v1607, 0
      %v1649 = vsel %vm976, %v1608, 0
      %v1652 = vsel %vm976, %v1609, 0
      %v1655 = vsel %vm976, %v1610, 0
      %v1658 = vsel %vm976, %v1611, 0
      %1660 = vmatprep.subr.mxu0 0.0
      %1661 = vmatpush1.msra.mxu0 %v1613
      %1662 = vmatprep.subr.mxu0 0.0
      %1663 = vmatpush1.msra.mxu0 %v1615
      %1664 = vmatprep.subr.mxu0 0.0
      %1665 = vmatpush1.msra.mxu0 %v1617
      %1666 = vmatprep.subr.mxu0 0.0
      %1667 = vmatpush1.msra.mxu0 %v1619
      %1668 = vmatprep.subr.mxu0 0.0
      %1669 = vmatpush1.msra.mxu0 %v1621
      %1670 = vmatprep.subr.mxu0 0.0
      %1671 = vmatpush1.msra.mxu0 %v1623
      %1672 = vmatprep.subr.mxu0 0.0
      %1673 = vmatpush1.msra.mxu0 %v1625
      %1674 = vmatprep.subr.mxu0 0.0
      %1675 = vmatpush1.msra.mxu0 %v1627
      %1676 = vmatprep.subr.mxu0 0.0
      %1677 = vmatpush1.msra.mxu0 0.0
      %1678 = vmatprep.subr.mxu0 0.0
      %1679 = vmatpush1.msra.mxu0 0.0
      %1680 = vmatprep.subr.mxu0 0.0
      %1681 = vmatpush1.msra.mxu0 0.0
      %1682 = vmatprep.subr.mxu0 0.0
      %1683 = vmatpush1.msra.mxu0 0.0
      %1684 = vmatprep.subr.mxu0 0.0
      %1685 = vmatpush1.msra.mxu0 0.0
      %1686 = vmatprep.subr.mxu0 0.0
      %1687 = vmatpush1.msra.mxu0 0.0
      %1688 = vmatprep.subr.mxu0 0.0
      %1689 = vmatpush1.msra.mxu0 0.0
      %1690 = vmatprep.subr.mxu0 0.0
      %1691 = vmatpush1.msra.mxu0 0.0
      %1692 = vmatprep.subr.mxu0 0.0
      %1693 = vmatpush1.msra.mxu0 0.0
      %1694 = vmatprep.subr.mxu0 0.0
      %1695 = vmatpush1.msra.mxu0 0.0
      %1696 = vmatprep.subr.mxu0 0.0
      %1697 = vmatpush1.msra.mxu0 0.0
      %1698 = vmatprep.subr.mxu0 0.0
      %1699 = vmatpush1.msra.mxu0 0.0
      %1700 = vmatprep.subr.mxu0 0.0
      %1701 = vmatpush1.msra.mxu0 0.0
      %1702 = vmatprep.subr.mxu0 0.0
      %1703 = vmatpush1.msra.mxu0 0.0
      %1704 = vmatprep.subr.mxu0 0.0
      %1705 = vmatpush1.msra.mxu0 0.0
      %1706 = vmatprep.subr.mxu0 0.0
      %1707 = vmatpush1.msra.mxu0 0.0
      %1708 = vmatprep.subr.mxu0 0.0
      %1709 = vmatpush1.msra.mxu0 0.0
      %1710 = vmatprep.subr.mxu0 0.0
      %1711 = vmatpush1.msra.mxu0 0.0
      %1712 = vmatprep.subr.mxu0 0.0
      %1713 = vmatpush1.msra.mxu0 0.0
      %1714 = vmatprep.subr.mxu0 0.0
      %1715 = vmatpush1.msra.mxu0 0.0
      %1716 = vmatprep.subr.mxu0 0.0
      %1717 = vmatpush1.msra.mxu0 0.0
      %1718 = vmatprep.subr.mxu0 0.0
      %1719 = vmatpush1.msra.mxu0 0.0
      %1720 = vmatprep.subr.mxu0 0.0
      %1721 = vmatpush1.msra.mxu0 0.0
      %1722 = vmatprep.subr.mxu0 0.0
      %1723 = vmatpush1.msra.mxu0 0.0
      %1724 = vmatprep.mubr.f32.mxu0 0.0
      %1725 = vmatmul.mubr.f32.gmra.mrb[0].mxu0 %v1637
      %v1726 = vpop.f32.mrb[0].mxu0
      %v1727 = vadd.f32 0.0, %v1726
      %v1728 = vpop.f32.mrb[0].mxu0
      %1729 = vmatprep.mubr.f32.mxu0 0.0
      %1730 = vmatmul.mubr.f32.gmra.mrb[0].mxu0 %v1640
      %v1731 = vpop.f32.mrb[0].mxu0
      %v1732 = vadd.f32 0.0, %v1731
      %v1733 = vpop.f32.mrb[0].mxu0
      %1734 = vmatprep.mubr.f32.mxu0 0.0
      %1735 = vmatmul.mubr.f32.gmra.mrb[0].mxu0 %v1643
      %v1736 = vpop.f32.mrb[0].mxu0
      %v1737 = vadd.f32 0.0, %v1736
      %v1738 = vpop.f32.mrb[0].mxu0
      %1739 = vmatprep.mubr.f32.mxu0 0.0
      %1740 = vmatmul.mubr.f32.gmra.mrb[0].mxu0 %v1646
      %v1741 = vpop.f32.mrb[0].mxu0
      %v1742 = vadd.f32 0.0, %v1741
      %v1743 = vpop.f32.mrb[0].mxu0
      %1744 = vmatprep.mubr.f32.mxu0 0.0
      %1745 = vmatmul.mubr.f32.gmra.mrb[0].mxu0 %v1649
      %v1746 = vpop.f32.mrb[0].mxu0
      %v1747 = vadd.f32 0.0, %v1746
      %v1748 = vpop.f32.mrb[0].mxu0
      %1749 = vmatprep.mubr.f32.mxu0 0.0
      %1750 = vmatmul.mubr.f32.gmra.mrb[0].mxu0 %v1652
      %v1751 = vpop.f32.mrb[0].mxu0
      %v1752 = vadd.f32 0.0, %v1751
      %v1753 = vpop.f32.mrb[0].mxu0
      %1754 = vmatprep.mubr.f32.mxu0 0.0
      %1755 = vmatmul.mubr.f32.gmra.mrb[0].mxu0 %v1655
      %v1756 = vpop.f32.mrb[0].mxu0
      %v1757 = vadd.f32 0.0, %v1756
      %v1758 = vpop.f32.mrb[0].mxu0
      %1759 = vmatprep.mubr.f32.mxu0 0.0
      %1760 = vmatmul.mubr.f32.gmra.mrb[0].mxu0 %v1658
      %v1761 = vpop.f32.mrb[0].mxu0
      %v1762 = vadd.f32 0.0, %v1761
      %v1763 = vpop.f32.mrb[0].mxu0
      %1764 = vdwg.mxu0
      %v1766 = vsel %vm838, %v1727, 0
      %v1769 = vsel %vm838, %v1732, 0
      %v1772 = vsel %vm838, %v1737, 0
      %v1775 = vsel %vm838, %v1742, 0
      %v1778 = vsel %vm838, %v1747, 0
      %v1781 = vsel %vm838, %v1752, 0
      %v1784 = vsel %vm838, %v1757, 0
      %v1787 = vsel %vm838, %v1762, 0
      %1789 = vmatprep.subr.mxu0 0.0
      %1790 = vmatpush1.msra.mxu0 %v796
      %1791 = vmatprep.subr.mxu0 0.0
      %1792 = vmatpush1.msra.mxu0 0.0
      %1793 = vmatprep.subr.mxu0 0.0
      %1794 = vmatpush1.msra.mxu0 0.0
      %1795 = vmatprep.subr.mxu0 0.0
      %1796 = vmatpush1.msra.mxu0 0.0
      %1797 = vmatprep.subr.mxu0 0.0
      %1798 = vmatpush1.msra.mxu0 0.0
      %1799 = vmatprep.subr.mxu0 0.0
      %1800 = vmatpush1.msra.mxu0 0.0
      %1801 = vmatprep.subr.mxu0 0.0
      %1802 = vmatpush1.msra.mxu0 0.0
      %1803 = vmatprep.subr.mxu0 0.0
      %1804 = vmatpush1.msra.mxu0 0.0
      %1805 = vmatprep.subr.mxu0 0.0
      %1806 = vmatpush1.msra.mxu0 0.0
      %1807 = vmatprep.subr.mxu0 0.0
      %1808 = vmatpush1.msra.mxu0 0.0
      %1809 = vmatprep.subr.mxu0 0.0
      %1810 = vmatpush1.msra.mxu0 0.0
      %1811 = vmatprep.subr.mxu0 0.0
      %1812 = vmatpush1.msra.mxu0 0.0
      %1813 = vmatprep.subr.mxu0 0.0
      %1814 = vmatpush1.msra.mxu0 0.0
      %1815 = vmatprep.subr.mxu0 0.0
      %1816 = vmatpush1.msra.mxu0 0.0
      %1817 = vmatprep.subr.mxu0 0.0
      %1818 = vmatpush1.msra.mxu0 0.0
      %1819 = vmatprep.subr.mxu0 0.0
      %1820 = vmatpush1.msra.mxu0 0.0
      %1821 = vmatprep.subr.mxu0 0.0
      %1822 = vmatpush1.msra.mxu0 0.0
      %1823 = vmatprep.subr.mxu0 0.0
      %1824 = vmatpush1.msra.mxu0 0.0
      %1825 = vmatprep.subr.mxu0 0.0
      %1826 = vmatpush1.msra.mxu0 0.0
      %1827 = vmatprep.subr.mxu0 0.0
      %1828 = vmatpush1.msra.mxu0 0.0
      %1829 = vmatprep.subr.mxu0 0.0
      %1830 = vmatpush1.msra.mxu0 0.0
      %1831 = vmatprep.subr.mxu0 0.0
      %1832 = vmatpush1.msra.mxu0 0.0
      %1833 = vmatprep.subr.mxu0 0.0
      %1834 = vmatpush1.msra.mxu0 0.0
      %1835 = vmatprep.subr.mxu0 0.0
      %1836 = vmatpush1.msra.mxu0 0.0
      %1837 = vmatprep.subr.mxu0 0.0
      %1838 = vmatpush1.msra.mxu0 0.0
      %1839 = vmatprep.subr.mxu0 0.0
      %1840 = vmatpush1.msra.mxu0 0.0
      %1841 = vmatprep.subr.mxu0 0.0
      %1842 = vmatpush1.msra.mxu0 0.0
      %1843 = vmatprep.subr.mxu0 0.0
      %1844 = vmatpush1.msra.mxu0 0.0
      %1845 = vmatprep.subr.mxu0 0.0
      %1846 = vmatpush1.msra.mxu0 0.0
      %1847 = vmatprep.subr.mxu0 0.0
      %1848 = vmatpush1.msra.mxu0 0.0
      %1849 = vmatprep.subr.mxu0 0.0
      %1850 = vmatpush1.msra.mxu0 0.0
      %1851 = vmatprep.subr.mxu0 0.0
      %1852 = vmatpush1.msra.mxu0 0.0
      %1853 = vmatprep.mubr.f32.mxu0 0.0
      %1854 = vmatmul.mubr.f32.gmra.mrb[0].mxu0 %v1766
      %v1855 = vpop.f32.mrb[0].mxu0
      %v1856 = vadd.f32 0.0, %v1855
      %v1857 = vpop.f32.mrb[0].mxu0
      %1858 = vmatprep.mubr.f32.mxu0 0.0
      %1859 = vmatmul.mubr.f32.gmra.mrb[0].mxu0 %v1769
      %v1860 = vpop.f32.mrb[0].mxu0
      %v1861 = vadd.f32 0.0, %v1860
      %v1862 = vpop.f32.mrb[0].mxu0
      %1863 = vmatprep.mubr.f32.mxu0 0.0
      %1864 = vmatmul.mubr.f32.gmra.mrb[0].mxu0 %v1772
      %v1865 = vpop.f32.mrb[0].mxu0
      %v1866 = vadd.f32 0.0, %v1865
      %v1867 = vpop.f32.mrb[0].mxu0
      %1868 = vmatprep.mubr.f32.mxu0 0.0
      %1869 = vmatmul.mubr.f32.gmra.mrb[0].mxu0 %v1775
      %v1870 = vpop.f32.mrb[0].mxu0
      %v1871 = vadd.f32 0.0, %v1870
      %v1872 = vpop.f32.mrb[0].mxu0
      %1873 = vmatprep.mubr.f32.mxu0 0.0
      %1874 = vmatmul.mubr.f32.gmra.mrb[0].mxu0 %v1778
      %v1875 = vpop.f32.mrb[0].mxu0
      %v1876 = vadd.f32 0.0, %v1875
      %v1877 = vpop.f32.mrb[0].mxu0
      %1878 = vmatprep.mubr.f32.mxu0 0.0
      %1879 = vmatmul.mubr.f32.gmra.mrb[0].mxu0 %v1781
      %v1880 = vpop.f32.mrb[0].mxu0
      %v1881 = vadd.f32 0.0, %v1880
      %v1882 = vpop.f32.mrb[0].mxu0
      %1883 = vmatprep.mubr.f32.mxu0 0.0
      %1884 = vmatmul.mubr.f32.gmra.mrb[0].mxu0 %v1784
      %v1885 = vpop.f32.mrb[0].mxu0
      %v1886 = vadd.f32 0.0, %v1885
      %v1887 = vpop.f32.mrb[0].mxu0
      %1888 = vmatprep.mubr.f32.mxu0 0.0
      %1889 = vmatmul.mubr.f32.gmra.mrb[0].mxu0 %v1787
      %v1890 = vpop.f32.mrb[0].mxu0
      %v1891 = vadd.f32 0.0, %v1890
      %v1892 = vpop.f32.mrb[0].mxu0
      %1893 = vdwg.mxu0
      %v1894 = vadd.f32 %v1347, %v1856
      %v1895 = vadd.f32 %v1348, %v1861
      %v1896 = vadd.f32 %v1349, %v1866
      %v1897 = vadd.f32 %v1350, %v1871
      %v1898 = vadd.f32 %v1351, %v1876
      %v1899 = vadd.f32 %v1352, %v1881
      %v1900 = vadd.f32 %v1353, %v1886
      %v1901 = vadd.f32 %v1354, %v1891
      %1902 = vrot.lane.b32.xlu0 %v757, 112
      %v1903 = vpop.permute.xlu0 %1902
      %1904 = vrot.lane.b32.xlu0 %v762, 112
      %v1905 = vpop.permute.xlu0 %1904
      %1906 = vrot.lane.b32.xlu0 %v767, 112
      %v1907 = vpop.permute.xlu0 %1906
      %1908 = vrot.lane.b32.xlu0 %v772, 112
      %v1909 = vpop.permute.xlu0 %1908
      %1910 = vrot.lane.b32.xlu0 %v777, 112
      %v1911 = vpop.permute.xlu0 %1910
      %1912 = vrot.lane.b32.xlu0 %v782, 112
      %v1913 = vpop.permute.xlu0 %1912
      %1914 = vrot.lane.b32.xlu0 %v787, 112
      %v1915 = vpop.permute.xlu0 %1914
      %1916 = vrot.lane.b32.xlu0 %v792, 112
      %v1917 = vpop.permute.xlu0 %1916
      %1918 = vrot.lane.b32.xlu0 %v757, 80
      %v1919 = vpop.permute.xlu0 %1918
      %1920 = vrot.lane.b32.xlu0 %v762, 80
      %v1921 = vpop.permute.xlu0 %1920
      %1922 = vrot.lane.b32.xlu0 %v767, 80
      %v1923 = vpop.permute.xlu0 %1922
      %1924 = vrot.lane.b32.xlu0 %v772, 80
      %v1925 = vpop.permute.xlu0 %1924
      %1926 = vrot.lane.b32.xlu0 %v777, 80
      %v1927 = vpop.permute.xlu0 %1926
      %1928 = vrot.lane.b32.xlu0 %v782, 80
      %v1929 = vpop.permute.xlu0 %1928
      %1930 = vrot.lane.b32.xlu0 %v787, 80
      %v1931 = vpop.permute.xlu0 %1930
      %1932 = vrot.lane.b32.xlu0 %v792, 80
      %v1933 = vpop.permute.xlu0 %1932
      %v1934 = vsel %vm838, %v1903, 0
      %v1936 = vsel %vm838, %v1905, 0
      %v1938 = vsel %vm838, %v1907, 0
      %v1940 = vsel %vm838, %v1909, 0
      %v1942 = vsel %vm838, %v1911, 0
      %v1944 = vsel %vm838, %v1913, 0
      %v1946 = vsel %vm838, %v1915, 0
      %v1948 = vsel %vm838, %v1917, 0
      %v1950 = vsel %vm838, %v1919, 0
      %v1952 = vsel %vm838, %v1921, 0
      %v1954 = vsel %vm838, %v1923, 0
      %v1956 = vsel %vm838, %v1925, 0
      %v1958 = vsel %vm838, %v1927, 0
      %v1960 = vsel %vm838, %v1929, 0
      %v1962 = vsel %vm838, %v1931, 0
      %v1964 = vsel %vm838, %v1933, 0
      %1966 = vmatprep.subr.mxu0 0.0
      %1967 = vmatpush1.xpose.msra.mxu0 %v1950
      %1968 = vmatprep.subr.mxu0 0.0
      %1969 = vmatpush1.xpose.msra.mxu0 %v1952
      %1970 = vmatprep.subr.mxu0 0.0
      %1971 = vmatpush1.xpose.msra.mxu0 %v1954
      %1972 = vmatprep.subr.mxu0 0.0
      %1973 = vmatpush1.xpose.msra.mxu0 %v1956
      %1974 = vmatprep.subr.mxu0 0.0
      %1975 = vmatpush1.xpose.msra.mxu0 %v1958
      %1976 = vmatprep.subr.mxu0 0.0
      %1977 = vmatpush1.xpose.msra.mxu0 %v1960
      %1978 = vmatprep.subr.mxu0 0.0
      %1979 = vmatpush1.xpose.msra.mxu0 %v1962
      %1980 = vmatprep.subr.mxu0 0.0
      %1981 = vmatpush1.xpose.msra.mxu0 %v1964
      %1982 = vmatprep.subr.mxu0 0.0
      %1983 = vmatpush1.xpose.msra.mxu0 0.0
      %1984 = vmatprep.subr.mxu0 0.0
      %1985 = vmatpush1.xpose.msra.mxu0 0.0
      %1986 = vmatprep.subr.mxu0 0.0
      %1987 = vmatpush1.xpose.msra.mxu0 0.0
      %1988 = vmatprep.subr.mxu0 0.0
      %1989 = vmatpush1.xpose.msra.mxu0 0.0
      %1990 = vmatprep.subr.mxu0 0.0
      %1991 = vmatpush1.xpose.msra.mxu0 0.0
      %1992 = vmatprep.subr.mxu0 0.0
      %1993 = vmatpush1.xpose.msra.mxu0 0.0
      %1994 = vmatprep.subr.mxu0 0.0
      %1995 = vmatpush1.xpose.msra.mxu0 0.0
      %1996 = vmatprep.subr.mxu0 0.0
      %1997 = vmatpush1.xpose.msra.mxu0 0.0
      %1998 = vmatprep.subr.mxu0 0.0
      %1999 = vmatpush1.xpose.msra.mxu0 0.0
      %2000 = vmatprep.subr.mxu0 0.0
      %2001 = vmatpush1.xpose.msra.mxu0 0.0
      %2002 = vmatprep.subr.mxu0 0.0
      %2003 = vmatpush1.xpose.msra.mxu0 0.0
      %2004 = vmatprep.subr.mxu0 0.0
      %2005 = vmatpush1.xpose.msra.mxu0 0.0
      %2006 = vmatprep.subr.mxu0 0.0
      %2007 = vmatpush1.xpose.msra.mxu0 0.0
      %2008 = vmatprep.subr.mxu0 0.0
      %2009 = vmatpush1.xpose.msra.mxu0 0.0
      %2010 = vmatprep.subr.mxu0 0.0
      %2011 = vmatpush1.xpose.msra.mxu0 0.0
      %2012 = vmatprep.subr.mxu0 0.0
      %2013 = vmatpush1.xpose.msra.mxu0 0.0
      %2014 = vmatprep.subr.mxu0 0.0
      %2015 = vmatpush1.xpose.msra.mxu0 0.0
      %2016 = vmatprep.subr.mxu0 0.0
      %2017 = vmatpush1.xpose.msra.mxu0 0.0
      %2018 = vmatprep.subr.mxu0 0.0
      %2019 = vmatpush1.xpose.msra.mxu0 0.0
      %2020 = vmatprep.subr.mxu0 0.0
      %2021 = vmatpush1.xpose.msra.mxu0 0.0
      %2022 = vmatprep.subr.mxu0 0.0
      %2023 = vmatpush1.xpose.msra.mxu0 0.0
      %2024 = vmatprep.subr.mxu0 0.0
      %2025 = vmatpush1.xpose.msra.mxu0 0.0
      %2026 = vmatprep.subr.mxu0 0.0
      %2027 = vmatpush1.xpose.msra.mxu0 0.0
      %2028 = vmatprep.subr.mxu0 0.0
      %2029 = vmatpush1.xpose.msra.mxu0 0.0
      %2030 = vmatprep.mubr.f32.mxu0 0.0
      %2031 = vmatmul.mubr.f32.gmra.mrb[0].mxu0 %v1934
      %v2032 = vpop.f32.mrb[0].mxu0
      %v2033 = vadd.f32 0.0, %v2032
      %v2034 = vpop.f32.mrb[0].mxu0
      %2035 = vmatprep.mubr.f32.mxu0 0.0
      %2036 = vmatmul.mubr.f32.gmra.mrb[0].mxu0 %v1936
      %v2037 = vpop.f32.mrb[0].mxu0
      %v2038 = vadd.f32 0.0, %v2037
      %v2039 = vpop.f32.mrb[0].mxu0
      %2040 = vmatprep.mubr.f32.mxu0 0.0
      %2041 = vmatmul.mubr.f32.gmra.mrb[0].mxu0 %v1938
      %v2042 = vpop.f32.mrb[0].mxu0
      %v2043 = vadd.f32 0.0, %v2042
      %v2044 = vpop.f32.mrb[0].mxu0
      %2045 = vmatprep.mubr.f32.mxu0 0.0
      %2046 = vmatmul.mubr.f32.gmra.mrb[0].mxu0 %v1940
      %v2047 = vpop.f32.mrb[0].mxu0
      %v2048 = vadd.f32 0.0, %v2047
      %v2049 = vpop.f32.mrb[0].mxu0
      %2050 = vmatprep.mubr.f32.mxu0 0.0
      %2051 = vmatmul.mubr.f32.gmra.mrb[0].mxu0 %v1942
      %v2052 = vpop.f32.mrb[0].mxu0
      %v2053 = vadd.f32 0.0, %v2052
      %v2054 = vpop.f32.mrb[0].mxu0
      %2055 = vmatprep.mubr.f32.mxu0 0.0
      %2056 = vmatmul.mubr.f32.gmra.mrb[0].mxu0 %v1944
      %v2057 = vpop.f32.mrb[0].mxu0
      %v2058 = vadd.f32 0.0, %v2057
      %v2059 = vpop.f32.mrb[0].mxu0
      %2060 = vmatprep.mubr.f32.mxu0 0.0
      %2061 = vmatmul.mubr.f32.gmra.mrb[0].mxu0 %v1946
      %v2062 = vpop.f32.mrb[0].mxu0
      %v2063 = vadd.f32 0.0, %v2062
      %v2064 = vpop.f32.mrb[0].mxu0
      %2065 = vmatprep.mubr.f32.mxu0 0.0
      %2066 = vmatmul.mubr.f32.gmra.mrb[0].mxu0 %v1948
      %v2067 = vpop.f32.mrb[0].mxu0
      %v2068 = vadd.f32 0.0, %v2067
      %v2069 = vpop.f32.mrb[0].mxu0
      %2070 = vdwg.mxu0
      %v2071 = vsel %vm976, %v2033, -inf
      %2072 = vmax.xlane.f32.xlu0 %v2071
      %v2073 = vpop.xlane.xlu0 %2072
      %v2074 = vsel %vm976, %v2038, -inf
      %2075 = vmax.xlane.f32.xlu0 %v2074
      %v2076 = vpop.xlane.xlu0 %2075
      %v2077 = vsel %vm976, %v2043, -inf
      %2078 = vmax.xlane.f32.xlu0 %v2077
      %v2079 = vpop.xlane.xlu0 %2078
      %v2080 = vsel %vm976, %v2048, -inf
      %2081 = vmax.xlane.f32.xlu0 %v2080
      %v2082 = vpop.xlane.xlu0 %2081
      %v2083 = vsel %vm976, %v2053, -inf
      %2084 = vmax.xlane.f32.xlu0 %v2083
      %v2085 = vpop.xlane.xlu0 %2084
      %v2086 = vsel %vm976, %v2058, -inf
      %2087 = vmax.xlane.f32.xlu0 %v2086
      %v2088 = vpop.xlane.xlu0 %2087
      %v2089 = vsel %vm976, %v2063, -inf
      %2090 = vmax.xlane.f32.xlu0 %v2089
      %v2091 = vpop.xlane.xlu0 %2090
      %v2092 = vsel %vm976, %v2068, -inf
      %2093 = vmax.xlane.f32.xlu0 %v2092
      %v2094 = vpop.xlane.xlu0 %2093
      %v2095 = vsub.f32 %v2033, %v2073
      %v2096 = vsub.f32 %v2038, %v2076
      %v2097 = vsub.f32 %v2043, %v2079
      %v2098 = vsub.f32 %v2048, %v2082
      %v2099 = vsub.f32 %v2053, %v2085
      %v2100 = vsub.f32 %v2058, %v2088
      %v2101 = vsub.f32 %v2063, %v2091
      %v2102 = vsub.f32 %v2068, %v2094
      %v2103 = vmul.f32 %v2095, 1.442695
      %v2104 = vpow.pop %v2103
      %v2105 = vmul.f32 %v2096, 1.442695
      %v2106 = vpow.pop %v2105
      %v2107 = vmul.f32 %v2097, 1.442695
      %v2108 = vpow.pop %v2107
      %v2109 = vmul.f32 %v2098, 1.442695
      %v2110 = vpow.pop %v2109
      %v2111 = vmul.f32 %v2099, 1.442695
      %v2112 = vpow.pop %v2111
      %v2113 = vmul.f32 %v2100, 1.442695
      %v2114 = vpow.pop %v2113
      %v2115 = vmul.f32 %v2101, 1.442695
      %v2116 = vpow.pop %v2115
      %v2117 = vmul.f32 %v2102, 1.442695
      %v2118 = vpow.pop %v2117
      %v2119 = vsel %vm976, %v2104, 0.0
      %2120 = vadd.xlane.f32.xlu0 %v2119
      %v2121 = vpop.xlane.xlu0 %2120
      %v2122 = vsel %vm976, %v2106, 0.0
      %2123 = vadd.xlane.f32.xlu0 %v2122
      %v2124 = vpop.xlane.xlu0 %2123
      %v2125 = vsel %vm976, %v2108, 0.0
      %2126 = vadd.xlane.f32.xlu0 %v2125
      %v2127 = vpop.xlane.xlu0 %2126
      %v2128 = vsel %vm976, %v2110, 0.0
      %2129 = vadd.xlane.f32.xlu0 %v2128
      %v2130 = vpop.xlane.xlu0 %2129
      %v2131 = vsel %vm976, %v2112, 0.0
      %2132 = vadd.xlane.f32.xlu0 %v2131
      %v2133 = vpop.xlane.xlu0 %2132
      %v2134 = vsel %vm976, %v2114, 0.0
      %2135 = vadd.xlane.f32.xlu0 %v2134
      %v2136 = vpop.xlane.xlu0 %2135
      %v2137 = vsel %vm976, %v2116, 0.0
      %2138 = vadd.xlane.f32.xlu0 %v2137
      %v2139 = vpop.xlane.xlu0 %2138
      %v2140 = vsel %vm976, %v2118, 0.0
      %2141 = vadd.xlane.f32.xlu0 %v2140
      %v2142 = vpop.xlane.xlu0 %2141
      %v2143 = vrcp.pop %v2121
      %v2144 = vrcp.pop %v2124
      %v2145 = vrcp.pop %v2127
      %v2146 = vrcp.pop %v2130
      %v2147 = vrcp.pop %v2133
      %v2148 = vrcp.pop %v2136
      %v2149 = vrcp.pop %v2139
      %v2150 = vrcp.pop %v2142
      %v2151 = vmul.f32 %v2104, %v2143
      %v2152 = vmul.f32 %v2106, %v2144
      %v2153 = vmul.f32 %v2108, %v2145
      %v2154 = vmul.f32 %v2110, %v2146
      %v2155 = vmul.f32 %v2112, %v2147
      %v2156 = vmul.f32 %v2114, %v2148
      %v2157 = vmul.f32 %v2116, %v2149
      %v2158 = vmul.f32 %v2118, %v2150
      %2159 = vrot.lane.b32.xlu0 %v757, 48
      %v2160 = vpop.permute.xlu0 %2159
      %2161 = vrot.lane.b32.xlu0 %v762, 48
      %v2162 = vpop.permute.xlu0 %2161
      %2163 = vrot.lane.b32.xlu0 %v767, 48
      %v2164 = vpop.permute.xlu0 %2163
      %2165 = vrot.lane.b32.xlu0 %v772, 48
      %v2166 = vpop.permute.xlu0 %2165
      %2167 = vrot.lane.b32.xlu0 %v777, 48
      %v2168 = vpop.permute.xlu0 %2167
      %2169 = vrot.lane.b32.xlu0 %v782, 48
      %v2170 = vpop.permute.xlu0 %2169
      %2171 = vrot.lane.b32.xlu0 %v787, 48
      %v2172 = vpop.permute.xlu0 %2171
      %2173 = vrot.lane.b32.xlu0 %v792, 48
      %v2174 = vpop.permute.xlu0 %2173
      %v2184 = vsel %vm976, %v2151, 0
      %v2187 = vsel %vm976, %v2152, 0
      %v2190 = vsel %vm976, %v2153, 0
      %v2193 = vsel %vm976, %v2154, 0
      %v2196 = vsel %vm976, %v2155, 0
      %v2199 = vsel %vm976, %v2156, 0
      %v2202 = vsel %vm976, %v2157, 0
      %v2205 = vsel %vm976, %v2158, 0
      %2207 = vmatprep.subr.mxu0 0.0
      %2208 = vmatpush1.msra.mxu0 %v2160
      %2209 = vmatprep.subr.mxu0 0.0
      %2210 = vmatpush1.msra.mxu0 %v2162
      %2211 = vmatprep.subr.mxu0 0.0
      %2212 = vmatpush1.msra.mxu0 %v2164
      %2213 = vmatprep.subr.mxu0 0.0
      %2214 = vmatpush1.msra.mxu0 %v2166
      %2215 = vmatprep.subr.mxu0 0.0
      %2216 = vmatpush1.msra.mxu0 %v2168
      %2217 = vmatprep.subr.mxu0 0.0
      %2218 = vmatpush1.msra.mxu0 %v2170
      %2219 = vmatprep.subr.mxu0 0.0
      %2220 = vmatpush1.msra.mxu0 %v2172
      %2221 = vmatprep.subr.mxu0 0.0
      %2222 = vmatpush1.msra.mxu0 %v2174
      %2223 = vmatprep.subr.mxu0 0.0
      %2224 = vmatpush1.msra.mxu0 0.0
      %2225 = vmatprep.subr.mxu0 0.0
      %2226 = vmatpush1.msra.mxu0 0.0
      %2227 = vmatprep.subr.mxu0 0.0
      %2228 = vmatpush1.msra.mxu0 0.0
      %2229 = vmatprep.subr.mxu0 0.0
      %2230 = vmatpush1.msra.mxu0 0.0
      %2231 = vmatprep.subr.mxu0 0.0
      %2232 = vmatpush1.msra.mxu0 0.0
      %2233 = vmatprep.subr.mxu0 0.0
      %2234 = vmatpush1.msra.mxu0 0.0
      %2235 = vmatprep.subr.mxu0 0.0
      %2236 = vmatpush1.msra.mxu0 0.0
      %2237 = vmatprep.subr.mxu0 0.0
      %2238 = vmatpush1.msra.mxu0 0.0
      %2239 = vmatprep.subr.mxu0 0.0
      %2240 = vmatpush1.msra.mxu0 0.0
      %2241 = vmatprep.subr.mxu0 0.0
      %2242 = vmatpush1.msra.mxu0 0.0
      %2243 = vmatprep.subr.mxu0 0.0
      %2244 = vmatpush1.msra.mxu0 0.0
      %2245 = vmatprep.subr.mxu0 0.0
      %2246 = vmatpush1.msra.mxu0 0.0
      %2247 = vmatprep.subr.mxu0 0.0
      %2248 = vmatpush1.msra.mxu0 0.0
      %2249 = vmatprep.subr.mxu0 0.0
      %2250 = vmatpush1.msra.mxu0 0.0
      %2251 = vmatprep.subr.mxu0 0.0
      %2252 = vmatpush1.msra.mxu0 0.0
      %2253 = vmatprep.subr.mxu0 0.0
      %2254 = vmatpush1.msra.mxu0 0.0
      %2255 = vmatprep.subr.mxu0 0.0
      %2256 = vmatpush1.msra.mxu0 0.0
      %2257 = vmatprep.subr.mxu0 0.0
      %2258 = vmatpush1.msra.mxu0 0.0
      %2259 = vmatprep.subr.mxu0 0.0
      %2260 = vmatpush1.msra.mxu0 0.0
      %2261 = vmatprep.subr.mxu0 0.0
      %2262 = vmatpush1.msra.mxu0 0.0
      %2263 = vmatprep.subr.mxu0 0.0
      %2264 = vmatpush1.msra.mxu0 0.0
      %2265 = vmatprep.subr.mxu0 0.0
      %2266 = vmatpush1.msra.mxu0 0.0
      %2267 = vmatprep.subr.mxu0 0.0
      %2268 = vmatpush1.msra.mxu0 0.0
      %2269 = vmatprep.subr.mxu0 0.0
      %2270 = vmatpush1.msra.mxu0 0.0
      %2271 = vmatprep.mubr.f32.mxu0 0.0
      %2272 = vmatmul.mubr.f32.gmra.mrb[0].mxu0 %v2184
      %v2273 = vpop.f32.mrb[0].mxu0
      %v2274 = vadd.f32 0.0, %v2273
      %v2275 = vpop.f32.mrb[0].mxu0
      %2276 = vmatprep.mubr.f32.mxu0 0.0
      %2277 = vmatmul.mubr.f32.gmra.mrb[0].mxu0 %v2187
      %v2278 = vpop.f32.mrb[0].mxu0
      %v2279 = vadd.f32 0.0, %v2278
      %v2280 = vpop.f32.mrb[0].mxu0
      %2281 = vmatprep.mubr.f32.mxu0 0.0
      %2282 = vmatmul.mubr.f32.gmra.mrb[0].mxu0 %v2190
      %v2283 = vpop.f32.mrb[0].mxu0
      %v2284 = vadd.f32 0.0, %v2283
      %v2285 = vpop.f32.mrb[0].mxu0
      %2286 = vmatprep.mubr.f32.mxu0 0.0
      %2287 = vmatmul.mubr.f32.gmra.mrb[0].mxu0 %v2193
      %v2288 = vpop.f32.mrb[0].mxu0
      %v2289 = vadd.f32 0.0, %v2288
      %v2290 = vpop.f32.mrb[0].mxu0
      %2291 = vmatprep.mubr.f32.mxu0 0.0
      %2292 = vmatmul.mubr.f32.gmra.mrb[0].mxu0 %v2196
      %v2293 = vpop.f32.mrb[0].mxu0
      %v2294 = vadd.f32 0.0, %v2293
      %v2295 = vpop.f32.mrb[0].mxu0
      %2296 = vmatprep.mubr.f32.mxu0 0.0
      %2297 = vmatmul.mubr.f32.gmra.mrb[0].mxu0 %v2199
      %v2298 = vpop.f32.mrb[0].mxu0
      %v2299 = vadd.f32 0.0, %v2298
      %v2300 = vpop.f32.mrb[0].mxu0
      %2301 = vmatprep.mubr.f32.mxu0 0.0
      %2302 = vmatmul.mubr.f32.gmra.mrb[0].mxu0 %v2202
      %v2303 = vpop.f32.mrb[0].mxu0
      %v2304 = vadd.f32 0.0, %v2303
      %v2305 = vpop.f32.mrb[0].mxu0
      %2306 = vmatprep.mubr.f32.mxu0 0.0
      %2307 = vmatmul.mubr.f32.gmra.mrb[0].mxu0 %v2205
      %v2308 = vpop.f32.mrb[0].mxu0
      %v2309 = vadd.f32 0.0, %v2308
      %v2310 = vpop.f32.mrb[0].mxu0
      %2311 = vdwg.mxu0
      %v2313 = vsel %vm838, %v2274, 0
      %v2316 = vsel %vm838, %v2279, 0
      %v2319 = vsel %vm838, %v2284, 0
      %v2322 = vsel %vm838, %v2289, 0
      %v2325 = vsel %vm838, %v2294, 0
      %v2328 = vsel %vm838, %v2299, 0
      %v2331 = vsel %vm838, %v2304, 0
      %v2334 = vsel %vm838, %v2309, 0
      %2336 = vmatprep.subr.mxu0 0.0
      %2337 = vmatpush1.msra.mxu0 %v797
      %2338 = vmatprep.subr.mxu0 0.0
      %2339 = vmatpush1.msra.mxu0 0.0
      %2340 = vmatprep.subr.mxu0 0.0
      %2341 = vmatpush1.msra.mxu0 0.0
      %2342 = vmatprep.subr.mxu0 0.0
      %2343 = vmatpush1.msra.mxu0 0.0
      %2344 = vmatprep.subr.mxu0 0.0
      %2345 = vmatpush1.msra.mxu0 0.0
      %2346 = vmatprep.subr.mxu0 0.0
      %2347 = vmatpush1.msra.mxu0 0.0
      %2348 = vmatprep.subr.mxu0 0.0
      %2349 = vmatpush1.msra.mxu0 0.0
      %2350 = vmatprep.subr.mxu0 0.0
      %2351 = vmatpush1.msra.mxu0 0.0
      %2352 = vmatprep.subr.mxu0 0.0
      %2353 = vmatpush1.msra.mxu0 0.0
      %2354 = vmatprep.subr.mxu0 0.0
      %2355 = vmatpush1.msra.mxu0 0.0
      %2356 = vmatprep.subr.mxu0 0.0
      %2357 = vmatpush1.msra.mxu0 0.0
      %2358 = vmatprep.subr.mxu0 0.0
      %2359 = vmatpush1.msra.mxu0 0.0
      %2360 = vmatprep.subr.mxu0 0.0
      %2361 = vmatpush1.msra.mxu0 0.0
      %2362 = vmatprep.subr.mxu0 0.0
      %2363 = vmatpush1.msra.mxu0 0.0
      %2364 = vmatprep.subr.mxu0 0.0
      %2365 = vmatpush1.msra.mxu0 0.0
      %2366 = vmatprep.subr.mxu0 0.0
      %2367 = vmatpush1.msra.mxu0 0.0
      %2368 = vmatprep.subr.mxu0 0.0
      %2369 = vmatpush1.msra.mxu0 0.0
      %2370 = vmatprep.subr.mxu0 0.0
      %2371 = vmatpush1.msra.mxu0 0.0
      %2372 = vmatprep.subr.mxu0 0.0
      %2373 = vmatpush1.msra.mxu0 0.0
      %2374 = vmatprep.subr.mxu0 0.0
      %2375 = vmatpush1.msra.mxu0 0.0
      %2376 = vmatprep.subr.mxu0 0.0
      %2377 = vmatpush1.msra.mxu0 0.0
      %2378 = vmatprep.subr.mxu0 0.0
      %2379 = vmatpush1.msra.mxu0 0.0
      %2380 = vmatprep.subr.mxu0 0.0
      %2381 = vmatpush1.msra.mxu0 0.0
      %2382 = vmatprep.subr.mxu0 0.0
      %2383 = vmatpush1.msra.mxu0 0.0
      %2384 = vmatprep.subr.mxu0 0.0
      %2385 = vmatpush1.msra.mxu0 0.0
      %2386 = vmatprep.subr.mxu0 0.0
      %2387 = vmatpush1.msra.mxu0 0.0
      %2388 = vmatprep.subr.mxu0 0.0
      %2389 = vmatpush1.msra.mxu0 0.0
      %2390 = vmatprep.subr.mxu0 0.0
      %2391 = vmatpush1.msra.mxu0 0.0
      %2392 = vmatprep.subr.mxu0 0.0
      %2393 = vmatpush1.msra.mxu0 0.0
      %2394 = vmatprep.subr.mxu0 0.0
      %2395 = vmatpush1.msra.mxu0 0.0
      %2396 = vmatprep.subr.mxu0 0.0
      %2397 = vmatpush1.msra.mxu0 0.0
      %2398 = vmatprep.subr.mxu0 0.0
      %2399 = vmatpush1.msra.mxu0 0.0
      %2400 = vmatprep.mubr.f32.mxu0 0.0
      %2401 = vmatmul.mubr.f32.gmra.mrb[0].mxu0 %v2313
      %v2402 = vpop.f32.mrb[0].mxu0
      %v2403 = vadd.f32 0.0, %v2402
      %v2404 = vpop.f32.mrb[0].mxu0
      %2405 = vmatprep.mubr.f32.mxu0 0.0
      %2406 = vmatmul.mubr.f32.gmra.mrb[0].mxu0 %v2316
      %v2407 = vpop.f32.mrb[0].mxu0
      %v2408 = vadd.f32 0.0, %v2407
      %v2409 = vpop.f32.mrb[0].mxu0
      %2410 = vmatprep.mubr.f32.mxu0 0.0
      %2411 = vmatmul.mubr.f32.gmra.mrb[0].mxu0 %v2319
      %v2412 = vpop.f32.mrb[0].mxu0
      %v2413 = vadd.f32 0.0, %v2412
      %v2414 = vpop.f32.mrb[0].mxu0
      %2415 = vmatprep.mubr.f32.mxu0 0.0
      %2416 = vmatmul.mubr.f32.gmra.mrb[0].mxu0 %v2322
      %v2417 = vpop.f32.mrb[0].mxu0
      %v2418 = vadd.f32 0.0, %v2417
      %v2419 = vpop.f32.mrb[0].mxu0
      %2420 = vmatprep.mubr.f32.mxu0 0.0
      %2421 = vmatmul.mubr.f32.gmra.mrb[0].mxu0 %v2325
      %v2422 = vpop.f32.mrb[0].mxu0
      %v2423 = vadd.f32 0.0, %v2422
      %v2424 = vpop.f32.mrb[0].mxu0
      %2425 = vmatprep.mubr.f32.mxu0 0.0
      %2426 = vmatmul.mubr.f32.gmra.mrb[0].mxu0 %v2328
      %v2427 = vpop.f32.mrb[0].mxu0
      %v2428 = vadd.f32 0.0, %v2427
      %v2429 = vpop.f32.mrb[0].mxu0
      %2430 = vmatprep.mubr.f32.mxu0 0.0
      %2431 = vmatmul.mubr.f32.gmra.mrb[0].mxu0 %v2331
      %v2432 = vpop.f32.mrb[0].mxu0
      %v2433 = vadd.f32 0.0, %v2432
      %v2434 = vpop.f32.mrb[0].mxu0
      %2435 = vmatprep.mubr.f32.mxu0 0.0
      %2436 = vmatmul.mubr.f32.gmra.mrb[0].mxu0 %v2334
      %v2437 = vpop.f32.mrb[0].mxu0
      %v2438 = vadd.f32 0.0, %v2437
      %v2439 = vpop.f32.mrb[0].mxu0
      %2440 = vdwg.mxu0
      %v2441 = vadd.f32 %v1894, %v2403
      %v2442 = vadd.f32 %v1895, %v2408
      %v2443 = vadd.f32 %v1896, %v2413
      %v2444 = vadd.f32 %v1897, %v2418
      %v2445 = vadd.f32 %v1898, %v2423
      %v2446 = vadd.f32 %v1899, %v2428
      %v2447 = vadd.f32 %v1900, %v2433
      %v2448 = vadd.f32 %v1901, %v2438
      %2449 = vrot.lane.b32.xlu0 %v757, 104
      %v2450 = vpop.permute.xlu0 %2449
      %2451 = vrot.lane.b32.xlu0 %v762, 104
      %v2452 = vpop.permute.xlu0 %2451
      %2453 = vrot.lane.b32.xlu0 %v767, 104
      %v2454 = vpop.permute.xlu0 %2453
      %2455 = vrot.lane.b32.xlu0 %v772, 104
      %v2456 = vpop.permute.xlu0 %2455
      %2457 = vrot.lane.b32.xlu0 %v777, 104
      %v2458 = vpop.permute.xlu0 %2457
      %2459 = vrot.lane.b32.xlu0 %v782, 104
      %v2460 = vpop.permute.xlu0 %2459
      %2461 = vrot.lane.b32.xlu0 %v787, 104
      %v2462 = vpop.permute.xlu0 %2461
      %2463 = vrot.lane.b32.xlu0 %v792, 104
      %v2464 = vpop.permute.xlu0 %2463
      %2465 = vrot.lane.b32.xlu0 %v757, 72
      %v2466 = vpop.permute.xlu0 %2465
      %2467 = vrot.lane.b32.xlu0 %v762, 72
      %v2468 = vpop.permute.xlu0 %2467
      %2469 = vrot.lane.b32.xlu0 %v767, 72
      %v2470 = vpop.permute.xlu0 %2469
      %2471 = vrot.lane.b32.xlu0 %v772, 72
      %v2472 = vpop.permute.xlu0 %2471
      %2473 = vrot.lane.b32.xlu0 %v777, 72
      %v2474 = vpop.permute.xlu0 %2473
      %2475 = vrot.lane.b32.xlu0 %v782, 72
      %v2476 = vpop.permute.xlu0 %2475
      %2477 = vrot.lane.b32.xlu0 %v787, 72
      %v2478 = vpop.permute.xlu0 %2477
      %2479 = vrot.lane.b32.xlu0 %v792, 72
      %v2480 = vpop.permute.xlu0 %2479
      %v2481 = vsel %vm838, %v2450, 0
      %v2483 = vsel %vm838, %v2452, 0
      %v2485 = vsel %vm838, %v2454, 0
      %v2487 = vsel %vm838, %v2456, 0
      %v2489 = vsel %vm838, %v2458, 0
      %v2491 = vsel %vm838, %v2460, 0
      %v2493 = vsel %vm838, %v2462, 0
      %v2495 = vsel %vm838, %v2464, 0
      %v2497 = vsel %vm838, %v2466, 0
      %v2499 = vsel %vm838, %v2468, 0
      %v2501 = vsel %vm838, %v2470, 0
      %v2503 = vsel %vm838, %v2472, 0
      %v2505 = vsel %vm838, %v2474, 0
      %v2507 = vsel %vm838, %v2476, 0
      %v2509 = vsel %vm838, %v2478, 0
      %v2511 = vsel %vm838, %v2480, 0
      %2513 = vmatprep.subr.mxu0 0.0
      %2514 = vmatpush1.xpose.msra.mxu0 %v2497
      %2515 = vmatprep.subr.mxu0 0.0
      %2516 = vmatpush1.xpose.msra.mxu0 %v2499
      %2517 = vmatprep.subr.mxu0 0.0
      %2518 = vmatpush1.xpose.msra.mxu0 %v2501
      %2519 = vmatprep.subr.mxu0 0.0
      %2520 = vmatpush1.xpose.msra.mxu0 %v2503
      %2521 = vmatprep.subr.mxu0 0.0
      %2522 = vmatpush1.xpose.msra.mxu0 %v2505
      %2523 = vmatprep.subr.mxu0 0.0
      %2524 = vmatpush1.xpose.msra.mxu0 %v2507
      %2525 = vmatprep.subr.mxu0 0.0
      %2526 = vmatpush1.xpose.msra.mxu0 %v2509
      %2527 = vmatprep.subr.mxu0 0.0
      %2528 = vmatpush1.xpose.msra.mxu0 %v2511
      %2529 = vmatprep.subr.mxu0 0.0
      %2530 = vmatpush1.xpose.msra.mxu0 0.0
      %2531 = vmatprep.subr.mxu0 0.0
      %2532 = vmatpush1.xpose.msra.mxu0 0.0
      %2533 = vmatprep.subr.mxu0 0.0
      %2534 = vmatpush1.xpose.msra.mxu0 0.0
      %2535 = vmatprep.subr.mxu0 0.0
      %2536 = vmatpush1.xpose.msra.mxu0 0.0
      %2537 = vmatprep.subr.mxu0 0.0
      %2538 = vmatpush1.xpose.msra.mxu0 0.0
      %2539 = vmatprep.subr.mxu0 0.0
      %2540 = vmatpush1.xpose.msra.mxu0 0.0
      %2541 = vmatprep.subr.mxu0 0.0
      %2542 = vmatpush1.xpose.msra.mxu0 0.0
      %2543 = vmatprep.subr.mxu0 0.0
      %2544 = vmatpush1.xpose.msra.mxu0 0.0
      %2545 = vmatprep.subr.mxu0 0.0
      %2546 = vmatpush1.xpose.msra.mxu0 0.0
      %2547 = vmatprep.subr.mxu0 0.0
      %2548 = vmatpush1.xpose.msra.mxu0 0.0
      %2549 = vmatprep.subr.mxu0 0.0
      %2550 = vmatpush1.xpose.msra.mxu0 0.0
      %2551 = vmatprep.subr.mxu0 0.0
      %2552 = vmatpush1.xpose.msra.mxu0 0.0
      %2553 = vmatprep.subr.mxu0 0.0
      %2554 = vmatpush1.xpose.msra.mxu0 0.0
      %2555 = vmatprep.subr.mxu0 0.0
      %2556 = vmatpush1.xpose.msra.mxu0 0.0
      %2557 = vmatprep.subr.mxu0 0.0
      %2558 = vmatpush1.xpose.msra.mxu0 0.0
      %2559 = vmatprep.subr.mxu0 0.0
      %2560 = vmatpush1.xpose.msra.mxu0 0.0
      %2561 = vmatprep.subr.mxu0 0.0
      %2562 = vmatpush1.xpose.msra.mxu0 0.0
      %2563 = vmatprep.subr.mxu0 0.0
      %2564 = vmatpush1.xpose.msra.mxu0 0.0
      %2565 = vmatprep.subr.mxu0 0.0
      %2566 = vmatpush1.xpose.msra.mxu0 0.0
      %2567 = vmatprep.subr.mxu0 0.0
      %2568 = vmatpush1.xpose.msra.mxu0 0.0
      %2569 = vmatprep.subr.mxu0 0.0
      %2570 = vmatpush1.xpose.msra.mxu0 0.0
      %2571 = vmatprep.subr.mxu0 0.0
      %2572 = vmatpush1.xpose.msra.mxu0 0.0
      %2573 = vmatprep.subr.mxu0 0.0
      %2574 = vmatpush1.xpose.msra.mxu0 0.0
      %2575 = vmatprep.subr.mxu0 0.0
      %2576 = vmatpush1.xpose.msra.mxu0 0.0
      %2577 = vmatprep.mubr.f32.mxu0 0.0
      %2578 = vmatmul.mubr.f32.gmra.mrb[0].mxu0 %v2481
      %v2579 = vpop.f32.mrb[0].mxu0
      %v2580 = vadd.f32 0.0, %v2579
      %v2581 = vpop.f32.mrb[0].mxu0
      %2582 = vmatprep.mubr.f32.mxu0 0.0
      %2583 = vmatmul.mubr.f32.gmra.mrb[0].mxu0 %v2483
      %v2584 = vpop.f32.mrb[0].mxu0
      %v2585 = vadd.f32 0.0, %v2584
      %v2586 = vpop.f32.mrb[0].mxu0
      %2587 = vmatprep.mubr.f32.mxu0 0.0
      %2588 = vmatmul.mubr.f32.gmra.mrb[0].mxu0 %v2485
      %v2589 = vpop.f32.mrb[0].mxu0
      %v2590 = vadd.f32 0.0, %v2589
      %v2591 = vpop.f32.mrb[0].mxu0
      %2592 = vmatprep.mubr.f32.mxu0 0.0
      %2593 = vmatmul.mubr.f32.gmra.mrb[0].mxu0 %v2487
      %v2594 = vpop.f32.mrb[0].mxu0
      %v2595 = vadd.f32 0.0, %v2594
      %v2596 = vpop.f32.mrb[0].mxu0
      %2597 = vmatprep.mubr.f32.mxu0 0.0
      %2598 = vmatmul.mubr.f32.gmra.mrb[0].mxu0 %v2489
      %v2599 = vpop.f32.mrb[0].mxu0
      %v2600 = vadd.f32 0.0, %v2599
      %v2601 = vpop.f32.mrb[0].mxu0
      %2602 = vmatprep.mubr.f32.mxu0 0.0
      %2603 = vmatmul.mubr.f32.gmra.mrb[0].mxu0 %v2491
      %v2604 = vpop.f32.mrb[0].mxu0
      %v2605 = vadd.f32 0.0, %v2604
      %v2606 = vpop.f32.mrb[0].mxu0
      %2607 = vmatprep.mubr.f32.mxu0 0.0
      %2608 = vmatmul.mubr.f32.gmra.mrb[0].mxu0 %v2493
      %v2609 = vpop.f32.mrb[0].mxu0
      %v2610 = vadd.f32 0.0, %v2609
      %v2611 = vpop.f32.mrb[0].mxu0
      %2612 = vmatprep.mubr.f32.mxu0 0.0
      %2613 = vmatmul.mubr.f32.gmra.mrb[0].mxu0 %v2495
      %v2614 = vpop.f32.mrb[0].mxu0
      %v2615 = vadd.f32 0.0, %v2614
      %v2616 = vpop.f32.mrb[0].mxu0
      %2617 = vdwg.mxu0
      %v2618 = vsel %vm976, %v2580, -inf
      %2619 = vmax.xlane.f32.xlu0 %v2618
      %v2620 = vpop.xlane.xlu0 %2619
      %v2621 = vsel %vm976, %v2585, -inf
      %2622 = vmax.xlane.f32.xlu0 %v2621
      %v2623 = vpop.xlane.xlu0 %2622
      %v2624 = vsel %vm976, %v2590, -inf
      %2625 = vmax.xlane.f32.xlu0 %v2624
      %v2626 = vpop.xlane.xlu0 %2625
      %v2627 = vsel %vm976, %v2595, -inf
      %2628 = vmax.xlane.f32.xlu0 %v2627
      %v2629 = vpop.xlane.xlu0 %2628
      %v2630 = vsel %vm976, %v2600, -inf
      %2631 = vmax.xlane.f32.xlu0 %v2630
      %v2632 = vpop.xlane.xlu0 %2631
      %v2633 = vsel %vm976, %v2605, -inf
      %2634 = vmax.xlane.f32.xlu0 %v2633
      %v2635 = vpop.xlane.xlu0 %2634
      %v2636 = vsel %vm976, %v2610, -inf
      %2637 = vmax.xlane.f32.xlu0 %v2636
      %v2638 = vpop.xlane.xlu0 %2637
      %v2639 = vsel %vm976, %v2615, -inf
      %2640 = vmax.xlane.f32.xlu0 %v2639
      %v2641 = vpop.xlane.xlu0 %2640
      %v2642 = vsub.f32 %v2580, %v2620
      %v2643 = vsub.f32 %v2585, %v2623
      %v2644 = vsub.f32 %v2590, %v2626
      %v2645 = vsub.f32 %v2595, %v2629
      %v2646 = vsub.f32 %v2600, %v2632
      %v2647 = vsub.f32 %v2605, %v2635
      %v2648 = vsub.f32 %v2610, %v2638
      %v2649 = vsub.f32 %v2615, %v2641
      %v2650 = vmul.f32 %v2642, 1.442695
      %v2651 = vpow.pop %v2650
      %v2652 = vmul.f32 %v2643, 1.442695
      %v2653 = vpow.pop %v2652
      %v2654 = vmul.f32 %v2644, 1.442695
      %v2655 = vpow.pop %v2654
      %v2656 = vmul.f32 %v2645, 1.442695
      %v2657 = vpow.pop %v2656
      %v2658 = vmul.f32 %v2646, 1.442695
      %v2659 = vpow.pop %v2658
      %v2660 = vmul.f32 %v2647, 1.442695
      %v2661 = vpow.pop %v2660
      %v2662 = vmul.f32 %v2648, 1.442695
      %v2663 = vpow.pop %v2662
      %v2664 = vmul.f32 %v2649, 1.442695
      %v2665 = vpow.pop %v2664
      %v2666 = vsel %vm976, %v2651, 0.0
      %2667 = vadd.xlane.f32.xlu0 %v2666
      %v2668 = vpop.xlane.xlu0 %2667
      %v2669 = vsel %vm976, %v2653, 0.0
      %2670 = vadd.xlane.f32.xlu0 %v2669
      %v2671 = vpop.xlane.xlu0 %2670
      %v2672 = vsel %vm976, %v2655, 0.0
      %2673 = vadd.xlane.f32.xlu0 %v2672
      %v2674 = vpop.xlane.xlu0 %2673
      %v2675 = vsel %vm976, %v2657, 0.0
      %2676 = vadd.xlane.f32.xlu0 %v2675
      %v2677 = vpop.xlane.xlu0 %2676
      %v2678 = vsel %vm976, %v2659, 0.0
      %2679 = vadd.xlane.f32.xlu0 %v2678
      %v2680 = vpop.xlane.xlu0 %2679
      %v2681 = vsel %vm976, %v2661, 0.0
      %2682 = vadd.xlane.f32.xlu0 %v2681
      %v2683 = vpop.xlane.xlu0 %2682
      %v2684 = vsel %vm976, %v2663, 0.0
      %2685 = vadd.xlane.f32.xlu0 %v2684
      %v2686 = vpop.xlane.xlu0 %2685
      %v2687 = vsel %vm976, %v2665, 0.0
      %2688 = vadd.xlane.f32.xlu0 %v2687
      %v2689 = vpop.xlane.xlu0 %2688
      %v2690 = vrcp.pop %v2668
      %v2691 = vrcp.pop %v2671
      %v2692 = vrcp.pop %v2674
      %v2693 = vrcp.pop %v2677
      %v2694 = vrcp.pop %v2680
      %v2695 = vrcp.pop %v2683
      %v2696 = vrcp.pop %v2686
      %v2697 = vrcp.pop %v2689
      %v2698 = vmul.f32 %v2651, %v2690
      %v2699 = vmul.f32 %v2653, %v2691
      %v2700 = vmul.f32 %v2655, %v2692
      %v2701 = vmul.f32 %v2657, %v2693
      %v2702 = vmul.f32 %v2659, %v2694
      %v2703 = vmul.f32 %v2661, %v2695
      %v2704 = vmul.f32 %v2663, %v2696
      %v2705 = vmul.f32 %v2665, %v2697
      %2706 = vrot.lane.b32.xlu0 %v757, 40
      %v2707 = vpop.permute.xlu0 %2706
      %2708 = vrot.lane.b32.xlu0 %v762, 40
      %v2709 = vpop.permute.xlu0 %2708
      %2710 = vrot.lane.b32.xlu0 %v767, 40
      %v2711 = vpop.permute.xlu0 %2710
      %2712 = vrot.lane.b32.xlu0 %v772, 40
      %v2713 = vpop.permute.xlu0 %2712
      %2714 = vrot.lane.b32.xlu0 %v777, 40
      %v2715 = vpop.permute.xlu0 %2714
      %2716 = vrot.lane.b32.xlu0 %v782, 40
      %v2717 = vpop.permute.xlu0 %2716
      %2718 = vrot.lane.b32.xlu0 %v787, 40
      %v2719 = vpop.permute.xlu0 %2718
      %2720 = vrot.lane.b32.xlu0 %v792, 40
      %v2721 = vpop.permute.xlu0 %2720
      %v2731 = vsel %vm976, %v2698, 0
      %v2734 = vsel %vm976, %v2699, 0
      %v2737 = vsel %vm976, %v2700, 0
      %v2740 = vsel %vm976, %v2701, 0
      %v2743 = vsel %vm976, %v2702, 0
      %v2746 = vsel %vm976, %v2703, 0
      %v2749 = vsel %vm976, %v2704, 0
      %v2752 = vsel %vm976, %v2705, 0
      %2754 = vmatprep.subr.mxu0 0.0
      %2755 = vmatpush1.msra.mxu0 %v2707
      %2756 = vmatprep.subr.mxu0 0.0
      %2757 = vmatpush1.msra.mxu0 %v2709
      %2758 = vmatprep.subr.mxu0 0.0
      %2759 = vmatpush1.msra.mxu0 %v2711
      %2760 = vmatprep.subr.mxu0 0.0
      %2761 = vmatpush1.msra.mxu0 %v2713
      %2762 = vmatprep.subr.mxu0 0.0
      %2763 = vmatpush1.msra.mxu0 %v2715
      %2764 = vmatprep.subr.mxu0 0.0
      %2765 = vmatpush1.msra.mxu0 %v2717
      %2766 = vmatprep.subr.mxu0 0.0
      %2767 = vmatpush1.msra.mxu0 %v2719
      %2768 = vmatprep.subr.mxu0 0.0
      %2769 = vmatpush1.msra.mxu0 %v2721
      %2770 = vmatprep.subr.mxu0 0.0
      %2771 = vmatpush1.msra.mxu0 0.0
      %2772 = vmatprep.subr.mxu0 0.0
      %2773 = vmatpush1.msra.mxu0 0.0
      %2774 = vmatprep.subr.mxu0 0.0
      %2775 = vmatpush1.msra.mxu0 0.0
      %2776 = vmatprep.subr.mxu0 0.0
      %2777 = vmatpush1.msra.mxu0 0.0
      %2778 = vmatprep.subr.mxu0 0.0
      %2779 = vmatpush1.msra.mxu0 0.0
      %2780 = vmatprep.subr.mxu0 0.0
      %2781 = vmatpush1.msra.mxu0 0.0
      %2782 = vmatprep.subr.mxu0 0.0
      %2783 = vmatpush1.msra.mxu0 0.0
      %2784 = vmatprep.subr.mxu0 0.0
      %2785 = vmatpush1.msra.mxu0 0.0
      %2786 = vmatprep.subr.mxu0 0.0
      %2787 = vmatpush1.msra.mxu0 0.0
      %2788 = vmatprep.subr.mxu0 0.0
      %2789 = vmatpush1.msra.mxu0 0.0
      %2790 = vmatprep.subr.mxu0 0.0
      %2791 = vmatpush1.msra.mxu0 0.0
      %2792 = vmatprep.subr.mxu0 0.0
      %2793 = vmatpush1.msra.mxu0 0.0
      %2794 = vmatprep.subr.mxu0 0.0
      %2795 = vmatpush1.msra.mxu0 0.0
      %2796 = vmatprep.subr.mxu0 0.0
      %2797 = vmatpush1.msra.mxu0 0.0
      %2798 = vmatprep.subr.mxu0 0.0
      %2799 = vmatpush1.msra.mxu0 0.0
      %2800 = vmatprep.subr.mxu0 0.0
      %2801 = vmatpush1.msra.mxu0 0.0
      %2802 = vmatprep.subr.mxu0 0.0
      %2803 = vmatpush1.msra.mxu0 0.0
      %2804 = vmatprep.subr.mxu0 0.0
      %2805 = vmatpush1.msra.mxu0 0.0
      %2806 = vmatprep.subr.mxu0 0.0
      %2807 = vmatpush1.msra.mxu0 0.0
      %2808 = vmatprep.subr.mxu0 0.0
      %2809 = vmatpush1.msra.mxu0 0.0
      %2810 = vmatprep.subr.mxu0 0.0
      %2811 = vmatpush1.msra.mxu0 0.0
      %2812 = vmatprep.subr.mxu0 0.0
      %2813 = vmatpush1.msra.mxu0 0.0
      %2814 = vmatprep.subr.mxu0 0.0
      %2815 = vmatpush1.msra.mxu0 0.0
      %2816 = vmatprep.subr.mxu0 0.0
      %2817 = vmatpush1.msra.mxu0 0.0
      %2818 = vmatprep.mubr.f32.mxu0 0.0
      %2819 = vmatmul.mubr.f32.gmra.mrb[0].mxu0 %v2731
      %v2820 = vpop.f32.mrb[0].mxu0
      %v2821 = vadd.f32 0.0, %v2820
      %v2822 = vpop.f32.mrb[0].mxu0
      %2823 = vmatprep.mubr.f32.mxu0 0.0
      %2824 = vmatmul.mubr.f32.gmra.mrb[0].mxu0 %v2734
      %v2825 = vpop.f32.mrb[0].mxu0
      %v2826 = vadd.f32 0.0, %v2825
      %v2827 = vpop.f32.mrb[0].mxu0
      %2828 = vmatprep.mubr.f32.mxu0 0.0
      %2829 = vmatmul.mubr.f32.gmra.mrb[0].mxu0 %v2737
      %v2830 = vpop.f32.mrb[0].mxu0
      %v2831 = vadd.f32 0.0, %v2830
      %v2832 = vpop.f32.mrb[0].mxu0
      %2833 = vmatprep.mubr.f32.mxu0 0.0
      %2834 = vmatmul.mubr.f32.gmra.mrb[0].mxu0 %v2740
      %v2835 = vpop.f32.mrb[0].mxu0
      %v2836 = vadd.f32 0.0, %v2835
      %v2837 = vpop.f32.mrb[0].mxu0
      %2838 = vmatprep.mubr.f32.mxu0 0.0
      %2839 = vmatmul.mubr.f32.gmra.mrb[0].mxu0 %v2743
      %v2840 = vpop.f32.mrb[0].mxu0
      %v2841 = vadd.f32 0.0, %v2840
      %v2842 = vpop.f32.mrb[0].mxu0
      %2843 = vmatprep.mubr.f32.mxu0 0.0
      %2844 = vmatmul.mubr.f32.gmra.mrb[0].mxu0 %v2746
      %v2845 = vpop.f32.mrb[0].mxu0
      %v2846 = vadd.f32 0.0, %v2845
      %v2847 = vpop.f32.mrb[0].mxu0
      %2848 = vmatprep.mubr.f32.mxu0 0.0
      %2849 = vmatmul.mubr.f32.gmra.mrb[0].mxu0 %v2749
      %v2850 = vpop.f32.mrb[0].mxu0
      %v2851 = vadd.f32 0.0, %v2850
      %v2852 = vpop.f32.mrb[0].mxu0
      %2853 = vmatprep.mubr.f32.mxu0 0.0
      %2854 = vmatmul.mubr.f32.gmra.mrb[0].mxu0 %v2752
      %v2855 = vpop.f32.mrb[0].mxu0
      %v2856 = vadd.f32 0.0, %v2855
      %v2857 = vpop.f32.mrb[0].mxu0
      %2858 = vdwg.mxu0
      %v2860 = vsel %vm838, %v2821, 0
      %v2863 = vsel %vm838, %v2826, 0
      %v2866 = vsel %vm838, %v2831, 0
      %v2869 = vsel %vm838, %v2836, 0
      %v2872 = vsel %vm838, %v2841, 0
      %v2875 = vsel %vm838, %v2846, 0
      %v2878 = vsel %vm838, %v2851, 0
      %v2881 = vsel %vm838, %v2856, 0
      %2883 = vmatprep.subr.mxu0 0.0
      %2884 = vmatpush1.msra.mxu0 %v798
      %2885 = vmatprep.subr.mxu0 0.0
      %2886 = vmatpush1.msra.mxu0 0.0
      %2887 = vmatprep.subr.mxu0 0.0
      %2888 = vmatpush1.msra.mxu0 0.0
      %2889 = vmatprep.subr.mxu0 0.0
      %2890 = vmatpush1.msra.mxu0 0.0
      %2891 = vmatprep.subr.mxu0 0.0
      %2892 = vmatpush1.msra.mxu0 0.0
      %2893 = vmatprep.subr.mxu0 0.0
      %2894 = vmatpush1.msra.mxu0 0.0
      %2895 = vmatprep.subr.mxu0 0.0
      %2896 = vmatpush1.msra.mxu0 0.0
      %2897 = vmatprep.subr.mxu0 0.0
      %2898 = vmatpush1.msra.mxu0 0.0
      %2899 = vmatprep.subr.mxu0 0.0
      %2900 = vmatpush1.msra.mxu0 0.0
      %2901 = vmatprep.subr.mxu0 0.0
      %2902 = vmatpush1.msra.mxu0 0.0
      %2903 = vmatprep.subr.mxu0 0.0
      %2904 = vmatpush1.msra.mxu0 0.0
      %2905 = vmatprep.subr.mxu0 0.0
      %2906 = vmatpush1.msra.mxu0 0.0
      %2907 = vmatprep.subr.mxu0 0.0
      %2908 = vmatpush1.msra.mxu0 0.0
      %2909 = vmatprep.subr.mxu0 0.0
      %2910 = vmatpush1.msra.mxu0 0.0
      %2911 = vmatprep.subr.mxu0 0.0
      %2912 = vmatpush1.msra.mxu0 0.0
      %2913 = vmatprep.subr.mxu0 0.0
      %2914 = vmatpush1.msra.mxu0 0.0
      %2915 = vmatprep.subr.mxu0 0.0
      %2916 = vmatpush1.msra.mxu0 0.0
      %2917 = vmatprep.subr.mxu0 0.0
      %2918 = vmatpush1.msra.mxu0 0.0
      %2919 = vmatprep.subr.mxu0 0.0
      %2920 = vmatpush1.msra.mxu0 0.0
      %2921 = vmatprep.subr.mxu0 0.0
      %2922 = vmatpush1.msra.mxu0 0.0
      %2923 = vmatprep.subr.mxu0 0.0
      %2924 = vmatpush1.msra.mxu0 0.0
      %2925 = vmatprep.subr.mxu0 0.0
      %2926 = vmatpush1.msra.mxu0 0.0
      %2927 = vmatprep.subr.mxu0 0.0
      %2928 = vmatpush1.msra.mxu0 0.0
      %2929 = vmatprep.subr.mxu0 0.0
      %2930 = vmatpush1.msra.mxu0 0.0
      %2931 = vmatprep.subr.mxu0 0.0
      %2932 = vmatpush1.msra.mxu0 0.0
      %2933 = vmatprep.subr.mxu0 0.0
      %2934 = vmatpush1.msra.mxu0 0.0
      %2935 = vmatprep.subr.mxu0 0.0
      %2936 = vmatpush1.msra.mxu0 0.0
      %2937 = vmatprep.subr.mxu0 0.0
      %2938 = vmatpush1.msra.mxu0 0.0
      %2939 = vmatprep.subr.mxu0 0.0
      %2940 = vmatpush1.msra.mxu0 0.0
      %2941 = vmatprep.subr.mxu0 0.0
      %2942 = vmatpush1.msra.mxu0 0.0
      %2943 = vmatprep.subr.mxu0 0.0
      %2944 = vmatpush1.msra.mxu0 0.0
      %2945 = vmatprep.subr.mxu0 0.0
      %2946 = vmatpush1.msra.mxu0 0.0
      %2947 = vmatprep.mubr.f32.mxu0 0.0
      %2948 = vmatmul.mubr.f32.gmra.mrb[0].mxu0 %v2860
      %v2949 = vpop.f32.mrb[0].mxu0
      %v2950 = vadd.f32 0.0, %v2949
      %v2951 = vpop.f32.mrb[0].mxu0
      %2952 = vmatprep.mubr.f32.mxu0 0.0
      %2953 = vmatmul.mubr.f32.gmra.mrb[0].mxu0 %v2863
      %v2954 = vpop.f32.mrb[0].mxu0
      %v2955 = vadd.f32 0.0, %v2954
      %v2956 = vpop.f32.mrb[0].mxu0
      %2957 = vmatprep.mubr.f32.mxu0 0.0
      %2958 = vmatmul.mubr.f32.gmra.mrb[0].mxu0 %v2866
      %v2959 = vpop.f32.mrb[0].mxu0
      %v2960 = vadd.f32 0.0, %v2959
      %v2961 = vpop.f32.mrb[0].mxu0
      %2962 = vmatprep.mubr.f32.mxu0 0.0
      %2963 = vmatmul.mubr.f32.gmra.mrb[0].mxu0 %v2869
      %v2964 = vpop.f32.mrb[0].mxu0
      %v2965 = vadd.f32 0.0, %v2964
      %v2966 = vpop.f32.mrb[0].mxu0
      %2967 = vmatprep.mubr.f32.mxu0 0.0
      %2968 = vmatmul.mubr.f32.gmra.mrb[0].mxu0 %v2872
      %v2969 = vpop.f32.mrb[0].mxu0
      %v2970 = vadd.f32 0.0, %v2969
      %v2971 = vpop.f32.mrb[0].mxu0
      %2972 = vmatprep.mubr.f32.mxu0 0.0
      %2973 = vmatmul.mubr.f32.gmra.mrb[0].mxu0 %v2875
      %v2974 = vpop.f32.mrb[0].mxu0
      %v2975 = vadd.f32 0.0, %v2974
      %v2976 = vpop.f32.mrb[0].mxu0
      %2977 = vmatprep.mubr.f32.mxu0 0.0
      %2978 = vmatmul.mubr.f32.gmra.mrb[0].mxu0 %v2878
      %v2979 = vpop.f32.mrb[0].mxu0
      %v2980 = vadd.f32 0.0, %v2979
      %v2981 = vpop.f32.mrb[0].mxu0
      %2982 = vmatprep.mubr.f32.mxu0 0.0
      %2983 = vmatmul.mubr.f32.gmra.mrb[0].mxu0 %v2881
      %v2984 = vpop.f32.mrb[0].mxu0
      %v2985 = vadd.f32 0.0, %v2984
      %v2986 = vpop.f32.mrb[0].mxu0
      %2987 = vdwg.mxu0
      %v2988 = vadd.f32 %v2441, %v2950
      %v2989 = vadd.f32 %v2442, %v2955
      %v2990 = vadd.f32 %v2443, %v2960
      %v2991 = vadd.f32 %v2444, %v2965
      %v2992 = vadd.f32 %v2445, %v2970
      %v2993 = vadd.f32 %v2446, %v2975
      %v2994 = vadd.f32 %v2447, %v2980
      %v2995 = vadd.f32 %v2448, %v2985
      %v2996 = vsel %vm665, %v2988, 0.0
      %2997 = vadd.xlane.f32.xlu0 %v2996
      %v2998 = vpop.xlane.xlu0 %2997
      %v2999 = vsel %vm665, %v2989, 0.0
      %3000 = vadd.xlane.f32.xlu0 %v2999
      %v3001 = vpop.xlane.xlu0 %3000
      %v3002 = vsel %vm665, %v2990, 0.0
      %3003 = vadd.xlane.f32.xlu0 %v3002
      %v3004 = vpop.xlane.xlu0 %3003
      %v3005 = vsel %vm665, %v2991, 0.0
      %3006 = vadd.xlane.f32.xlu0 %v3005
      %v3007 = vpop.xlane.xlu0 %3006
      %v3008 = vsel %vm665, %v2992, 0.0
      %3009 = vadd.xlane.f32.xlu0 %v3008
      %v3010 = vpop.xlane.xlu0 %3009
      %v3011 = vsel %vm665, %v2993, 0.0
      %3012 = vadd.xlane.f32.xlu0 %v3011
      %v3013 = vpop.xlane.xlu0 %3012
      %v3014 = vsel %vm665, %v2994, 0.0
      %3015 = vadd.xlane.f32.xlu0 %v3014
      %v3016 = vpop.xlane.xlu0 %3015
      %v3017 = vsel %vm665, %v2995, 0.0
      %3018 = vadd.xlane.f32.xlu0 %v3017
      %v3019 = vpop.xlane.xlu0 %3018
      %v3020 = vrcp.pop 32.0
      %v3021 = vmul.f32 %v2998, %v3020
      %v3022 = vmul.f32 %v3001, %v3020
      %v3023 = vmul.f32 %v3004, %v3020
      %v3024 = vmul.f32 %v3007, %v3020
      %v3025 = vmul.f32 %v3010, %v3020
      %v3026 = vmul.f32 %v3013, %v3020
      %v3027 = vmul.f32 %v3016, %v3020
      %v3028 = vmul.f32 %v3019, %v3020
      %v3029 = vsub.f32 %v2988, %v3021
      %v3030 = vsub.f32 %v2989, %v3022
      %v3031 = vsub.f32 %v2990, %v3023
      %v3032 = vsub.f32 %v2991, %v3024
      %v3033 = vsub.f32 %v2992, %v3025
      %v3034 = vsub.f32 %v2993, %v3026
      %v3035 = vsub.f32 %v2994, %v3027
      %v3036 = vsub.f32 %v2995, %v3028
      %v3037 = vmul.f32 %v3029, %v3029
      %v3038 = vmul.f32 %v3030, %v3030
      %v3039 = vmul.f32 %v3031, %v3031
      %v3040 = vmul.f32 %v3032, %v3032
      %v3041 = vmul.f32 %v3033, %v3033
      %v3042 = vmul.f32 %v3034, %v3034
      %v3043 = vmul.f32 %v3035, %v3035
      %v3044 = vmul.f32 %v3036, %v3036
      %v3045 = vsel %vm665, %v3037, 0.0
      %3046 = vadd.xlane.f32.xlu0 %v3045
      %v3047 = vpop.xlane.xlu0 %3046
      %v3048 = vsel %vm665, %v3038, 0.0
      %3049 = vadd.xlane.f32.xlu0 %v3048
      %v3050 = vpop.xlane.xlu0 %3049
      %v3051 = vsel %vm665, %v3039, 0.0
      %3052 = vadd.xlane.f32.xlu0 %v3051
      %v3053 = vpop.xlane.xlu0 %3052
      %v3054 = vsel %vm665, %v3040, 0.0
      %3055 = vadd.xlane.f32.xlu0 %v3054
      %v3056 = vpop.xlane.xlu0 %3055
      %v3057 = vsel %vm665, %v3041, 0.0
      %3058 = vadd.xlane.f32.xlu0 %v3057
      %v3059 = vpop.xlane.xlu0 %3058
      %v3060 = vsel %vm665, %v3042, 0.0
      %3061 = vadd.xlane.f32.xlu0 %v3060
      %v3062 = vpop.xlane.xlu0 %3061
      %v3063 = vsel %vm665, %v3043, 0.0
      %3064 = vadd.xlane.f32.xlu0 %v3063
      %v3065 = vpop.xlane.xlu0 %3064
      %v3066 = vsel %vm665, %v3044, 0.0
      %3067 = vadd.xlane.f32.xlu0 %v3066
      %v3068 = vpop.xlane.xlu0 %3067
      %v3069 = vmul.f32 %v3047, %v3020
      %v3070 = vmul.f32 %v3050, %v3020
      %v3071 = vmul.f32 %v3053, %v3020
      %v3072 = vmul.f32 %v3056, %v3020
      %v3073 = vmul.f32 %v3059, %v3020
      %v3074 = vmul.f32 %v3062, %v3020
      %v3075 = vmul.f32 %v3065, %v3020
      %v3076 = vmul.f32 %v3068, %v3020
      %v3077 = vadd.f32 %v3069, 1e-05
      %v3078 = vadd.f32 %v3070, 1e-05
      %v3079 = vadd.f32 %v3071, 1e-05
      %v3080 = vadd.f32 %v3072, 1e-05
      %v3081 = vadd.f32 %v3073, 1e-05
      %v3082 = vadd.f32 %v3074, 1e-05
      %v3083 = vadd.f32 %v3075, 1e-05
      %v3084 = vadd.f32 %v3076, 1e-05
      %v3085 = vrsqrt.pop %v3077
      %v3086 = vrsqrt.pop %v3078
      %v3087 = vrsqrt.pop %v3079
      %v3088 = vrsqrt.pop %v3080
      %v3089 = vrsqrt.pop %v3081
      %v3090 = vrsqrt.pop %v3082
      %v3091 = vrsqrt.pop %v3083
      %v3092 = vrsqrt.pop %v3084
      %v3093 = vmul.f32 %v3029, %v3085
      %v3094 = vmul.f32 %v3030, %v3086
      %v3095 = vmul.f32 %v3031, %v3087
      %v3096 = vmul.f32 %v3032, %v3088
      %v3097 = vmul.f32 %v3033, %v3089
      %v3098 = vmul.f32 %v3034, %v3090
      %v3099 = vmul.f32 %v3035, %v3091
      %v3100 = vmul.f32 %v3036, %v3092
      %v3101 = vlaneseq
      %v3102 = vshrl.u32 %v3101, 7
      %v3103 = vsub.s32 0, %v3102
      %v3104 = vrot.slane %v652, %v3103
      %v3105 = vmul.f32 %v3093, %v3104
      %v3106 = vmul.f32 %v3094, %v3104
      %v3107 = vmul.f32 %v3095, %v3104
      %v3108 = vmul.f32 %v3096, %v3104
      %v3109 = vmul.f32 %v3097, %v3104
      %v3110 = vmul.f32 %v3098, %v3104
      %v3111 = vmul.f32 %v3099, %v3104
      %v3112 = vmul.f32 %v3100, %v3104
      %v3113 = vlaneseq
      %v3114 = vshrl.u32 %v3113, 7
      %v3115 = vsub.s32 0, %v3114
      %v3116 = vrot.slane %v653, %v3115
      %v3117 = vadd.f32 %v3105, %v3116
      %v3118 = vadd.f32 %v3106, %v3116
      %v3119 = vadd.f32 %v3107, %v3116
      %v3120 = vadd.f32 %v3108, %v3116
      %v3121 = vadd.f32 %v3109, %v3116
      %v3122 = vadd.f32 %v3110, %v3116
      %v3123 = vadd.f32 %v3111, %v3116
      %v3124 = vadd.f32 %v3112, %v3116
      %v3125 = vld [vmem:[%s598] sm:$0xff]
      %v3126 = vld [vmem:[%s598 + $0x8] sm:$0xff]
      %v3127 = vld [vmem:[%s598 + $0x10] sm:$0xff]
      %v3128 = vld [vmem:[%s598 + $0x18] sm:$0xff]
      %v3129 = vld [vmem:[%s601] sm:$0x1]
      %v3131 = vlaneseq
      %v3132 = vshrl.u32 %v3131, 7
      %v3133 = vsub.s32 0, %v3132
      %v3134 = vrot.slane %v3129, %v3133
      %v3137 = vsel %vm665, %v3117, 0
      %v3140 = vsel %vm665, %v3118, 0
      %v3143 = vsel %vm665, %v3119, 0
      %v3146 = vsel %vm665, %v3120, 0
      %v3149 = vsel %vm665, %v3121, 0
      %v3152 = vsel %vm665, %v3122, 0
      %v3155 = vsel %vm665, %v3123, 0
      %v3158 = vsel %vm665, %v3124, 0
      %3160 = vmatprep.subr.mxu0 0.0
      %3161 = vmatpush1.msra.mxu0 %v3125
      %3162 = vmatprep.subr.mxu0 0.0
      %3163 = vmatpush1.msra.mxu0 %v3126
      %3164 = vmatprep.subr.mxu0 0.0
      %3165 = vmatpush1.msra.mxu0 %v3127
      %3166 = vmatprep.subr.mxu0 0.0
      %3167 = vmatpush1.msra.mxu0 %v3128
      %3168 = vmatprep.subr.mxu0 0.0
      %3169 = vmatpush1.msra.mxu0 0.0
      %3170 = vmatprep.subr.mxu0 0.0
      %3171 = vmatpush1.msra.mxu0 0.0
      %3172 = vmatprep.subr.mxu0 0.0
      %3173 = vmatpush1.msra.mxu0 0.0
      %3174 = vmatprep.subr.mxu0 0.0
      %3175 = vmatpush1.msra.mxu0 0.0
      %3176 = vmatprep.subr.mxu0 0.0
      %3177 = vmatpush1.msra.mxu0 0.0
      %3178 = vmatprep.subr.mxu0 0.0
      %3179 = vmatpush1.msra.mxu0 0.0
      %3180 = vmatprep.subr.mxu0 0.0
      %3181 = vmatpush1.msra.mxu0 0.0
      %3182 = vmatprep.subr.mxu0 0.0
      %3183 = vmatpush1.msra.mxu0 0.0
      %3184 = vmatprep.subr.mxu0 0.0
      %3185 = vmatpush1.msra.mxu0 0.0
      %3186 = vmatprep.subr.mxu0 0.0
      %3187 = vmatpush1.msra.mxu0 0.0
      %3188 = vmatprep.subr.mxu0 0.0
      %3189 = vmatpush1.msra.mxu0 0.0
      %3190 = vmatprep.subr.mxu0 0.0
      %3191 = vmatpush1.msra.mxu0 0.0
      %3192 = vmatprep.subr.mxu0 0.0
      %3193 = vmatpush1.msra.mxu0 0.0
      %3194 = vmatprep.subr.mxu0 0.0
      %3195 = vmatpush1.msra.mxu0 0.0
      %3196 = vmatprep.subr.mxu0 0.0
      %3197 = vmatpush1.msra.mxu0 0.0
      %3198 = vmatprep.subr.mxu0 0.0
      %3199 = vmatpush1.msra.mxu0 0.0
      %3200 = vmatprep.subr.mxu0 0.0
      %3201 = vmatpush1.msra.mxu0 0.0
      %3202 = vmatprep.subr.mxu0 0.0
      %3203 = vmatpush1.msra.mxu0 0.0
      %3204 = vmatprep.subr.mxu0 0.0
      %3205 = vmatpush1.msra.mxu0 0.0
      %3206 = vmatprep.subr.mxu0 0.0
      %3207 = vmatpush1.msra.mxu0 0.0
      %3208 = vmatprep.subr.mxu0 0.0
      %3209 = vmatpush1.msra.mxu0 0.0
      %3210 = vmatprep.subr.mxu0 0.0
      %3211 = vmatpush1.msra.mxu0 0.0
      %3212 = vmatprep.subr.mxu0 0.0
      %3213 = vmatpush1.msra.mxu0 0.0
      %3214 = vmatprep.subr.mxu0 0.0
      %3215 = vmatpush1.msra.mxu0 0.0
      %3216 = vmatprep.subr.mxu0 0.0
      %3217 = vmatpush1.msra.mxu0 0.0
      %3218 = vmatprep.subr.mxu0 0.0
      %3219 = vmatpush1.msra.mxu0 0.0
      %3220 = vmatprep.subr.mxu0 0.0
      %3221 = vmatpush1.msra.mxu0 0.0
      %3222 = vmatprep.subr.mxu0 0.0
      %3223 = vmatpush1.msra.mxu0 0.0
      %3224 = vmatprep.mubr.f32.mxu0 0.0
      %3225 = vmatmul.mubr.f32.gmra.mrb[0].mxu0 %v3137
      %v3226 = vpop.f32.mrb[0].mxu0
      %v3227 = vadd.f32 %v3134, %v3226
      %v3228 = vpop.f32.mrb[0].mxu0
      %3229 = vmatprep.mubr.f32.mxu0 0.0
      %3230 = vmatmul.mubr.f32.gmra.mrb[0].mxu0 %v3140
      %v3231 = vpop.f32.mrb[0].mxu0
      %v3232 = vadd.f32 %v3134, %v3231
      %v3233 = vpop.f32.mrb[0].mxu0
      %3234 = vmatprep.mubr.f32.mxu0 0.0
      %3235 = vmatmul.mubr.f32.gmra.mrb[0].mxu0 %v3143
      %v3236 = vpop.f32.mrb[0].mxu0
      %v3237 = vadd.f32 %v3134, %v3236
      %v3238 = vpop.f32.mrb[0].mxu0
      %3239 = vmatprep.mubr.f32.mxu0 0.0
      %3240 = vmatmul.mubr.f32.gmra.mrb[0].mxu0 %v3146
      %v3241 = vpop.f32.mrb[0].mxu0
      %v3242 = vadd.f32 %v3134, %v3241
      %v3243 = vpop.f32.mrb[0].mxu0
      %3244 = vmatprep.mubr.f32.mxu0 0.0
      %3245 = vmatmul.mubr.f32.gmra.mrb[0].mxu0 %v3149
      %v3246 = vpop.f32.mrb[0].mxu0
      %v3247 = vadd.f32 %v3134, %v3246
      %v3248 = vpop.f32.mrb[0].mxu0
      %3249 = vmatprep.mubr.f32.mxu0 0.0
      %3250 = vmatmul.mubr.f32.gmra.mrb[0].mxu0 %v3152
      %v3251 = vpop.f32.mrb[0].mxu0
      %v3252 = vadd.f32 %v3134, %v3251
      %v3253 = vpop.f32.mrb[0].mxu0
      %3254 = vmatprep.mubr.f32.mxu0 0.0
      %3255 = vmatmul.mubr.f32.gmra.mrb[0].mxu0 %v3155
      %v3256 = vpop.f32.mrb[0].mxu0
      %v3257 = vadd.f32 %v3134, %v3256
      %v3258 = vpop.f32.mrb[0].mxu0
      %3259 = vmatprep.mubr.f32.mxu0 0.0
      %3260 = vmatmul.mubr.f32.gmra.mrb[0].mxu0 %v3158
      %v3261 = vpop.f32.mrb[0].mxu0
      %v3262 = vadd.f32 %v3134, %v3261
      %v3263 = vpop.f32.mrb[0].mxu0
      %3264 = vdwg.mxu0
      %v3265 = vmax.f32 %v3227, 0.0
      %v3266 = vmax.f32 %v3232, 0.0
      %v3267 = vmax.f32 %v3237, 0.0
      %v3268 = vmax.f32 %v3242, 0.0
      %v3269 = vmax.f32 %v3247, 0.0
      %v3270 = vmax.f32 %v3252, 0.0
      %v3271 = vmax.f32 %v3257, 0.0
      %v3272 = vmax.f32 %v3262, 0.0
      %v3273 = vld [vmem:[%s606] sm:$0xff]
      %v3274 = vld [vmem:[%s606 + $0x8] sm:$0xff]
      %v3275 = vld [vmem:[%s606 + $0x10] sm:$0xff]
      %v3276 = vld [vmem:[%s606 + $0x18] sm:$0xff]
      %v3277 = vld [vmem:[%s606 + $0x20] sm:$0xff]
      %v3278 = vld [vmem:[%s606 + $0x28] sm:$0xff]
      %v3279 = vld [vmem:[%s606 + $0x30] sm:$0xff]
      %v3280 = vld [vmem:[%s606 + $0x38] sm:$0xff]
      %v3282 = vsel %vm976, %v3265, 0
      %v3285 = vsel %vm976, %v3266, 0
      %v3288 = vsel %vm976, %v3267, 0
      %v3291 = vsel %vm976, %v3268, 0
      %v3294 = vsel %vm976, %v3269, 0
      %v3297 = vsel %vm976, %v3270, 0
      %v3300 = vsel %vm976, %v3271, 0
      %v3303 = vsel %vm976, %v3272, 0
      %3305 = vmatprep.subr.mxu0 0.0
      %3306 = vmatpush1.msra.mxu0 %v3273
      %3307 = vmatprep.subr.mxu0 0.0
      %3308 = vmatpush1.msra.mxu0 %v3274
      %3309 = vmatprep.subr.mxu0 0.0
      %3310 = vmatpush1.msra.mxu0 %v3275
      %3311 = vmatprep.subr.mxu0 0.0
      %3312 = vmatpush1.msra.mxu0 %v3276
      %3313 = vmatprep.subr.mxu0 0.0
      %3314 = vmatpush1.msra.mxu0 %v3277
      %3315 = vmatprep.subr.mxu0 0.0
      %3316 = vmatpush1.msra.mxu0 %v3278
      %3317 = vmatprep.subr.mxu0 0.0
      %3318 = vmatpush1.msra.mxu0 %v3279
      %3319 = vmatprep.subr.mxu0 0.0
      %3320 = vmatpush1.msra.mxu0 %v3280
      %3321 = vmatprep.subr.mxu0 0.0
      %3322 = vmatpush1.msra.mxu0 0.0
      %3323 = vmatprep.subr.mxu0 0.0
      %3324 = vmatpush1.msra.mxu0 0.0
      %3325 = vmatprep.subr.mxu0 0.0
      %3326 = vmatpush1.msra.mxu0 0.0
      %3327 = vmatprep.subr.mxu0 0.0
      %3328 = vmatpush1.msra.mxu0 0.0
      %3329 = vmatprep.subr.mxu0 0.0
      %3330 = vmatpush1.msra.mxu0 0.0
      %3331 = vmatprep.subr.mxu0 0.0
      %3332 = vmatpush1.msra.mxu0 0.0
      %3333 = vmatprep.subr.mxu0 0.0
      %3334 = vmatpush1.msra.mxu0 0.0
      %3335 = vmatprep.subr.mxu0 0.0
      %3336 = vmatpush1.msra.mxu0 0.0
      %3337 = vmatprep.subr.mxu0 0.0
      %3338 = vmatpush1.msra.mxu0 0.0
      %3339 = vmatprep.subr.mxu0 0.0
      %3340 = vmatpush1.msra.mxu0 0.0
      %3341 = vmatprep.subr.mxu0 0.0
      %3342 = vmatpush1.msra.mxu0 0.0
      %3343 = vmatprep.subr.mxu0 0.0
      %3344 = vmatpush1.msra.mxu0 0.0
      %3345 = vmatprep.subr.mxu0 0.0
      %3346 = vmatpush1.msra.mxu0 0.0
      %3347 = vmatprep.subr.mxu0 0.0
      %3348 = vmatpush1.msra.mxu0 0.0
      %3349 = vmatprep.subr.mxu0 0.0
      %3350 = vmatpush1.msra.mxu0 0.0
      %3351 = vmatprep.subr.mxu0 0.0
      %3352 = vmatpush1.msra.mxu0 0.0
      %3353 = vmatprep.subr.mxu0 0.0
      %3354 = vmatpush1.msra.mxu0 0.0
      %3355 = vmatprep.subr.mxu0 0.0
      %3356 = vmatpush1.msra.mxu0 0.0
      %3357 = vmatprep.subr.mxu0 0.0
      %3358 = vmatpush1.msra.mxu0 0.0
      %3359 = vmatprep.subr.mxu0 0.0
      %3360 = vmatpush1.msra.mxu0 0.0
      %3361 = vmatprep.subr.mxu0 0.0
      %3362 = vmatpush1.msra.mxu0 0.0
      %3363 = vmatprep.subr.mxu0 0.0
      %3364 = vmatpush1.msra.mxu0 0.0
      %3365 = vmatprep.subr.mxu0 0.0
      %3366 = vmatpush1.msra.mxu0 0.0
      %3367 = vmatprep.subr.mxu0 0.0
      %3368 = vmatpush1.msra.mxu0 0.0
      %3369 = vmatprep.mubr.f32.mxu0 0.0
      %3370 = vmatmul.mubr.f32.gmra.mrb[0].mxu0 %v3282
      %v3371 = vpop.f32.mrb[0].mxu0
      %v3372 = vadd.f32 0.0, %v3371
      %v3373 = vpop.f32.mrb[0].mxu0
      %3374 = vmatprep.mubr.f32.mxu0 0.0
      %3375 = vmatmul.mubr.f32.gmra.mrb[0].mxu0 %v3285
      %v3376 = vpop.f32.mrb[0].mxu0
      %v3377 = vadd.f32 0.0, %v3376
      %v3378 = vpop.f32.mrb[0].mxu0
      %3379 = vmatprep.mubr.f32.mxu0 0.0
      %3380 = vmatmul.mubr.f32.gmra.mrb[0].mxu0 %v3288
      %v3381 = vpop.f32.mrb[0].mxu0
      %v3382 = vadd.f32 0.0, %v3381
      %v3383 = vpop.f32.mrb[0].mxu0
      %3384 = vmatprep.mubr.f32.mxu0 0.0
      %3385 = vmatmul.mubr.f32.gmra.mrb[0].mxu0 %v3291
      %v3386 = vpop.f32.mrb[0].mxu0
      %v3387 = vadd.f32 0.0, %v3386
      %v3388 = vpop.f32.mrb[0].mxu0
      %3389 = vmatprep.mubr.f32.mxu0 0.0
      %3390 = vmatmul.mubr.f32.gmra.mrb[0].mxu0 %v3294
      %v3391 = vpop.f32.mrb[0].mxu0
      %v3392 = vadd.f32 0.0, %v3391
      %v3393 = vpop.f32.mrb[0].mxu0
      %3394 = vmatprep.mubr.f32.mxu0 0.0
      %3395 = vmatmul.mubr.f32.gmra.mrb[0].mxu0 %v3297
      %v3396 = vpop.f32.mrb[0].mxu0
      %v3397 = vadd.f32 0.0, %v3396
      %v3398 = vpop.f32.mrb[0].mxu0
      %3399 = vmatprep.mubr.f32.mxu0 0.0
      %3400 = vmatmul.mubr.f32.gmra.mrb[0].mxu0 %v3300
      %v3401 = vpop.f32.mrb[0].mxu0
      %v3402 = vadd.f32 0.0, %v3401
      %v3403 = vpop.f32.mrb[0].mxu0
      %3404 = vmatprep.mubr.f32.mxu0 0.0
      %3405 = vmatmul.mubr.f32.gmra.mrb[0].mxu0 %v3303
      %v3406 = vpop.f32.mrb[0].mxu0
      %v3407 = vadd.f32 0.0, %v3406
      %v3408 = vpop.f32.mrb[0].mxu0
      %3409 = vdwg.mxu0
      %v3410 = vadd.f32 %v3117, %v3372
      %v3411 = vadd.f32 %v3118, %v3377
      %v3412 = vadd.f32 %v3119, %v3382
      %v3413 = vadd.f32 %v3120, %v3387
      %v3414 = vadd.f32 %v3121, %v3392
      %v3415 = vadd.f32 %v3122, %v3397
      %v3416 = vadd.f32 %v3123, %v3402
      %v3417 = vadd.f32 %v3124, %v3407
      %v3418 = vld [vmem:[%s609] sm:$0x1]
      %v3420 = vlaneseq
      %v3421 = vshrl.u32 %v3420, 7
      %v3422 = vsub.s32 0, %v3421
      %v3423 = vrot.slane %v3418, %v3422
      %v3425 = vadd.f32 %v3410, %v3423
      %v3426 = vadd.f32 %v3411, %v3423
      %v3427 = vadd.f32 %v3412, %v3423
      %v3428 = vadd.f32 %v3413, %v3423
      %v3429 = vadd.f32 %v3414, %v3423
      %v3430 = vadd.f32 %v3415, %v3423
      %v3431 = vadd.f32 %v3416, %v3423
      %v3432 = vadd.f32 %v3417, %v3423
      %v3433 = vsel %vm665, %v3425, 0.0
      %3434 = vadd.xlane.f32.xlu0 %v3433
      %v3435 = vpop.xlane.xlu0 %3434
      %v3436 = vsel %vm665, %v3426, 0.0
      %3437 = vadd.xlane.f32.xlu0 %v3436
      %v3438 = vpop.xlane.xlu0 %3437
      %v3439 = vsel %vm665, %v3427, 0.0
      %3440 = vadd.xlane.f32.xlu0 %v3439
      %v3441 = vpop.xlane.xlu0 %3440
      %v3442 = vsel %vm665, %v3428, 0.0
      %3443 = vadd.xlane.f32.xlu0 %v3442
      %v3444 = vpop.xlane.xlu0 %3443
      %v3445 = vsel %vm665, %v3429, 0.0
      %3446 = vadd.xlane.f32.xlu0 %v3445
      %v3447 = vpop.xlane.xlu0 %3446
      %v3448 = vsel %vm665, %v3430, 0.0
      %3449 = vadd.xlane.f32.xlu0 %v3448
      %v3450 = vpop.xlane.xlu0 %3449
      %v3451 = vsel %vm665, %v3431, 0.0
      %3452 = vadd.xlane.f32.xlu0 %v3451
      %v3453 = vpop.xlane.xlu0 %3452
      %v3454 = vsel %vm665, %v3432, 0.0
      %3455 = vadd.xlane.f32.xlu0 %v3454
      %v3456 = vpop.xlane.xlu0 %3455
      %v3457 = vmul.f32 %v3435, %v3020
      %v3458 = vmul.f32 %v3438, %v3020
      %v3459 = vmul.f32 %v3441, %v3020
      %v3460 = vmul.f32 %v3444, %v3020
      %v3461 = vmul.f32 %v3447, %v3020
      %v3462 = vmul.f32 %v3450, %v3020
      %v3463 = vmul.f32 %v3453, %v3020
      %v3464 = vmul.f32 %v3456, %v3020
      %v3465 = vsub.f32 %v3425, %v3457
      %v3466 = vsub.f32 %v3426, %v3458
      %v3467 = vsub.f32 %v3427, %v3459
      %v3468 = vsub.f32 %v3428, %v3460
      %v3469 = vsub.f32 %v3429, %v3461
      %v3470 = vsub.f32 %v3430, %v3462
      %v3471 = vsub.f32 %v3431, %v3463
      %v3472 = vsub.f32 %v3432, %v3464
      %v3473 = vmul.f32 %v3465, %v3465
      %v3474 = vmul.f32 %v3466, %v3466
      %v3475 = vmul.f32 %v3467, %v3467
      %v3476 = vmul.f32 %v3468, %v3468
      %v3477 = vmul.f32 %v3469, %v3469
      %v3478 = vmul.f32 %v3470, %v3470
      %v3479 = vmul.f32 %v3471, %v3471
      %v3480 = vmul.f32 %v3472, %v3472
      %v3481 = vsel %vm665, %v3473, 0.0
      %3482 = vadd.xlane.f32.xlu0 %v3481
      %v3483 = vpop.xlane.xlu0 %3482
      %v3484 = vsel %vm665, %v3474, 0.0
      %3485 = vadd.xlane.f32.xlu0 %v3484
      %v3486 = vpop.xlane.xlu0 %3485
      %v3487 = vsel %vm665, %v3475, 0.0
      %3488 = vadd.xlane.f32.xlu0 %v3487
      %v3489 = vpop.xlane.xlu0 %3488
      %v3490 = vsel %vm665, %v3476, 0.0
      %3491 = vadd.xlane.f32.xlu0 %v3490
      %v3492 = vpop.xlane.xlu0 %3491
      %v3493 = vsel %vm665, %v3477, 0.0
      %3494 = vadd.xlane.f32.xlu0 %v3493
      %v3495 = vpop.xlane.xlu0 %3494
      %v3496 = vsel %vm665, %v3478, 0.0
      %3497 = vadd.xlane.f32.xlu0 %v3496
      %v3498 = vpop.xlane.xlu0 %3497
      %v3499 = vsel %vm665, %v3479, 0.0
      %3500 = vadd.xlane.f32.xlu0 %v3499
      %v3501 = vpop.xlane.xlu0 %3500
      %v3502 = vsel %vm665, %v3480, 0.0
      %3503 = vadd.xlane.f32.xlu0 %v3502
      %v3504 = vpop.xlane.xlu0 %3503
      %v3505 = vmul.f32 %v3483, %v3020
      %v3506 = vmul.f32 %v3486, %v3020
      %v3507 = vmul.f32 %v3489, %v3020
      %v3508 = vmul.f32 %v3492, %v3020
      %v3509 = vmul.f32 %v3495, %v3020
      %v3510 = vmul.f32 %v3498, %v3020
      %v3511 = vmul.f32 %v3501, %v3020
      %v3512 = vmul.f32 %v3504, %v3020
      %v3513 = vadd.f32 %v3505, 1e-05
      %v3514 = vadd.f32 %v3506, 1e-05
      %v3515 = vadd.f32 %v3507, 1e-05
      %v3516 = vadd.f32 %v3508, 1e-05
      %v3517 = vadd.f32 %v3509, 1e-05
      %v3518 = vadd.f32 %v3510, 1e-05
      %v3519 = vadd.f32 %v3511, 1e-05
      %v3520 = vadd.f32 %v3512, 1e-05
      %v3521 = vrsqrt.pop %v3513
      %v3522 = vrsqrt.pop %v3514
      %v3523 = vrsqrt.pop %v3515
      %v3524 = vrsqrt.pop %v3516
      %v3525 = vrsqrt.pop %v3517
      %v3526 = vrsqrt.pop %v3518
      %v3527 = vrsqrt.pop %v3519
      %v3528 = vrsqrt.pop %v3520
      %v3529 = vmul.f32 %v3465, %v3521
      %v3530 = vmul.f32 %v3466, %v3522
      %v3531 = vmul.f32 %v3467, %v3523
      %v3532 = vmul.f32 %v3468, %v3524
      %v3533 = vmul.f32 %v3469, %v3525
      %v3534 = vmul.f32 %v3470, %v3526
      %v3535 = vmul.f32 %v3471, %v3527
      %v3536 = vmul.f32 %v3472, %v3528
      %v3537 = vlaneseq
      %v3538 = vshrl.u32 %v3537, 7
      %v3539 = vsub.s32 1, %v3538
      %v3540 = vrot.slane %v652, %v3539
      %v3541 = vmul.f32 %v3529, %v3540
      %v3542 = vmul.f32 %v3530, %v3540
      %v3543 = vmul.f32 %v3531, %v3540
      %v3544 = vmul.f32 %v3532, %v3540
      %v3545 = vmul.f32 %v3533, %v3540
      %v3546 = vmul.f32 %v3534, %v3540
      %v3547 = vmul.f32 %v3535, %v3540
      %v3548 = vmul.f32 %v3536, %v3540
      %v3549 = vlaneseq
      %v3550 = vshrl.u32 %v3549, 7
      %v3551 = vsub.s32 1, %v3550
      %v3552 = vrot.slane %v653, %v3551
      %v3553 = vadd.f32 %v3541, %v3552
      %v3554 = vadd.f32 %v3542, %v3552
      %v3555 = vadd.f32 %v3543, %v3552
      %v3556 = vadd.f32 %v3544, %v3552
      %v3557 = vadd.f32 %v3545, %v3552
      %v3558 = vadd.f32 %v3546, %v3552
      %v3559 = vadd.f32 %v3547, %v3552
      %v3560 = vadd.f32 %v3548, %v3552
      %p3561 = scmp.lt.s32.totalorder %s29, 1
      // Predicated region
      $region77: #{detr_forward.4} parent=71 // pred_check
        %p3562 = pneg %p3561
      $region78: #{detr_forward.4} parent=71 // pred_check_branch
        %3564 = sbr.rel (%p3562) target = $region80
      $region79: #{detr_forward.4} parent=71 // pred_region
        %3565 = vst.msk [vmem:[#allocation2] sm:$0xff] %vm665, %v3553
        %3566 = vst.msk [vmem:[#allocation2 + $0x8] sm:$0xff] %vm665, %v3554
        %3567 = vst.msk [vmem:[#allocation2 + $0x10] sm:$0xff] %vm665, %v3555
        %3568 = vst.msk [vmem:[#allocation2 + $0x18] sm:$0xff] %vm665, %v3556
        %3569 = vst.msk [vmem:[#allocation2 + $0x20] sm:$0xff] %vm665, %v3557
        %3570 = vst.msk [vmem:[#allocation2 + $0x28] sm:$0xff] %vm665, %v3558
        %3571 = vst.msk [vmem:[#allocation2 + $0x30] sm:$0xff] %vm665, %v3559
        %3572 = vst.msk [vmem:[#allocation2 + $0x38] sm:$0xff] %vm665, %v3560
      $region80: #{detr_forward.4} parent=71 // pred_fallthru
        _
      %p3573 = scmp.eq.s32.totalorder %s29, 1
      // Predicated region
      $region81: #{detr_forward.4} parent=71 // pred_check
        %p3574 = pneg %p3573
      $region82: #{detr_forward.4} parent=71 // pred_check_branch
        %3576 = sbr.rel (%p3574) target = $region84
      $region83: #{detr_forward.4} parent=71 // pred_region
        %v3577 = vld [vmem:[%s11] sm:$0x1]
        %v3578 = vld [vmem:[%s12] sm:$0x1]
        %v3579 = vsel %vm665, %v3553, 0.0
        %3580 = vadd.xlane.f32.xlu0 %v3579
        %v3581 = vpop.xlane.xlu0 %3580
        %v3582 = vsel %vm665, %v3554, 0.0
        %3583 = vadd.xlane.f32.xlu0 %v3582
        %v3584 = vpop.xlane.xlu0 %3583
        %v3585 = vsel %vm665, %v3555, 0.0
        %3586 = vadd.xlane.f32.xlu0 %v3585
        %v3587 = vpop.xlane.xlu0 %3586
        %v3588 = vsel %vm665, %v3556, 0.0
        %3589 = vadd.xlane.f32.xlu0 %v3588
        %v3590 = vpop.xlane.xlu0 %3589
        %v3591 = vsel %vm665, %v3557, 0.0
        %3592 = vadd.xlane.f32.xlu0 %v3591
        %v3593 = vpop.xlane.xlu0 %3592
        %v3594 = vsel %vm665, %v3558, 0.0
        %3595 = vadd.xlane.f32.xlu0 %v3594
        %v3596 = vpop.xlane.xlu0 %3595
        %v3597 = vsel %vm665, %v3559, 0.0
        %3598 = vadd.xlane.f32.xlu0 %v3597
        %v3599 = vpop.xlane.xlu0 %3598
        %v3600 = vsel %vm665, %v3560, 0.0
        %3601 = vadd.xlane.f32.xlu0 %v3600
        %v3602 = vpop.xlane.xlu0 %3601
        %v3603 = vmul.f32 %v3581, %v3020
        %v3604 = vmul.f32 %v3584, %v3020
        %v3605 = vmul.f32 %v3587, %v3020
        %v3606 = vmul.f32 %v3590, %v3020
        %v3607 = vmul.f32 %v3593, %v3020
        %v3608 = vmul.f32 %v3596, %v3020
        %v3609 = vmul.f32 %v3599, %v3020
        %v3610 = vmul.f32 %v3602, %v3020
        %v3611 = vsub.f32 %v3553, %v3603
        %v3612 = vsub.f32 %v3554, %v3604
        %v3613 = vsub.f32 %v3555, %v3605
        %v3614 = vsub.f32 %v3556, %v3606
        %v3615 = vsub.f32 %v3557, %v3607
        %v3616 = vsub.f32 %v3558, %v3608
        %v3617 = vsub.f32 %v3559, %v3609
        %v3618 = vsub.f32 %v3560, %v3610
        %v3619 = vmul.f32 %v3611, %v3611
        %v3620 = vmul.f32 %v3612, %v3612
        %v3621 = vmul.f32 %v3613, %v3613
        %v3622 = vmul.f32 %v3614, %v3614
        %v3623 = vmul.f32 %v3615, %v3615
        %v3624 = vmul.f32 %v3616, %v3616
        %v3625 = vmul.f32 %v3617, %v3617
        %v3626 = vmul.f32 %v3618, %v3618
        %v3627 = vsel %vm665, %v3619, 0.0
        %3628 = vadd.xlane.f32.xlu0 %v3627
        %v3629 = vpop.xlane.xlu0 %3628
        %v3630 = vsel %vm665, %v3620, 0.0
        %3631 = vadd.xlane.f32.xlu0 %v3630
        %v3632 = vpop.xlane.xlu0 %3631
        %v3633 = vsel %vm665, %v3621, 0.0
        %3634 = vadd.xlane.f32.xlu0 %v3633
        %v3635 = vpop.xlane.xlu0 %3634
        %v3636 = vsel %vm665, %v3622, 0.0
        %3637 = vadd.xlane.f32.xlu0 %v3636
        %v3638 = vpop.xlane.xlu0 %3637
        %v3639 = vsel %vm665, %v3623, 0.0
        %3640 = vadd.xlane.f32.xlu0 %v3639
        %v3641 = vpop.xlane.xlu0 %3640
        %v3642 = vsel %vm665, %v3624, 0.0
        %3643 = vadd.xlane.f32.xlu0 %v3642
        %v3644 = vpop.xlane.xlu0 %3643
        %v3645 = vsel %vm665, %v3625, 0.0
        %3646 = vadd.xlane.f32.xlu0 %v3645
        %v3647 = vpop.xlane.xlu0 %3646
        %v3648 = vsel %vm665, %v3626, 0.0
        %3649 = vadd.xlane.f32.xlu0 %v3648
        %v3650 = vpop.xlane.xlu0 %3649
        %v3651 = vmul.f32 %v3629, %v3020
        %v3652 = vmul.f32 %v3632, %v3020
        %v3653 = vmul.f32 %v3635, %v3020
        %v3654 = vmul.f32 %v3638, %v3020
        %v3655 = vmul.f32 %v3641, %v3020
        %v3656 = vmul.f32 %v3644, %v3020
        %v3657 = vmul.f32 %v3647, %v3020
        %v3658 = vmul.f32 %v3650, %v3020
        %v3659 = vadd.f32 %v3651, 1e-05
        %v3660 = vadd.f32 %v3652, 1e-05
        %v3661 = vadd.f32 %v3653, 1e-05
        %v3662 = vadd.f32 %v3654, 1e-05
        %v3663 = vadd.f32 %v3655, 1e-05
        %v3664 = vadd.f32 %v3656, 1e-05
        %v3665 = vadd.f32 %v3657, 1e-05
        %v3666 = vadd.f32 %v3658, 1e-05
        %v3667 = vrsqrt.pop %v3659
        %v3668 = vrsqrt.pop %v3660
        %v3669 = vrsqrt.pop %v3661
        %v3670 = vrsqrt.pop %v3662
        %v3671 = vrsqrt.pop %v3663
        %v3672 = vrsqrt.pop %v3664
        %v3673 = vrsqrt.pop %v3665
        %v3674 = vrsqrt.pop %v3666
        %v3675 = vmul.f32 %v3611, %v3667
        %v3676 = vmul.f32 %v3612, %v3668
        %v3677 = vmul.f32 %v3613, %v3669
        %v3678 = vmul.f32 %v3614, %v3670
        %v3679 = vmul.f32 %v3615, %v3671
        %v3680 = vmul.f32 %v3616, %v3672
        %v3681 = vmul.f32 %v3617, %v3673
        %v3682 = vmul.f32 %v3618, %v3674
        %v3684 = vlaneseq
        %v3685 = vshrl.u32 %v3684, 7
        %v3686 = vsub.s32 0, %v3685
        %v3687 = vrot.slane %v3577, %v3686
        %v3689 = vmul.f32 %v3675, %v3687
        %v3690 = vmul.f32 %v3676, %v3687
        %v3691 = vmul.f32 %v3677, %v3687
        %v3692 = vmul.f32 %v3678, %v3687
        %v3693 = vmul.f32 %v3679, %v3687
        %v3694 = vmul.f32 %v3680, %v3687
        %v3695 = vmul.f32 %v3681, %v3687
        %v3696 = vmul.f32 %v3682, %v3687
        %v3698 = vlaneseq
        %v3699 = vshrl.u32 %v3698, 7
        %v3700 = vsub.s32 0, %v3699
        %v3701 = vrot.slane %v3578, %v3700
        %v3703 = vadd.f32 %v3689, %v3701
        %v3704 = vadd.f32 %v3690, %v3701
        %v3705 = vadd.f32 %v3691, %v3701
        %v3706 = vadd.f32 %v3692, %v3701
        %v3707 = vadd.f32 %v3693, %v3701
        %v3708 = vadd.f32 %v3694, %v3701
        %v3709 = vadd.f32 %v3695, %v3701
        %v3710 = vadd.f32 %v3696, %v3701
        %3711 = vst.msk [vmem:[%s622] sm:$0xff] %vm665, %v3703
        %3712 = vst.msk [vmem:[%s622 + $0x8] sm:$0xff] %vm665, %v3704
        %3713 = vst.msk [vmem:[%s622 + $0x10] sm:$0xff] %vm665, %v3705
        %3714 = vst.msk [vmem:[%s622 + $0x18] sm:$0xff] %vm665, %v3706
        %3715 = vst.msk [vmem:[%s622 + $0x20] sm:$0xff] %vm665, %v3707
        %3716 = vst.msk [vmem:[%s622 + $0x28] sm:$0xff] %vm665, %v3708
        %3717 = vst.msk [vmem:[%s622 + $0x30] sm:$0xff] %vm665, %v3709
        %3718 = vst.msk [vmem:[%s622 + $0x38] sm:$0xff] %vm665, %v3710
      $region84: #{detr_forward.4} parent=71 // pred_fallthru
        _
      %p3719 = scmp.lt.s32.totalorder %s28, 1
      %s3720 = scalar_select %p3719, %s28, 1
      %s3721 = smul.addr %s3720, 8
      %s3722 = smul.addr %s3721, 8
      %s3723 = scalar_lea.vmem %s13, %s3722
      // Predicated region
      $region85: #{detr_forward.4} parent=71 // pred_check
        %p3724 = pneg %p382
      $region86: #{detr_forward.4} parent=71 // pred_check_branch
        %3726 = sbr.rel (%p3724) target = $region88
      $region87: #{detr_forward.4} parent=71 // pred_region
        _
      $region88: #{detr_forward.4} parent=71 // pred_fallthru
        _
    $region72: #{detr_forward.4} parent=5 // pred_fallthru
      _
    %p3727 = scmp.le.s32.totalorder 2, %s19
    // Predicated region
    $region89: #{detr_forward.4} parent=5 // pred_check
      %p3728 = pneg %p3727
    $region90: #{detr_forward.4} parent=5 // pred_check_branch
      %3730 = sbr.rel (%p3728) target = $region92
    $region91: #{detr_forward.4} parent=5 // pred_region
      %s3731 = ssub.s32 %s19, 2
      // Predicated region
      $region93: #{detr_forward.4} parent=91 // pred_check
        %p3732 = pneg %p388
      $region94: #{detr_forward.4} parent=91 // pred_check_branch
        %3734 = sbr.rel (%p3732) target = $region96
      $region95: #{detr_forward.4} parent=91 // pred_region
        %p3735 = scmp.lt.s32.totalorder %s30, 1
        %s3736 = scalar_select %p3735, %s30, 1
        %s3737 = smul.addr %s3736, 8
        %s3738 = smul.addr %s3737, 8
        %s3739 = scalar_lea.vmem %s13, %s3738
      $region96: #{detr_forward.4} parent=91 // pred_fallthru
        _
    $region92: #{detr_forward.4} parent=5 // pred_fallthru
      _
  $region6: #{detr_forward.4} parent=0 // loop_footer
    %s23 = sadd.s32 1, %s19
  $region7: #{detr_forward.4} parent=0 // loop_footer_branch
    %18 = sbr.rel target = $region3
  $region8: #{detr_forward.4} parent=0 // loop_exit
    _

// kernel: detr_forward.5
$region0: #{detr_forward.5}
  #allocation0 [shape = 'u32[]', space=smem, size = 0x4, offset = 0x4, fixed_abs, tag = 'smem constant byte address 0x4 - core index']
  #allocation1 [shape = 'u32[144,128]{1,0:T(1,128)}', space=vmem, size = 0x12000, scoped, tag = 'internal scratch']
  #allocation2 [shape = 'f32[16,32]{1,0:T(8,128)}', space=vmem, size = 0x2000, scoped, tag = 'scratch operand']
  %s0 = inlined_call_operand.vmem [shape: f32[2,64,32], index: 0, kind: input, shape index: {}]
  %s1 = inlined_call_operand.vmem [shape: f32[16,32], index: 1, kind: input, shape index: {}]
  %s2 = inlined_call_operand.vmem [shape: f32[2,32,96], index: 2, kind: input, shape index: {}]
  %s3 = inlined_call_operand.vmem [shape: f32[2,1,96], index: 3, kind: input, shape index: {}]
  %s4 = inlined_call_operand.vmem [shape: f32[2,32,32], index: 4, kind: input, shape index: {}]
  %s5 = inlined_call_operand.vmem [shape: f32[2,1,32], index: 5, kind: input, shape index: {}]
  %s6 = inlined_call_operand.vmem [shape: f32[2,32,32], index: 6, kind: input, shape index: {}]
  %s7 = inlined_call_operand.vmem [shape: f32[2,1,32], index: 7, kind: input, shape index: {}]
  %s8 = inlined_call_operand.vmem [shape: f32[2,32,64], index: 8, kind: input, shape index: {}]
  %s9 = inlined_call_operand.vmem [shape: f32[2,1,64], index: 9, kind: input, shape index: {}]
  %s10 = inlined_call_operand.vmem [shape: f32[2,32,32], index: 10, kind: input, shape index: {}]
  %s11 = inlined_call_operand.vmem [shape: f32[2,1,32], index: 11, kind: input, shape index: {}]
  %s12 = inlined_call_operand.vmem [shape: f32[2,32,64], index: 12, kind: input, shape index: {}]
  %s13 = inlined_call_operand.vmem [shape: f32[2,1,64], index: 13, kind: input, shape index: {}]
  %s14 = inlined_call_operand.vmem [shape: f32[2,64,32], index: 14, kind: input, shape index: {}]
  %s15 = inlined_call_operand.vmem [shape: f32[2,1,32], index: 15, kind: input, shape index: {}]
  %s16 = inlined_call_operand.vmem [shape: f32[2,3,32], index: 16, kind: input, shape index: {}]
  %s17 = inlined_call_operand.vmem [shape: f32[2,3,32], index: 17, kind: input, shape index: {}]
  %s18 = inlined_call_operand.vmem [shape: f32[1,32], index: 18, kind: input, shape index: {}]
  %s19 = inlined_call_operand.vmem [shape: f32[1,32], index: 19, kind: input, shape index: {}]
  %s20 = inlined_call_operand.vmem [shape: f32[32,32], index: 20, kind: input, shape index: {}]
  %s21 = inlined_call_operand.vmem [shape: f32[1,32], index: 21, kind: input, shape index: {}]
  %s22 = inlined_call_operand.vmem [shape: f32[32,32], index: 22, kind: input, shape index: {}]
  %s23 = inlined_call_operand.vmem [shape: f32[1,32], index: 23, kind: input, shape index: {}]
  %s24 = inlined_call_operand.vmem [shape: f32[32,128], index: 24, kind: input, shape index: {}]
  %s25 = inlined_call_operand.vmem [shape: f32[1,128], index: 25, kind: input, shape index: {}]
  %s26 = inlined_call_operand.hbm [shape: f32[2,16,32], index: 26, kind: output, shape index: {0}]
  %s27 = inlined_call_operand.vmem [shape: f32[2,16,128], index: 27, kind: output, shape index: {1}]
  %28 = xla_tuple %s26, %s27
  %s29 = sld [smem:[#allocation0]]
  $region157: #{detr_forward.5} parent=0
    _
  %s31 = ssub.s32 1, %s29
  %s32 = scalar_select 0, %s31, %s29
  $region1: #{detr_forward.5} parent=0
    #allocation3 [shape = 'u8[16384]{0}', space=vmem, size = 0x4000, scoped, tag = 'output window, operand 0']
    #allocation4 [shape = 's32[2]{0}', space=sflag, size = 0x8, scoped, tag = 'scoped memory for detr_forward.5']
    %33 = vsyncpa [#allocation4], 0
    %s34 = scalar_lea.sflag [#allocation4], 1
    %35 = vsyncpa %s34, 0
    loop: start=0, step=1, limit=6
    $region2: #{detr_forward.5} parent=1 // loop_pre_header
      _
    $region3: #{detr_forward.5} parent=1 // loop_header
      %s37 = sphi 0, %s41
      %p38 = scmp.ge.s32.totalorder %s37, 6
      %s44 = sphi 0, %s56
      %s45 = sphi 0, %s52
      %s46 = sphi 0, %s44
      %s47 = sphi 0, %s45
      %s48 = sphi 0, %s46
      %s49 = sphi 0, %s47
      %s59 = sphi 0, %s61
      %s62 = sphi 0, %s59
      %s63 = sphi 0, %s62
      %s79 = sphi 0, %s63
      %s83 = sphi 0, %s83
      %s85 = sphi 0, %s83
      %s86 = sphi 0, %s85
      %s100 = sphi 0, %s86
      %s106 = sphi 0, %s108
      %s109 = sphi 0, %s106
      %s110 = sphi 0, %s109
      %s126 = sphi 0, %s110
      %s132 = sphi 0, %s134
      %s135 = sphi 0, %s132
      %s136 = sphi 0, %s135
      %s152 = sphi 0, %s136
      %s158 = sphi 0, %s160
      %s161 = sphi 0, %s158
      %s162 = sphi 0, %s161
      %s178 = sphi 0, %s162
      %s184 = sphi 0, %s186
      %s187 = sphi 0, %s184
      %s188 = sphi 0, %s187
      %s204 = sphi 0, %s188
      %s210 = sphi 0, %s212
      %s213 = sphi 0, %s210
      %s214 = sphi 0, %s213
      %s230 = sphi 0, %s214
      %s236 = sphi 0, %s238
      %s239 = sphi 0, %s236
      %s240 = sphi 0, %s239
      %s256 = sphi 0, %s240
      %s262 = sphi 0, %s264
      %s265 = sphi 0, %s262
      %s266 = sphi 0, %s265
      %s282 = sphi 0, %s266
      %s288 = sphi 0, %s290
      %s291 = sphi 0, %s288
      %s292 = sphi 0, %s291
      %s308 = sphi 0, %s292
      %s314 = sphi 0, %s316
      %s317 = sphi 0, %s314
      %s318 = sphi 0, %s317
      %s334 = sphi 0, %s318
      %s340 = sphi 0, %s342
      %s343 = sphi 0, %s340
      %s344 = sphi 0, %s343
      %s360 = sphi 0, %s344
      %s366 = sphi 0, %s368
      %s369 = sphi 0, %s366
      %s370 = sphi 0, %s369
      %s386 = sphi 0, %s370
      %s392 = sphi 0, %s394
      %s395 = sphi 0, %s392
      %s396 = sphi 0, %s395
      %s412 = sphi 0, %s396
      %s418 = sphi 0, %s420
      %s421 = sphi 0, %s418
      %s422 = sphi 0, %s421
      %s438 = sphi 0, %s422
      %s444 = sphi 0, %s446
      %s447 = sphi 0, %s444
      %s448 = sphi 0, %s447
      %s464 = sphi 0, %s448
      %s470 = sphi 0, %s472
      %s473 = sphi 0, %s470
      %s474 = sphi 0, %s473
      %s490 = sphi 0, %s474
      %s496 = sphi 0, %s498
      %s499 = sphi 0, %s496
      %s500 = sphi 0, %s499
      %s516 = sphi 0, %s500
      %s520 = sphi 0, %s520
      %s522 = sphi 0, %s520
      %s523 = sphi 0, %s522
      %s537 = sphi 0, %s523
      %s541 = sphi 0, %s541
      %s543 = sphi 0, %s541
      %s544 = sphi 0, %s543
      %s558 = sphi 0, %s544
      %s562 = sphi 0, %s562
      %s564 = sphi 0, %s562
      %s565 = sphi 0, %s564
      %s579 = sphi 0, %s565
      %s583 = sphi 0, %s583
      %s585 = sphi 0, %s583
      %s586 = sphi 0, %s585
      %s600 = sphi 0, %s586
      %s604 = sphi 0, %s604
      %s606 = sphi 0, %s604
      %s607 = sphi 0, %s606
      %s621 = sphi 0, %s607
      %s625 = sphi 0, %s625
      %s627 = sphi 0, %s625
      %s628 = sphi 0, %s627
      %s642 = sphi 0, %s628
      %s646 = sphi 0, %s646
      %s648 = sphi 0, %s646
      %s649 = sphi 0, %s648
      %s663 = sphi 0, %s649
      %s667 = sphi 0, %s667
      %s669 = sphi 0, %s667
      %s670 = sphi 0, %s669
      %s684 = sphi 0, %s670
      %s690 = sphi 0, %s692
      %s693 = sphi 0, %s690
      %s694 = sphi 0, %s693
      %s710 = sphi 0, %s694
      %s716 = sphi 0, %s718
      %s719 = sphi 0, %s716
      %s720 = sphi 0, %s719
      %s736 = sphi 0, %s720
    $region4: #{detr_forward.5} parent=1 // loop_header_branch
      %40 = sbr.rel (%p38) target = $region8
    $region5: #{detr_forward.5} parent=1 // loop_body
      %s42 = ssub.s32 %s37, 1
      %s43 = ssub.s32 %s37, 2
      %s50 = sadd.s32 1, %s45
      %p51 = scmp.ge.s32.totalorder %s50, 2
      %s52 = scalar_select %p51, 0, %s50
      %s53 = sadd.s32 1, %s44
      %s54 = scalar_select %p51, %s53, %s44
      %p55 = scmp.ge.s32.totalorder %s54, 2
      %s56 = scalar_select %p55, 0, %s54
      %s57 = ssub.s32 %s44, %s56
      %p58 = scmp.eq.s32.totalorder %s57, 0
      %s60 = sadd.s32 %s59, 1
      %s61 = scalar_select %p58, %s59, %s60
      %p64 = pneg %p58
      %p65 = scmp.eq.s32.totalorder %s37, 3
      %p66 = por %p64, %p65
      %p67 = scmp.ne.s32.totalorder %s59, %s62
      %p68 = scmp.eq.s32.totalorder %s37, 0
      %p69 = por %p67, %p68
      %p70 = scmp.ne.s32.totalorder %s59, %s62
      %p71 = scmp.eq.s32.totalorder %s42, 3
      %p72 = por %p70, %p71
      %p73 = scmp.ne.s32.totalorder %s62, %s63
      %p74 = scmp.eq.s32.totalorder %s42, 0
      %p75 = por %p73, %p74
      %p76 = scmp.ne.s32.totalorder %s62, %s63
      %p77 = scmp.eq.s32.totalorder %s43, 3
      %p78 = por %p76, %p77
      %p80 = scmp.ne.s32.totalorder %s63, %s79
      %p81 = scmp.eq.s32.totalorder %s43, 0
      %p82 = por %p80, %p81
      %s84 = sadd.s32 %s83, 1
      %p87 = scmp.eq.s32.totalorder %s37, 3
      %p88 = scmp.ne.s32.totalorder %s83, %s85
      %p89 = scmp.eq.s32.totalorder %s37, 0
      %p90 = por %p88, %p89
      %p91 = scmp.ne.s32.totalorder %s83, %s85
      %p92 = scmp.eq.s32.totalorder %s42, 3
      %p93 = por %p91, %p92
      %p94 = scmp.ne.s32.totalorder %s85, %s86
      %p95 = scmp.eq.s32.totalorder %s42, 0
      %p96 = por %p94, %p95
      %p97 = scmp.ne.s32.totalorder %s85, %s86
      %p98 = scmp.eq.s32.totalorder %s43, 3
      %p99 = por %p97, %p98
      %p101 = scmp.ne.s32.totalorder %s86, %s100
      %p102 = scmp.eq.s32.totalorder %s43, 0
      %p103 = por %p101, %p102
      %s104 = ssub.s32 %s45, %s52
      %p105 = scmp.eq.s32.totalorder %s104, 0
      %s107 = sadd.s32 %s106, 1
      %s108 = scalar_select %p105, %s106, %s107
      %p111 = pneg %p105
      %p112 = scmp.eq.s32.totalorder %s37, 3
      %p113 = por %p111, %p112
      %p114 = scmp.ne.s32.totalorder %s106, %s109
      %p115 = scmp.eq.s32.totalorder %s37, 0
      %p116 = por %p114, %p115
      %p117 = scmp.ne.s32.totalorder %s106, %s109
      %p118 = scmp.eq.s32.totalorder %s42, 3
      %p119 = por %p117, %p118
      %p120 = scmp.ne.s32.totalorder %s109, %s110
      %p121 = scmp.eq.s32.totalorder %s42, 0
      %p122 = por %p120, %p121
      %p123 = scmp.ne.s32.totalorder %s109, %s110
      %p124 = scmp.eq.s32.totalorder %s43, 3
      %p125 = por %p123, %p124
      %p127 = scmp.ne.s32.totalorder %s110, %s126
      %p128 = scmp.eq.s32.totalorder %s43, 0
      %p129 = por %p127, %p128
      %s130 = ssub.s32 %s45, %s52
      %p131 = scmp.eq.s32.totalorder %s130, 0
      %s133 = sadd.s32 %s132, 1
      %s134 = scalar_select %p131, %s132, %s133
      %p137 = pneg %p131
      %p138 = scmp.eq.s32.totalorder %s37, 3
      %p139 = por %p137, %p138
      %p140 = scmp.ne.s32.totalorder %s132, %s135
      %p141 = scmp.eq.s32.totalorder %s37, 0
      %p142 = por %p140, %p141
      %p143 = scmp.ne.s32.totalorder %s132, %s135
      %p144 = scmp.eq.s32.totalorder %s42, 3
      %p145 = por %p143, %p144
      %p146 = scmp.ne.s32.totalorder %s135, %s136
      %p147 = scmp.eq.s32.totalorder %s42, 0
      %p148 = por %p146, %p147
      %p149 = scmp.ne.s32.totalorder %s135, %s136
      %p150 = scmp.eq.s32.totalorder %s43, 3
      %p151 = por %p149, %p150
      %p153 = scmp.ne.s32.totalorder %s136, %s152
      %p154 = scmp.eq.s32.totalorder %s43, 0
      %p155 = por %p153, %p154
      %s156 = ssub.s32 %s45, %s52
      %p157 = scmp.eq.s32.totalorder %s156, 0
      %s159 = sadd.s32 %s158, 1
      %s160 = scalar_select %p157, %s158, %s159
      %p163 = pneg %p157
      %p164 = scmp.eq.s32.totalorder %s37, 3
      %p165 = por %p163, %p164
      %p166 = scmp.ne.s32.totalorder %s158, %s161
      %p167 = scmp.eq.s32.totalorder %s37, 0
      %p168 = por %p166, %p167
      %p169 = scmp.ne.s32.totalorder %s158, %s161
      %p170 = scmp.eq.s32.totalorder %s42, 3
      %p171 = por %p169, %p170
      %p172 = scmp.ne.s32.totalorder %s161, %s162
      %p173 = scmp.eq.s32.totalorder %s42, 0
      %p174 = por %p172, %p173
      %p175 = scmp.ne.s32.totalorder %s161, %s162
      %p176 = scmp.eq.s32.totalorder %s43, 3
      %p177 = por %p175, %p176
      %p179 = scmp.ne.s32.totalorder %s162, %s178
      %p180 = scmp.eq.s32.totalorder %s43, 0
      %p181 = por %p179, %p180
      %s182 = ssub.s32 %s45, %s52
      %p183 = scmp.eq.s32.totalorder %s182, 0
      %s185 = sadd.s32 %s184, 1
      %s186 = scalar_select %p183, %s184, %s185
      %p189 = pneg %p183
      %p190 = scmp.eq.s32.totalorder %s37, 3
      %p191 = por %p189, %p190
      %p192 = scmp.ne.s32.totalorder %s184, %s187
      %p193 = scmp.eq.s32.totalorder %s37, 0
      %p194 = por %p192, %p193
      %p195 = scmp.ne.s32.totalorder %s184, %s187
      %p196 = scmp.eq.s32.totalorder %s42, 3
      %p197 = por %p195, %p196
      %p198 = scmp.ne.s32.totalorder %s187, %s188
      %p199 = scmp.eq.s32.totalorder %s42, 0
      %p200 = por %p198, %p199
      %p201 = scmp.ne.s32.totalorder %s187, %s188
      %p202 = scmp.eq.s32.totalorder %s43, 3
      %p203 = por %p201, %p202
      %p205 = scmp.ne.s32.totalorder %s188, %s204
      %p206 = scmp.eq.s32.totalorder %s43, 0
      %p207 = por %p205, %p206
      %s208 = ssub.s32 %s45, %s52
      %p209 = scmp.eq.s32.totalorder %s208, 0
      %s211 = sadd.s32 %s210, 1
      %s212 = scalar_select %p209, %s210, %s211
      %p215 = pneg %p209
      %p216 = scmp.eq.s32.totalorder %s37, 3
      %p217 = por %p215, %p216
      %p218 = scmp.ne.s32.totalorder %s210, %s213
      %p219 = scmp.eq.s32.totalorder %s37, 0
      %p220 = por %p218, %p219
      %p221 = scmp.ne.s32.totalorder %s210, %s213
      %p222 = scmp.eq.s32.totalorder %s42, 3
      %p223 = por %p221, %p222
      %p224 = scmp.ne.s32.totalorder %s213, %s214
      %p225 = scmp.eq.s32.totalorder %s42, 0
      %p226 = por %p224, %p225
      %p227 = scmp.ne.s32.totalorder %s213, %s214
      %p228 = scmp.eq.s32.totalorder %s43, 3
      %p229 = por %p227, %p228
      %p231 = scmp.ne.s32.totalorder %s214, %s230
      %p232 = scmp.eq.s32.totalorder %s43, 0
      %p233 = por %p231, %p232
      %s234 = ssub.s32 %s45, %s52
      %p235 = scmp.eq.s32.totalorder %s234, 0
      %s237 = sadd.s32 %s236, 1
      %s238 = scalar_select %p235, %s236, %s237
      %p241 = pneg %p235
      %p242 = scmp.eq.s32.totalorder %s37, 3
      %p243 = por %p241, %p242
      %p244 = scmp.ne.s32.totalorder %s236, %s239
      %p245 = scmp.eq.s32.totalorder %s37, 0
      %p246 = por %p244, %p245
      %p247 = scmp.ne.s32.totalorder %s236, %s239
      %p248 = scmp.eq.s32.totalorder %s42, 3
      %p249 = por %p247, %p248
      %p250 = scmp.ne.s32.totalorder %s239, %s240
      %p251 = scmp.eq.s32.totalorder %s42, 0
      %p252 = por %p250, %p251
      %p253 = scmp.ne.s32.totalorder %s239, %s240
      %p254 = scmp.eq.s32.totalorder %s43, 3
      %p255 = por %p253, %p254
      %p257 = scmp.ne.s32.totalorder %s240, %s256
      %p258 = scmp.eq.s32.totalorder %s43, 0
      %p259 = por %p257, %p258
      %s260 = ssub.s32 %s45, %s52
      %p261 = scmp.eq.s32.totalorder %s260, 0
      %s263 = sadd.s32 %s262, 1
      %s264 = scalar_select %p261, %s262, %s263
      %p267 = pneg %p261
      %p268 = scmp.eq.s32.totalorder %s37, 3
      %p269 = por %p267, %p268
      %p270 = scmp.ne.s32.totalorder %s262, %s265
      %p271 = scmp.eq.s32.totalorder %s37, 0
      %p272 = por %p270, %p271
      %p273 = scmp.ne.s32.totalorder %s262, %s265
      %p274 = scmp.eq.s32.totalorder %s42, 3
      %p275 = por %p273, %p274
      %p276 = scmp.ne.s32.totalorder %s265, %s266
      %p277 = scmp.eq.s32.totalorder %s42, 0
      %p278 = por %p276, %p277
      %p279 = scmp.ne.s32.totalorder %s265, %s266
      %p280 = scmp.eq.s32.totalorder %s43, 3
      %p281 = por %p279, %p280
      %p283 = scmp.ne.s32.totalorder %s266, %s282
      %p284 = scmp.eq.s32.totalorder %s43, 0
      %p285 = por %p283, %p284
      %s286 = ssub.s32 %s45, %s52
      %p287 = scmp.eq.s32.totalorder %s286, 0
      %s289 = sadd.s32 %s288, 1
      %s290 = scalar_select %p287, %s288, %s289
      %p293 = pneg %p287
      %p294 = scmp.eq.s32.totalorder %s37, 3
      %p295 = por %p293, %p294
      %p296 = scmp.ne.s32.totalorder %s288, %s291
      %p297 = scmp.eq.s32.totalorder %s37, 0
      %p298 = por %p296, %p297
      %p299 = scmp.ne.s32.totalorder %s288, %s291
      %p300 = scmp.eq.s32.totalorder %s42, 3
      %p301 = por %p299, %p300
      %p302 = scmp.ne.s32.totalorder %s291, %s292
      %p303 = scmp.eq.s32.totalorder %s42, 0
      %p304 = por %p302, %p303
      %p305 = scmp.ne.s32.totalorder %s291, %s292
      %p306 = scmp.eq.s32.totalorder %s43, 3
      %p307 = por %p305, %p306
      %p309 = scmp.ne.s32.totalorder %s292, %s308
      %p310 = scmp.eq.s32.totalorder %s43, 0
      %p311 = por %p309, %p310
      %s312 = ssub.s32 %s45, %s52
      %p313 = scmp.eq.s32.totalorder %s312, 0
      %s315 = sadd.s32 %s314, 1
      %s316 = scalar_select %p313, %s314, %s315
      %p319 = pneg %p313
      %p320 = scmp.eq.s32.totalorder %s37, 3
      %p321 = por %p319, %p320
      %p322 = scmp.ne.s32.totalorder %s314, %s317
      %p323 = scmp.eq.s32.totalorder %s37, 0
      %p324 = por %p322, %p323
      %p325 = scmp.ne.s32.totalorder %s314, %s317
      %p326 = scmp.eq.s32.totalorder %s42, 3
      %p327 = por %p325, %p326
      %p328 = scmp.ne.s32.totalorder %s317, %s318
      %p329 = scmp.eq.s32.totalorder %s42, 0
      %p330 = por %p328, %p329
      %p331 = scmp.ne.s32.totalorder %s317, %s318
      %p332 = scmp.eq.s32.totalorder %s43, 3
      %p333 = por %p331, %p332
      %p335 = scmp.ne.s32.totalorder %s318, %s334
      %p336 = scmp.eq.s32.totalorder %s43, 0
      %p337 = por %p335, %p336
      %s338 = ssub.s32 %s45, %s52
      %p339 = scmp.eq.s32.totalorder %s338, 0
      %s341 = sadd.s32 %s340, 1
      %s342 = scalar_select %p339, %s340, %s341
      %p345 = pneg %p339
      %p346 = scmp.eq.s32.totalorder %s37, 3
      %p347 = por %p345, %p346
      %p348 = scmp.ne.s32.totalorder %s340, %s343
      %p349 = scmp.eq.s32.totalorder %s37, 0
      %p350 = por %p348, %p349
      %p351 = scmp.ne.s32.totalorder %s340, %s343
      %p352 = scmp.eq.s32.totalorder %s42, 3
      %p353 = por %p351, %p352
      %p354 = scmp.ne.s32.totalorder %s343, %s344
      %p355 = scmp.eq.s32.totalorder %s42, 0
      %p356 = por %p354, %p355
      %p357 = scmp.ne.s32.totalorder %s343, %s344
      %p358 = scmp.eq.s32.totalorder %s43, 3
      %p359 = por %p357, %p358
      %p361 = scmp.ne.s32.totalorder %s344, %s360
      %p362 = scmp.eq.s32.totalorder %s43, 0
      %p363 = por %p361, %p362
      %s364 = ssub.s32 %s45, %s52
      %p365 = scmp.eq.s32.totalorder %s364, 0
      %s367 = sadd.s32 %s366, 1
      %s368 = scalar_select %p365, %s366, %s367
      %p371 = pneg %p365
      %p372 = scmp.eq.s32.totalorder %s37, 3
      %p373 = por %p371, %p372
      %p374 = scmp.ne.s32.totalorder %s366, %s369
      %p375 = scmp.eq.s32.totalorder %s37, 0
      %p376 = por %p374, %p375
      %p377 = scmp.ne.s32.totalorder %s366, %s369
      %p378 = scmp.eq.s32.totalorder %s42, 3
      %p379 = por %p377, %p378
      %p380 = scmp.ne.s32.totalorder %s369, %s370
      %p381 = scmp.eq.s32.totalorder %s42, 0
      %p382 = por %p380, %p381
      %p383 = scmp.ne.s32.totalorder %s369, %s370
      %p384 = scmp.eq.s32.totalorder %s43, 3
      %p385 = por %p383, %p384
      %p387 = scmp.ne.s32.totalorder %s370, %s386
      %p388 = scmp.eq.s32.totalorder %s43, 0
      %p389 = por %p387, %p388
      %s390 = ssub.s32 %s45, %s52
      %p391 = scmp.eq.s32.totalorder %s390, 0
      %s393 = sadd.s32 %s392, 1
      %s394 = scalar_select %p391, %s392, %s393
      %p397 = pneg %p391
      %p398 = scmp.eq.s32.totalorder %s37, 3
      %p399 = por %p397, %p398
      %p400 = scmp.ne.s32.totalorder %s392, %s395
      %p401 = scmp.eq.s32.totalorder %s37, 0
      %p402 = por %p400, %p401
      %p403 = scmp.ne.s32.totalorder %s392, %s395
      %p404 = scmp.eq.s32.totalorder %s42, 3
      %p405 = por %p403, %p404
      %p406 = scmp.ne.s32.totalorder %s395, %s396
      %p407 = scmp.eq.s32.totalorder %s42, 0
      %p408 = por %p406, %p407
      %p409 = scmp.ne.s32.totalorder %s395, %s396
      %p410 = scmp.eq.s32.totalorder %s43, 3
      %p411 = por %p409, %p410
      %p413 = scmp.ne.s32.totalorder %s396, %s412
      %p414 = scmp.eq.s32.totalorder %s43, 0
      %p415 = por %p413, %p414
      %s416 = ssub.s32 %s45, %s52
      %p417 = scmp.eq.s32.totalorder %s416, 0
      %s419 = sadd.s32 %s418, 1
      %s420 = scalar_select %p417, %s418, %s419
      %p423 = pneg %p417
      %p424 = scmp.eq.s32.totalorder %s37, 3
      %p425 = por %p423, %p424
      %p426 = scmp.ne.s32.totalorder %s418, %s421
      %p427 = scmp.eq.s32.totalorder %s37, 0
      %p428 = por %p426, %p427
      %p429 = scmp.ne.s32.totalorder %s418, %s421
      %p430 = scmp.eq.s32.totalorder %s42, 3
      %p431 = por %p429, %p430
      %p432 = scmp.ne.s32.totalorder %s421, %s422
      %p433 = scmp.eq.s32.totalorder %s42, 0
      %p434 = por %p432, %p433
      %p435 = scmp.ne.s32.totalorder %s421, %s422
      %p436 = scmp.eq.s32.totalorder %s43, 3
      %p437 = por %p435, %p436
      %p439 = scmp.ne.s32.totalorder %s422, %s438
      %p440 = scmp.eq.s32.totalorder %s43, 0
      %p441 = por %p439, %p440
      %s442 = ssub.s32 %s45, %s52
      %p443 = scmp.eq.s32.totalorder %s442, 0
      %s445 = sadd.s32 %s444, 1
      %s446 = scalar_select %p443, %s444, %s445
      %p449 = pneg %p443
      %p450 = scmp.eq.s32.totalorder %s37, 3
      %p451 = por %p449, %p450
      %p452 = scmp.ne.s32.totalorder %s444, %s447
      %p453 = scmp.eq.s32.totalorder %s37, 0
      %p454 = por %p452, %p453
      %p455 = scmp.ne.s32.totalorder %s444, %s447
      %p456 = scmp.eq.s32.totalorder %s42, 3
      %p457 = por %p455, %p456
      %p458 = scmp.ne.s32.totalorder %s447, %s448
      %p459 = scmp.eq.s32.totalorder %s42, 0
      %p460 = por %p458, %p459
      %p461 = scmp.ne.s32.totalorder %s447, %s448
      %p462 = scmp.eq.s32.totalorder %s43, 3
      %p463 = por %p461, %p462
      %p465 = scmp.ne.s32.totalorder %s448, %s464
      %p466 = scmp.eq.s32.totalorder %s43, 0
      %p467 = por %p465, %p466
      %s468 = ssub.s32 %s45, %s52
      %p469 = scmp.eq.s32.totalorder %s468, 0
      %s471 = sadd.s32 %s470, 1
      %s472 = scalar_select %p469, %s470, %s471
      %p475 = pneg %p469
      %p476 = scmp.eq.s32.totalorder %s37, 3
      %p477 = por %p475, %p476
      %p478 = scmp.ne.s32.totalorder %s470, %s473
      %p479 = scmp.eq.s32.totalorder %s37, 0
      %p480 = por %p478, %p479
      %p481 = scmp.ne.s32.totalorder %s470, %s473
      %p482 = scmp.eq.s32.totalorder %s42, 3
      %p483 = por %p481, %p482
      %p484 = scmp.ne.s32.totalorder %s473, %s474
      %p485 = scmp.eq.s32.totalorder %s42, 0
      %p486 = por %p484, %p485
      %p487 = scmp.ne.s32.totalorder %s473, %s474
      %p488 = scmp.eq.s32.totalorder %s43, 3
      %p489 = por %p487, %p488
      %p491 = scmp.ne.s32.totalorder %s474, %s490
      %p492 = scmp.eq.s32.totalorder %s43, 0
      %p493 = por %p491, %p492
      %s494 = ssub.s32 %s45, %s52
      %p495 = scmp.eq.s32.totalorder %s494, 0
      %s497 = sadd.s32 %s496, 1
      %s498 = scalar_select %p495, %s496, %s497
      %p501 = pneg %p495
      %p502 = scmp.eq.s32.totalorder %s37, 3
      %p503 = por %p501, %p502
      %p504 = scmp.ne.s32.totalorder %s496, %s499
      %p505 = scmp.eq.s32.totalorder %s37, 0
      %p506 = por %p504, %p505
      %p507 = scmp.ne.s32.totalorder %s496, %s499
      %p508 = scmp.eq.s32.totalorder %s42, 3
      %p509 = por %p507, %p508
      %p510 = scmp.ne.s32.totalorder %s499, %s500
      %p511 = scmp.eq.s32.totalorder %s42, 0
      %p512 = por %p510, %p511
      %p513 = scmp.ne.s32.totalorder %s499, %s500
      %p514 = scmp.eq.s32.totalorder %s43, 3
      %p515 = por %p513, %p514
      %p517 = scmp.ne.s32.totalorder %s500, %s516
      %p518 = scmp.eq.s32.totalorder %s43, 0
      %p519 = por %p517, %p518
      %s521 = sadd.s32 %s520, 1
      %p524 = scmp.eq.s32.totalorder %s37, 3
      %p525 = scmp.ne.s32.totalorder %s520, %s522
      %p526 = scmp.eq.s32.totalorder %s37, 0
      %p527 = por %p525, %p526
      %p528 = scmp.ne.s32.totalorder %s520, %s522
      %p529 = scmp.eq.s32.totalorder %s42, 3
      %p530 = por %p528, %p529
      %p531 = scmp.ne.s32.totalorder %s522, %s523
      %p532 = scmp.eq.s32.totalorder %s42, 0
      %p533 = por %p531, %p532
      %p534 = scmp.ne.s32.totalorder %s522, %s523
      %p535 = scmp.eq.s32.totalorder %s43, 3
      %p536 = por %p534, %p535
      %p538 = scmp.ne.s32.totalorder %s523, %s537
      %p539 = scmp.eq.s32.totalorder %s43, 0
      %p540 = por %p538, %p539
      %s542 = sadd.s32 %s541, 1
      %p545 = scmp.eq.s32.totalorder %s37, 3
      %p546 = scmp.ne.s32.totalorder %s541, %s543
      %p547 = scmp.eq.s32.totalorder %s37, 0
      %p548 = por %p546, %p547
      %p549 = scmp.ne.s32.totalorder %s541, %s543
      %p550 = scmp.eq.s32.totalorder %s42, 3
      %p551 = por %p549, %p550
      %p552 = scmp.ne.s32.totalorder %s543, %s544
      %p553 = scmp.eq.s32.totalorder %s42, 0
      %p554 = por %p552, %p553
      %p555 = scmp.ne.s32.totalorder %s543, %s544
      %p556 = scmp.eq.s32.totalorder %s43, 3
      %p557 = por %p555, %p556
      %p559 = scmp.ne.s32.totalorder %s544, %s558
      %p560 = scmp.eq.s32.totalorder %s43, 0
      %p561 = por %p559, %p560
      %s563 = sadd.s32 %s562, 1
      %p566 = scmp.eq.s32.totalorder %s37, 3
      %p567 = scmp.ne.s32.totalorder %s562, %s564
      %p568 = scmp.eq.s32.totalorder %s37, 0
      %p569 = por %p567, %p568
      %p570 = scmp.ne.s32.totalorder %s562, %s564
      %p571 = scmp.eq.s32.totalorder %s42, 3
      %p572 = por %p570, %p571
      %p573 = scmp.ne.s32.totalorder %s564, %s565
      %p574 = scmp.eq.s32.totalorder %s42, 0
      %p575 = por %p573, %p574
      %p576 = scmp.ne.s32.totalorder %s564, %s565
      %p577 = scmp.eq.s32.totalorder %s43, 3
      %p578 = por %p576, %p577
      %p580 = scmp.ne.s32.totalorder %s565, %s579
      %p581 = scmp.eq.s32.totalorder %s43, 0
      %p582 = por %p580, %p581
      %s584 = sadd.s32 %s583, 1
      %p587 = scmp.eq.s32.totalorder %s37, 3
      %p588 = scmp.ne.s32.totalorder %s583, %s585
      %p589 = scmp.eq.s32.totalorder %s37, 0
      %p590 = por %p588, %p589
      %p591 = scmp.ne.s32.totalorder %s583, %s585
      %p592 = scmp.eq.s32.totalorder %s42, 3
      %p593 = por %p591, %p592
      %p594 = scmp.ne.s32.totalorder %s585, %s586
      %p595 = scmp.eq.s32.totalorder %s42, 0
      %p596 = por %p594, %p595
      %p597 = scmp.ne.s32.totalorder %s585, %s586
      %p598 = scmp.eq.s32.totalorder %s43, 3
      %p599 = por %p597, %p598
      %p601 = scmp.ne.s32.totalorder %s586, %s600
      %p602 = scmp.eq.s32.totalorder %s43, 0
      %p603 = por %p601, %p602
      %s605 = sadd.s32 %s604, 1
      %p608 = scmp.eq.s32.totalorder %s37, 3
      %p609 = scmp.ne.s32.totalorder %s604, %s606
      %p610 = scmp.eq.s32.totalorder %s37, 0
      %p611 = por %p609, %p610
      %p612 = scmp.ne.s32.totalorder %s604, %s606
      %p613 = scmp.eq.s32.totalorder %s42, 3
      %p614 = por %p612, %p613
      %p615 = scmp.ne.s32.totalorder %s606, %s607
      %p616 = scmp.eq.s32.totalorder %s42, 0
      %p617 = por %p615, %p616
      %p618 = scmp.ne.s32.totalorder %s606, %s607
      %p619 = scmp.eq.s32.totalorder %s43, 3
      %p620 = por %p618, %p619
      %p622 = scmp.ne.s32.totalorder %s607, %s621
      %p623 = scmp.eq.s32.totalorder %s43, 0
      %p624 = por %p622, %p623
      %s626 = sadd.s32 %s625, 1
      %p629 = scmp.eq.s32.totalorder %s37, 3
      %p630 = scmp.ne.s32.totalorder %s625, %s627
      %p631 = scmp.eq.s32.totalorder %s37, 0
      %p632 = por %p630, %p631
      %p633 = scmp.ne.s32.totalorder %s625, %s627
      %p634 = scmp.eq.s32.totalorder %s42, 3
      %p635 = por %p633, %p634
      %p636 = scmp.ne.s32.totalorder %s627, %s628
      %p637 = scmp.eq.s32.totalorder %s42, 0
      %p638 = por %p636, %p637
      %p639 = scmp.ne.s32.totalorder %s627, %s628
      %p640 = scmp.eq.s32.totalorder %s43, 3
      %p641 = por %p639, %p640
      %p643 = scmp.ne.s32.totalorder %s628, %s642
      %p644 = scmp.eq.s32.totalorder %s43, 0
      %p645 = por %p643, %p644
      %s647 = sadd.s32 %s646, 1
      %p650 = scmp.eq.s32.totalorder %s37, 3
      %p651 = scmp.ne.s32.totalorder %s646, %s648
      %p652 = scmp.eq.s32.totalorder %s37, 0
      %p653 = por %p651, %p652
      %p654 = scmp.ne.s32.totalorder %s646, %s648
      %p655 = scmp.eq.s32.totalorder %s42, 3
      %p656 = por %p654, %p655
      %p657 = scmp.ne.s32.totalorder %s648, %s649
      %p658 = scmp.eq.s32.totalorder %s42, 0
      %p659 = por %p657, %p658
      %p660 = scmp.ne.s32.totalorder %s648, %s649
      %p661 = scmp.eq.s32.totalorder %s43, 3
      %p662 = por %p660, %p661
      %p664 = scmp.ne.s32.totalorder %s649, %s663
      %p665 = scmp.eq.s32.totalorder %s43, 0
      %p666 = por %p664, %p665
      %s668 = sadd.s32 %s667, 1
      %p671 = scmp.eq.s32.totalorder %s37, 3
      %p672 = scmp.ne.s32.totalorder %s667, %s669
      %p673 = scmp.eq.s32.totalorder %s37, 0
      %p674 = por %p672, %p673
      %p675 = scmp.ne.s32.totalorder %s667, %s669
      %p676 = scmp.eq.s32.totalorder %s42, 3
      %p677 = por %p675, %p676
      %p678 = scmp.ne.s32.totalorder %s669, %s670
      %p679 = scmp.eq.s32.totalorder %s42, 0
      %p680 = por %p678, %p679
      %p681 = scmp.ne.s32.totalorder %s669, %s670
      %p682 = scmp.eq.s32.totalorder %s43, 3
      %p683 = por %p681, %p682
      %p685 = scmp.ne.s32.totalorder %s670, %s684
      %p686 = scmp.eq.s32.totalorder %s43, 0
      %p687 = por %p685, %p686
      %s688 = ssub.s32 %s44, %s56
      %p689 = scmp.eq.s32.totalorder %s688, 0
      %s691 = sadd.s32 %s690, 1
      %s692 = scalar_select %p689, %s690, %s691
      %p695 = pneg %p689
      %p696 = scmp.eq.s32.totalorder %s37, 3
      %p697 = por %p695, %p696
      %p698 = scmp.ne.s32.totalorder %s690, %s693
      %p699 = scmp.eq.s32.totalorder %s37, 0
      %p700 = por %p698, %p699
      %p701 = scmp.ne.s32.totalorder %s690, %s693
      %p702 = scmp.eq.s32.totalorder %s42, 3
      %p703 = por %p701, %p702
      %p704 = scmp.ne.s32.totalorder %s693, %s694
      %p705 = scmp.eq.s32.totalorder %s42, 0
      %p706 = por %p704, %p705
      %p707 = scmp.ne.s32.totalorder %s693, %s694
      %p708 = scmp.eq.s32.totalorder %s43, 3
      %p709 = por %p707, %p708
      %p711 = scmp.ne.s32.totalorder %s694, %s710
      %p712 = scmp.eq.s32.totalorder %s43, 0
      %p713 = por %p711, %p712
      %s714 = ssub.s32 %s44, %s56
      %p715 = scmp.eq.s32.totalorder %s714, 0
      %s717 = sadd.s32 %s716, 1
      %s718 = scalar_select %p715, %s716, %s717
      %p721 = pneg %p715
      %p722 = scmp.eq.s32.totalorder %s37, 3
      %p723 = por %p721, %p722
      %p724 = scmp.ne.s32.totalorder %s716, %s719
      %p725 = scmp.eq.s32.totalorder %s37, 0
      %p726 = por %p724, %p725
      %p727 = scmp.ne.s32.totalorder %s716, %s719
      %p728 = scmp.eq.s32.totalorder %s42, 3
      %p729 = por %p727, %p728
      %p730 = scmp.ne.s32.totalorder %s719, %s720
      %p731 = scmp.eq.s32.totalorder %s42, 0
      %p732 = por %p730, %p731
      %p733 = scmp.ne.s32.totalorder %s719, %s720
      %p734 = scmp.eq.s32.totalorder %s43, 3
      %p735 = por %p733, %p734
      %p737 = scmp.ne.s32.totalorder %s720, %s736
      %p738 = scmp.eq.s32.totalorder %s43, 0
      %p739 = por %p737, %p738
      %p740 = scmp.le.s32.totalorder 1, %s37
      %p741 = scmp.lt.s32.totalorder %s37, 5
      %p742 = pnand %p740, %p741
      %p743 = pneg %p742
      // Predicated region
      $region9: #{detr_forward.5} parent=5 // pred_check
        _
      $region10: #{detr_forward.5} parent=5 // pred_check_branch
        %745 = sbr.rel (%p742) target = $region12
      $region11: #{detr_forward.5} parent=5 // pred_region
        %s746 = ssub.s32 %s37, 1
        // Predicated region
        $region13: #{detr_forward.5} parent=11 // pred_check
          %p747 = pneg %p96
        $region14: #{detr_forward.5} parent=11 // pred_check_branch
          %749 = sbr.rel (%p747) target = $region16
        $region15: #{detr_forward.5} parent=11 // pred_region
          _
        $region16: #{detr_forward.5} parent=11 // pred_fallthru
          _
        // Predicated region
        $region17: #{detr_forward.5} parent=11 // pred_check
          %p750 = pneg %p533
        $region18: #{detr_forward.5} parent=11 // pred_check_branch
          %752 = sbr.rel (%p750) target = $region20
        $region19: #{detr_forward.5} parent=11 // pred_region
          _
        $region20: #{detr_forward.5} parent=11 // pred_fallthru
          _
        // Predicated region
        $region21: #{detr_forward.5} parent=11 // pred_check
          %p753 = pneg %p554
        $region22: #{detr_forward.5} parent=11 // pred_check_branch
          %755 = sbr.rel (%p753) target = $region24
        $region23: #{detr_forward.5} parent=11 // pred_region
          _
        $region24: #{detr_forward.5} parent=11 // pred_fallthru
          _
        // Predicated region
        $region25: #{detr_forward.5} parent=11 // pred_check
          %p756 = pneg %p575
        $region26: #{detr_forward.5} parent=11 // pred_check_branch
          %758 = sbr.rel (%p756) target = $region28
        $region27: #{detr_forward.5} parent=11 // pred_region
          _
        $region28: #{detr_forward.5} parent=11 // pred_fallthru
          _
        // Predicated region
        $region29: #{detr_forward.5} parent=11 // pred_check
          %p759 = pneg %p596
        $region30: #{detr_forward.5} parent=11 // pred_check_branch
          %761 = sbr.rel (%p759) target = $region32
        $region31: #{detr_forward.5} parent=11 // pred_region
          _
        $region32: #{detr_forward.5} parent=11 // pred_fallthru
          _
        // Predicated region
        $region33: #{detr_forward.5} parent=11 // pred_check
          %p762 = pneg %p617
        $region34: #{detr_forward.5} parent=11 // pred_check_branch
          %764 = sbr.rel (%p762) target = $region36
        $region35: #{detr_forward.5} parent=11 // pred_region
          _
        $region36: #{detr_forward.5} parent=11 // pred_fallthru
          _
        // Predicated region
        $region37: #{detr_forward.5} parent=11 // pred_check
          %p765 = pneg %p638
        $region38: #{detr_forward.5} parent=11 // pred_check_branch
          %767 = sbr.rel (%p765) target = $region40
        $region39: #{detr_forward.5} parent=11 // pred_region
          _
        $region40: #{detr_forward.5} parent=11 // pred_fallthru
          _
        // Predicated region
        $region41: #{detr_forward.5} parent=11 // pred_check
          %p768 = pneg %p659
        $region42: #{detr_forward.5} parent=11 // pred_check_branch
          %770 = sbr.rel (%p768) target = $region44
        $region43: #{detr_forward.5} parent=11 // pred_region
          _
        $region44: #{detr_forward.5} parent=11 // pred_fallthru
          _
        // Predicated region
        $region45: #{detr_forward.5} parent=11 // pred_check
          %p771 = pneg %p680
        $region46: #{detr_forward.5} parent=11 // pred_check_branch
          %773 = sbr.rel (%p771) target = $region48
        $region47: #{detr_forward.5} parent=11 // pred_region
          _
        $region48: #{detr_forward.5} parent=11 // pred_fallthru
          _
      $region12: #{detr_forward.5} parent=5 // pred_fallthru
        _
      %p774 = scmp.lt.s32.totalorder %s37, 4
      // Predicated region
      $region49: #{detr_forward.5} parent=5 // pred_check
        %p775 = pneg %p774
      $region50: #{detr_forward.5} parent=5 // pred_check_branch
        %777 = sbr.rel (%p775) target = $region52
      $region51: #{detr_forward.5} parent=5 // pred_region
        // Predicated region
        $region53: #{detr_forward.5} parent=51 // pred_check
          %p778 = pneg %p69
        $region54: #{detr_forward.5} parent=51 // pred_check_branch
          %780 = sbr.rel (%p778) target = $region56
        $region55: #{detr_forward.5} parent=51 // pred_region
          %p781 = scmp.lt.s32.totalorder %s44, 1
          %s782 = scalar_select %p781, %s44, 1
          %s783 = smul.addr %s782, 8
          %s784 = smul.addr %s783, 8
          %s785 = scalar_lea.vmem %s0, %s784
        $region56: #{detr_forward.5} parent=51 // pred_fallthru
          _
        // Predicated region
        $region57: #{detr_forward.5} parent=51 // pred_check
          %p786 = pneg %p116
        $region58: #{detr_forward.5} parent=51 // pred_check_branch
          %788 = sbr.rel (%p786) target = $region60
        $region59: #{detr_forward.5} parent=51 // pred_region
          %p789 = scmp.lt.s32.totalorder %s45, 1
          %s790 = scalar_select %p789, %s45, 1
          %s791 = smul.addr %s790, 4
          %s792 = smul.addr %s791, 8
          %s793 = scalar_lea.vmem %s2, %s792
        $region60: #{detr_forward.5} parent=51 // pred_fallthru
          _
        // Predicated region
        $region61: #{detr_forward.5} parent=51 // pred_check
          %p794 = pneg %p142
        $region62: #{detr_forward.5} parent=51 // pred_check_branch
          %796 = sbr.rel (%p794) target = $region64
        $region63: #{detr_forward.5} parent=51 // pred_region
          %p797 = scmp.lt.s32.totalorder %s45, 1
          %s798 = scalar_select %p797, %s45, 1
          %s799 = scalar_lea.vmem %s3, %s798
        $region64: #{detr_forward.5} parent=51 // pred_fallthru
          _
        // Predicated region
        $region65: #{detr_forward.5} parent=51 // pred_check
          %p800 = pneg %p168
        $region66: #{detr_forward.5} parent=51 // pred_check_branch
          %802 = sbr.rel (%p800) target = $region68
        $region67: #{detr_forward.5} parent=51 // pred_region
          %p803 = scmp.lt.s32.totalorder %s45, 1
          %s804 = scalar_select %p803, %s45, 1
          %s805 = smul.addr %s804, 4
          %s806 = smul.addr %s805, 8
          %s807 = scalar_lea.vmem %s4, %s806
        $region68: #{detr_forward.5} parent=51 // pred_fallthru
          _
        // Predicated region
        $region69: #{detr_forward.5} parent=51 // pred_check
          %p808 = pneg %p194
        $region70: #{detr_forward.5} parent=51 // pred_check_branch
          %810 = sbr.rel (%p808) target = $region72
        $region71: #{detr_forward.5} parent=51 // pred_region
          %p811 = scmp.lt.s32.totalorder %s45, 1
          %s812 = scalar_select %p811, %s45, 1
          %s813 = scalar_lea.vmem %s5, %s812
        $region72: #{detr_forward.5} parent=51 // pred_fallthru
          _
        // Predicated region
        $region73: #{detr_forward.5} parent=51 // pred_check
          %p814 = pneg %p220
        $region74: #{detr_forward.5} parent=51 // pred_check_branch
          %816 = sbr.rel (%p814) target = $region76
        $region75: #{detr_forward.5} parent=51 // pred_region
          %p817 = scmp.lt.s32.totalorder %s45, 1
          %s818 = scalar_select %p817, %s45, 1
          %s819 = smul.addr %s818, 4
          %s820 = smul.addr %s819, 8
          %s821 = scalar_lea.vmem %s6, %s820
        $region76: #{detr_forward.5} parent=51 // pred_fallthru
          _
        // Predicated region
        $region77: #{detr_forward.5} parent=51 // pred_check
          %p822 = pneg %p246
        $region78: #{detr_forward.5} parent=51 // pred_check_branch
          %824 = sbr.rel (%p822) target = $region80
        $region79: #{detr_forward.5} parent=51 // pred_region
          %p825 = scmp.lt.s32.totalorder %s45, 1
          %s826 = scalar_select %p825, %s45, 1
          %s827 = scalar_lea.vmem %s7, %s826
        $region80: #{detr_forward.5} parent=51 // pred_fallthru
          _
        // Predicated region
        $region81: #{detr_forward.5} parent=51 // pred_check
          %p828 = pneg %p272
        $region82: #{detr_forward.5} parent=51 // pred_check_branch
          %830 = sbr.rel (%p828) target = $region84
        $region83: #{detr_forward.5} parent=51 // pred_region
          %p831 = scmp.lt.s32.totalorder %s45, 1
          %s832 = scalar_select %p831, %s45, 1
          %s833 = smul.addr %s832, 4
          %s834 = smul.addr %s833, 8
          %s835 = scalar_lea.vmem %s8, %s834
        $region84: #{detr_forward.5} parent=51 // pred_fallthru
          _
        // Predicated region
        $region85: #{detr_forward.5} parent=51 // pred_check
          %p836 = pneg %p298
        $region86: #{detr_forward.5} parent=51 // pred_check_branch
          %838 = sbr.rel (%p836) target = $region88
        $region87: #{detr_forward.5} parent=51 // pred_region
          %p839 = scmp.lt.s32.totalorder %s45, 1
          %s840 = scalar_select %p839, %s45, 1
          %s841 = scalar_lea.vmem %s9, %s840
        $region88: #{detr_forward.5} parent=51 // pred_fallthru
          _
        // Predicated region
        $region89: #{detr_forward.5} parent=51 // pred_check
          %p842 = pneg %p324
        $region90: #{detr_forward.5} parent=51 // pred_check_branch
          %844 = sbr.rel (%p842) target = $region92
        $region91: #{detr_forward.5} parent=51 // pred_region
          %p845 = scmp.lt.s32.totalorder %s45, 1
          %s846 = scalar_select %p845, %s45, 1
          %s847 = smul.addr %s846, 4
          %s848 = smul.addr %s847, 8
          %s849 = scalar_lea.vmem %s10, %s848
        $region92: #{detr_forward.5} parent=51 // pred_fallthru
          _
        // Predicated region
        $region93: #{detr_forward.5} parent=51 // pred_check
          %p850 = pneg %p350
        $region94: #{detr_forward.5} parent=51 // pred_check_branch
          %852 = sbr.rel (%p850) target = $region96
        $region95: #{detr_forward.5} parent=51 // pred_region
          %p853 = scmp.lt.s32.totalorder %s45, 1
          %s854 = scalar_select %p853, %s45, 1
          %s855 = scalar_lea.vmem %s11, %s854
        $region96: #{detr_forward.5} parent=51 // pred_fallthru
          _
        // Predicated region
        $region97: #{detr_forward.5} parent=51 // pred_check
          %p856 = pneg %p376
        $region98: #{detr_forward.5} parent=51 // pred_check_branch
          %858 = sbr.rel (%p856) target = $region100
        $region99: #{detr_forward.5} parent=51 // pred_region
          %p859 = scmp.lt.s32.totalorder %s45, 1
          %s860 = scalar_select %p859, %s45, 1
          %s861 = smul.addr %s860, 4
          %s862 = smul.addr %s861, 8
          %s863 = scalar_lea.vmem %s12, %s862
        $region100: #{detr_forward.5} parent=51 // pred_fallthru
          _
        // Predicated region
        $region101: #{detr_forward.5} parent=51 // pred_check
          %p864 = pneg %p402
        $region102: #{detr_forward.5} parent=51 // pred_check_branch
          %866 = sbr.rel (%p864) target = $region104
        $region103: #{detr_forward.5} parent=51 // pred_region
          %p867 = scmp.lt.s32.totalorder %s45, 1
          %s868 = scalar_select %p867, %s45, 1
          %s869 = scalar_lea.vmem %s13, %s868
        $region104: #{detr_forward.5} parent=51 // pred_fallthru
          _
        // Predicated region
        $region105: #{detr_forward.5} parent=51 // pred_check
          %p870 = pneg %p428
        $region106: #{detr_forward.5} parent=51 // pred_check_branch
          %872 = sbr.rel (%p870) target = $region108
        $region107: #{detr_forward.5} parent=51 // pred_region
          %p873 = scmp.lt.s32.totalorder %s45, 1
          %s874 = scalar_select %p873, %s45, 1
          %s875 = smul.addr %s874, 8
          %s876 = smul.addr %s875, 8
          %s877 = scalar_lea.vmem %s14, %s876
        $region108: #{detr_forward.5} parent=51 // pred_fallthru
          _
        // Predicated region
        $region109: #{detr_forward.5} parent=51 // pred_check
          %p878 = pneg %p454
        $region110: #{detr_forward.5} parent=51 // pred_check_branch
          %880 = sbr.rel (%p878) target = $region112
        $region111: #{detr_forward.5} parent=51 // pred_region
          %p881 = scmp.lt.s32.totalorder %s45, 1
          %s882 = scalar_select %p881, %s45, 1
          %s883 = scalar_lea.vmem %s15, %s882
        $region112: #{detr_forward.5} parent=51 // pred_fallthru
          _
        // Predicated region
        $region113: #{detr_forward.5} parent=51 // pred_check
          %p884 = pneg %p480
        $region114: #{detr_forward.5} parent=51 // pred_check_branch
          %886 = sbr.rel (%p884) target = $region116
        $region115: #{detr_forward.5} parent=51 // pred_region
          %p887 = scmp.lt.s32.totalorder %s45, 1
          %s888 = scalar_select %p887, %s45, 1
          %s889 = smul.addr %s888, 4
          %s890 = scalar_lea.vmem %s16, %s889
        $region116: #{detr_forward.5} parent=51 // pred_fallthru
          _
        // Predicated region
        $region117: #{detr_forward.5} parent=51 // pred_check
          %p891 = pneg %p506
        $region118: #{detr_forward.5} parent=51 // pred_check_branch
          %893 = sbr.rel (%p891) target = $region120
        $region119: #{detr_forward.5} parent=51 // pred_region
          %p894 = scmp.lt.s32.totalorder %s45, 1
          %s895 = scalar_select %p894, %s45, 1
          %s896 = smul.addr %s895, 4
          %s897 = scalar_lea.vmem %s17, %s896
        $region120: #{detr_forward.5} parent=51 // pred_fallthru
          _
      $region52: #{detr_forward.5} parent=5 // pred_fallthru
        _
      %p898 = scmp.le.s32.totalorder 1, %s37
      %p899 = scmp.lt.s32.totalorder %s37, 5
      %p900 = pnand %p898, %p899
      %p901 = pneg %p900
      // Predicated region
      $region121: #{detr_forward.5} parent=5 // pred_check
        _
      $region122: #{detr_forward.5} parent=5 // pred_check_branch
        %903 = sbr.rel (%p900) target = $region124
      $region123: #{detr_forward.5} parent=5 // pred_region
        %s904 = ssub.s32 %s37, 1
        %p905 = scmp.lt.s32.totalorder %s46, 1
        %s906 = scalar_select %p905, %s46, 1
        %s907 = smul.addr %s906, 8
        %s908 = smul.addr %s907, 8
        %s909 = scalar_lea.vmem %s0, %s908
        %p910 = pneg %p75
        %p911 = pneg %p72
        %p912 = pneg %p96
        %p913 = pneg %p93
        %p914 = scmp.lt.s32.totalorder %s47, 1
        %s915 = scalar_select %p914, %s47, 1
        %s916 = smul.addr %s915, 4
        %s917 = smul.addr %s916, 8
        %s918 = scalar_lea.vmem %s2, %s917
        %p919 = pneg %p122
        %p920 = pneg %p119
        %p921 = scmp.lt.s32.totalorder %s47, 1
        %s922 = scalar_select %p921, %s47, 1
        %s923 = scalar_lea.vmem %s3, %s922
        %p924 = pneg %p148
        %p925 = pneg %p145
        %p926 = scmp.lt.s32.totalorder %s47, 1
        %s927 = scalar_select %p926, %s47, 1
        %s928 = smul.addr %s927, 4
        %s929 = smul.addr %s928, 8
        %s930 = scalar_lea.vmem %s4, %s929
        %p931 = pneg %p174
        %p932 = pneg %p171
        %p933 = scmp.lt.s32.totalorder %s47, 1
        %s934 = scalar_select %p933, %s47, 1
        %s935 = scalar_lea.vmem %s5, %s934
        %p936 = pneg %p200
        %p937 = pneg %p197
        %p938 = scmp.lt.s32.totalorder %s47, 1
        %s939 = scalar_select %p938, %s47, 1
        %s940 = smul.addr %s939, 4
        %s941 = smul.addr %s940, 8
        %s942 = scalar_lea.vmem %s6, %s941
        %p943 = pneg %p226
        %p944 = pneg %p223
        %p945 = scmp.lt.s32.totalorder %s47, 1
        %s946 = scalar_select %p945, %s47, 1
        %s947 = scalar_lea.vmem %s7, %s946
        %p948 = pneg %p252
        %p949 = pneg %p249
        %p950 = scmp.lt.s32.totalorder %s47, 1
        %s951 = scalar_select %p950, %s47, 1
        %s952 = smul.addr %s951, 4
        %s953 = smul.addr %s952, 8
        %s954 = scalar_lea.vmem %s8, %s953
        %p955 = pneg %p278
        %p956 = pneg %p275
        %p957 = scmp.lt.s32.totalorder %s47, 1
        %s958 = scalar_select %p957, %s47, 1
        %s959 = scalar_lea.vmem %s9, %s958
        %p960 = pneg %p304
        %p961 = pneg %p301
        %p962 = scmp.lt.s32.totalorder %s47, 1
        %s963 = scalar_select %p962, %s47, 1
        %s964 = smul.addr %s963, 4
        %s965 = smul.addr %s964, 8
        %s966 = scalar_lea.vmem %s10, %s965
        %p967 = pneg %p330
        %p968 = pneg %p327
        %p969 = scmp.lt.s32.totalorder %s47, 1
        %s970 = scalar_select %p969, %s47, 1
        %s971 = scalar_lea.vmem %s11, %s970
        %p972 = pneg %p356
        %p973 = pneg %p353
        %p974 = scmp.lt.s32.totalorder %s47, 1
        %s975 = scalar_select %p974, %s47, 1
        %s976 = smul.addr %s975, 4
        %s977 = smul.addr %s976, 8
        %s978 = scalar_lea.vmem %s12, %s977
        %p979 = pneg %p382
        %p980 = pneg %p379
        %p981 = scmp.lt.s32.totalorder %s47, 1
        %s982 = scalar_select %p981, %s47, 1
        %s983 = scalar_lea.vmem %s13, %s982
        %p984 = pneg %p408
        %p985 = pneg %p405
        %p986 = scmp.lt.s32.totalorder %s47, 1
        %s987 = scalar_select %p986, %s47, 1
        %s988 = smul.addr %s987, 8
        %s989 = smul.addr %s988, 8
        %s990 = scalar_lea.vmem %s14, %s989
        %p991 = pneg %p434
        %p992 = pneg %p431
        %p993 = scmp.lt.s32.totalorder %s47, 1
        %s994 = scalar_select %p993, %s47, 1
        %s995 = scalar_lea.vmem %s15, %s994
        %p996 = pneg %p460
        %p997 = pneg %p457
        %p998 = scmp.lt.s32.totalorder %s47, 1
        %s999 = scalar_select %p998, %s47, 1
        %s1000 = smul.addr %s999, 4
        %s1001 = scalar_lea.vmem %s16, %s1000
        %p1002 = pneg %p486
        %p1003 = pneg %p483
        %p1004 = scmp.lt.s32.totalorder %s47, 1
        %s1005 = scalar_select %p1004, %s47, 1
        %s1006 = smul.addr %s1005, 4
        %s1007 = scalar_lea.vmem %s17, %s1006
        %p1008 = pneg %p512
        %p1009 = pneg %p509
        %p1010 = pneg %p533
        %p1011 = pneg %p530
        %p1012 = pneg %p554
        %p1013 = pneg %p551
        %p1014 = pneg %p575
        %p1015 = pneg %p572
        %p1016 = pneg %p596
        %p1017 = pneg %p593
        %p1018 = pneg %p617
        %p1019 = pneg %p614
        %p1020 = pneg %p638
        %p1021 = pneg %p635
        %p1022 = pneg %p659
        %p1023 = pneg %p656
        %p1024 = pneg %p680
        %p1025 = pneg %p677
        %p1026 = pneg %p706
        %p1027 = pneg %p703
        %s1028 = sand.u32 %s693, 1
        %s1029 = scalar_lea.sflag [#allocation4], %s1028
        %s1030 = sand.u32 %s693, 1
        %s1031 = smul.addr %s1030, 16
        %s1032 = scalar_lea.vmem [#allocation3], %s1031
        %p1033 = pneg %p732
        %p1034 = pneg %p729
        %p1035 = scmp.lt.s32.totalorder %s46, 1
        %s1036 = scalar_select %p1035, %s46, 1
        %s1037 = smul.addr %s1036, 2
        %s1038 = smul.addr %s1037, 8
        %s1039 = scalar_lea.vmem %s27, %s1038
        %p1040 = scmp.lt.s32.totalorder %s46, 1
        %s1041 = scalar_select %p1040, %s46, 1
        %s1042 = smul.addr %s1041, 8
        %s1043 = smul.addr %s1042, 8
        %s1044 = scalar_lea.vmem %s0, %s1043
        %p1045 = scmp.lt.s32.totalorder %s47, 1
        %s1046 = scalar_select %p1045, %s47, 1
        %s1047 = smul.addr %s1046, 4
        %s1048 = smul.addr %s1047, 8
        %s1049 = scalar_lea.vmem %s2, %s1048
        %p1050 = scmp.lt.s32.totalorder %s47, 1
        %s1051 = scalar_select %p1050, %s47, 1
        %s1052 = scalar_lea.vmem %s3, %s1051
        %p1053 = scmp.lt.s32.totalorder %s47, 1
        %s1054 = scalar_select %p1053, %s47, 1
        %s1055 = smul.addr %s1054, 4
        %s1056 = smul.addr %s1055, 8
        %s1057 = scalar_lea.vmem %s4, %s1056
        %p1058 = scmp.lt.s32.totalorder %s47, 1
        %s1059 = scalar_select %p1058, %s47, 1
        %s1060 = scalar_lea.vmem %s5, %s1059
        %p1061 = scmp.lt.s32.totalorder %s47, 1
        %s1062 = scalar_select %p1061, %s47, 1
        %s1063 = smul.addr %s1062, 4
        %s1064 = smul.addr %s1063, 8
        %s1065 = scalar_lea.vmem %s6, %s1064
        %p1066 = scmp.lt.s32.totalorder %s47, 1
        %s1067 = scalar_select %p1066, %s47, 1
        %s1068 = scalar_lea.vmem %s7, %s1067
        %p1069 = scmp.lt.s32.totalorder %s47, 1
        %s1070 = scalar_select %p1069, %s47, 1
        %s1071 = smul.addr %s1070, 4
        %s1072 = smul.addr %s1071, 8
        %s1073 = scalar_lea.vmem %s8, %s1072
        %p1074 = scmp.lt.s32.totalorder %s47, 1
        %s1075 = scalar_select %p1074, %s47, 1
        %s1076 = scalar_lea.vmem %s9, %s1075
        %p1077 = scmp.lt.s32.totalorder %s47, 1
        %s1078 = scalar_select %p1077, %s47, 1
        %s1079 = smul.addr %s1078, 4
        %s1080 = smul.addr %s1079, 8
        %s1081 = scalar_lea.vmem %s10, %s1080
        %p1082 = scmp.lt.s32.totalorder %s47, 1
        %s1083 = scalar_select %p1082, %s47, 1
        %s1084 = scalar_lea.vmem %s11, %s1083
        %p1085 = scmp.lt.s32.totalorder %s47, 1
        %s1086 = scalar_select %p1085, %s47, 1
        %s1087 = smul.addr %s1086, 4
        %s1088 = smul.addr %s1087, 8
        %s1089 = scalar_lea.vmem %s12, %s1088
        %p1090 = scmp.lt.s32.totalorder %s47, 1
        %s1091 = scalar_select %p1090, %s47, 1
        %s1092 = scalar_lea.vmem %s13, %s1091
        %p1093 = scmp.lt.s32.totalorder %s47, 1
        %s1094 = scalar_select %p1093, %s47, 1
        %s1095 = smul.addr %s1094, 8
        %s1096 = smul.addr %s1095, 8
        %s1097 = scalar_lea.vmem %s14, %s1096
        %p1098 = scmp.lt.s32.totalorder %s47, 1
        %s1099 = scalar_select %p1098, %s47, 1
        %s1100 = scalar_lea.vmem %s15, %s1099
        %p1101 = scmp.lt.s32.totalorder %s47, 1
        %s1102 = scalar_select %p1101, %s47, 1
        %s1103 = smul.addr %s1102, 4
        %s1104 = scalar_lea.vmem %s16, %s1103
        %p1105 = scmp.lt.s32.totalorder %s47, 1
        %s1106 = scalar_select %p1105, %s47, 1
        %s1107 = smul.addr %s1106, 4
        %s1108 = scalar_lea.vmem %s17, %s1107
        %p1109 = scmp.lt.s32.totalorder %s46, 1
        %s1110 = scalar_select %p1109, %s46, 1
        %s1111 = smul.addr %s1110, 2
        %s1112 = smul.addr %s1111, 8
        %s1113 = scalar_lea.vmem %s27, %s1112
        %p1114 = scmp.eq.s32.totalorder %s47, 0
        // Predicated region
        $region125: #{detr_forward.5} parent=123 // pred_check
          %p1115 = pneg %p1114
        $region126: #{detr_forward.5} parent=123 // pred_check_branch
          %1117 = sbr.rel (%p1115) target = $region128
        $region127: #{detr_forward.5} parent=123 // pred_region
          %v1118 = vld [vmem:[%s1] sm:$0xff]
          %v1119 = vld [vmem:[%s1 + $0x8] sm:$0xff]
          %vm1120 = vcmask 261120
          %1121 = vst.msk [vmem:[#allocation2] sm:$0xff] %vm1120, %v1118
          %1122 = vst.msk [vmem:[#allocation2 + $0x8] sm:$0xff] %vm1120, %v1119
        $region128: #{detr_forward.5} parent=123 // pred_fallthru
          _
        %v1123 = vld [vmem:[#allocation2] sm:$0xff]
        %v1124 = vld [vmem:[#allocation2 + $0x8] sm:$0xff]
        %v1125 = vld [vmem:[%s1044] sm:$0xff]
        %v1126 = vld [vmem:[%s1044 + $0x8] sm:$0xff]
        %v1127 = vld [vmem:[%s1044 + $0x10] sm:$0xff]
        %v1128 = vld [vmem:[%s1044 + $0x18] sm:$0xff]
        %v1129 = vld [vmem:[%s1044 + $0x20] sm:$0xff]
        %v1130 = vld [vmem:[%s1044 + $0x28] sm:$0xff]
        %v1131 = vld [vmem:[%s1044 + $0x30] sm:$0xff]
        %v1132 = vld [vmem:[%s1044 + $0x38] sm:$0xff]
        %v1133 = vld [vmem:[%s1104] sm:$0x7]
        %v1134 = vld [vmem:[%s1108] sm:$0x7]
        %v1135 = vld [vmem:[%s1049] sm:$0xff]
        %v1136 = vld [vmem:[%s1049 + $0x8] sm:$0xff]
        %v1137 = vld [vmem:[%s1049 + $0x10] sm:$0xff]
        %v1138 = vld [vmem:[%s1049 + $0x18] sm:$0xff]
        %v1139 = vld [vmem:[%s1052] sm:$0x1]
        %v1141 = vlaneseq
        %v1142 = vshrl.u32 %v1141, 7
        %v1143 = vsub.s32 0, %v1142
        %v1144 = vrot.slane %v1139, %v1143
        %vm1146 = vcmask 261120
        %v1148 = vsel %vm1146, %v1123, 0
        %v1151 = vsel %vm1146, %v1124, 0
        %1153 = vmatprep.subr.mxu0 0.0
        %1154 = vmatpush1.msra.mxu0 %v1135
        %1155 = vmatprep.subr.mxu0 0.0
        %1156 = vmatpush1.msra.mxu0 %v1136
        %1157 = vmatprep.subr.mxu0 0.0
        %1158 = vmatpush1.msra.mxu0 %v1137
        %1159 = vmatprep.subr.mxu0 0.0
        %1160 = vmatpush1.msra.mxu0 %v1138
        %1161 = vmatprep.subr.mxu0 0.0
        %1162 = vmatpush1.msra.mxu0 0.0
        %1163 = vmatprep.subr.mxu0 0.0
        %1164 = vmatpush1.msra.mxu0 0.0
        %1165 = vmatprep.subr.mxu0 0.0
        %1166 = vmatpush1.msra.mxu0 0.0
        %1167 = vmatprep.subr.mxu0 0.0
        %1168 = vmatpush1.msra.mxu0 0.0
        %1169 = vmatprep.subr.mxu0 0.0
        %1170 = vmatpush1.msra.mxu0 0.0
        %1171 = vmatprep.subr.mxu0 0.0
        %1172 = vmatpush1.msra.mxu0 0.0
        %1173 = vmatprep.subr.mxu0 0.0
        %1174 = vmatpush1.msra.mxu0 0.0
        %1175 = vmatprep.subr.mxu0 0.0
        %1176 = vmatpush1.msra.mxu0 0.0
        %1177 = vmatprep.subr.mxu0 0.0
        %1178 = vmatpush1.msra.mxu0 0.0
        %1179 = vmatprep.subr.mxu0 0.0
        %1180 = vmatpush1.msra.mxu0 0.0
        %1181 = vmatprep.subr.mxu0 0.0
        %1182 = vmatpush1.msra.mxu0 0.0
        %1183 = vmatprep.subr.mxu0 0.0
        %1184 = vmatpush1.msra.mxu0 0.0
        %1185 = vmatprep.subr.mxu0 0.0
        %1186 = vmatpush1.msra.mxu0 0.0
        %1187 = vmatprep.subr.mxu0 0.0
        %1188 = vmatpush1.msra.mxu0 0.0
        %1189 = vmatprep.subr.mxu0 0.0
        %1190 = vmatpush1.msra.mxu0 0.0
        %1191 = vmatprep.subr.mxu0 0.0
        %1192 = vmatpush1.msra.mxu0 0.0
        %1193 = vmatprep.subr.mxu0 0.0
        %1194 = vmatpush1.msra.mxu0 0.0
        %1195 = vmatprep.subr.mxu0 0.0
        %1196 = vmatpush1.msra.mxu0 0.0
        %1197 = vmatprep.subr.mxu0 0.0
        %1198 = vmatpush1.msra.mxu0 0.0
        %1199 = vmatprep.subr.mxu0 0.0
        %1200 = vmatpush1.msra.mxu0 0.0
        %1201 = vmatprep.subr.mxu0 0.0
        %1202 = vmatpush1.msra.mxu0 0.0
        %1203 = vmatprep.subr.mxu0 0.0
        %1204 = vmatpush1.msra.mxu0 0.0
        %1205 = vmatprep.subr.mxu0 0.0
        %1206 = vmatpush1.msra.mxu0 0.0
        %1207 = vmatprep.subr.mxu0 0.0
        %1208 = vmatpush1.msra.mxu0 0.0
        %1209 = vmatprep.subr.mxu0 0.0
        %1210 = vmatpush1.msra.mxu0 0.0
        %1211 = vmatprep.subr.mxu0 0.0
        %1212 = vmatpush1.msra.mxu0 0.0
        %1213 = vmatprep.subr.mxu0 0.0
        %1214 = vmatpush1.msra.mxu0 0.0
        %1215 = vmatprep.subr.mxu0 0.0
        %1216 = vmatpush1.msra.mxu0 0.0
        %1217 = vmatprep.mubr.f32.mxu0 0.0
        %1218 = vmatmul.mubr.f32.gmra.mrb[0].mxu0 %v1148
        %v1219 = vpop.f32.mrb[0].mxu0
        %v1220 = vadd.f32 %v1144, %v1219
        %v1221 = vpop.f32.mrb[0].mxu0
        %1222 = vmatprep.mubr.f32.mxu0 0.0
        %1223 = vmatmul.mubr.f32.gmra.mrb[0].mxu0 %v1151
        %v1224 = vpop.f32.mrb[0].mxu0
        %v1225 = vadd.f32 %v1144, %v1224
        %v1226 = vpop.f32.mrb[0].mxu0
        %1227 = vdwg.mxu0
        %v1228 = vld [vmem:[%s1057] sm:$0xff]
        %v1229 = vld [vmem:[%s1057 + $0x8] sm:$0xff]
        %v1230 = vld [vmem:[%s1057 + $0x10] sm:$0xff]
        %v1231 = vld [vmem:[%s1057 + $0x18] sm:$0xff]
        %v1232 = vld [vmem:[%s1060] sm:$0x1]
        %v1234 = vlaneseq
        %v1235 = vshrl.u32 %v1234, 7
        %v1236 = vsub.s32 0, %v1235
        %v1237 = vrot.slane %v1232, %v1236
        %v1239 = vadd.f32 %v1123, %v1237
        %v1240 = vadd.f32 %v1124, %v1237
        %1243 = vrot.lane.b32.xlu0 %v1220, 96
        %v1244 = vpop.permute.xlu0 %1243
        %1245 = vrot.lane.b32.xlu0 %v1225, 96
        %v1246 = vpop.permute.xlu0 %1245
        %vm1247 = vcmask 64512
        %v1248 = vsel %vm1247, %v1220, 0
        %v1250 = vsel %vm1247, %v1225, 0
        %v1252 = vsel %vm1247, %v1244, 0
        %v1254 = vsel %vm1247, %v1246, 0
        %1256 = vmatprep.subr.mxu0 0.0
        %1257 = vmatpush1.xpose.msra.mxu0 %v1252
        %1258 = vmatprep.subr.mxu0 0.0
        %1259 = vmatpush1.xpose.msra.mxu0 %v1254
        %1260 = vmatprep.subr.mxu0 0.0
        %1261 = vmatpush1.xpose.msra.mxu0 0.0
        %1262 = vmatprep.subr.mxu0 0.0
        %1263 = vmatpush1.xpose.msra.mxu0 0.0
        %1264 = vmatprep.subr.mxu0 0.0
        %1265 = vmatpush1.xpose.msra.mxu0 0.0
        %1266 = vmatprep.subr.mxu0 0.0
        %1267 = vmatpush1.xpose.msra.mxu0 0.0
        %1268 = vmatprep.subr.mxu0 0.0
        %1269 = vmatpush1.xpose.msra.mxu0 0.0
        %1270 = vmatprep.subr.mxu0 0.0
        %1271 = vmatpush1.xpose.msra.mxu0 0.0
        %1272 = vmatprep.subr.mxu0 0.0
        %1273 = vmatpush1.xpose.msra.mxu0 0.0
        %1274 = vmatprep.subr.mxu0 0.0
        %1275 = vmatpush1.xpose.msra.mxu0 0.0
        %1276 = vmatprep.subr.mxu0 0.0
        %1277 = vmatpush1.xpose.msra.mxu0 0.0
        %1278 = vmatprep.subr.mxu0 0.0
        %1279 = vmatpush1.xpose.msra.mxu0 0.0
        %1280 = vmatprep.subr.mxu0 0.0
        %1281 = vmatpush1.xpose.msra.mxu0 0.0
        %1282 = vmatprep.subr.mxu0 0.0
        %1283 = vmatpush1.xpose.msra.mxu0 0.0
        %1284 = vmatprep.subr.mxu0 0.0
        %1285 = vmatpush1.xpose.msra.mxu0 0.0
        %1286 = vmatprep.subr.mxu0 0.0
        %1287 = vmatpush1.xpose.msra.mxu0 0.0
        %1288 = vmatprep.subr.mxu0 0.0
        %1289 = vmatpush1.xpose.msra.mxu0 0.0
        %1290 = vmatprep.subr.mxu0 0.0
        %1291 = vmatpush1.xpose.msra.mxu0 0.0
        %1292 = vmatprep.subr.mxu0 0.0
        %1293 = vmatpush1.xpose.msra.mxu0 0.0
        %1294 = vmatprep.subr.mxu0 0.0
        %1295 = vmatpush1.xpose.msra.mxu0 0.0
        %1296 = vmatprep.subr.mxu0 0.0
        %1297 = vmatpush1.xpose.msra.mxu0 0.0
        %1298 = vmatprep.subr.mxu0 0.0
        %1299 = vmatpush1.xpose.msra.mxu0 0.0
        %1300 = vmatprep.subr.mxu0 0.0
        %1301 = vmatpush1.xpose.msra.mxu0 0.0
        %1302 = vmatprep.subr.mxu0 0.0
        %1303 = vmatpush1.xpose.msra.mxu0 0.0
        %1304 = vmatprep.subr.mxu0 0.0
        %1305 = vmatpush1.xpose.msra.mxu0 0.0
        %1306 = vmatprep.subr.mxu0 0.0
        %1307 = vmatpush1.xpose.msra.mxu0 0.0
        %1308 = vmatprep.subr.mxu0 0.0
        %1309 = vmatpush1.xpose.msra.mxu0 0.0
        %1310 = vmatprep.subr.mxu0 0.0
        %1311 = vmatpush1.xpose.msra.mxu0 0.0
        %1312 = vmatprep.subr.mxu0 0.0
        %1313 = vmatpush1.xpose.msra.mxu0 0.0
        %1314 = vmatprep.subr.mxu0 0.0
        %1315 = vmatpush1.xpose.msra.mxu0 0.0
        %1316 = vmatprep.subr.mxu0 0.0
        %1317 = vmatpush1.xpose.msra.mxu0 0.0
        %1318 = vmatprep.subr.mxu0 0.0
        %1319 = vmatpush1.xpose.msra.mxu0 0.0
        %1320 = vmatprep.mubr.f32.mxu0 0.0
        %1321 = vmatmul.mubr.f32.gmra.mrb[0].mxu0 %v1248
        %v1322 = vpop.f32.mrb[0].mxu0
        %v1323 = vadd.f32 0.0, %v1322
        %v1324 = vpop.f32.mrb[0].mxu0
        %1325 = vmatprep.mubr.f32.mxu0 0.0
        %1326 = vmatmul.mubr.f32.gmra.mrb[0].mxu0 %v1250
        %v1327 = vpop.f32.mrb[0].mxu0
        %v1328 = vadd.f32 0.0, %v1327
        %v1329 = vpop.f32.mrb[0].mxu0
        %1330 = vdwg.mxu0
        %vm1331 = vcmask 130048
        %v1332 = vsel %vm1331, %v1323, -inf
        %1333 = vmax.xlane.f32.xlu0 %v1332
        %v1334 = vpop.xlane.xlu0 %1333
        %v1335 = vsel %vm1331, %v1328, -inf
        %1336 = vmax.xlane.f32.xlu0 %v1335
        %v1337 = vpop.xlane.xlu0 %1336
        %v1338 = vsub.f32 %v1323, %v1334
        %v1339 = vsub.f32 %v1328, %v1337
        %v1340 = vmul.f32 %v1338, 1.442695
        %v1341 = vpow.pop %v1340
        %v1342 = vmul.f32 %v1339, 1.442695
        %v1343 = vpow.pop %v1342
        %v1344 = vsel %vm1331, %v1341, 0.0
        %1345 = vadd.xlane.f32.xlu0 %v1344
        %v1346 = vpop.xlane.xlu0 %1345
        %v1347 = vsel %vm1331, %v1343, 0.0
        %1348 = vadd.xlane.f32.xlu0 %v1347
        %v1349 = vpop.xlane.xlu0 %1348
        %v1350 = vrcp.pop %v1346
        %v1351 = vrcp.pop %v1349
        %v1352 = vmul.f32 %v1341, %v1350
        %v1353 = vmul.f32 %v1343, %v1351
        %1354 = vrot.lane.b32.xlu0 %v1220, 64
        %v1355 = vpop.permute.xlu0 %1354
        %1356 = vrot.lane.b32.xlu0 %v1225, 64
        %v1357 = vpop.permute.xlu0 %1356
        %v1361 = vsel %vm1331, %v1352, 0
        %v1364 = vsel %vm1331, %v1353, 0
        %1366 = vmatprep.subr.mxu0 0.0
        %1367 = vmatpush1.msra.mxu0 %v1355
        %1368 = vmatprep.subr.mxu0 0.0
        %1369 = vmatpush1.msra.mxu0 %v1357
        %1370 = vmatprep.subr.mxu0 0.0
        %1371 = vmatpush1.msra.mxu0 0.0
        %1372 = vmatprep.subr.mxu0 0.0
        %1373 = vmatpush1.msra.mxu0 0.0
        %1374 = vmatprep.subr.mxu0 0.0
        %1375 = vmatpush1.msra.mxu0 0.0
        %1376 = vmatprep.subr.mxu0 0.0
        %1377 = vmatpush1.msra.mxu0 0.0
        %1378 = vmatprep.subr.mxu0 0.0
        %1379 = vmatpush1.msra.mxu0 0.0
        %1380 = vmatprep.subr.mxu0 0.0
        %1381 = vmatpush1.msra.mxu0 0.0
        %1382 = vmatprep.subr.mxu0 0.0
        %1383 = vmatpush1.msra.mxu0 0.0
        %1384 = vmatprep.subr.mxu0 0.0
        %1385 = vmatpush1.msra.mxu0 0.0
        %1386 = vmatprep.subr.mxu0 0.0
        %1387 = vmatpush1.msra.mxu0 0.0
        %1388 = vmatprep.subr.mxu0 0.0
        %1389 = vmatpush1.msra.mxu0 0.0
        %1390 = vmatprep.subr.mxu0 0.0
        %1391 = vmatpush1.msra.mxu0 0.0
        %1392 = vmatprep.subr.mxu0 0.0
        %1393 = vmatpush1.msra.mxu0 0.0
        %1394 = vmatprep.subr.mxu0 0.0
        %1395 = vmatpush1.msra.mxu0 0.0
        %1396 = vmatprep.subr.mxu0 0.0
        %1397 = vmatpush1.msra.mxu0 0.0
        %1398 = vmatprep.subr.mxu0 0.0
        %1399 = vmatpush1.msra.mxu0 0.0
        %1400 = vmatprep.subr.mxu0 0.0
        %1401 = vmatpush1.msra.mxu0 0.0
        %1402 = vmatprep.subr.mxu0 0.0
        %1403 = vmatpush1.msra.mxu0 0.0
        %1404 = vmatprep.subr.mxu0 0.0
        %1405 = vmatpush1.msra.mxu0 0.0
        %1406 = vmatprep.subr.mxu0 0.0
        %1407 = vmatpush1.msra.mxu0 0.0
        %1408 = vmatprep.subr.mxu0 0.0
        %1409 = vmatpush1.msra.mxu0 0.0
        %1410 = vmatprep.subr.mxu0 0.0
        %1411 = vmatpush1.msra.mxu0 0.0
        %1412 = vmatprep.subr.mxu0 0.0
        %1413 = vmatpush1.msra.mxu0 0.0
        %1414 = vmatprep.subr.mxu0 0.0
        %1415 = vmatpush1.msra.mxu0 0.0
        %1416 = vmatprep.subr.mxu0 0.0
        %1417 = vmatpush1.msra.mxu0 0.0
        %1418 = vmatprep.subr.mxu0 0.0
        %1419 = vmatpush1.msra.mxu0 0.0
        %1420 = vmatprep.subr.mxu0 0.0
        %1421 = vmatpush1.msra.mxu0 0.0
        %1422 = vmatprep.subr.mxu0 0.0
        %1423 = vmatpush1.msra.mxu0 0.0
        %1424 = vmatprep.subr.mxu0 0.0
        %1425 = vmatpush1.msra.mxu0 0.0
        %1426 = vmatprep.subr.mxu0 0.0
        %1427 = vmatpush1.msra.mxu0 0.0
        %1428 = vmatprep.subr.mxu0 0.0
        %1429 = vmatpush1.msra.mxu0 0.0
        %1430 = vmatprep.mubr.f32.mxu0 0.0
        %1431 = vmatmul.mubr.f32.gmra.mrb[0].mxu0 %v1361
        %v1432 = vpop.f32.mrb[0].mxu0
        %v1433 = vadd.f32 0.0, %v1432
        %v1434 = vpop.f32.mrb[0].mxu0
        %1435 = vmatprep.mubr.f32.mxu0 0.0
        %1436 = vmatmul.mubr.f32.gmra.mrb[0].mxu0 %v1364
        %v1437 = vpop.f32.mrb[0].mxu0
        %v1438 = vadd.f32 0.0, %v1437
        %v1439 = vpop.f32.mrb[0].mxu0
        %1440 = vdwg.mxu0
        %v1442 = vsel %vm1247, %v1433, 0
        %v1445 = vsel %vm1247, %v1438, 0
        %1447 = vmatprep.subr.mxu0 0.0
        %1448 = vmatpush1.msra.mxu0 %v1228
        %1449 = vmatprep.subr.mxu0 0.0
        %1450 = vmatpush1.msra.mxu0 0.0
        %1451 = vmatprep.subr.mxu0 0.0
        %1452 = vmatpush1.msra.mxu0 0.0
        %1453 = vmatprep.subr.mxu0 0.0
        %1454 = vmatpush1.msra.mxu0 0.0
        %1455 = vmatprep.subr.mxu0 0.0
        %1456 = vmatpush1.msra.mxu0 0.0
        %1457 = vmatprep.subr.mxu0 0.0
        %1458 = vmatpush1.msra.mxu0 0.0
        %1459 = vmatprep.subr.mxu0 0.0
        %1460 = vmatpush1.msra.mxu0 0.0
        %1461 = vmatprep.subr.mxu0 0.0
        %1462 = vmatpush1.msra.mxu0 0.0
        %1463 = vmatprep.subr.mxu0 0.0
        %1464 = vmatpush1.msra.mxu0 0.0
        %1465 = vmatprep.subr.mxu0 0.0
        %1466 = vmatpush1.msra.mxu0 0.0
        %1467 = vmatprep.subr.mxu0 0.0
        %1468 = vmatpush1.msra.mxu0 0.0
        %1469 = vmatprep.subr.mxu0 0.0
        %1470 = vmatpush1.msra.mxu0 0.0
        %1471 = vmatprep.subr.mxu0 0.0
        %1472 = vmatpush1.msra.mxu0 0.0
        %1473 = vmatprep.subr.mxu0 0.0
        %1474 = vmatpush1.msra.mxu0 0.0
        %1475 = vmatprep.subr.mxu0 0.0
        %1476 = vmatpush1.msra.mxu0 0.0
        %1477 = vmatprep.subr.mxu0 0.0
        %1478 = vmatpush1.msra.mxu0 0.0
        %1479 = vmatprep.subr.mxu0 0.0
        %1480 = vmatpush1.msra.mxu0 0.0
        %1481 = vmatprep.subr.mxu0 0.0
        %1482 = vmatpush1.msra.mxu0 0.0
        %1483 = vmatprep.subr.mxu0 0.0
        %1484 = vmatpush1.msra.mxu0 0.0
        %1485 = vmatprep.subr.mxu0 0.0
        %1486 = vmatpush1.msra.mxu0 0.0
        %1487 = vmatprep.subr.mxu0 0.0
        %1488 = vmatpush1.msra.mxu0 0.0
        %1489 = vmatprep.subr.mxu0 0.0
        %1490 = vmatpush1.msra.mxu0 0.0
        %1491 = vmatprep.subr.mxu0 0.0
        %1492 = vmatpush1.msra.mxu0 0.0
        %1493 = vmatprep.subr.mxu0 0.0
        %1494 = vmatpush1.msra.mxu0 0.0
        %1495 = vmatprep.subr.mxu0 0.0
        %1496 = vmatpush1.msra.mxu0 0.0
        %1497 = vmatprep.subr.mxu0 0.0
        %1498 = vmatpush1.msra.mxu0 0.0
        %1499 = vmatprep.subr.mxu0 0.0
        %1500 = vmatpush1.msra.mxu0 0.0
        %1501 = vmatprep.subr.mxu0 0.0
        %1502 = vmatpush1.msra.mxu0 0.0
        %1503 = vmatprep.subr.mxu0 0.0
        %1504 = vmatpush1.msra.mxu0 0.0
        %1505 = vmatprep.subr.mxu0 0.0
        %1506 = vmatpush1.msra.mxu0 0.0
        %1507 = vmatprep.subr.mxu0 0.0
        %1508 = vmatpush1.msra.mxu0 0.0
        %1509 = vmatprep.subr.mxu0 0.0
        %1510 = vmatpush1.msra.mxu0 0.0
        %1511 = vmatprep.mubr.f32.mxu0 0.0
        %1512 = vmatmul.mubr.f32.gmra.mrb[0].mxu0 %v1442
        %v1513 = vpop.f32.mrb[0].mxu0
        %v1514 = vadd.f32 0.0, %v1513
        %v1515 = vpop.f32.mrb[0].mxu0
        %1516 = vmatprep.mubr.f32.mxu0 0.0
        %1517 = vmatmul.mubr.f32.gmra.mrb[0].mxu0 %v1445
        %v1518 = vpop.f32.mrb[0].mxu0
        %v1519 = vadd.f32 0.0, %v1518
        %v1520 = vpop.f32.mrb[0].mxu0
        %1521 = vdwg.mxu0
        %v1522 = vadd.f32 %v1239, %v1514
        %v1523 = vadd.f32 %v1240, %v1519
        %1524 = vrot.lane.b32.xlu0 %v1220, 120
        %v1525 = vpop.permute.xlu0 %1524
        %1526 = vrot.lane.b32.xlu0 %v1225, 120
        %v1527 = vpop.permute.xlu0 %1526
        %1528 = vrot.lane.b32.xlu0 %v1220, 88
        %v1529 = vpop.permute.xlu0 %1528
        %1530 = vrot.lane.b32.xlu0 %v1225, 88
        %v1531 = vpop.permute.xlu0 %1530
        %v1532 = vsel %vm1247, %v1525, 0
        %v1534 = vsel %vm1247, %v1527, 0
        %v1536 = vsel %vm1247, %v1529, 0
        %v1538 = vsel %vm1247, %v1531, 0
        %1540 = vmatprep.subr.mxu0 0.0
        %1541 = vmatpush1.xpose.msra.mxu0 %v1536
        %1542 = vmatprep.subr.mxu0 0.0
        %1543 = vmatpush1.xpose.msra.mxu0 %v1538
        %1544 = vmatprep.subr.mxu0 0.0
        %1545 = vmatpush1.xpose.msra.mxu0 0.0
        %1546 = vmatprep.subr.mxu0 0.0
        %1547 = vmatpush1.xpose.msra.mxu0 0.0
        %1548 = vmatprep.subr.mxu0 0.0
        %1549 = vmatpush1.xpose.msra.mxu0 0.0
        %1550 = vmatprep.subr.mxu0 0.0
        %1551 = vmatpush1.xpose.msra.mxu0 0.0
        %1552 = vmatprep.subr.mxu0 0.0
        %1553 = vmatpush1.xpose.msra.mxu0 0.0
        %1554 = vmatprep.subr.mxu0 0.0
        %1555 = vmatpush1.xpose.msra.mxu0 0.0
        %1556 = vmatprep.subr.mxu0 0.0
        %1557 = vmatpush1.xpose.msra.mxu0 0.0
        %1558 = vmatprep.subr.mxu0 0.0
        %1559 = vmatpush1.xpose.msra.mxu0 0.0
        %1560 = vmatprep.subr.mxu0 0.0
        %1561 = vmatpush1.xpose.msra.mxu0 0.0
        %1562 = vmatprep.subr.mxu0 0.0
        %1563 = vmatpush1.xpose.msra.mxu0 0.0
        %1564 = vmatprep.subr.mxu0 0.0
        %1565 = vmatpush1.xpose.msra.mxu0 0.0
        %1566 = vmatprep.subr.mxu0 0.0
        %1567 = vmatpush1.xpose.msra.mxu0 0.0
        %1568 = vmatprep.subr.mxu0 0.0
        %1569 = vmatpush1.xpose.msra.mxu0 0.0
        %1570 = vmatprep.subr.mxu0 0.0
        %1571 = vmatpush1.xpose.msra.mxu0 0.0
        %1572 = vmatprep.subr.mxu0 0.0
        %1573 = vmatpush1.xpose.msra.mxu0 0.0
        %1574 = vmatprep.subr.mxu0 0.0
        %1575 = vmatpush1.xpose.msra.mxu0 0.0
        %1576 = vmatprep.subr.mxu0 0.0
        %1577 = vmatpush1.xpose.msra.mxu0 0.0
        %1578 = vmatprep.subr.mxu0 0.0
        %1579 = vmatpush1.xpose.msra.mxu0 0.0
        %1580 = vmatprep.subr.mxu0 0.0
        %1581 = vmatpush1.xpose.msra.mxu0 0.0
        %1582 = vmatprep.subr.mxu0 0.0
        %1583 = vmatpush1.xpose.msra.mxu0 0.0
        %1584 = vmatprep.subr.mxu0 0.0
        %1585 = vmatpush1.xpose.msra.mxu0 0.0
        %1586 = vmatprep.subr.mxu0 0.0
        %1587 = vmatpush1.xpose.msra.mxu0 0.0
        %1588 = vmatprep.subr.mxu0 0.0
        %1589 = vmatpush1.xpose.msra.mxu0 0.0
        %1590 = vmatprep.subr.mxu0 0.0
        %1591 = vmatpush1.xpose.msra.mxu0 0.0
        %1592 = vmatprep.subr.mxu0 0.0
        %1593 = vmatpush1.xpose.msra.mxu0 0.0
        %1594 = vmatprep.subr.mxu0 0.0
        %1595 = vmatpush1.xpose.msra.mxu0 0.0
        %1596 = vmatprep.subr.mxu0 0.0
        %1597 = vmatpush1.xpose.msra.mxu0 0.0
        %1598 = vmatprep.subr.mxu0 0.0
        %1599 = vmatpush1.xpose.msra.mxu0 0.0
        %1600 = vmatprep.subr.mxu0 0.0
        %1601 = vmatpush1.xpose.msra.mxu0 0.0
        %1602 = vmatprep.subr.mxu0 0.0
        %1603 = vmatpush1.xpose.msra.mxu0 0.0
        %1604 = vmatprep.mubr.f32.mxu0 0.0
        %1605 = vmatmul.mubr.f32.gmra.mrb[0].mxu0 %v1532
        %v1606 = vpop.f32.mrb[0].mxu0
        %v1607 = vadd.f32 0.0, %v1606
        %v1608 = vpop.f32.mrb[0].mxu0
        %1609 = vmatprep.mubr.f32.mxu0 0.0
        %1610 = vmatmul.mubr.f32.gmra.mrb[0].mxu0 %v1534
        %v1611 = vpop.f32.mrb[0].mxu0
        %v1612 = vadd.f32 0.0, %v1611
        %v1613 = vpop.f32.mrb[0].mxu0
        %1614 = vdwg.mxu0
        %v1615 = vsel %vm1331, %v1607, -inf
        %1616 = vmax.xlane.f32.xlu0 %v1615
        %v1617 = vpop.xlane.xlu0 %1616
        %v1618 = vsel %vm1331, %v1612, -inf
        %1619 = vmax.xlane.f32.xlu0 %v1618
        %v1620 = vpop.xlane.xlu0 %1619
        %v1621 = vsub.f32 %v1607, %v1617
        %v1622 = vsub.f32 %v1612, %v1620
        %v1623 = vmul.f32 %v1621, 1.442695
        %v1624 = vpow.pop %v1623
        %v1625 = vmul.f32 %v1622, 1.442695
        %v1626 = vpow.pop %v1625
        %v1627 = vsel %vm1331, %v1624, 0.0
        %1628 = vadd.xlane.f32.xlu0 %v1627
        %v1629 = vpop.xlane.xlu0 %1628
        %v1630 = vsel %vm1331, %v1626, 0.0
        %1631 = vadd.xlane.f32.xlu0 %v1630
        %v1632 = vpop.xlane.xlu0 %1631
        %v1633 = vrcp.pop %v1629
        %v1634 = vrcp.pop %v1632
        %v1635 = vmul.f32 %v1624, %v1633
        %v1636 = vmul.f32 %v1626, %v1634
        %1637 = vrot.lane.b32.xlu0 %v1220, 56
        %v1638 = vpop.permute.xlu0 %1637
        %1639 = vrot.lane.b32.xlu0 %v1225, 56
        %v1640 = vpop.permute.xlu0 %1639
        %v1644 = vsel %vm1331, %v1635, 0
        %v1647 = vsel %vm1331, %v1636, 0
        %1649 = vmatprep.subr.mxu0 0.0
        %1650 = vmatpush1.msra.mxu0 %v1638
        %1651 = vmatprep.subr.mxu0 0.0
        %1652 = vmatpush1.msra.mxu0 %v1640
        %1653 = vmatprep.subr.mxu0 0.0
        %1654 = vmatpush1.msra.mxu0 0.0
        %1655 = vmatprep.subr.mxu0 0.0
        %1656 = vmatpush1.msra.mxu0 0.0
        %1657 = vmatprep.subr.mxu0 0.0
        %1658 = vmatpush1.msra.mxu0 0.0
        %1659 = vmatprep.subr.mxu0 0.0
        %1660 = vmatpush1.msra.mxu0 0.0
        %1661 = vmatprep.subr.mxu0 0.0
        %1662 = vmatpush1.msra.mxu0 0.0
        %1663 = vmatprep.subr.mxu0 0.0
        %1664 = vmatpush1.msra.mxu0 0.0
        %1665 = vmatprep.subr.mxu0 0.0
        %1666 = vmatpush1.msra.mxu0 0.0
        %1667 = vmatprep.subr.mxu0 0.0
        %1668 = vmatpush1.msra.mxu0 0.0
        %1669 = vmatprep.subr.mxu0 0.0
        %1670 = vmatpush1.msra.mxu0 0.0
        %1671 = vmatprep.subr.mxu0 0.0
        %1672 = vmatpush1.msra.mxu0 0.0
        %1673 = vmatprep.subr.mxu0 0.0
        %1674 = vmatpush1.msra.mxu0 0.0
        %1675 = vmatprep.subr.mxu0 0.0
        %1676 = vmatpush1.msra.mxu0 0.0
        %1677 = vmatprep.subr.mxu0 0.0
        %1678 = vmatpush1.msra.mxu0 0.0
        %1679 = vmatprep.subr.mxu0 0.0
        %1680 = vmatpush1.msra.mxu0 0.0
        %1681 = vmatprep.subr.mxu0 0.0
        %1682 = vmatpush1.msra.mxu0 0.0
        %1683 = vmatprep.subr.mxu0 0.0
        %1684 = vmatpush1.msra.mxu0 0.0
        %1685 = vmatprep.subr.mxu0 0.0
        %1686 = vmatpush1.msra.mxu0 0.0
        %1687 = vmatprep.subr.mxu0 0.0
        %1688 = vmatpush1.msra.mxu0 0.0
        %1689 = vmatprep.subr.mxu0 0.0
        %1690 = vmatpush1.msra.mxu0 0.0
        %1691 = vmatprep.subr.mxu0 0.0
        %1692 = vmatpush1.msra.mxu0 0.0
        %1693 = vmatprep.subr.mxu0 0.0
        %1694 = vmatpush1.msra.mxu0 0.0
        %1695 = vmatprep.subr.mxu0 0.0
        %1696 = vmatpush1.msra.mxu0 0.0
        %1697 = vmatprep.subr.mxu0 0.0
        %1698 = vmatpush1.msra.mxu0 0.0
        %1699 = vmatprep.subr.mxu0 0.0
        %1700 = vmatpush1.msra.mxu0 0.0
        %1701 = vmatprep.subr.mxu0 0.0
        %1702 = vmatpush1.msra.mxu0 0.0
        %1703 = vmatprep.subr.mxu0 0.0
        %1704 = vmatpush1.msra.mxu0 0.0
        %1705 = vmatprep.subr.mxu0 0.0
        %1706 = vmatpush1.msra.mxu0 0.0
        %1707 = vmatprep.subr.mxu0 0.0
        %1708 = vmatpush1.msra.mxu0 0.0
        %1709 = vmatprep.subr.mxu0 0.0
        %1710 = vmatpush1.msra.mxu0 0.0
        %1711 = vmatprep.subr.mxu0 0.0
        %1712 = vmatpush1.msra.mxu0 0.0
        %1713 = vmatprep.mubr.f32.mxu0 0.0
        %1714 = vmatmul.mubr.f32.gmra.mrb[0].mxu0 %v1644
        %v1715 = vpop.f32.mrb[0].mxu0
        %v1716 = vadd.f32 0.0, %v1715
        %v1717 = vpop.f32.mrb[0].mxu0
        %1718 = vmatprep.mubr.f32.mxu0 0.0
        %1719 = vmatmul.mubr.f32.gmra.mrb[0].mxu0 %v1647
        %v1720 = vpop.f32.mrb[0].mxu0
        %v1721 = vadd.f32 0.0, %v1720
        %v1722 = vpop.f32.mrb[0].mxu0
        %1723 = vdwg.mxu0
        %v1725 = vsel %vm1247, %v1716, 0
        %v1728 = vsel %vm1247, %v1721, 0
        %1730 = vmatprep.subr.mxu0 0.0
        %1731 = vmatpush1.msra.mxu0 %v1229
        %1732 = vmatprep.subr.mxu0 0.0
        %1733 = vmatpush1.msra.mxu0 0.0
        %1734 = vmatprep.subr.mxu0 0.0
        %1735 = vmatpush1.msra.mxu0 0.0
        %1736 = vmatprep.subr.mxu0 0.0
        %1737 = vmatpush1.msra.mxu0 0.0
        %1738 = vmatprep.subr.mxu0 0.0
        %1739 = vmatpush1.msra.mxu0 0.0
        %1740 = vmatprep.subr.mxu0 0.0
        %1741 = vmatpush1.msra.mxu0 0.0
        %1742 = vmatprep.subr.mxu0 0.0
        %1743 = vmatpush1.msra.mxu0 0.0
        %1744 = vmatprep.subr.mxu0 0.0
        %1745 = vmatpush1.msra.mxu0 0.0
        %1746 = vmatprep.subr.mxu0 0.0
        %1747 = vmatpush1.msra.mxu0 0.0
        %1748 = vmatprep.subr.mxu0 0.0
        %1749 = vmatpush1.msra.mxu0 0.0
        %1750 = vmatprep.subr.mxu0 0.0
        %1751 = vmatpush1.msra.mxu0 0.0
        %1752 = vmatprep.subr.mxu0 0.0
        %1753 = vmatpush1.msra.mxu0 0.0
        %1754 = vmatprep.subr.mxu0 0.0
        %1755 = vmatpush1.msra.mxu0 0.0
        %1756 = vmatprep.subr.mxu0 0.0
        %1757 = vmatpush1.msra.mxu0 0.0
        %1758 = vmatprep.subr.mxu0 0.0
        %1759 = vmatpush1.msra.mxu0 0.0
        %1760 = vmatprep.subr.mxu0 0.0
        %1761 = vmatpush1.msra.mxu0 0.0
        %1762 = vmatprep.subr.mxu0 0.0
        %1763 = vmatpush1.msra.mxu0 0.0
        %1764 = vmatprep.subr.mxu0 0.0
        %1765 = vmatpush1.msra.mxu0 0.0
        %1766 = vmatprep.subr.mxu0 0.0
        %1767 = vmatpush1.msra.mxu0 0.0
        %1768 = vmatprep.subr.mxu0 0.0
        %1769 = vmatpush1.msra.mxu0 0.0
        %1770 = vmatprep.subr.mxu0 0.0
        %1771 = vmatpush1.msra.mxu0 0.0
        %1772 = vmatprep.subr.mxu0 0.0
        %1773 = vmatpush1.msra.mxu0 0.0
        %1774 = vmatprep.subr.mxu0 0.0
        %1775 = vmatpush1.msra.mxu0 0.0
        %1776 = vmatprep.subr.mxu0 0.0
        %1777 = vmatpush1.msra.mxu0 0.0
        %1778 = vmatprep.subr.mxu0 0.0
        %1779 = vmatpush1.msra.mxu0 0.0
        %1780 = vmatprep.subr.mxu0 0.0
        %1781 = vmatpush1.msra.mxu0 0.0
        %1782 = vmatprep.subr.mxu0 0.0
        %1783 = vmatpush1.msra.mxu0 0.0
        %1784 = vmatprep.subr.mxu0 0.0
        %1785 = vmatpush1.msra.mxu0 0.0
        %1786 = vmatprep.subr.mxu0 0.0
        %1787 = vmatpush1.msra.mxu0 0.0
        %1788 = vmatprep.subr.mxu0 0.0
        %1789 = vmatpush1.msra.mxu0 0.0
        %1790 = vmatprep.subr.mxu0 0.0
        %1791 = vmatpush1.msra.mxu0 0.0
        %1792 = vmatprep.subr.mxu0 0.0
        %1793 = vmatpush1.msra.mxu0 0.0
        %1794 = vmatprep.mubr.f32.mxu0 0.0
        %1795 = vmatmul.mubr.f32.gmra.mrb[0].mxu0 %v1725
        %v1796 = vpop.f32.mrb[0].mxu0
        %v1797 = vadd.f32 0.0, %v1796
        %v1798 = vpop.f32.mrb[0].mxu0
        %1799 = vmatprep.mubr.f32.mxu0 0.0
        %1800 = vmatmul.mubr.f32.gmra.mrb[0].mxu0 %v1728
        %v1801 = vpop.f32.mrb[0].mxu0
        %v1802 = vadd.f32 0.0, %v1801
        %v1803 = vpop.f32.mrb[0].mxu0
        %1804 = vdwg.mxu0
        %v1805 = vadd.f32 %v1522, %v1797
        %v1806 = vadd.f32 %v1523, %v1802
        %1807 = vrot.lane.b32.xlu0 %v1220, 112
        %v1808 = vpop.permute.xlu0 %1807
        %1809 = vrot.lane.b32.xlu0 %v1225, 112
        %v1810 = vpop.permute.xlu0 %1809
        %1811 = vrot.lane.b32.xlu0 %v1220, 80
        %v1812 = vpop.permute.xlu0 %1811
        %1813 = vrot.lane.b32.xlu0 %v1225, 80
        %v1814 = vpop.permute.xlu0 %1813
        %v1815 = vsel %vm1247, %v1808, 0
        %v1817 = vsel %vm1247, %v1810, 0
        %v1819 = vsel %vm1247, %v1812, 0
        %v1821 = vsel %vm1247, %v1814, 0
        %1823 = vmatprep.subr.mxu0 0.0
        %1824 = vmatpush1.xpose.msra.mxu0 %v1819
        %1825 = vmatprep.subr.mxu0 0.0
        %1826 = vmatpush1.xpose.msra.mxu0 %v1821
        %1827 = vmatprep.subr.mxu0 0.0
        %1828 = vmatpush1.xpose.msra.mxu0 0.0
        %1829 = vmatprep.subr.mxu0 0.0
        %1830 = vmatpush1.xpose.msra.mxu0 0.0
        %1831 = vmatprep.subr.mxu0 0.0
        %1832 = vmatpush1.xpose.msra.mxu0 0.0
        %1833 = vmatprep.subr.mxu0 0.0
        %1834 = vmatpush1.xpose.msra.mxu0 0.0
        %1835 = vmatprep.subr.mxu0 0.0
        %1836 = vmatpush1.xpose.msra.mxu0 0.0
        %1837 = vmatprep.subr.mxu0 0.0
        %1838 = vmatpush1.xpose.msra.mxu0 0.0
        %1839 = vmatprep.subr.mxu0 0.0
        %1840 = vmatpush1.xpose.msra.mxu0 0.0
        %1841 = vmatprep.subr.mxu0 0.0
        %1842 = vmatpush1.xpose.msra.mxu0 0.0
        %1843 = vmatprep.subr.mxu0 0.0
        %1844 = vmatpush1.xpose.msra.mxu0 0.0
        %1845 = vmatprep.subr.mxu0 0.0
        %1846 = vmatpush1.xpose.msra.mxu0 0.0
        %1847 = vmatprep.subr.mxu0 0.0
        %1848 = vmatpush1.xpose.msra.mxu0 0.0
        %1849 = vmatprep.subr.mxu0 0.0
        %1850 = vmatpush1.xpose.msra.mxu0 0.0
        %1851 = vmatprep.subr.mxu0 0.0
        %1852 = vmatpush1.xpose.msra.mxu0 0.0
        %1853 = vmatprep.subr.mxu0 0.0
        %1854 = vmatpush1.xpose.msra.mxu0 0.0
        %1855 = vmatprep.subr.mxu0 0.0
        %1856 = vmatpush1.xpose.msra.mxu0 0.0
        %1857 = vmatprep.subr.mxu0 0.0
        %1858 = vmatpush1.xpose.msra.mxu0 0.0
        %1859 = vmatprep.subr.mxu0 0.0
        %1860 = vmatpush1.xpose.msra.mxu0 0.0
        %1861 = vmatprep.subr.mxu0 0.0
        %1862 = vmatpush1.xpose.msra.mxu0 0.0
        %1863 = vmatprep.subr.mxu0 0.0
        %1864 = vmatpush1.xpose.msra.mxu0 0.0
        %1865 = vmatprep.subr.mxu0 0.0
        %1866 = vmatpush1.xpose.msra.mxu0 0.0
        %1867 = vmatprep.subr.mxu0 0.0
        %1868 = vmatpush1.xpose.msra.mxu0 0.0
        %1869 = vmatprep.subr.mxu0 0.0
        %1870 = vmatpush1.xpose.msra.mxu0 0.0
        %1871 = vmatprep.subr.mxu0 0.0
        %1872 = vmatpush1.xpose.msra.mxu0 0.0
        %1873 = vmatprep.subr.mxu0 0.0
        %1874 = vmatpush1.xpose.msra.mxu0 0.0
        %1875 = vmatprep.subr.mxu0 0.0
        %1876 = vmatpush1.xpose.msra.mxu0 0.0
        %1877 = vmatprep.subr.mxu0 0.0
        %1878 = vmatpush1.xpose.msra.mxu0 0.0
        %1879 = vmatprep.subr.mxu0 0.0
        %1880 = vmatpush1.xpose.msra.mxu0 0.0
        %1881 = vmatprep.subr.mxu0 0.0
        %1882 = vmatpush1.xpose.msra.mxu0 0.0
        %1883 = vmatprep.subr.mxu0 0.0
        %1884 = vmatpush1.xpose.msra.mxu0 0.0
        %1885 = vmatprep.subr.mxu0 0.0
        %1886 = vmatpush1.xpose.msra.mxu0 0.0
        %1887 = vmatprep.mubr.f32.mxu0 0.0
        %1888 = vmatmul.mubr.f32.gmra.mrb[0].mxu0 %v1815
        %v1889 = vpop.f32.mrb[0].mxu0
        %v1890 = vadd.f32 0.0, %v1889
        %v1891 = vpop.f32.mrb[0].mxu0
        %1892 = vmatprep.mubr.f32.mxu0 0.0
        %1893 = vmatmul.mubr.f32.gmra.mrb[0].mxu0 %v1817
        %v1894 = vpop.f32.mrb[0].mxu0
        %v1895 = vadd.f32 0.0, %v1894
        %v1896 = vpop.f32.mrb[0].mxu0
        %1897 = vdwg.mxu0
        %v1898 = vsel %vm1331, %v1890, -inf
        %1899 = vmax.xlane.f32.xlu0 %v1898
        %v1900 = vpop.xlane.xlu0 %1899
        %v1901 = vsel %vm1331, %v1895, -inf
        %1902 = vmax.xlane.f32.xlu0 %v1901
        %v1903 = vpop.xlane.xlu0 %1902
        %v1904 = vsub.f32 %v1890, %v1900
        %v1905 = vsub.f32 %v1895, %v1903
        %v1906 = vmul.f32 %v1904, 1.442695
        %v1907 = vpow.pop %v1906
        %v1908 = vmul.f32 %v1905, 1.442695
        %v1909 = vpow.pop %v1908
        %v1910 = vsel %vm1331, %v1907, 0.0
        %1911 = vadd.xlane.f32.xlu0 %v1910
        %v1912 = vpop.xlane.xlu0 %1911
        %v1913 = vsel %vm1331, %v1909, 0.0
        %1914 = vadd.xlane.f32.xlu0 %v1913
        %v1915 = vpop.xlane.xlu0 %1914
        %v1916 = vrcp.pop %v1912
        %v1917 = vrcp.pop %v1915
        %v1918 = vmul.f32 %v1907, %v1916
        %v1919 = vmul.f32 %v1909, %v1917
        %1920 = vrot.lane.b32.xlu0 %v1220, 48
        %v1921 = vpop.permute.xlu0 %1920
        %1922 = vrot.lane.b32.xlu0 %v1225, 48
        %v1923 = vpop.permute.xlu0 %1922
        %v1927 = vsel %vm1331, %v1918, 0
        %v1930 = vsel %vm1331, %v1919, 0
        %1932 = vmatprep.subr.mxu0 0.0
        %1933 = vmatpush1.msra.mxu0 %v1921
        %1934 = vmatprep.subr.mxu0 0.0
        %1935 = vmatpush1.msra.mxu0 %v1923
        %1936 = vmatprep.subr.mxu0 0.0
        %1937 = vmatpush1.msra.mxu0 0.0
        %1938 = vmatprep.subr.mxu0 0.0
        %1939 = vmatpush1.msra.mxu0 0.0
        %1940 = vmatprep.subr.mxu0 0.0
        %1941 = vmatpush1.msra.mxu0 0.0
        %1942 = vmatprep.subr.mxu0 0.0
        %1943 = vmatpush1.msra.mxu0 0.0
        %1944 = vmatprep.subr.mxu0 0.0
        %1945 = vmatpush1.msra.mxu0 0.0
        %1946 = vmatprep.subr.mxu0 0.0
        %1947 = vmatpush1.msra.mxu0 0.0
        %1948 = vmatprep.subr.mxu0 0.0
        %1949 = vmatpush1.msra.mxu0 0.0
        %1950 = vmatprep.subr.mxu0 0.0
        %1951 = vmatpush1.msra.mxu0 0.0
        %1952 = vmatprep.subr.mxu0 0.0
        %1953 = vmatpush1.msra.mxu0 0.0
        %1954 = vmatprep.subr.mxu0 0.0
        %1955 = vmatpush1.msra.mxu0 0.0
        %1956 = vmatprep.subr.mxu0 0.0
        %1957 = vmatpush1.msra.mxu0 0.0
        %1958 = vmatprep.subr.mxu0 0.0
        %1959 = vmatpush1.msra.mxu0 0.0
        %1960 = vmatprep.subr.mxu0 0.0
        %1961 = vmatpush1.msra.mxu0 0.0
        %1962 = vmatprep.subr.mxu0 0.0
        %1963 = vmatpush1.msra.mxu0 0.0
        %1964 = vmatprep.subr.mxu0 0.0
        %1965 = vmatpush1.msra.mxu0 0.0
        %1966 = vmatprep.subr.mxu0 0.0
        %1967 = vmatpush1.msra.mxu0 0.0
        %1968 = vmatprep.subr.mxu0 0.0
        %1969 = vmatpush1.msra.mxu0 0.0
        %1970 = vmatprep.subr.mxu0 0.0
        %1971 = vmatpush1.msra.mxu0 0.0
        %1972 = vmatprep.subr.mxu0 0.0
        %1973 = vmatpush1.msra.mxu0 0.0
        %1974 = vmatprep.subr.mxu0 0.0
        %1975 = vmatpush1.msra.mxu0 0.0
        %1976 = vmatprep.subr.mxu0 0.0
        %1977 = vmatpush1.msra.mxu0 0.0
        %1978 = vmatprep.subr.mxu0 0.0
        %1979 = vmatpush1.msra.mxu0 0.0
        %1980 = vmatprep.subr.mxu0 0.0
        %1981 = vmatpush1.msra.mxu0 0.0
        %1982 = vmatprep.subr.mxu0 0.0
        %1983 = vmatpush1.msra.mxu0 0.0
        %1984 = vmatprep.subr.mxu0 0.0
        %1985 = vmatpush1.msra.mxu0 0.0
        %1986 = vmatprep.subr.mxu0 0.0
        %1987 = vmatpush1.msra.mxu0 0.0
        %1988 = vmatprep.subr.mxu0 0.0
        %1989 = vmatpush1.msra.mxu0 0.0
        %1990 = vmatprep.subr.mxu0 0.0
        %1991 = vmatpush1.msra.mxu0 0.0
        %1992 = vmatprep.subr.mxu0 0.0
        %1993 = vmatpush1.msra.mxu0 0.0
        %1994 = vmatprep.subr.mxu0 0.0
        %1995 = vmatpush1.msra.mxu0 0.0
        %1996 = vmatprep.mubr.f32.mxu0 0.0
        %1997 = vmatmul.mubr.f32.gmra.mrb[0].mxu0 %v1927
        %v1998 = vpop.f32.mrb[0].mxu0
        %v1999 = vadd.f32 0.0, %v1998
        %v2000 = vpop.f32.mrb[0].mxu0
        %2001 = vmatprep.mubr.f32.mxu0 0.0
        %2002 = vmatmul.mubr.f32.gmra.mrb[0].mxu0 %v1930
        %v2003 = vpop.f32.mrb[0].mxu0
        %v2004 = vadd.f32 0.0, %v2003
        %v2005 = vpop.f32.mrb[0].mxu0
        %2006 = vdwg.mxu0
        %v2008 = vsel %vm1247, %v1999, 0
        %v2011 = vsel %vm1247, %v2004, 0
        %2013 = vmatprep.subr.mxu0 0.0
        %2014 = vmatpush1.msra.mxu0 %v1230
        %2015 = vmatprep.subr.mxu0 0.0
        %2016 = vmatpush1.msra.mxu0 0.0
        %2017 = vmatprep.subr.mxu0 0.0
        %2018 = vmatpush1.msra.mxu0 0.0
        %2019 = vmatprep.subr.mxu0 0.0
        %2020 = vmatpush1.msra.mxu0 0.0
        %2021 = vmatprep.subr.mxu0 0.0
        %2022 = vmatpush1.msra.mxu0 0.0
        %2023 = vmatprep.subr.mxu0 0.0
        %2024 = vmatpush1.msra.mxu0 0.0
        %2025 = vmatprep.subr.mxu0 0.0
        %2026 = vmatpush1.msra.mxu0 0.0
        %2027 = vmatprep.subr.mxu0 0.0
        %2028 = vmatpush1.msra.mxu0 0.0
        %2029 = vmatprep.subr.mxu0 0.0
        %2030 = vmatpush1.msra.mxu0 0.0
        %2031 = vmatprep.subr.mxu0 0.0
        %2032 = vmatpush1.msra.mxu0 0.0
        %2033 = vmatprep.subr.mxu0 0.0
        %2034 = vmatpush1.msra.mxu0 0.0
        %2035 = vmatprep.subr.mxu0 0.0
        %2036 = vmatpush1.msra.mxu0 0.0
        %2037 = vmatprep.subr.mxu0 0.0
        %2038 = vmatpush1.msra.mxu0 0.0
        %2039 = vmatprep.subr.mxu0 0.0
        %2040 = vmatpush1.msra.mxu0 0.0
        %2041 = vmatprep.subr.mxu0 0.0
        %2042 = vmatpush1.msra.mxu0 0.0
        %2043 = vmatprep.subr.mxu0 0.0
        %2044 = vmatpush1.msra.mxu0 0.0
        %2045 = vmatprep.subr.mxu0 0.0
        %2046 = vmatpush1.msra.mxu0 0.0
        %2047 = vmatprep.subr.mxu0 0.0
        %2048 = vmatpush1.msra.mxu0 0.0
        %2049 = vmatprep.subr.mxu0 0.0
        %2050 = vmatpush1.msra.mxu0 0.0
        %2051 = vmatprep.subr.mxu0 0.0
        %2052 = vmatpush1.msra.mxu0 0.0
        %2053 = vmatprep.subr.mxu0 0.0
        %2054 = vmatpush1.msra.mxu0 0.0
        %2055 = vmatprep.subr.mxu0 0.0
        %2056 = vmatpush1.msra.mxu0 0.0
        %2057 = vmatprep.subr.mxu0 0.0
        %2058 = vmatpush1.msra.mxu0 0.0
        %2059 = vmatprep.subr.mxu0 0.0
        %2060 = vmatpush1.msra.mxu0 0.0
        %2061 = vmatprep.subr.mxu0 0.0
        %2062 = vmatpush1.msra.mxu0 0.0
        %2063 = vmatprep.subr.mxu0 0.0
        %2064 = vmatpush1.msra.mxu0 0.0
        %2065 = vmatprep.subr.mxu0 0.0
        %2066 = vmatpush1.msra.mxu0 0.0
        %2067 = vmatprep.subr.mxu0 0.0
        %2068 = vmatpush1.msra.mxu0 0.0
        %2069 = vmatprep.subr.mxu0 0.0
        %2070 = vmatpush1.msra.mxu0 0.0
        %2071 = vmatprep.subr.mxu0 0.0
        %2072 = vmatpush1.msra.mxu0 0.0
        %2073 = vmatprep.subr.mxu0 0.0
        %2074 = vmatpush1.msra.mxu0 0.0
        %2075 = vmatprep.subr.mxu0 0.0
        %2076 = vmatpush1.msra.mxu0 0.0
        %2077 = vmatprep.mubr.f32.mxu0 0.0
        %2078 = vmatmul.mubr.f32.gmra.mrb[0].mxu0 %v2008
        %v2079 = vpop.f32.mrb[0].mxu0
        %v2080 = vadd.f32 0.0, %v2079
        %v2081 = vpop.f32.mrb[0].mxu0
        %2082 = vmatprep.mubr.f32.mxu0 0.0
        %2083 = vmatmul.mubr.f32.gmra.mrb[0].mxu0 %v2011
        %v2084 = vpop.f32.mrb[0].mxu0
        %v2085 = vadd.f32 0.0, %v2084
        %v2086 = vpop.f32.mrb[0].mxu0
        %2087 = vdwg.mxu0
        %v2088 = vadd.f32 %v1805, %v2080
        %v2089 = vadd.f32 %v1806, %v2085
        %2090 = vrot.lane.b32.xlu0 %v1220, 104
        %v2091 = vpop.permute.xlu0 %2090
        %2092 = vrot.lane.b32.xlu0 %v1225, 104
        %v2093 = vpop.permute.xlu0 %2092
        %2094 = vrot.lane.b32.xlu0 %v1220, 72
        %v2095 = vpop.permute.xlu0 %2094
        %2096 = vrot.lane.b32.xlu0 %v1225, 72
        %v2097 = vpop.permute.xlu0 %2096
        %v2098 = vsel %vm1247, %v2091, 0
        %v2100 = vsel %vm1247, %v2093, 0
        %v2102 = vsel %vm1247, %v2095, 0
        %v2104 = vsel %vm1247, %v2097, 0
        %2106 = vmatprep.subr.mxu0 0.0
        %2107 = vmatpush1.xpose.msra.mxu0 %v2102
        %2108 = vmatprep.subr.mxu0 0.0
        %2109 = vmatpush1.xpose.msra.mxu0 %v2104
        %2110 = vmatprep.subr.mxu0 0.0
        %2111 = vmatpush1.xpose.msra.mxu0 0.0
        %2112 = vmatprep.subr.mxu0 0.0
        %2113 = vmatpush1.xpose.msra.mxu0 0.0
        %2114 = vmatprep.subr.mxu0 0.0
        %2115 = vmatpush1.xpose.msra.mxu0 0.0
        %2116 = vmatprep.subr.mxu0 0.0
        %2117 = vmatpush1.xpose.msra.mxu0 0.0
        %2118 = vmatprep.subr.mxu0 0.0
        %2119 = vmatpush1.xpose.msra.mxu0 0.0
        %2120 = vmatprep.subr.mxu0 0.0
        %2121 = vmatpush1.xpose.msra.mxu0 0.0
        %2122 = vmatprep.subr.mxu0 0.0
        %2123 = vmatpush1.xpose.msra.mxu0 0.0
        %2124 = vmatprep.subr.mxu0 0.0
        %2125 = vmatpush1.xpose.msra.mxu0 0.0
        %2126 = vmatprep.subr.mxu0 0.0
        %2127 = vmatpush1.xpose.msra.mxu0 0.0
        %2128 = vmatprep.subr.mxu0 0.0
        %2129 = vmatpush1.xpose.msra.mxu0 0.0
        %2130 = vmatprep.subr.mxu0 0.0
        %2131 = vmatpush1.xpose.msra.mxu0 0.0
        %2132 = vmatprep.subr.mxu0 0.0
        %2133 = vmatpush1.xpose.msra.mxu0 0.0
        %2134 = vmatprep.subr.mxu0 0.0
        %2135 = vmatpush1.xpose.msra.mxu0 0.0
        %2136 = vmatprep.subr.mxu0 0.0
        %2137 = vmatpush1.xpose.msra.mxu0 0.0
        %2138 = vmatprep.subr.mxu0 0.0
        %2139 = vmatpush1.xpose.msra.mxu0 0.0
        %2140 = vmatprep.subr.mxu0 0.0
        %2141 = vmatpush1.xpose.msra.mxu0 0.0
        %2142 = vmatprep.subr.mxu0 0.0
        %2143 = vmatpush1.xpose.msra.mxu0 0.0
        %2144 = vmatprep.subr.mxu0 0.0
        %2145 = vmatpush1.xpose.msra.mxu0 0.0
        %2146 = vmatprep.subr.mxu0 0.0
        %2147 = vmatpush1.xpose.msra.mxu0 0.0
        %2148 = vmatprep.subr.mxu0 0.0
        %2149 = vmatpush1.xpose.msra.mxu0 0.0
        %2150 = vmatprep.subr.mxu0 0.0
        %2151 = vmatpush1.xpose.msra.mxu0 0.0
        %2152 = vmatprep.subr.mxu0 0.0
        %2153 = vmatpush1.xpose.msra.mxu0 0.0
        %2154 = vmatprep.subr.mxu0 0.0
        %2155 = vmatpush1.xpose.msra.mxu0 0.0
        %2156 = vmatprep.subr.mxu0 0.0
        %2157 = vmatpush1.xpose.msra.mxu0 0.0
        %2158 = vmatprep.subr.mxu0 0.0
        %2159 = vmatpush1.xpose.msra.mxu0 0.0
        %2160 = vmatprep.subr.mxu0 0.0
        %2161 = vmatpush1.xpose.msra.mxu0 0.0
        %2162 = vmatprep.subr.mxu0 0.0
        %2163 = vmatpush1.xpose.msra.mxu0 0.0
        %2164 = vmatprep.subr.mxu0 0.0
        %2165 = vmatpush1.xpose.msra.mxu0 0.0
        %2166 = vmatprep.subr.mxu0 0.0
        %2167 = vmatpush1.xpose.msra.mxu0 0.0
        %2168 = vmatprep.subr.mxu0 0.0
        %2169 = vmatpush1.xpose.msra.mxu0 0.0
        %2170 = vmatprep.mubr.f32.mxu0 0.0
        %2171 = vmatmul.mubr.f32.gmra.mrb[0].mxu0 %v2098
        %v2172 = vpop.f32.mrb[0].mxu0
        %v2173 = vadd.f32 0.0, %v2172
        %v2174 = vpop.f32.mrb[0].mxu0
        %2175 = vmatprep.mubr.f32.mxu0 0.0
        %2176 = vmatmul.mubr.f32.gmra.mrb[0].mxu0 %v2100
        %v2177 = vpop.f32.mrb[0].mxu0
        %v2178 = vadd.f32 0.0, %v2177
        %v2179 = vpop.f32.mrb[0].mxu0
        %2180 = vdwg.mxu0
        %v2181 = vsel %vm1331, %v2173, -inf
        %2182 = vmax.xlane.f32.xlu0 %v2181
        %v2183 = vpop.xlane.xlu0 %2182
        %v2184 = vsel %vm1331, %v2178, -inf
        %2185 = vmax.xlane.f32.xlu0 %v2184
        %v2186 = vpop.xlane.xlu0 %2185
        %v2187 = vsub.f32 %v2173, %v2183
        %v2188 = vsub.f32 %v2178, %v2186
        %v2189 = vmul.f32 %v2187, 1.442695
        %v2190 = vpow.pop %v2189
        %v2191 = vmul.f32 %v2188, 1.442695
        %v2192 = vpow.pop %v2191
        %v2193 = vsel %vm1331, %v2190, 0.0
        %2194 = vadd.xlane.f32.xlu0 %v2193
        %v2195 = vpop.xlane.xlu0 %2194
        %v2196 = vsel %vm1331, %v2192, 0.0
        %2197 = vadd.xlane.f32.xlu0 %v2196
        %v2198 = vpop.xlane.xlu0 %2197
        %v2199 = vrcp.pop %v2195
        %v2200 = vrcp.pop %v2198
        %v2201 = vmul.f32 %v2190, %v2199
        %v2202 = vmul.f32 %v2192, %v2200
        %2203 = vrot.lane.b32.xlu0 %v1220, 40
        %v2204 = vpop.permute.xlu0 %2203
        %2205 = vrot.lane.b32.xlu0 %v1225, 40
        %v2206 = vpop.permute.xlu0 %2205
        %v2210 = vsel %vm1331, %v2201, 0
        %v2213 = vsel %vm1331, %v2202, 0
        %2215 = vmatprep.subr.mxu0 0.0
        %2216 = vmatpush1.msra.mxu0 %v2204
        %2217 = vmatprep.subr.mxu0 0.0
        %2218 = vmatpush1.msra.mxu0 %v2206
        %2219 = vmatprep.subr.mxu0 0.0
        %2220 = vmatpush1.msra.mxu0 0.0
        %2221 = vmatprep.subr.mxu0 0.0
        %2222 = vmatpush1.msra.mxu0 0.0
        %2223 = vmatprep.subr.mxu0 0.0
        %2224 = vmatpush1.msra.mxu0 0.0
        %2225 = vmatprep.subr.mxu0 0.0
        %2226 = vmatpush1.msra.mxu0 0.0
        %2227 = vmatprep.subr.mxu0 0.0
        %2228 = vmatpush1.msra.mxu0 0.0
        %2229 = vmatprep.subr.mxu0 0.0
        %2230 = vmatpush1.msra.mxu0 0.0
        %2231 = vmatprep.subr.mxu0 0.0
        %2232 = vmatpush1.msra.mxu0 0.0
        %2233 = vmatprep.subr.mxu0 0.0
        %2234 = vmatpush1.msra.mxu0 0.0
        %2235 = vmatprep.subr.mxu0 0.0
        %2236 = vmatpush1.msra.mxu0 0.0
        %2237 = vmatprep.subr.mxu0 0.0
        %2238 = vmatpush1.msra.mxu0 0.0
        %2239 = vmatprep.subr.mxu0 0.0
        %2240 = vmatpush1.msra.mxu0 0.0
        %2241 = vmatprep.subr.mxu0 0.0
        %2242 = vmatpush1.msra.mxu0 0.0
        %2243 = vmatprep.subr.mxu0 0.0
        %2244 = vmatpush1.msra.mxu0 0.0
        %2245 = vmatprep.subr.mxu0 0.0
        %2246 = vmatpush1.msra.mxu0 0.0
        %2247 = vmatprep.subr.mxu0 0.0
        %2248 = vmatpush1.msra.mxu0 0.0
        %2249 = vmatprep.subr.mxu0 0.0
        %2250 = vmatpush1.msra.mxu0 0.0
        %2251 = vmatprep.subr.mxu0 0.0
        %2252 = vmatpush1.msra.mxu0 0.0
        %2253 = vmatprep.subr.mxu0 0.0
        %2254 = vmatpush1.msra.mxu0 0.0
        %2255 = vmatprep.subr.mxu0 0.0
        %2256 = vmatpush1.msra.mxu0 0.0
        %2257 = vmatprep.subr.mxu0 0.0
        %2258 = vmatpush1.msra.mxu0 0.0
        %2259 = vmatprep.subr.mxu0 0.0
        %2260 = vmatpush1.msra.mxu0 0.0
        %2261 = vmatprep.subr.mxu0 0.0
        %2262 = vmatpush1.msra.mxu0 0.0
        %2263 = vmatprep.subr.mxu0 0.0
        %2264 = vmatpush1.msra.mxu0 0.0
        %2265 = vmatprep.subr.mxu0 0.0
        %2266 = vmatpush1.msra.mxu0 0.0
        %2267 = vmatprep.subr.mxu0 0.0
        %2268 = vmatpush1.msra.mxu0 0.0
        %2269 = vmatprep.subr.mxu0 0.0
        %2270 = vmatpush1.msra.mxu0 0.0
        %2271 = vmatprep.subr.mxu0 0.0
        %2272 = vmatpush1.msra.mxu0 0.0
        %2273 = vmatprep.subr.mxu0 0.0
        %2274 = vmatpush1.msra.mxu0 0.0
        %2275 = vmatprep.subr.mxu0 0.0
        %2276 = vmatpush1.msra.mxu0 0.0
        %2277 = vmatprep.subr.mxu0 0.0
        %2278 = vmatpush1.msra.mxu0 0.0
        %2279 = vmatprep.mubr.f32.mxu0 0.0
        %2280 = vmatmul.mubr.f32.gmra.mrb[0].mxu0 %v2210
        %v2281 = vpop.f32.mrb[0].mxu0
        %v2282 = vadd.f32 0.0, %v2281
        %v2283 = vpop.f32.mrb[0].mxu0
        %2284 = vmatprep.mubr.f32.mxu0 0.0
        %2285 = vmatmul.mubr.f32.gmra.mrb[0].mxu0 %v2213
        %v2286 = vpop.f32.mrb[0].mxu0
        %v2287 = vadd.f32 0.0, %v2286
        %v2288 = vpop.f32.mrb[0].mxu0
        %2289 = vdwg.mxu0
        %v2291 = vsel %vm1247, %v2282, 0
        %v2294 = vsel %vm1247, %v2287, 0
        %2296 = vmatprep.subr.mxu0 0.0
        %2297 = vmatpush1.msra.mxu0 %v1231
        %2298 = vmatprep.subr.mxu0 0.0
        %2299 = vmatpush1.msra.mxu0 0.0
        %2300 = vmatprep.subr.mxu0 0.0
        %2301 = vmatpush1.msra.mxu0 0.0
        %2302 = vmatprep.subr.mxu0 0.0
        %2303 = vmatpush1.msra.mxu0 0.0
        %2304 = vmatprep.subr.mxu0 0.0
        %2305 = vmatpush1.msra.mxu0 0.0
        %2306 = vmatprep.subr.mxu0 0.0
        %2307 = vmatpush1.msra.mxu0 0.0
        %2308 = vmatprep.subr.mxu0 0.0
        %2309 = vmatpush1.msra.mxu0 0.0
        %2310 = vmatprep.subr.mxu0 0.0
        %2311 = vmatpush1.msra.mxu0 0.0
        %2312 = vmatprep.subr.mxu0 0.0
        %2313 = vmatpush1.msra.mxu0 0.0
        %2314 = vmatprep.subr.mxu0 0.0
        %2315 = vmatpush1.msra.mxu0 0.0
        %2316 = vmatprep.subr.mxu0 0.0
        %2317 = vmatpush1.msra.mxu0 0.0
        %2318 = vmatprep.subr.mxu0 0.0
        %2319 = vmatpush1.msra.mxu0 0.0
        %2320 = vmatprep.subr.mxu0 0.0
        %2321 = vmatpush1.msra.mxu0 0.0
        %2322 = vmatprep.subr.mxu0 0.0
        %2323 = vmatpush1.msra.mxu0 0.0
        %2324 = vmatprep.subr.mxu0 0.0
        %2325 = vmatpush1.msra.mxu0 0.0
        %2326 = vmatprep.subr.mxu0 0.0
        %2327 = vmatpush1.msra.mxu0 0.0
        %2328 = vmatprep.subr.mxu0 0.0
        %2329 = vmatpush1.msra.mxu0 0.0
        %2330 = vmatprep.subr.mxu0 0.0
        %2331 = vmatpush1.msra.mxu0 0.0
        %2332 = vmatprep.subr.mxu0 0.0
        %2333 = vmatpush1.msra.mxu0 0.0
        %2334 = vmatprep.subr.mxu0 0.0
        %2335 = vmatpush1.msra.mxu0 0.0
        %2336 = vmatprep.subr.mxu0 0.0
        %2337 = vmatpush1.msra.mxu0 0.0
        %2338 = vmatprep.subr.mxu0 0.0
        %2339 = vmatpush1.msra.mxu0 0.0
        %2340 = vmatprep.subr.mxu0 0.0
        %2341 = vmatpush1.msra.mxu0 0.0
        %2342 = vmatprep.subr.mxu0 0.0
        %2343 = vmatpush1.msra.mxu0 0.0
        %2344 = vmatprep.subr.mxu0 0.0
        %2345 = vmatpush1.msra.mxu0 0.0
        %2346 = vmatprep.subr.mxu0 0.0
        %2347 = vmatpush1.msra.mxu0 0.0
        %2348 = vmatprep.subr.mxu0 0.0
        %2349 = vmatpush1.msra.mxu0 0.0
        %2350 = vmatprep.subr.mxu0 0.0
        %2351 = vmatpush1.msra.mxu0 0.0
        %2352 = vmatprep.subr.mxu0 0.0
        %2353 = vmatpush1.msra.mxu0 0.0
        %2354 = vmatprep.subr.mxu0 0.0
        %2355 = vmatpush1.msra.mxu0 0.0
        %2356 = vmatprep.subr.mxu0 0.0
        %2357 = vmatpush1.msra.mxu0 0.0
        %2358 = vmatprep.subr.mxu0 0.0
        %2359 = vmatpush1.msra.mxu0 0.0
        %2360 = vmatprep.mubr.f32.mxu0 0.0
        %2361 = vmatmul.mubr.f32.gmra.mrb[0].mxu0 %v2291
        %v2362 = vpop.f32.mrb[0].mxu0
        %v2363 = vadd.f32 0.0, %v2362
        %v2364 = vpop.f32.mrb[0].mxu0
        %2365 = vmatprep.mubr.f32.mxu0 0.0
        %2366 = vmatmul.mubr.f32.gmra.mrb[0].mxu0 %v2294
        %v2367 = vpop.f32.mrb[0].mxu0
        %v2368 = vadd.f32 0.0, %v2367
        %v2369 = vpop.f32.mrb[0].mxu0
        %2370 = vdwg.mxu0
        %v2371 = vadd.f32 %v2088, %v2363
        %v2372 = vadd.f32 %v2089, %v2368
        %v2373 = vsel %vm1146, %v2371, 0.0
        %2374 = vadd.xlane.f32.xlu0 %v2373
        %v2375 = vpop.xlane.xlu0 %2374
        %v2376 = vsel %vm1146, %v2372, 0.0
        %2377 = vadd.xlane.f32.xlu0 %v2376
        %v2378 = vpop.xlane.xlu0 %2377
        %v2379 = vrcp.pop 32.0
        %v2380 = vmul.f32 %v2375, %v2379
        %v2381 = vmul.f32 %v2378, %v2379
        %v2382 = vsub.f32 %v2371, %v2380
        %v2383 = vsub.f32 %v2372, %v2381
        %v2384 = vmul.f32 %v2382, %v2382
        %v2385 = vmul.f32 %v2383, %v2383
        %v2386 = vsel %vm1146, %v2384, 0.0
        %2387 = vadd.xlane.f32.xlu0 %v2386
        %v2388 = vpop.xlane.xlu0 %2387
        %v2389 = vsel %vm1146, %v2385, 0.0
        %2390 = vadd.xlane.f32.xlu0 %v2389
        %v2391 = vpop.xlane.xlu0 %2390
        %v2392 = vmul.f32 %v2388, %v2379
        %v2393 = vmul.f32 %v2391, %v2379
        %v2394 = vadd.f32 %v2392, 1e-05
        %v2395 = vadd.f32 %v2393, 1e-05
        %v2396 = vrsqrt.pop %v2394
        %v2397 = vrsqrt.pop %v2395
        %v2398 = vmul.f32 %v2382, %v2396
        %v2399 = vmul.f32 %v2383, %v2397
        %v2400 = vlaneseq
        %v2401 = vshrl.u32 %v2400, 7
        %v2402 = vsub.s32 0, %v2401
        %v2403 = vrot.slane %v1133, %v2402
        %v2404 = vmul.f32 %v2398, %v2403
        %v2405 = vmul.f32 %v2399, %v2403
        %v2406 = vlaneseq
        %v2407 = vshrl.u32 %v2406, 7
        %v2408 = vsub.s32 0, %v2407
        %v2409 = vrot.slane %v1134, %v2408
        %v2410 = vadd.f32 %v2404, %v2409
        %v2411 = vadd.f32 %v2405, %v2409
        %v2412 = vld [vmem:[%s1065] sm:$0xff]
        %v2413 = vld [vmem:[%s1065 + $0x8] sm:$0xff]
        %v2414 = vld [vmem:[%s1065 + $0x10] sm:$0xff]
        %v2415 = vld [vmem:[%s1065 + $0x18] sm:$0xff]
        %v2416 = vld [vmem:[%s1068] sm:$0x1]
        %v2418 = vlaneseq
        %v2419 = vshrl.u32 %v2418, 7
        %v2420 = vsub.s32 0, %v2419
        %v2421 = vrot.slane %v2416, %v2420
        %v2424 = vsel %vm1146, %v2410, 0
        %v2427 = vsel %vm1146, %v2411, 0
        %2429 = vmatprep.subr.mxu0 0.0
        %2430 = vmatpush1.msra.mxu0 %v2412
        %2431 = vmatprep.subr.mxu0 0.0
        %2432 = vmatpush1.msra.mxu0 %v2413
        %2433 = vmatprep.subr.mxu0 0.0
        %2434 = vmatpush1.msra.mxu0 %v2414
        %2435 = vmatprep.subr.mxu0 0.0
        %2436 = vmatpush1.msra.mxu0 %v2415
        %2437 = vmatprep.subr.mxu0 0.0
        %2438 = vmatpush1.msra.mxu0 0.0
        %2439 = vmatprep.subr.mxu0 0.0
        %2440 = vmatpush1.msra.mxu0 0.0
        %2441 = vmatprep.subr.mxu0 0.0
        %2442 = vmatpush1.msra.mxu0 0.0
        %2443 = vmatprep.subr.mxu0 0.0
        %2444 = vmatpush1.msra.mxu0 0.0
        %2445 = vmatprep.subr.mxu0 0.0
        %2446 = vmatpush1.msra.mxu0 0.0
        %2447 = vmatprep.subr.mxu0 0.0
        %2448 = vmatpush1.msra.mxu0 0.0
        %2449 = vmatprep.subr.mxu0 0.0
        %2450 = vmatpush1.msra.mxu0 0.0
        %2451 = vmatprep.subr.mxu0 0.0
        %2452 = vmatpush1.msra.mxu0 0.0
        %2453 = vmatprep.subr.mxu0 0.0
        %2454 = vmatpush1.msra.mxu0 0.0
        %2455 = vmatprep.subr.mxu0 0.0
        %2456 = vmatpush1.msra.mxu0 0.0
        %2457 = vmatprep.subr.mxu0 0.0
        %2458 = vmatpush1.msra.mxu0 0.0
        %2459 = vmatprep.subr.mxu0 0.0
        %2460 = vmatpush1.msra.mxu0 0.0
        %2461 = vmatprep.subr.mxu0 0.0
        %2462 = vmatpush1.msra.mxu0 0.0
        %2463 = vmatprep.subr.mxu0 0.0
        %2464 = vmatpush1.msra.mxu0 0.0
        %2465 = vmatprep.subr.mxu0 0.0
        %2466 = vmatpush1.msra.mxu0 0.0
        %2467 = vmatprep.subr.mxu0 0.0
        %2468 = vmatpush1.msra.mxu0 0.0
        %2469 = vmatprep.subr.mxu0 0.0
        %2470 = vmatpush1.msra.mxu0 0.0
        %2471 = vmatprep.subr.mxu0 0.0
        %2472 = vmatpush1.msra.mxu0 0.0
        %2473 = vmatprep.subr.mxu0 0.0
        %2474 = vmatpush1.msra.mxu0 0.0
        %2475 = vmatprep.subr.mxu0 0.0
        %2476 = vmatpush1.msra.mxu0 0.0
        %2477 = vmatprep.subr.mxu0 0.0
        %2478 = vmatpush1.msra.mxu0 0.0
        %2479 = vmatprep.subr.mxu0 0.0
        %2480 = vmatpush1.msra.mxu0 0.0
        %2481 = vmatprep.subr.mxu0 0.0
        %2482 = vmatpush1.msra.mxu0 0.0
        %2483 = vmatprep.subr.mxu0 0.0
        %2484 = vmatpush1.msra.mxu0 0.0
        %2485 = vmatprep.subr.mxu0 0.0
        %2486 = vmatpush1.msra.mxu0 0.0
        %2487 = vmatprep.subr.mxu0 0.0
        %2488 = vmatpush1.msra.mxu0 0.0
        %2489 = vmatprep.subr.mxu0 0.0
        %2490 = vmatpush1.msra.mxu0 0.0
        %2491 = vmatprep.subr.mxu0 0.0
        %2492 = vmatpush1.msra.mxu0 0.0
        %2493 = vmatprep.mubr.f32.mxu0 0.0
        %2494 = vmatmul.mubr.f32.gmra.mrb[0].mxu0 %v2424
        %v2495 = vpop.f32.mrb[0].mxu0
        %v2496 = vadd.f32 %v2421, %v2495
        %v2497 = vpop.f32.mrb[0].mxu0
        %2498 = vmatprep.mubr.f32.mxu0 0.0
        %2499 = vmatmul.mubr.f32.gmra.mrb[0].mxu0 %v2427
        %v2500 = vpop.f32.mrb[0].mxu0
        %v2501 = vadd.f32 %v2421, %v2500
        %v2502 = vpop.f32.mrb[0].mxu0
        %2503 = vdwg.mxu0
        %v2504 = vld [vmem:[%s1073] sm:$0xff]
        %v2505 = vld [vmem:[%s1073 + $0x8] sm:$0xff]
        %v2506 = vld [vmem:[%s1073 + $0x10] sm:$0xff]
        %v2507 = vld [vmem:[%s1073 + $0x18] sm:$0xff]
        %v2508 = vld [vmem:[%s1076] sm:$0x1]
        %v2510 = vlaneseq
        %v2511 = vshrl.u32 %v2510, 7
        %v2512 = vsub.s32 0, %v2511
        %v2513 = vrot.slane %v2508, %v2512
        %v2516 = vsel %vm1146, %v1125, 0
        %v2519 = vsel %vm1146, %v1126, 0
        %v2522 = vsel %vm1146, %v1127, 0
        %v2525 = vsel %vm1146, %v1128, 0
        %v2528 = vsel %vm1146, %v1129, 0
        %v2531 = vsel %vm1146, %v1130, 0
        %v2534 = vsel %vm1146, %v1131, 0
        %v2537 = vsel %vm1146, %v1132, 0
        %2539 = vmatprep.subr.mxu0 0.0
        %2540 = vmatpush1.msra.mxu0 %v2504
        %2541 = vmatprep.subr.mxu0 0.0
        %2542 = vmatpush1.msra.mxu0 %v2505
        %2543 = vmatprep.subr.mxu0 0.0
        %2544 = vmatpush1.msra.mxu0 %v2506
        %2545 = vmatprep.subr.mxu0 0.0
        %2546 = vmatpush1.msra.mxu0 %v2507
        %2547 = vmatprep.subr.mxu0 0.0
        %2548 = vmatpush1.msra.mxu0 0.0
        %2549 = vmatprep.subr.mxu0 0.0
        %2550 = vmatpush1.msra.mxu0 0.0
        %2551 = vmatprep.subr.mxu0 0.0
        %2552 = vmatpush1.msra.mxu0 0.0
        %2553 = vmatprep.subr.mxu0 0.0
        %2554 = vmatpush1.msra.mxu0 0.0
        %2555 = vmatprep.subr.mxu0 0.0
        %2556 = vmatpush1.msra.mxu0 0.0
        %2557 = vmatprep.subr.mxu0 0.0
        %2558 = vmatpush1.msra.mxu0 0.0
        %2559 = vmatprep.subr.mxu0 0.0
        %2560 = vmatpush1.msra.mxu0 0.0
        %2561 = vmatprep.subr.mxu0 0.0
        %2562 = vmatpush1.msra.mxu0 0.0
        %2563 = vmatprep.subr.mxu0 0.0
        %2564 = vmatpush1.msra.mxu0 0.0
        %2565 = vmatprep.subr.mxu0 0.0
        %2566 = vmatpush1.msra.mxu0 0.0
        %2567 = vmatprep.subr.mxu0 0.0
        %2568 = vmatpush1.msra.mxu0 0.0
        %2569 = vmatprep.subr.mxu0 0.0
        %2570 = vmatpush1.msra.mxu0 0.0
        %2571 = vmatprep.subr.mxu0 0.0
        %2572 = vmatpush1.msra.mxu0 0.0
        %2573 = vmatprep.subr.mxu0 0.0
        %2574 = vmatpush1.msra.mxu0 0.0
        %2575 = vmatprep.subr.mxu0 0.0
        %2576 = vmatpush1.msra.mxu0 0.0
        %2577 = vmatprep.subr.mxu0 0.0
        %2578 = vmatpush1.msra.mxu0 0.0
        %2579 = vmatprep.subr.mxu0 0.0
        %2580 = vmatpush1.msra.mxu0 0.0
        %2581 = vmatprep.subr.mxu0 0.0
        %2582 = vmatpush1.msra.mxu0 0.0
        %2583 = vmatprep.subr.mxu0 0.0
        %2584 = vmatpush1.msra.mxu0 0.0
        %2585 = vmatprep.subr.mxu0 0.0
        %2586 = vmatpush1.msra.mxu0 0.0
        %2587 = vmatprep.subr.mxu0 0.0
        %2588 = vmatpush1.msra.mxu0 0.0
        %2589 = vmatprep.subr.mxu0 0.0
        %2590 = vmatpush1.msra.mxu0 0.0
        %2591 = vmatprep.subr.mxu0 0.0
        %2592 = vmatpush1.msra.mxu0 0.0
        %2593 = vmatprep.subr.mxu0 0.0
        %2594 = vmatpush1.msra.mxu0 0.0
        %2595 = vmatprep.subr.mxu0 0.0
        %2596 = vmatpush1.msra.mxu0 0.0
        %2597 = vmatprep.subr.mxu0 0.0
        %2598 = vmatpush1.msra.mxu0 0.0
        %2599 = vmatprep.subr.mxu0 0.0
        %2600 = vmatpush1.msra.mxu0 0.0
        %2601 = vmatprep.subr.mxu0 0.0
        %2602 = vmatpush1.msra.mxu0 0.0
        %2603 = vmatprep.mubr.f32.mxu0 0.0
        %2604 = vmatmul.mubr.f32.gmra.mrb[0].mxu0 %v2516
        %v2605 = vpop.f32.mrb[0].mxu0
        %v2606 = vadd.f32 %v2513, %v2605
        %v2607 = vpop.f32.mrb[0].mxu0
        %2608 = vmatprep.mubr.f32.mxu0 0.0
        %2609 = vmatmul.mubr.f32.gmra.mrb[0].mxu0 %v2519
        %v2610 = vpop.f32.mrb[0].mxu0
        %v2611 = vadd.f32 %v2513, %v2610
        %v2612 = vpop.f32.mrb[0].mxu0
        %2613 = vmatprep.mubr.f32.mxu0 0.0
        %2614 = vmatmul.mubr.f32.gmra.mrb[0].mxu0 %v2522
        %v2615 = vpop.f32.mrb[0].mxu0
        %v2616 = vadd.f32 %v2513, %v2615
        %v2617 = vpop.f32.mrb[0].mxu0
        %2618 = vmatprep.mubr.f32.mxu0 0.0
        %2619 = vmatmul.mubr.f32.gmra.mrb[0].mxu0 %v2525
        %v2620 = vpop.f32.mrb[0].mxu0
        %v2621 = vadd.f32 %v2513, %v2620
        %v2622 = vpop.f32.mrb[0].mxu0
        %2623 = vmatprep.mubr.f32.mxu0 0.0
        %2624 = vmatmul.mubr.f32.gmra.mrb[0].mxu0 %v2528
        %v2625 = vpop.f32.mrb[0].mxu0
        %v2626 = vadd.f32 %v2513, %v2625
        %v2627 = vpop.f32.mrb[0].mxu0
        %2628 = vmatprep.mubr.f32.mxu0 0.0
        %2629 = vmatmul.mubr.f32.gmra.mrb[0].mxu0 %v2531
        %v2630 = vpop.f32.mrb[0].mxu0
        %v2631 = vadd.f32 %v2513, %v2630
        %v2632 = vpop.f32.mrb[0].mxu0
        %2633 = vmatprep.mubr.f32.mxu0 0.0
        %2634 = vmatmul.mubr.f32.gmra.mrb[0].mxu0 %v2534
        %v2635 = vpop.f32.mrb[0].mxu0
        %v2636 = vadd.f32 %v2513, %v2635
        %v2637 = vpop.f32.mrb[0].mxu0
        %2638 = vmatprep.mubr.f32.mxu0 0.0
        %2639 = vmatmul.mubr.f32.gmra.mrb[0].mxu0 %v2537
        %v2640 = vpop.f32.mrb[0].mxu0
        %v2641 = vadd.f32 %v2513, %v2640
        %v2642 = vpop.f32.mrb[0].mxu0
        %2643 = vdwg.mxu0
        %v2644 = vld [vmem:[%s1081] sm:$0xff]
        %v2645 = vld [vmem:[%s1081 + $0x8] sm:$0xff]
        %v2646 = vld [vmem:[%s1081 + $0x10] sm:$0xff]
        %v2647 = vld [vmem:[%s1081 + $0x18] sm:$0xff]
        %v2648 = vld [vmem:[%s1084] sm:$0x1]
        %v2650 = vlaneseq
        %v2651 = vshrl.u32 %v2650, 7
        %v2652 = vsub.s32 0, %v2651
        %v2653 = vrot.slane %v2648, %v2652
        %v2655 = vadd.f32 %v2410, %v2653
        %v2656 = vadd.f32 %v2411, %v2653
        %v2658 = vsel %vm1247, %v2496, 0
        %v2661 = vsel %vm1247, %v2501, 0
        %v2664 = vsel %vm1247, %v2606, 0
        %v2667 = vsel %vm1247, %v2611, 0
        %v2670 = vsel %vm1247, %v2616, 0
        %v2673 = vsel %vm1247, %v2621, 0
        %v2676 = vsel %vm1247, %v2626, 0
        %v2679 = vsel %vm1247, %v2631, 0
        %v2682 = vsel %vm1247, %v2636, 0
        %v2685 = vsel %vm1247, %v2641, 0
        %2687 = vmatprep.subr.mxu0 0.0
        %2688 = vmatpush1.xpose.msra.mxu0 %v2664
        %2689 = vmatprep.subr.mxu0 0.0
        %2690 = vmatpush1.xpose.msra.mxu0 %v2667
        %2691 = vmatprep.subr.mxu0 0.0
        %2692 = vmatpush1.xpose.msra.mxu0 %v2670
        %2693 = vmatprep.subr.mxu0 0.0
        %2694 = vmatpush1.xpose.msra.mxu0 %v2673
        %2695 = vmatprep.subr.mxu0 0.0
        %2696 = vmatpush1.xpose.msra.mxu0 %v2676
        %2697 = vmatprep.subr.mxu0 0.0
        %2698 = vmatpush1.xpose.msra.mxu0 %v2679
        %2699 = vmatprep.subr.mxu0 0.0
        %2700 = vmatpush1.xpose.msra.mxu0 %v2682
        %2701 = vmatprep.subr.mxu0 0.0
        %2702 = vmatpush1.xpose.msra.mxu0 %v2685
        %2703 = vmatprep.subr.mxu0 0.0
        %2704 = vmatpush1.xpose.msra.mxu0 0.0
        %2705 = vmatprep.subr.mxu0 0.0
        %2706 = vmatpush1.xpose.msra.mxu0 0.0
        %2707 = vmatprep.subr.mxu0 0.0
        %2708 = vmatpush1.xpose.msra.mxu0 0.0
        %2709 = vmatprep.subr.mxu0 0.0
        %2710 = vmatpush1.xpose.msra.mxu0 0.0
        %2711 = vmatprep.subr.mxu0 0.0
        %2712 = vmatpush1.xpose.msra.mxu0 0.0
        %2713 = vmatprep.subr.mxu0 0.0
        %2714 = vmatpush1.xpose.msra.mxu0 0.0
        %2715 = vmatprep.subr.mxu0 0.0
        %2716 = vmatpush1.xpose.msra.mxu0 0.0
        %2717 = vmatprep.subr.mxu0 0.0
        %2718 = vmatpush1.xpose.msra.mxu0 0.0
        %2719 = vmatprep.subr.mxu0 0.0
        %2720 = vmatpush1.xpose.msra.mxu0 0.0
        %2721 = vmatprep.subr.mxu0 0.0
        %2722 = vmatpush1.xpose.msra.mxu0 0.0
        %2723 = vmatprep.subr.mxu0 0.0
        %2724 = vmatpush1.xpose.msra.mxu0 0.0
        %2725 = vmatprep.subr.mxu0 0.0
        %2726 = vmatpush1.xpose.msra.mxu0 0.0
        %2727 = vmatprep.subr.mxu0 0.0
        %2728 = vmatpush1.xpose.msra.mxu0 0.0
        %2729 = vmatprep.subr.mxu0 0.0
        %2730 = vmatpush1.xpose.msra.mxu0 0.0
        %2731 = vmatprep.subr.mxu0 0.0
        %2732 = vmatpush1.xpose.msra.mxu0 0.0
        %2733 = vmatprep.subr.mxu0 0.0
        %2734 = vmatpush1.xpose.msra.mxu0 0.0
        %2735 = vmatprep.subr.mxu0 0.0
        %2736 = vmatpush1.xpose.msra.mxu0 0.0
        %2737 = vmatprep.subr.mxu0 0.0
        %2738 = vmatpush1.xpose.msra.mxu0 0.0
        %2739 = vmatprep.subr.mxu0 0.0
        %2740 = vmatpush1.xpose.msra.mxu0 0.0
        %2741 = vmatprep.subr.mxu0 0.0
        %2742 = vmatpush1.xpose.msra.mxu0 0.0
        %2743 = vmatprep.subr.mxu0 0.0
        %2744 = vmatpush1.xpose.msra.mxu0 0.0
        %2745 = vmatprep.subr.mxu0 0.0
        %2746 = vmatpush1.xpose.msra.mxu0 0.0
        %2747 = vmatprep.subr.mxu0 0.0
        %2748 = vmatpush1.xpose.msra.mxu0 0.0
        %2749 = vmatprep.subr.mxu0 0.0
        %2750 = vmatpush1.xpose.msra.mxu0 0.0
        %2751 = vmatprep.mubr.f32.mxu0 0.0
        %2752 = vmatmul.mubr.f32.gmra.mrb[0].mxu0 %v2658
        %v2753 = vpop.f32.mrb[0].mxu0
        %v2754 = vadd.f32 0.0, %v2753
        %v2755 = vpop.f32.mrb[0].mxu0
        %2756 = vmatprep.mubr.f32.mxu0 0.0
        %2757 = vmatmul.mubr.f32.gmra.mrb[0].mxu0 %v2661
        %v2758 = vpop.f32.mrb[0].mxu0
        %v2759 = vadd.f32 0.0, %v2758
        %v2760 = vpop.f32.mrb[0].mxu0
        %2761 = vdwg.mxu0
        %vm2762 = vcmask 523264
        %v2763 = vsel %vm2762, %v2754, -inf
        %2764 = vmax.xlane.f32.xlu0 %v2763
        %v2765 = vpop.xlane.xlu0 %2764
        %v2766 = vsel %vm2762, %v2759, -inf
        %2767 = vmax.xlane.f32.xlu0 %v2766
        %v2768 = vpop.xlane.xlu0 %2767
        %v2769 = vsub.f32 %v2754, %v2765
        %v2770 = vsub.f32 %v2759, %v2768
        %v2771 = vmul.f32 %v2769, 1.442695
        %v2772 = vpow.pop %v2771
        %v2773 = vmul.f32 %v2770, 1.442695
        %v2774 = vpow.pop %v2773
        %v2775 = vsel %vm2762, %v2772, 0.0
        %2776 = vadd.xlane.f32.xlu0 %v2775
        %v2777 = vpop.xlane.xlu0 %2776
        %v2778 = vsel %vm2762, %v2774, 0.0
        %2779 = vadd.xlane.f32.xlu0 %v2778
        %v2780 = vpop.xlane.xlu0 %2779
        %v2781 = vrcp.pop %v2777
        %v2782 = vrcp.pop %v2780
        %v2783 = vmul.f32 %v2772, %v2781
        %v2784 = vmul.f32 %v2774, %v2782
        %2785 = vrot.lane.b32.xlu0 %v2606, 96
        %v2786 = vpop.permute.xlu0 %2785
        %2787 = vrot.lane.b32.xlu0 %v2611, 96
        %v2788 = vpop.permute.xlu0 %2787
        %2789 = vrot.lane.b32.xlu0 %v2616, 96
        %v2790 = vpop.permute.xlu0 %2789
        %2791 = vrot.lane.b32.xlu0 %v2621, 96
        %v2792 = vpop.permute.xlu0 %2791
        %2793 = vrot.lane.b32.xlu0 %v2626, 96
        %v2794 = vpop.permute.xlu0 %2793
        %2795 = vrot.lane.b32.xlu0 %v2631, 96
        %v2796 = vpop.permute.xlu0 %2795
        %2797 = vrot.lane.b32.xlu0 %v2636, 96
        %v2798 = vpop.permute.xlu0 %2797
        %2799 = vrot.lane.b32.xlu0 %v2641, 96
        %v2800 = vpop.permute.xlu0 %2799
        %v2810 = vsel %vm2762, %v2783, 0
        %v2813 = vsel %vm2762, %v2784, 0
        %2815 = vmatprep.subr.mxu0 0.0
        %2816 = vmatpush1.msra.mxu0 %v2786
        %2817 = vmatprep.subr.mxu0 0.0
        %2818 = vmatpush1.msra.mxu0 %v2788
        %2819 = vmatprep.subr.mxu0 0.0
        %2820 = vmatpush1.msra.mxu0 %v2790
        %2821 = vmatprep.subr.mxu0 0.0
        %2822 = vmatpush1.msra.mxu0 %v2792
        %2823 = vmatprep.subr.mxu0 0.0
        %2824 = vmatpush1.msra.mxu0 %v2794
        %2825 = vmatprep.subr.mxu0 0.0
        %2826 = vmatpush1.msra.mxu0 %v2796
        %2827 = vmatprep.subr.mxu0 0.0
        %2828 = vmatpush1.msra.mxu0 %v2798
        %2829 = vmatprep.subr.mxu0 0.0
        %2830 = vmatpush1.msra.mxu0 %v2800
        %2831 = vmatprep.subr.mxu0 0.0
        %2832 = vmatpush1.msra.mxu0 0.0
        %2833 = vmatprep.subr.mxu0 0.0
        %2834 = vmatpush1.msra.mxu0 0.0
        %2835 = vmatprep.subr.mxu0 0.0
        %2836 = vmatpush1.msra.mxu0 0.0
        %2837 = vmatprep.subr.mxu0 0.0
        %2838 = vmatpush1.msra.mxu0 0.0
        %2839 = vmatprep.subr.mxu0 0.0
        %2840 = vmatpush1.msra.mxu0 0.0
        %2841 = vmatprep.subr.mxu0 0.0
        %2842 = vmatpush1.msra.mxu0 0.0
        %2843 = vmatprep.subr.mxu0 0.0
        %2844 = vmatpush1.msra.mxu0 0.0
        %2845 = vmatprep.subr.mxu0 0.0
        %2846 = vmatpush1.msra.mxu0 0.0
        %2847 = vmatprep.subr.mxu0 0.0
        %2848 = vmatpush1.msra.mxu0 0.0
        %2849 = vmatprep.subr.mxu0 0.0
        %2850 = vmatpush1.msra.mxu0 0.0
        %2851 = vmatprep.subr.mxu0 0.0
        %2852 = vmatpush1.msra.mxu0 0.0
        %2853 = vmatprep.subr.mxu0 0.0
        %2854 = vmatpush1.msra.mxu0 0.0
        %2855 = vmatprep.subr.mxu0 0.0
        %2856 = vmatpush1.msra.mxu0 0.0
        %2857 = vmatprep.subr.mxu0 0.0
        %2858 = vmatpush1.msra.mxu0 0.0
        %2859 = vmatprep.subr.mxu0 0.0
        %2860 = vmatpush1.msra.mxu0 0.0
        %2861 = vmatprep.subr.mxu0 0.0
        %2862 = vmatpush1.msra.mxu0 0.0
        %2863 = vmatprep.subr.mxu0 0.0
        %2864 = vmatpush1.msra.mxu0 0.0
        %2865 = vmatprep.subr.mxu0 0.0
        %2866 = vmatpush1.msra.mxu0 0.0
        %2867 = vmatprep.subr.mxu0 0.0
        %2868 = vmatpush1.msra.mxu0 0.0
        %2869 = vmatprep.subr.mxu0 0.0
        %2870 = vmatpush1.msra.mxu0 0.0
        %2871 = vmatprep.subr.mxu0 0.0
        %2872 = vmatpush1.msra.mxu0 0.0
        %2873 = vmatprep.subr.mxu0 0.0
        %2874 = vmatpush1.msra.mxu0 0.0
        %2875 = vmatprep.subr.mxu0 0.0
        %2876 = vmatpush1.msra.mxu0 0.0
        %2877 = vmatprep.subr.mxu0 0.0
        %2878 = vmatpush1.msra.mxu0 0.0
        %2879 = vmatprep.mubr.f32.mxu0 0.0
        %2880 = vmatmul.mubr.f32.gmra.mrb[0].mxu0 %v2810
        %v2881 = vpop.f32.mrb[0].mxu0
        %v2882 = vadd.f32 0.0, %v2881
        %v2883 = vpop.f32.mrb[0].mxu0
        %2884 = vmatprep.mubr.f32.mxu0 0.0
        %2885 = vmatmul.mubr.f32.gmra.mrb[0].mxu0 %v2813
        %v2886 = vpop.f32.mrb[0].mxu0
        %v2887 = vadd.f32 0.0, %v2886
        %v2888 = vpop.f32.mrb[0].mxu0
        %2889 = vdwg.mxu0
        %v2891 = vsel %vm1247, %v2882, 0
        %v2894 = vsel %vm1247, %v2887, 0
        %2896 = vmatprep.subr.mxu0 0.0
        %2897 = vmatpush1.msra.mxu0 %v2644
        %2898 = vmatprep.subr.mxu0 0.0
        %2899 = vmatpush1.msra.mxu0 0.0
        %2900 = vmatprep.subr.mxu0 0.0
        %2901 = vmatpush1.msra.mxu0 0.0
        %2902 = vmatprep.subr.mxu0 0.0
        %2903 = vmatpush1.msra.mxu0 0.0
        %2904 = vmatprep.subr.mxu0 0.0
        %2905 = vmatpush1.msra.mxu0 0.0
        %2906 = vmatprep.subr.mxu0 0.0
        %2907 = vmatpush1.msra.mxu0 0.0
        %2908 = vmatprep.subr.mxu0 0.0
        %2909 = vmatpush1.msra.mxu0 0.0
        %2910 = vmatprep.subr.mxu0 0.0
        %2911 = vmatpush1.msra.mxu0 0.0
        %2912 = vmatprep.subr.mxu0 0.0
        %2913 = vmatpush1.msra.mxu0 0.0
        %2914 = vmatprep.subr.mxu0 0.0
        %2915 = vmatpush1.msra.mxu0 0.0
        %2916 = vmatprep.subr.mxu0 0.0
        %2917 = vmatpush1.msra.mxu0 0.0
        %2918 = vmatprep.subr.mxu0 0.0
        %2919 = vmatpush1.msra.mxu0 0.0
        %2920 = vmatprep.subr.mxu0 0.0
        %2921 = vmatpush1.msra.mxu0 0.0
        %2922 = vmatprep.subr.mxu0 0.0
        %2923 = vmatpush1.msra.mxu0 0.0
        %2924 = vmatprep.subr.mxu0 0.0
        %2925 = vmatpush1.msra.mxu0 0.0
        %2926 = vmatprep.subr.mxu0 0.0
        %2927 = vmatpush1.msra.mxu0 0.0
        %2928 = vmatprep.subr.mxu0 0.0
        %2929 = vmatpush1.msra.mxu0 0.0
        %2930 = vmatprep.subr.mxu0 0.0
        %2931 = vmatpush1.msra.mxu0 0.0
        %2932 = vmatprep.subr.mxu0 0.0
        %2933 = vmatpush1.msra.mxu0 0.0
        %2934 = vmatprep.subr.mxu0 0.0
        %2935 = vmatpush1.msra.mxu0 0.0
        %2936 = vmatprep.subr.mxu0 0.0
        %2937 = vmatpush1.msra.mxu0 0.0
        %2938 = vmatprep.subr.mxu0 0.0
        %2939 = vmatpush1.msra.mxu0 0.0
        %2940 = vmatprep.subr.mxu0 0.0
        %2941 = vmatpush1.msra.mxu0 0.0
        %2942 = vmatprep.subr.mxu0 0.0
        %2943 = vmatpush1.msra.mxu0 0.0
        %2944 = vmatprep.subr.mxu0 0.0
        %2945 = vmatpush1.msra.mxu0 0.0
        %2946 = vmatprep.subr.mxu0 0.0
        %2947 = vmatpush1.msra.mxu0 0.0
        %2948 = vmatprep.subr.mxu0 0.0
        %2949 = vmatpush1.msra.mxu0 0.0
        %2950 = vmatprep.subr.mxu0 0.0
        %2951 = vmatpush1.msra.mxu0 0.0
        %2952 = vmatprep.subr.mxu0 0.0
        %2953 = vmatpush1.msra.mxu0 0.0
        %2954 = vmatprep.subr.mxu0 0.0
        %2955 = vmatpush1.msra.mxu0 0.0
        %2956 = vmatprep.subr.mxu0 0.0
        %2957 = vmatpush1.msra.mxu0 0.0
        %2958 = vmatprep.subr.mxu0 0.0
        %2959 = vmatpush1.msra.mxu0 0.0
        %2960 = vmatprep.mubr.f32.mxu0 0.0
        %2961 = vmatmul.mubr.f32.gmra.mrb[0].mxu0 %v2891
        %v2962 = vpop.f32.mrb[0].mxu0
        %v2963 = vadd.f32 0.0, %v2962
        %v2964 = vpop.f32.mrb[0].mxu0
        %2965 = vmatprep.mubr.f32.mxu0 0.0
        %2966 = vmatmul.mubr.f32.gmra.mrb[0].mxu0 %v2894
        %v2967 = vpop.f32.mrb[0].mxu0
        %v2968 = vadd.f32 0.0, %v2967
        %v2969 = vpop.f32.mrb[0].mxu0
        %2970 = vdwg.mxu0
        %v2971 = vadd.f32 %v2655, %v2963
        %v2972 = vadd.f32 %v2656, %v2968
        %2973 = vrot.lane.b32.xlu0 %v2496, 120
        %v2974 = vpop.permute.xlu0 %2973
        %2975 = vrot.lane.b32.xlu0 %v2501, 120
        %v2976 = vpop.permute.xlu0 %2975
        %2977 = vrot.lane.b32.xlu0 %v2606, 120
        %v2978 = vpop.permute.xlu0 %2977
        %2979 = vrot.lane.b32.xlu0 %v2611, 120
        %v2980 = vpop.permute.xlu0 %2979
        %2981 = vrot.lane.b32.xlu0 %v2616, 120
        %v2982 = vpop.permute.xlu0 %2981
        %2983 = vrot.lane.b32.xlu0 %v2621, 120
        %v2984 = vpop.permute.xlu0 %2983
        %2985 = vrot.lane.b32.xlu0 %v2626, 120
        %v2986 = vpop.permute.xlu0 %2985
        %2987 = vrot.lane.b32.xlu0 %v2631, 120
        %v2988 = vpop.permute.xlu0 %2987
        %2989 = vrot.lane.b32.xlu0 %v2636, 120
        %v2990 = vpop.permute.xlu0 %2989
        %2991 = vrot.lane.b32.xlu0 %v2641, 120
        %v2992 = vpop.permute.xlu0 %2991
        %v2993 = vsel %vm1247, %v2974, 0
        %v2995 = vsel %vm1247, %v2976, 0
        %v2997 = vsel %vm1247, %v2978, 0
        %v2999 = vsel %vm1247, %v2980, 0
        %v3001 = vsel %vm1247, %v2982, 0
        %v3003 = vsel %vm1247, %v2984, 0
        %v3005 = vsel %vm1247, %v2986, 0
        %v3007 = vsel %vm1247, %v2988, 0
        %v3009 = vsel %vm1247, %v2990, 0
        %v3011 = vsel %vm1247, %v2992, 0
        %3013 = vmatprep.subr.mxu0 0.0
        %3014 = vmatpush1.xpose.msra.mxu0 %v2997
        %3015 = vmatprep.subr.mxu0 0.0
        %3016 = vmatpush1.xpose.msra.mxu0 %v2999
        %3017 = vmatprep.subr.mxu0 0.0
        %3018 = vmatpush1.xpose.msra.mxu0 %v3001
        %3019 = vmatprep.subr.mxu0 0.0
        %3020 = vmatpush1.xpose.msra.mxu0 %v3003
        %3021 = vmatprep.subr.mxu0 0.0
        %3022 = vmatpush1.xpose.msra.mxu0 %v3005
        %3023 = vmatprep.subr.mxu0 0.0
        %3024 = vmatpush1.xpose.msra.mxu0 %v3007
        %3025 = vmatprep.subr.mxu0 0.0
        %3026 = vmatpush1.xpose.msra.mxu0 %v3009
        %3027 = vmatprep.subr.mxu0 0.0
        %3028 = vmatpush1.xpose.msra.mxu0 %v3011
        %3029 = vmatprep.subr.mxu0 0.0
        %3030 = vmatpush1.xpose.msra.mxu0 0.0
        %3031 = vmatprep.subr.mxu0 0.0
        %3032 = vmatpush1.xpose.msra.mxu0 0.0
        %3033 = vmatprep.subr.mxu0 0.0
        %3034 = vmatpush1.xpose.msra.mxu0 0.0
        %3035 = vmatprep.subr.mxu0 0.0
        %3036 = vmatpush1.xpose.msra.mxu0 0.0
        %3037 = vmatprep.subr.mxu0 0.0
        %3038 = vmatpush1.xpose.msra.mxu0 0.0
        %3039 = vmatprep.subr.mxu0 0.0
        %3040 = vmatpush1.xpose.msra.mxu0 0.0
        %3041 = vmatprep.subr.mxu0 0.0
        %3042 = vmatpush1.xpose.msra.mxu0 0.0
        %3043 = vmatprep.subr.mxu0 0.0
        %3044 = vmatpush1.xpose.msra.mxu0 0.0
        %3045 = vmatprep.subr.mxu0 0.0
        %3046 = vmatpush1.xpose.msra.mxu0 0.0
        %3047 = vmatprep.subr.mxu0 0.0
        %3048 = vmatpush1.xpose.msra.mxu0 0.0
        %3049 = vmatprep.subr.mxu0 0.0
        %3050 = vmatpush1.xpose.msra.mxu0 0.0
        %3051 = vmatprep.subr.mxu0 0.0
        %3052 = vmatpush1.xpose.msra.mxu0 0.0
        %3053 = vmatprep.subr.mxu0 0.0
        %3054 = vmatpush1.xpose.msra.mxu0 0.0
        %3055 = vmatprep.subr.mxu0 0.0
        %3056 = vmatpush1.xpose.msra.mxu0 0.0
        %3057 = vmatprep.subr.mxu0 0.0
        %3058 = vmatpush1.xpose.msra.mxu0 0.0
        %3059 = vmatprep.subr.mxu0 0.0
        %3060 = vmatpush1.xpose.msra.mxu0 0.0
        %3061 = vmatprep.subr.mxu0 0.0
        %3062 = vmatpush1.xpose.msra.mxu0 0.0
        %3063 = vmatprep.subr.mxu0 0.0
        %3064 = vmatpush1.xpose.msra.mxu0 0.0
        %3065 = vmatprep.subr.mxu0 0.0
        %3066 = vmatpush1.xpose.msra.mxu0 0.0
        %3067 = vmatprep.subr.mxu0 0.0
        %3068 = vmatpush1.xpose.msra.mxu0 0.0
        %3069 = vmatprep.subr.mxu0 0.0
        %3070 = vmatpush1.xpose.msra.mxu0 0.0
        %3071 = vmatprep.subr.mxu0 0.0
        %3072 = vmatpush1.xpose.msra.mxu0 0.0
        %3073 = vmatprep.subr.mxu0 0.0
        %3074 = vmatpush1.xpose.msra.mxu0 0.0
        %3075 = vmatprep.subr.mxu0 0.0
        %3076 = vmatpush1.xpose.msra.mxu0 0.0
        %3077 = vmatprep.mubr.f32.mxu0 0.0
        %3078 = vmatmul.mubr.f32.gmra.mrb[0].mxu0 %v2993
        %v3079 = vpop.f32.mrb[0].mxu0
        %v3080 = vadd.f32 0.0, %v3079
        %v3081 = vpop.f32.mrb[0].mxu0
        %3082 = vmatprep.mubr.f32.mxu0 0.0
        %3083 = vmatmul.mubr.f32.gmra.mrb[0].mxu0 %v2995
        %v3084 = vpop.f32.mrb[0].mxu0
        %v3085 = vadd.f32 0.0, %v3084
        %v3086 = vpop.f32.mrb[0].mxu0
        %3087 = vdwg.mxu0
        %v3088 = vsel %vm2762, %v3080, -inf
        %3089 = vmax.xlane.f32.xlu0 %v3088
        %v3090 = vpop.xlane.xlu0 %3089
        %v3091 = vsel %vm2762, %v3085, -inf
        %3092 = vmax.xlane.f32.xlu0 %v3091
        %v3093 = vpop.xlane.xlu0 %3092
        %v3094 = vsub.f32 %v3080, %v3090
        %v3095 = vsub.f32 %v3085, %v3093
        %v3096 = vmul.f32 %v3094, 1.442695
        %v3097 = vpow.pop %v3096
        %v3098 = vmul.f32 %v3095, 1.442695
        %v3099 = vpow.pop %v3098
        %v3100 = vsel %vm2762, %v3097, 0.0
        %3101 = vadd.xlane.f32.xlu0 %v3100
        %v3102 = vpop.xlane.xlu0 %3101
        %v3103 = vsel %vm2762, %v3099, 0.0
        %3104 = vadd.xlane.f32.xlu0 %v3103
        %v3105 = vpop.xlane.xlu0 %3104
        %v3106 = vrcp.pop %v3102
        %v3107 = vrcp.pop %v3105
        %v3108 = vmul.f32 %v3097, %v3106
        %v3109 = vmul.f32 %v3099, %v3107
        %3110 = vrot.lane.b32.xlu0 %v2606, 88
        %v3111 = vpop.permute.xlu0 %3110
        %3112 = vrot.lane.b32.xlu0 %v2611, 88
        %v3113 = vpop.permute.xlu0 %3112
        %3114 = vrot.lane.b32.xlu0 %v2616, 88
        %v3115 = vpop.permute.xlu0 %3114
        %3116 = vrot.lane.b32.xlu0 %v2621, 88
        %v3117 = vpop.permute.xlu0 %3116
        %3118 = vrot.lane.b32.xlu0 %v2626, 88
        %v3119 = vpop.permute.xlu0 %3118
        %3120 = vrot.lane.b32.xlu0 %v2631, 88
        %v3121 = vpop.permute.xlu0 %3120
        %3122 = vrot.lane.b32.xlu0 %v2636, 88
        %v3123 = vpop.permute.xlu0 %3122
        %3124 = vrot.lane.b32.xlu0 %v2641, 88
        %v3125 = vpop.permute.xlu0 %3124
        %v3135 = vsel %vm2762, %v3108, 0
        %v3138 = vsel %vm2762, %v3109, 0
        %3140 = vmatprep.subr.mxu0 0.0
        %3141 = vmatpush1.msra.mxu0 %v3111
        %3142 = vmatprep.subr.mxu0 0.0
        %3143 = vmatpush1.msra.mxu0 %v3113
        %3144 = vmatprep.subr.mxu0 0.0
        %3145 = vmatpush1.msra.mxu0 %v3115
        %3146 = vmatprep.subr.mxu0 0.0
        %3147 = vmatpush1.msra.mxu0 %v3117
        %3148 = vmatprep.subr.mxu0 0.0
        %3149 = vmatpush1.msra.mxu0 %v3119
        %3150 = vmatprep.subr.mxu0 0.0
        %3151 = vmatpush1.msra.mxu0 %v3121
        %3152 = vmatprep.subr.mxu0 0.0
        %3153 = vmatpush1.msra.mxu0 %v3123
        %3154 = vmatprep.subr.mxu0 0.0
        %3155 = vmatpush1.msra.mxu0 %v3125
        %3156 = vmatprep.subr.mxu0 0.0
        %3157 = vmatpush1.msra.mxu0 0.0
        %3158 = vmatprep.subr.mxu0 0.0
        %3159 = vmatpush1.msra.mxu0 0.0
        %3160 = vmatprep.subr.mxu0 0.0
        %3161 = vmatpush1.msra.mxu0 0.0
        %3162 = vmatprep.subr.mxu0 0.0
        %3163 = vmatpush1.msra.mxu0 0.0
        %3164 = vmatprep.subr.mxu0 0.0
        %3165 = vmatpush1.msra.mxu0 0.0
        %3166 = vmatprep.subr.mxu0 0.0
        %3167 = vmatpush1.msra.mxu0 0.0
        %3168 = vmatprep.subr.mxu0 0.0
        %3169 = vmatpush1.msra.mxu0 0.0
        %3170 = vmatprep.subr.mxu0 0.0
        %3171 = vmatpush1.msra.mxu0 0.0
        %3172 = vmatprep.subr.mxu0 0.0
        %3173 = vmatpush1.msra.mxu0 0.0
        %3174 = vmatprep.subr.mxu0 0.0
        %3175 = vmatpush1.msra.mxu0 0.0
        %3176 = vmatprep.subr.mxu0 0.0
        %3177 = vmatpush1.msra.mxu0 0.0
        %3178 = vmatprep.subr.mxu0 0.0
        %3179 = vmatpush1.msra.mxu0 0.0
        %3180 = vmatprep.subr.mxu0 0.0
        %3181 = vmatpush1.msra.mxu0 0.0
        %3182 = vmatprep.subr.mxu0 0.0
        %3183 = vmatpush1.msra.mxu0 0.0
        %3184 = vmatprep.subr.mxu0 0.0
        %3185 = vmatpush1.msra.mxu0 0.0
        %3186 = vmatprep.subr.mxu0 0.0
        %3187 = vmatpush1.msra.mxu0 0.0
        %3188 = vmatprep.subr.mxu0 0.0
        %3189 = vmatpush1.msra.mxu0 0.0
        %3190 = vmatprep.subr.mxu0 0.0
        %3191 = vmatpush1.msra.mxu0 0.0
        %3192 = vmatprep.subr.mxu0 0.0
        %3193 = vmatpush1.msra.mxu0 0.0
        %3194 = vmatprep.subr.mxu0 0.0
        %3195 = vmatpush1.msra.mxu0 0.0
        %3196 = vmatprep.subr.mxu0 0.0
        %3197 = vmatpush1.msra.mxu0 0.0
        %3198 = vmatprep.subr.mxu0 0.0
        %3199 = vmatpush1.msra.mxu0 0.0
        %3200 = vmatprep.subr.mxu0 0.0
        %3201 = vmatpush1.msra.mxu0 0.0
        %3202 = vmatprep.subr.mxu0 0.0
        %3203 = vmatpush1.msra.mxu0 0.0
        %3204 = vmatprep.mubr.f32.mxu0 0.0
        %3205 = vmatmul.mubr.f32.gmra.mrb[0].mxu0 %v3135
        %v3206 = vpop.f32.mrb[0].mxu0
        %v3207 = vadd.f32 0.0, %v3206
        %v3208 = vpop.f32.mrb[0].mxu0
        %3209 = vmatprep.mubr.f32.mxu0 0.0
        %3210 = vmatmul.mubr.f32.gmra.mrb[0].mxu0 %v3138
        %v3211 = vpop.f32.mrb[0].mxu0
        %v3212 = vadd.f32 0.0, %v3211
        %v3213 = vpop.f32.mrb[0].mxu0
        %3214 = vdwg.mxu0
        %v3216 = vsel %vm1247, %v3207, 0
        %v3219 = vsel %vm1247, %v3212, 0
        %3221 = vmatprep.subr.mxu0 0.0
        %3222 = vmatpush1.msra.mxu0 %v2645
        %3223 = vmatprep.subr.mxu0 0.0
        %3224 = vmatpush1.msra.mxu0 0.0
        %3225 = vmatprep.subr.mxu0 0.0
        %3226 = vmatpush1.msra.mxu0 0.0
        %3227 = vmatprep.subr.mxu0 0.0
        %3228 = vmatpush1.msra.mxu0 0.0
        %3229 = vmatprep.subr.mxu0 0.0
        %3230 = vmatpush1.msra.mxu0 0.0
        %3231 = vmatprep.subr.mxu0 0.0
        %3232 = vmatpush1.msra.mxu0 0.0
        %3233 = vmatprep.subr.mxu0 0.0
        %3234 = vmatpush1.msra.mxu0 0.0
        %3235 = vmatprep.subr.mxu0 0.0
        %3236 = vmatpush1.msra.mxu0 0.0
        %3237 = vmatprep.subr.mxu0 0.0
        %3238 = vmatpush1.msra.mxu0 0.0
        %3239 = vmatprep.subr.mxu0 0.0
        %3240 = vmatpush1.msra.mxu0 0.0
        %3241 = vmatprep.subr.mxu0 0.0
        %3242 = vmatpush1.msra.mxu0 0.0
        %3243 = vmatprep.subr.mxu0 0.0
        %3244 = vmatpush1.msra.mxu0 0.0
        %3245 = vmatprep.subr.mxu0 0.0
        %3246 = vmatpush1.msra.mxu0 0.0
        %3247 = vmatprep.subr.mxu0 0.0
        %3248 = vmatpush1.msra.mxu0 0.0
        %3249 = vmatprep.subr.mxu0 0.0
        %3250 = vmatpush1.msra.mxu0 0.0
        %3251 = vmatprep.subr.mxu0 0.0
        %3252 = vmatpush1.msra.mxu0 0.0
        %3253 = vmatprep.subr.mxu0 0.0
        %3254 = vmatpush1.msra.mxu0 0.0
        %3255 = vmatprep.subr.mxu0 0.0
        %3256 = vmatpush1.msra.mxu0 0.0
        %3257 = vmatprep.subr.mxu0 0.0
        %3258 = vmatpush1.msra.mxu0 0.0
        %3259 = vmatprep.subr.mxu0 0.0
        %3260 = vmatpush1.msra.mxu0 0.0
        %3261 = vmatprep.subr.mxu0 0.0
        %3262 = vmatpush1.msra.mxu0 0.0
        %3263 = vmatprep.subr.mxu0 0.0
        %3264 = vmatpush1.msra.mxu0 0.0
        %3265 = vmatprep.subr.mxu0 0.0
        %3266 = vmatpush1.msra.mxu0 0.0
        %3267 = vmatprep.subr.mxu0 0.0
        %3268 = vmatpush1.msra.mxu0 0.0
        %3269 = vmatprep.subr.mxu0 0.0
        %3270 = vmatpush1.msra.mxu0 0.0
        %3271 = vmatprep.subr.mxu0 0.0
        %3272 = vmatpush1.msra.mxu0 0.0
        %3273 = vmatprep.subr.mxu0 0.0
        %3274 = vmatpush1.msra.mxu0 0.0
        %3275 = vmatprep.subr.mxu0 0.0
        %3276 = vmatpush1.msra.mxu0 0.0
        %3277 = vmatprep.subr.mxu0 0.0
        %3278 = vmatpush1.msra.mxu0 0.0
        %3279 = vmatprep.subr.mxu0 0.0
        %3280 = vmatpush1.msra.mxu0 0.0
        %3281 = vmatprep.subr.mxu0 0.0
        %3282 = vmatpush1.msra.mxu0 0.0
        %3283 = vmatprep.subr.mxu0 0.0
        %3284 = vmatpush1.msra.mxu0 0.0
        %3285 = vmatprep.mubr.f32.mxu0 0.0
        %3286 = vmatmul.mubr.f32.gmra.mrb[0].mxu0 %v3216
        %v3287 = vpop.f32.mrb[0].mxu0
        %v3288 = vadd.f32 0.0, %v3287
        %v3289 = vpop.f32.mrb[0].mxu0
        %3290 = vmatprep.mubr.f32.mxu0 0.0
        %3291 = vmatmul.mubr.f32.gmra.mrb[0].mxu0 %v3219
        %v3292 = vpop.f32.mrb[0].mxu0
        %v3293 = vadd.f32 0.0, %v3292
        %v3294 = vpop.f32.mrb[0].mxu0
        %3295 = vdwg.mxu0
        %v3296 = vadd.f32 %v2971, %v3288
        %v3297 = vadd.f32 %v2972, %v3293
        %3298 = vrot.lane.b32.xlu0 %v2496, 112
        %v3299 = vpop.permute.xlu0 %3298
        %3300 = vrot.lane.b32.xlu0 %v2501, 112
        %v3301 = vpop.permute.xlu0 %3300
        %3302 = vrot.lane.b32.xlu0 %v2606, 112
        %v3303 = vpop.permute.xlu0 %3302
        %3304 = vrot.lane.b32.xlu0 %v2611, 112
        %v3305 = vpop.permute.xlu0 %3304
        %3306 = vrot.lane.b32.xlu0 %v2616, 112
        %v3307 = vpop.permute.xlu0 %3306
        %3308 = vrot.lane.b32.xlu0 %v2621, 112
        %v3309 = vpop.permute.xlu0 %3308
        %3310 = vrot.lane.b32.xlu0 %v2626, 112
        %v3311 = vpop.permute.xlu0 %3310
        %3312 = vrot.lane.b32.xlu0 %v2631, 112
        %v3313 = vpop.permute.xlu0 %3312
        %3314 = vrot.lane.b32.xlu0 %v2636, 112
        %v3315 = vpop.permute.xlu0 %3314
        %3316 = vrot.lane.b32.xlu0 %v2641, 112
        %v3317 = vpop.permute.xlu0 %3316
        %v3318 = vsel %vm1247, %v3299, 0
        %v3320 = vsel %vm1247, %v3301, 0
        %v3322 = vsel %vm1247, %v3303, 0
        %v3324 = vsel %vm1247, %v3305, 0
        %v3326 = vsel %vm1247, %v3307, 0
        %v3328 = vsel %vm1247, %v3309, 0
        %v3330 = vsel %vm1247, %v3311, 0
        %v3332 = vsel %vm1247, %v3313, 0
        %v3334 = vsel %vm1247, %v3315, 0
        %v3336 = vsel %vm1247, %v3317, 0
        %3338 = vmatprep.subr.mxu0 0.0
        %3339 = vmatpush1.xpose.msra.mxu0 %v3322
        %3340 = vmatprep.subr.mxu0 0.0
        %3341 = vmatpush1.xpose.msra.mxu0 %v3324
        %3342 = vmatprep.subr.mxu0 0.0
        %3343 = vmatpush1.xpose.msra.mxu0 %v3326
        %3344 = vmatprep.subr.mxu0 0.0
        %3345 = vmatpush1.xpose.msra.mxu0 %v3328
        %3346 = vmatprep.subr.mxu0 0.0
        %3347 = vmatpush1.xpose.msra.mxu0 %v3330
        %3348 = vmatprep.subr.mxu0 0.0
        %3349 = vmatpush1.xpose.msra.mxu0 %v3332
        %3350 = vmatprep.subr.mxu0 0.0
        %3351 = vmatpush1.xpose.msra.mxu0 %v3334
        %3352 = vmatprep.subr.mxu0 0.0
        %3353 = vmatpush1.xpose.msra.mxu0 %v3336
        %3354 = vmatprep.subr.mxu0 0.0
        %3355 = vmatpush1.xpose.msra.mxu0 0.0
        %3356 = vmatprep.subr.mxu0 0.0
        %3357 = vmatpush1.xpose.msra.mxu0 0.0
        %3358 = vmatprep.subr.mxu0 0.0
        %3359 = vmatpush1.xpose.msra.mxu0 0.0
        %3360 = vmatprep.subr.mxu0 0.0
        %3361 = vmatpush1.xpose.msra.mxu0 0.0
        %3362 = vmatprep.subr.mxu0 0.0
        %3363 = vmatpush1.xpose.msra.mxu0 0.0
        %3364 = vmatprep.subr.mxu0 0.0
        %3365 = vmatpush1.xpose.msra.mxu0 0.0
        %3366 = vmatprep.subr.mxu0 0.0
        %3367 = vmatpush1.xpose.msra.mxu0 0.0
        %3368 = vmatprep.subr.mxu0 0.0
        %3369 = vmatpush1.xpose.msra.mxu0 0.0
        %3370 = vmatprep.subr.mxu0 0.0
        %3371 = vmatpush1.xpose.msra.mxu0 0.0
        %3372 = vmatprep.subr.mxu0 0.0
        %3373 = vmatpush1.xpose.msra.mxu0 0.0
        %3374 = vmatprep.subr.mxu0 0.0
        %3375 = vmatpush1.xpose.msra.mxu0 0.0
        %3376 = vmatprep.subr.mxu0 0.0
        %3377 = vmatpush1.xpose.msra.mxu0 0.0
        %3378 = vmatprep.subr.mxu0 0.0
        %3379 = vmatpush1.xpose.msra.mxu0 0.0
        %3380 = vmatprep.subr.mxu0 0.0
        %3381 = vmatpush1.xpose.msra.mxu0 0.0
        %3382 = vmatprep.subr.mxu0 0.0
        %3383 = vmatpush1.xpose.msra.mxu0 0.0
        %3384 = vmatprep.subr.mxu0 0.0
        %3385 = vmatpush1.xpose.msra.mxu0 0.0
        %3386 = vmatprep.subr.mxu0 0.0
        %3387 = vmatpush1.xpose.msra.mxu0 0.0
        %3388 = vmatprep.subr.mxu0 0.0
        %3389 = vmatpush1.xpose.msra.mxu0 0.0
        %3390 = vmatprep.subr.mxu0 0.0
        %3391 = vmatpush1.xpose.msra.mxu0 0.0
        %3392 = vmatprep.subr.mxu0 0.0
        %3393 = vmatpush1.xpose.msra.mxu0 0.0
        %3394 = vmatprep.subr.mxu0 0.0
        %3395 = vmatpush1.xpose.msra.mxu0 0.0
        %3396 = vmatprep.subr.mxu0 0.0
        %3397 = vmatpush1.xpose.msra.mxu0 0.0
        %3398 = vmatprep.subr.mxu0 0.0
        %3399 = vmatpush1.xpose.msra.mxu0 0.0
        %3400 = vmatprep.subr.mxu0 0.0
        %3401 = vmatpush1.xpose.msra.mxu0 0.0
        %3402 = vmatprep.mubr.f32.mxu0 0.0
        %3403 = vmatmul.mubr.f32.gmra.mrb[0].mxu0 %v3318
        %v3404 = vpop.f32.mrb[0].mxu0
        %v3405 = vadd.f32 0.0, %v3404
        %v3406 = vpop.f32.mrb[0].mxu0
        %3407 = vmatprep.mubr.f32.mxu0 0.0
        %3408 = vmatmul.mubr.f32.gmra.mrb[0].mxu0 %v3320
        %v3409 = vpop.f32.mrb[0].mxu0
        %v3410 = vadd.f32 0.0, %v3409
        %v3411 = vpop.f32.mrb[0].mxu0
        %3412 = vdwg.mxu0
        %v3413 = vsel %vm2762, %v3405, -inf
        %3414 = vmax.xlane.f32.xlu0 %v3413
        %v3415 = vpop.xlane.xlu0 %3414
        %v3416 = vsel %vm2762, %v3410, -inf
        %3417 = vmax.xlane.f32.xlu0 %v3416
        %v3418 = vpop.xlane.xlu0 %3417
        %v3419 = vsub.f32 %v3405, %v3415
        %v3420 = vsub.f32 %v3410, %v3418
        %v3421 = vmul.f32 %v3419, 1.442695
        %v3422 = vpow.pop %v3421
        %v3423 = vmul.f32 %v3420, 1.442695
        %v3424 = vpow.pop %v3423
        %v3425 = vsel %vm2762, %v3422, 0.0
        %3426 = vadd.xlane.f32.xlu0 %v3425
        %v3427 = vpop.xlane.xlu0 %3426
        %v3428 = vsel %vm2762, %v3424, 0.0
        %3429 = vadd.xlane.f32.xlu0 %v3428
        %v3430 = vpop.xlane.xlu0 %3429
        %v3431 = vrcp.pop %v3427
        %v3432 = vrcp.pop %v3430
        %v3433 = vmul.f32 %v3422, %v3431
        %v3434 = vmul.f32 %v3424, %v3432
        %3435 = vrot.lane.b32.xlu0 %v2606, 80
        %v3436 = vpop.permute.xlu0 %3435
        %3437 = vrot.lane.b32.xlu0 %v2611, 80
        %v3438 = vpop.permute.xlu0 %3437
        %3439 = vrot.lane.b32.xlu0 %v2616, 80
        %v3440 = vpop.permute.xlu0 %3439
        %3441 = vrot.lane.b32.xlu0 %v2621, 80
        %v3442 = vpop.permute.xlu0 %3441
        %3443 = vrot.lane.b32.xlu0 %v2626, 80
        %v3444 = vpop.permute.xlu0 %3443
        %3445 = vrot.lane.b32.xlu0 %v2631, 80
        %v3446 = vpop.permute.xlu0 %3445
        %3447 = vrot.lane.b32.xlu0 %v2636, 80
        %v3448 = vpop.permute.xlu0 %3447
        %3449 = vrot.lane.b32.xlu0 %v2641, 80
        %v3450 = vpop.permute.xlu0 %3449
        %v3460 = vsel %vm2762, %v3433, 0
        %v3463 = vsel %vm2762, %v3434, 0
        %3465 = vmatprep.subr.mxu0 0.0
        %3466 = vmatpush1.msra.mxu0 %v3436
        %3467 = vmatprep.subr.mxu0 0.0
        %3468 = vmatpush1.msra.mxu0 %v3438
        %3469 = vmatprep.subr.mxu0 0.0
        %3470 = vmatpush1.msra.mxu0 %v3440
        %3471 = vmatprep.subr.mxu0 0.0
        %3472 = vmatpush1.msra.mxu0 %v3442
        %3473 = vmatprep.subr.mxu0 0.0
        %3474 = vmatpush1.msra.mxu0 %v3444
        %3475 = vmatprep.subr.mxu0 0.0
        %3476 = vmatpush1.msra.mxu0 %v3446
        %3477 = vmatprep.subr.mxu0 0.0
        %3478 = vmatpush1.msra.mxu0 %v3448
        %3479 = vmatprep.subr.mxu0 0.0
        %3480 = vmatpush1.msra.mxu0 %v3450
        %3481 = vmatprep.subr.mxu0 0.0
        %3482 = vmatpush1.msra.mxu0 0.0
        %3483 = vmatprep.subr.mxu0 0.0
        %3484 = vmatpush1.msra.mxu0 0.0
        %3485 = vmatprep.subr.mxu0 0.0
        %3486 = vmatpush1.msra.mxu0 0.0
        %3487 = vmatprep.subr.mxu0 0.0
        %3488 = vmatpush1.msra.mxu0 0.0
        %3489 = vmatprep.subr.mxu0 0.0
        %3490 = vmatpush1.msra.mxu0 0.0
        %3491 = vmatprep.subr.mxu0 0.0
        %3492 = vmatpush1.msra.mxu0 0.0
        %3493 = vmatprep.subr.mxu0 0.0
        %3494 = vmatpush1.msra.mxu0 0.0
        %3495 = vmatprep.subr.mxu0 0.0
        %3496 = vmatpush1.msra.mxu0 0.0
        %3497 = vmatprep.subr.mxu0 0.0
        %3498 = vmatpush1.msra.mxu0 0.0
        %3499 = vmatprep.subr.mxu0 0.0
        %3500 = vmatpush1.msra.mxu0 0.0
        %3501 = vmatprep.subr.mxu0 0.0
        %3502 = vmatpush1.msra.mxu0 0.0
        %3503 = vmatprep.subr.mxu0 0.0
        %3504 = vmatpush1.msra.mxu0 0.0
        %3505 = vmatprep.subr.mxu0 0.0
        %3506 = vmatpush1.msra.mxu0 0.0
        %3507 = vmatprep.subr.mxu0 0.0
        %3508 = vmatpush1.msra.mxu0 0.0
        %3509 = vmatprep.subr.mxu0 0.0
        %3510 = vmatpush1.msra.mxu0 0.0
        %3511 = vmatprep.subr.mxu0 0.0
        %3512 = vmatpush1.msra.mxu0 0.0
        %3513 = vmatprep.subr.mxu0 0.0
        %3514 = vmatpush1.msra.mxu0 0.0
        %3515 = vmatprep.subr.mxu0 0.0
        %3516 = vmatpush1.msra.mxu0 0.0
        %3517 = vmatprep.subr.mxu0 0.0
        %3518 = vmatpush1.msra.mxu0 0.0
        %3519 = vmatprep.subr.mxu0 0.0
        %3520 = vmatpush1.msra.mxu0 0.0
        %3521 = vmatprep.subr.mxu0 0.0
        %3522 = vmatpush1.msra.mxu0 0.0
        %3523 = vmatprep.subr.mxu0 0.0
        %3524 = vmatpush1.msra.mxu0 0.0
        %3525 = vmatprep.subr.mxu0 0.0
        %3526 = vmatpush1.msra.mxu0 0.0
        %3527 = vmatprep.subr.mxu0 0.0
        %3528 = vmatpush1.msra.mxu0 0.0
        %3529 = vmatprep.mubr.f32.mxu0 0.0
        %3530 = vmatmul.mubr.f32.gmra.mrb[0].mxu0 %v3460
        %v3531 = vpop.f32.mrb[0].mxu0
        %v3532 = vadd.f32 0.0, %v3531
        %v3533 = vpop.f32.mrb[0].mxu0
        %3534 = vmatprep.mubr.f32.mxu0 0.0
        %3535 = vmatmul.mubr.f32.gmra.mrb[0].mxu0 %v3463
        %v3536 = vpop.f32.mrb[0].mxu0
        %v3537 = vadd.f32 0.0, %v3536
        %v3538 = vpop.f32.mrb[0].mxu0
        %3539 = vdwg.mxu0
        %v3541 = vsel %vm1247, %v3532, 0
        %v3544 = vsel %vm1247, %v3537, 0
        %3546 = vmatprep.subr.mxu0 0.0
        %3547 = vmatpush1.msra.mxu0 %v2646
        %3548 = vmatprep.subr.mxu0 0.0
        %3549 = vmatpush1.msra.mxu0 0.0
        %3550 = vmatprep.subr.mxu0 0.0
        %3551 = vmatpush1.msra.mxu0 0.0
        %3552 = vmatprep.subr.mxu0 0.0
        %3553 = vmatpush1.msra.mxu0 0.0
        %3554 = vmatprep.subr.mxu0 0.0
        %3555 = vmatpush1.msra.mxu0 0.0
        %3556 = vmatprep.subr.mxu0 0.0
        %3557 = vmatpush1.msra.mxu0 0.0
        %3558 = vmatprep.subr.mxu0 0.0
        %3559 = vmatpush1.msra.mxu0 0.0
        %3560 = vmatprep.subr.mxu0 0.0
        %3561 = vmatpush1.msra.mxu0 0.0
        %3562 = vmatprep.subr.mxu0 0.0
        %3563 = vmatpush1.msra.mxu0 0.0
        %3564 = vmatprep.subr.mxu0 0.0
        %3565 = vmatpush1.msra.mxu0 0.0
        %3566 = vmatprep.subr.mxu0 0.0
        %3567 = vmatpush1.msra.mxu0 0.0
        %3568 = vmatprep.subr.mxu0 0.0
        %3569 = vmatpush1.msra.mxu0 0.0
        %3570 = vmatprep.subr.mxu0 0.0
        %3571 = vmatpush1.msra.mxu0 0.0
        %3572 = vmatprep.subr.mxu0 0.0
        %3573 = vmatpush1.msra.mxu0 0.0
        %3574 = vmatprep.subr.mxu0 0.0
        %3575 = vmatpush1.msra.mxu0 0.0
        %3576 = vmatprep.subr.mxu0 0.0
        %3577 = vmatpush1.msra.mxu0 0.0
        %3578 = vmatprep.subr.mxu0 0.0
        %3579 = vmatpush1.msra.mxu0 0.0
        %3580 = vmatprep.subr.mxu0 0.0
        %3581 = vmatpush1.msra.mxu0 0.0
        %3582 = vmatprep.subr.mxu0 0.0
        %3583 = vmatpush1.msra.mxu0 0.0
        %3584 = vmatprep.subr.mxu0 0.0
        %3585 = vmatpush1.msra.mxu0 0.0
        %3586 = vmatprep.subr.mxu0 0.0
        %3587 = vmatpush1.msra.mxu0 0.0
        %3588 = vmatprep.subr.mxu0 0.0
        %3589 = vmatpush1.msra.mxu0 0.0
        %3590 = vmatprep.subr.mxu0 0.0
        %3591 = vmatpush1.msra.mxu0 0.0
        %3592 = vmatprep.subr.mxu0 0.0
        %3593 = vmatpush1.msra.mxu0 0.0
        %3594 = vmatprep.subr.mxu0 0.0
        %3595 = vmatpush1.msra.mxu0 0.0
        %3596 = vmatprep.subr.mxu0 0.0
        %3597 = vmatpush1.msra.mxu0 0.0
        %3598 = vmatprep.subr.mxu0 0.0
        %3599 = vmatpush1.msra.mxu0 0.0
        %3600 = vmatprep.subr.mxu0 0.0
        %3601 = vmatpush1.msra.mxu0 0.0
        %3602 = vmatprep.subr.mxu0 0.0
        %3603 = vmatpush1.msra.mxu0 0.0
        %3604 = vmatprep.subr.mxu0 0.0
        %3605 = vmatpush1.msra.mxu0 0.0
        %3606 = vmatprep.subr.mxu0 0.0
        %3607 = vmatpush1.msra.mxu0 0.0
        %3608 = vmatprep.subr.mxu0 0.0
        %3609 = vmatpush1.msra.mxu0 0.0
        %3610 = vmatprep.mubr.f32.mxu0 0.0
        %3611 = vmatmul.mubr.f32.gmra.mrb[0].mxu0 %v3541
        %v3612 = vpop.f32.mrb[0].mxu0
        %v3613 = vadd.f32 0.0, %v3612
        %v3614 = vpop.f32.mrb[0].mxu0
        %3615 = vmatprep.mubr.f32.mxu0 0.0
        %3616 = vmatmul.mubr.f32.gmra.mrb[0].mxu0 %v3544
        %v3617 = vpop.f32.mrb[0].mxu0
        %v3618 = vadd.f32 0.0, %v3617
        %v3619 = vpop.f32.mrb[0].mxu0
        %3620 = vdwg.mxu0
        %v3621 = vadd.f32 %v3296, %v3613
        %v3622 = vadd.f32 %v3297, %v3618
        %3623 = vrot.lane.b32.xlu0 %v2496, 104
        %v3624 = vpop.permute.xlu0 %3623
        %3625 = vrot.lane.b32.xlu0 %v2501, 104
        %v3626 = vpop.permute.xlu0 %3625
        %3627 = vrot.lane.b32.xlu0 %v2606, 104
        %v3628 = vpop.permute.xlu0 %3627
        %3629 = vrot.lane.b32.xlu0 %v2611, 104
        %v3630 = vpop.permute.xlu0 %3629
        %3631 = vrot.lane.b32.xlu0 %v2616, 104
        %v3632 = vpop.permute.xlu0 %3631
        %3633 = vrot.lane.b32.xlu0 %v2621, 104
        %v3634 = vpop.permute.xlu0 %3633
        %3635 = vrot.lane.b32.xlu0 %v2626, 104
        %v3636 = vpop.permute.xlu0 %3635
        %3637 = vrot.lane.b32.xlu0 %v2631, 104
        %v3638 = vpop.permute.xlu0 %3637
        %3639 = vrot.lane.b32.xlu0 %v2636, 104
        %v3640 = vpop.permute.xlu0 %3639
        %3641 = vrot.lane.b32.xlu0 %v2641, 104
        %v3642 = vpop.permute.xlu0 %3641
        %v3643 = vsel %vm1247, %v3624, 0
        %v3645 = vsel %vm1247, %v3626, 0
        %v3647 = vsel %vm1247, %v3628, 0
        %v3649 = vsel %vm1247, %v3630, 0
        %v3651 = vsel %vm1247, %v3632, 0
        %v3653 = vsel %vm1247, %v3634, 0
        %v3655 = vsel %vm1247, %v3636, 0
        %v3657 = vsel %vm1247, %v3638, 0
        %v3659 = vsel %vm1247, %v3640, 0
        %v3661 = vsel %vm1247, %v3642, 0
        %3663 = vmatprep.subr.mxu0 0.0
        %3664 = vmatpush1.xpose.msra.mxu0 %v3647
        %3665 = vmatprep.subr.mxu0 0.0
        %3666 = vmatpush1.xpose.msra.mxu0 %v3649
        %3667 = vmatprep.subr.mxu0 0.0
        %3668 = vmatpush1.xpose.msra.mxu0 %v3651
        %3669 = vmatprep.subr.mxu0 0.0
        %3670 = vmatpush1.xpose.msra.mxu0 %v3653
        %3671 = vmatprep.subr.mxu0 0.0
        %3672 = vmatpush1.xpose.msra.mxu0 %v3655
        %3673 = vmatprep.subr.mxu0 0.0
        %3674 = vmatpush1.xpose.msra.mxu0 %v3657
        %3675 = vmatprep.subr.mxu0 0.0
        %3676 = vmatpush1.xpose.msra.mxu0 %v3659
        %3677 = vmatprep.subr.mxu0 0.0
        %3678 = vmatpush1.xpose.msra.mxu0 %v3661
        %3679 = vmatprep.subr.mxu0 0.0
        %3680 = vmatpush1.xpose.msra.mxu0 0.0
        %3681 = vmatprep.subr.mxu0 0.0
        %3682 = vmatpush1.xpose.msra.mxu0 0.0
        %3683 = vmatprep.subr.mxu0 0.0
        %3684 = vmatpush1.xpose.msra.mxu0 0.0
        %3685 = vmatprep.subr.mxu0 0.0
        %3686 = vmatpush1.xpose.msra.mxu0 0.0
        %3687 = vmatprep.subr.mxu0 0.0
        %3688 = vmatpush1.xpose.msra.mxu0 0.0
        %3689 = vmatprep.subr.mxu0 0.0
        %3690 = vmatpush1.xpose.msra.mxu0 0.0
        %3691 = vmatprep.subr.mxu0 0.0
        %3692 = vmatpush1.xpose.msra.mxu0 0.0
        %3693 = vmatprep.subr.mxu0 0.0
        %3694 = vmatpush1.xpose.msra.mxu0 0.0
        %3695 = vmatprep.subr.mxu0 0.0
        %3696 = vmatpush1.xpose.msra.mxu0 0.0
        %3697 = vmatprep.subr.mxu0 0.0
        %3698 = vmatpush1.xpose.msra.mxu0 0.0
        %3699 = vmatprep.subr.mxu0 0.0
        %3700 = vmatpush1.xpose.msra.mxu0 0.0
        %3701 = vmatprep.subr.mxu0 0.0
        %3702 = vmatpush1.xpose.msra.mxu0 0.0
        %3703 = vmatprep.subr.mxu0 0.0
        %3704 = vmatpush1.xpose.msra.mxu0 0.0
        %3705 = vmatprep.subr.mxu0 0.0
        %3706 = vmatpush1.xpose.msra.mxu0 0.0
        %3707 = vmatprep.subr.mxu0 0.0
        %3708 = vmatpush1.xpose.msra.mxu0 0.0
        %3709 = vmatprep.subr.mxu0 0.0
        %3710 = vmatpush1.xpose.msra.mxu0 0.0
        %3711 = vmatprep.subr.mxu0 0.0
        %3712 = vmatpush1.xpose.msra.mxu0 0.0
        %3713 = vmatprep.subr.mxu0 0.0
        %3714 = vmatpush1.xpose.msra.mxu0 0.0
        %3715 = vmatprep.subr.mxu0 0.0
        %3716 = vmatpush1.xpose.msra.mxu0 0.0
        %3717 = vmatprep.subr.mxu0 0.0
        %3718 = vmatpush1.xpose.msra.mxu0 0.0
        %3719 = vmatprep.subr.mxu0 0.0
        %3720 = vmatpush1.xpose.msra.mxu0 0.0
        %3721 = vmatprep.subr.mxu0 0.0
        %3722 = vmatpush1.xpose.msra.mxu0 0.0
        %3723 = vmatprep.subr.mxu0 0.0
        %3724 = vmatpush1.xpose.msra.mxu0 0.0
        %3725 = vmatprep.subr.mxu0 0.0
        %3726 = vmatpush1.xpose.msra.mxu0 0.0
        %3727 = vmatprep.mubr.f32.mxu0 0.0
        %3728 = vmatmul.mubr.f32.gmra.mrb[0].mxu0 %v3643
        %v3729 = vpop.f32.mrb[0].mxu0
        %v3730 = vadd.f32 0.0, %v3729
        %v3731 = vpop.f32.mrb[0].mxu0
        %3732 = vmatprep.mubr.f32.mxu0 0.0
        %3733 = vmatmul.mubr.f32.gmra.mrb[0].mxu0 %v3645
        %v3734 = vpop.f32.mrb[0].mxu0
        %v3735 = vadd.f32 0.0, %v3734
        %v3736 = vpop.f32.mrb[0].mxu0
        %3737 = vdwg.mxu0
        %v3738 = vsel %vm2762, %v3730, -inf
        %3739 = vmax.xlane.f32.xlu0 %v3738
        %v3740 = vpop.xlane.xlu0 %3739
        %v3741 = vsel %vm2762, %v3735, -inf
        %3742 = vmax.xlane.f32.xlu0 %v3741
        %v3743 = vpop.xlane.xlu0 %3742
        %v3744 = vsub.f32 %v3730, %v3740
        %v3745 = vsub.f32 %v3735, %v3743
        %v3746 = vmul.f32 %v3744, 1.442695
        %v3747 = vpow.pop %v3746
        %v3748 = vmul.f32 %v3745, 1.442695
        %v3749 = vpow.pop %v3748
        %v3750 = vsel %vm2762, %v3747, 0.0
        %3751 = vadd.xlane.f32.xlu0 %v3750
        %v3752 = vpop.xlane.xlu0 %3751
        %v3753 = vsel %vm2762, %v3749, 0.0
        %3754 = vadd.xlane.f32.xlu0 %v3753
        %v3755 = vpop.xlane.xlu0 %3754
        %v3756 = vrcp.pop %v3752
        %v3757 = vrcp.pop %v3755
        %v3758 = vmul.f32 %v3747, %v3756
        %v3759 = vmul.f32 %v3749, %v3757
        %3760 = vrot.lane.b32.xlu0 %v2606, 72
        %v3761 = vpop.permute.xlu0 %3760
        %3762 = vrot.lane.b32.xlu0 %v2611, 72
        %v3763 = vpop.permute.xlu0 %3762
        %3764 = vrot.lane.b32.xlu0 %v2616, 72
        %v3765 = vpop.permute.xlu0 %3764
        %3766 = vrot.lane.b32.xlu0 %v2621, 72
        %v3767 = vpop.permute.xlu0 %3766
        %3768 = vrot.lane.b32.xlu0 %v2626, 72
        %v3769 = vpop.permute.xlu0 %3768
        %3770 = vrot.lane.b32.xlu0 %v2631, 72
        %v3771 = vpop.permute.xlu0 %3770
        %3772 = vrot.lane.b32.xlu0 %v2636, 72
        %v3773 = vpop.permute.xlu0 %3772
        %3774 = vrot.lane.b32.xlu0 %v2641, 72
        %v3775 = vpop.permute.xlu0 %3774
        %v3785 = vsel %vm2762, %v3758, 0
        %v3788 = vsel %vm2762, %v3759, 0
        %3790 = vmatprep.subr.mxu0 0.0
        %3791 = vmatpush1.msra.mxu0 %v3761
        %3792 = vmatprep.subr.mxu0 0.0
        %3793 = vmatpush1.msra.mxu0 %v3763
        %3794 = vmatprep.subr.mxu0 0.0
        %3795 = vmatpush1.msra.mxu0 %v3765
        %3796 = vmatprep.subr.mxu0 0.0
        %3797 = vmatpush1.msra.mxu0 %v3767
        %3798 = vmatprep.subr.mxu0 0.0
        %3799 = vmatpush1.msra.mxu0 %v3769
        %3800 = vmatprep.subr.mxu0 0.0
        %3801 = vmatpush1.msra.mxu0 %v3771
        %3802 = vmatprep.subr.mxu0 0.0
        %3803 = vmatpush1.msra.mxu0 %v3773
        %3804 = vmatprep.subr.mxu0 0.0
        %3805 = vmatpush1.msra.mxu0 %v3775
        %3806 = vmatprep.subr.mxu0 0.0
        %3807 = vmatpush1.msra.mxu0 0.0
        %3808 = vmatprep.subr.mxu0 0.0
        %3809 = vmatpush1.msra.mxu0 0.0
        %3810 = vmatprep.subr.mxu0 0.0
        %3811 = vmatpush1.msra.mxu0 0.0
        %3812 = vmatprep.subr.mxu0 0.0
        %3813 = vmatpush1.msra.mxu0 0.0
        %3814 = vmatprep.subr.mxu0 0.0
        %3815 = vmatpush1.msra.mxu0 0.0
        %3816 = vmatprep.subr.mxu0 0.0
        %3817 = vmatpush1.msra.mxu0 0.0
        %3818 = vmatprep.subr.mxu0 0.0
        %3819 = vmatpush1.msra.mxu0 0.0
        %3820 = vmatprep.subr.mxu0 0.0
        %3821 = vmatpush1.msra.mxu0 0.0
        %3822 = vmatprep.subr.mxu0 0.0
        %3823 = vmatpush1.msra.mxu0 0.0
        %3824 = vmatprep.subr.mxu0 0.0
        %3825 = vmatpush1.msra.mxu0 0.0
        %3826 = vmatprep.subr.mxu0 0.0
        %3827 = vmatpush1.msra.mxu0 0.0
        %3828 = vmatprep.subr.mxu0 0.0
        %3829 = vmatpush1.msra.mxu0 0.0
        %3830 = vmatprep.subr.mxu0 0.0
        %3831 = vmatpush1.msra.mxu0 0.0
        %3832 = vmatprep.subr.mxu0 0.0
        %3833 = vmatpush1.msra.mxu0 0.0
        %3834 = vmatprep.subr.mxu0 0.0
        %3835 = vmatpush1.msra.mxu0 0.0
        %3836 = vmatprep.subr.mxu0 0.0
        %3837 = vmatpush1.msra.mxu0 0.0
        %3838 = vmatprep.subr.mxu0 0.0
        %3839 = vmatpush1.msra.mxu0 0.0
        %3840 = vmatprep.subr.mxu0 0.0
        %3841 = vmatpush1.msra.mxu0 0.0
        %3842 = vmatprep.subr.mxu0 0.0
        %3843 = vmatpush1.msra.mxu0 0.0
        %3844 = vmatprep.subr.mxu0 0.0
        %3845 = vmatpush1.msra.mxu0 0.0
        %3846 = vmatprep.subr.mxu0 0.0
        %3847 = vmatpush1.msra.mxu0 0.0
        %3848 = vmatprep.subr.mxu0 0.0
        %3849 = vmatpush1.msra.mxu0 0.0
        %3850 = vmatprep.subr.mxu0 0.0
        %3851 = vmatpush1.msra.mxu0 0.0
        %3852 = vmatprep.subr.mxu0 0.0
        %3853 = vmatpush1.msra.mxu0 0.0
        %3854 = vmatprep.mubr.f32.mxu0 0.0
        %3855 = vmatmul.mubr.f32.gmra.mrb[0].mxu0 %v3785
        %v3856 = vpop.f32.mrb[0].mxu0
        %v3857 = vadd.f32 0.0, %v3856
        %v3858 = vpop.f32.mrb[0].mxu0
        %3859 = vmatprep.mubr.f32.mxu0 0.0
        %3860 = vmatmul.mubr.f32.gmra.mrb[0].mxu0 %v3788
        %v3861 = vpop.f32.mrb[0].mxu0
        %v3862 = vadd.f32 0.0, %v3861
        %v3863 = vpop.f32.mrb[0].mxu0
        %3864 = vdwg.mxu0
        %v3866 = vsel %vm1247, %v3857, 0
        %v3869 = vsel %vm1247, %v3862, 0
        %3871 = vmatprep.subr.mxu0 0.0
        %3872 = vmatpush1.msra.mxu0 %v2647
        %3873 = vmatprep.subr.mxu0 0.0
        %3874 = vmatpush1.msra.mxu0 0.0
        %3875 = vmatprep.subr.mxu0 0.0
        %3876 = vmatpush1.msra.mxu0 0.0
        %3877 = vmatprep.subr.mxu0 0.0
        %3878 = vmatpush1.msra.mxu0 0.0
        %3879 = vmatprep.subr.mxu0 0.0
        %3880 = vmatpush1.msra.mxu0 0.0
        %3881 = vmatprep.subr.mxu0 0.0
        %3882 = vmatpush1.msra.mxu0 0.0
        %3883 = vmatprep.subr.mxu0 0.0
        %3884 = vmatpush1.msra.mxu0 0.0
        %3885 = vmatprep.subr.mxu0 0.0
        %3886 = vmatpush1.msra.mxu0 0.0
        %3887 = vmatprep.subr.mxu0 0.0
        %3888 = vmatpush1.msra.mxu0 0.0
        %3889 = vmatprep.subr.mxu0 0.0
        %3890 = vmatpush1.msra.mxu0 0.0
        %3891 = vmatprep.subr.mxu0 0.0
        %3892 = vmatpush1.msra.mxu0 0.0
        %3893 = vmatprep.subr.mxu0 0.0
        %3894 = vmatpush1.msra.mxu0 0.0
        %3895 = vmatprep.subr.mxu0 0.0
        %3896 = vmatpush1.msra.mxu0 0.0
        %3897 = vmatprep.subr.mxu0 0.0
        %3898 = vmatpush1.msra.mxu0 0.0
        %3899 = vmatprep.subr.mxu0 0.0
        %3900 = vmatpush1.msra.mxu0 0.0
        %3901 = vmatprep.subr.mxu0 0.0
        %3902 = vmatpush1.msra.mxu0 0.0
        %3903 = vmatprep.subr.mxu0 0.0
        %3904 = vmatpush1.msra.mxu0 0.0
        %3905 = vmatprep.subr.mxu0 0.0
        %3906 = vmatpush1.msra.mxu0 0.0
        %3907 = vmatprep.subr.mxu0 0.0
        %3908 = vmatpush1.msra.mxu0 0.0
        %3909 = vmatprep.subr.mxu0 0.0
        %3910 = vmatpush1.msra.mxu0 0.0
        %3911 = vmatprep.subr.mxu0 0.0
        %3912 = vmatpush1.msra.mxu0 0.0
        %3913 = vmatprep.subr.mxu0 0.0
        %3914 = vmatpush1.msra.mxu0 0.0
        %3915 = vmatprep.subr.mxu0 0.0
        %3916 = vmatpush1.msra.mxu0 0.0
        %3917 = vmatprep.subr.mxu0 0.0
        %3918 = vmatpush1.msra.mxu0 0.0
        %3919 = vmatprep.subr.mxu0 0.0
        %3920 = vmatpush1.msra.mxu0 0.0
        %3921 = vmatprep.subr.mxu0 0.0
        %3922 = vmatpush1.msra.mxu0 0.0
        %3923 = vmatprep.subr.mxu0 0.0
        %3924 = vmatpush1.msra.mxu0 0.0
        %3925 = vmatprep.subr.mxu0 0.0
        %3926 = vmatpush1.msra.mxu0 0.0
        %3927 = vmatprep.subr.mxu0 0.0
        %3928 = vmatpush1.msra.mxu0 0.0
        %3929 = vmatprep.subr.mxu0 0.0
        %3930 = vmatpush1.msra.mxu0 0.0
        %3931 = vmatprep.subr.mxu0 0.0
        %3932 = vmatpush1.msra.mxu0 0.0
        %3933 = vmatprep.subr.mxu0 0.0
        %3934 = vmatpush1.msra.mxu0 0.0
        %3935 = vmatprep.mubr.f32.mxu0 0.0
        %3936 = vmatmul.mubr.f32.gmra.mrb[0].mxu0 %v3866
        %v3937 = vpop.f32.mrb[0].mxu0
        %v3938 = vadd.f32 0.0, %v3937
        %v3939 = vpop.f32.mrb[0].mxu0
        %3940 = vmatprep.mubr.f32.mxu0 0.0
        %3941 = vmatmul.mubr.f32.gmra.mrb[0].mxu0 %v3869
        %v3942 = vpop.f32.mrb[0].mxu0
        %v3943 = vadd.f32 0.0, %v3942
        %v3944 = vpop.f32.mrb[0].mxu0
        %3945 = vdwg.mxu0
        %v3946 = vadd.f32 %v3621, %v3938
        %v3947 = vadd.f32 %v3622, %v3943
        %v3948 = vsel %vm1146, %v3946, 0.0
        %3949 = vadd.xlane.f32.xlu0 %v3948
        %v3950 = vpop.xlane.xlu0 %3949
        %v3951 = vsel %vm1146, %v3947, 0.0
        %3952 = vadd.xlane.f32.xlu0 %v3951
        %v3953 = vpop.xlane.xlu0 %3952
        %v3954 = vmul.f32 %v3950, %v2379
        %v3955 = vmul.f32 %v3953, %v2379
        %v3956 = vsub.f32 %v3946, %v3954
        %v3957 = vsub.f32 %v3947, %v3955
        %v3958 = vmul.f32 %v3956, %v3956
        %v3959 = vmul.f32 %v3957, %v3957
        %v3960 = vsel %vm1146, %v3958, 0.0
        %3961 = vadd.xlane.f32.xlu0 %v3960
        %v3962 = vpop.xlane.xlu0 %3961
        %v3963 = vsel %vm1146, %v3959, 0.0
        %3964 = vadd.xlane.f32.xlu0 %v3963
        %v3965 = vpop.xlane.xlu0 %3964
        %v3966 = vmul.f32 %v3962, %v2379
        %v3967 = vmul.f32 %v3965, %v2379
        %v3968 = vadd.f32 %v3966, 1e-05
        %v3969 = vadd.f32 %v3967, 1e-05
        %v3970 = vrsqrt.pop %v3968
        %v3971 = vrsqrt.pop %v3969
        %v3972 = vmul.f32 %v3956, %v3970
        %v3973 = vmul.f32 %v3957, %v3971
        %v3974 = vlaneseq
        %v3975 = vshrl.u32 %v3974, 7
        %v3976 = vsub.s32 1, %v3975
        %v3977 = vrot.slane %v1133, %v3976
        %v3978 = vmul.f32 %v3972, %v3977
        %v3979 = vmul.f32 %v3973, %v3977
        %v3980 = vlaneseq
        %v3981 = vshrl.u32 %v3980, 7
        %v3982 = vsub.s32 1, %v3981
        %v3983 = vrot.slane %v1134, %v3982
        %v3984 = vadd.f32 %v3978, %v3983
        %v3985 = vadd.f32 %v3979, %v3983
        %v3986 = vld [vmem:[%s1089] sm:$0xff]
        %v3987 = vld [vmem:[%s1089 + $0x8] sm:$0xff]
        %v3988 = vld [vmem:[%s1089 + $0x10] sm:$0xff]
        %v3989 = vld [vmem:[%s1089 + $0x18] sm:$0xff]
        %v3990 = vld [vmem:[%s1092] sm:$0x1]
        %v3992 = vlaneseq
        %v3993 = vshrl.u32 %v3992, 7
        %v3994 = vsub.s32 0, %v3993
        %v3995 = vrot.slane %v3990, %v3994
        %v3998 = vsel %vm1146, %v3984, 0
        %v4001 = vsel %vm1146, %v3985, 0
        %4003 = vmatprep.subr.mxu0 0.0
        %4004 = vmatpush1.msra.mxu0 %v3986
        %4005 = vmatprep.subr.mxu0 0.0
        %4006 = vmatpush1.msra.mxu0 %v3987
        %4007 = vmatprep.subr.mxu0 0.0
        %4008 = vmatpush1.msra.mxu0 %v3988
        %4009 = vmatprep.subr.mxu0 0.0
        %4010 = vmatpush1.msra.mxu0 %v3989
        %4011 = vmatprep.subr.mxu0 0.0
        %4012 = vmatpush1.msra.mxu0 0.0
        %4013 = vmatprep.subr.mxu0 0.0
        %4014 = vmatpush1.msra.mxu0 0.0
        %4015 = vmatprep.subr.mxu0 0.0
        %4016 = vmatpush1.msra.mxu0 0.0
        %4017 = vmatprep.subr.mxu0 0.0
        %4018 = vmatpush1.msra.mxu0 0.0
        %4019 = vmatprep.subr.mxu0 0.0
        %4020 = vmatpush1.msra.mxu0 0.0
        %4021 = vmatprep.subr.mxu0 0.0
        %4022 = vmatpush1.msra.mxu0 0.0
        %4023 = vmatprep.subr.mxu0 0.0
        %4024 = vmatpush1.msra.mxu0 0.0
        %4025 = vmatprep.subr.mxu0 0.0
        %4026 = vmatpush1.msra.mxu0 0.0
        %4027 = vmatprep.subr.mxu0 0.0
        %4028 = vmatpush1.msra.mxu0 0.0
        %4029 = vmatprep.subr.mxu0 0.0
        %4030 = vmatpush1.msra.mxu0 0.0
        %4031 = vmatprep.subr.mxu0 0.0
        %4032 = vmatpush1.msra.mxu0 0.0
        %4033 = vmatprep.subr.mxu0 0.0
        %4034 = vmatpush1.msra.mxu0 0.0
        %4035 = vmatprep.subr.mxu0 0.0
        %4036 = vmatpush1.msra.mxu0 0.0
        %4037 = vmatprep.subr.mxu0 0.0
        %4038 = vmatpush1.msra.mxu0 0.0
        %4039 = vmatprep.subr.mxu0 0.0
        %4040 = vmatpush1.msra.mxu0 0.0
        %4041 = vmatprep.subr.mxu0 0.0
        %4042 = vmatpush1.msra.mxu0 0.0
        %4043 = vmatprep.subr.mxu0 0.0
        %4044 = vmatpush1.msra.mxu0 0.0
        %4045 = vmatprep.subr.mxu0 0.0
        %4046 = vmatpush1.msra.mxu0 0.0
        %4047 = vmatprep.subr.mxu0 0.0
        %4048 = vmatpush1.msra.mxu0 0.0
        %4049 = vmatprep.subr.mxu0 0.0
        %4050 = vmatpush1.msra.mxu0 0.0
        %4051 = vmatprep.subr.mxu0 0.0
        %4052 = vmatpush1.msra.mxu0 0.0
        %4053 = vmatprep.subr.mxu0 0.0
        %4054 = vmatpush1.msra.mxu0 0.0
        %4055 = vmatprep.subr.mxu0 0.0
        %4056 = vmatpush1.msra.mxu0 0.0
        %4057 = vmatprep.subr.mxu0 0.0
        %4058 = vmatpush1.msra.mxu0 0.0
        %4059 = vmatprep.subr.mxu0 0.0
        %4060 = vmatpush1.msra.mxu0 0.0
        %4061 = vmatprep.subr.mxu0 0.0
        %4062 = vmatpush1.msra.mxu0 0.0
        %4063 = vmatprep.subr.mxu0 0.0
        %4064 = vmatpush1.msra.mxu0 0.0
        %4065 = vmatprep.subr.mxu0 0.0
        %4066 = vmatpush1.msra.mxu0 0.0
        %4067 = vmatprep.mubr.f32.mxu0 0.0
        %4068 = vmatmul.mubr.f32.gmra.mrb[0].mxu0 %v3998
        %v4069 = vpop.f32.mrb[0].mxu0
        %v4070 = vadd.f32 %v3995, %v4069
        %v4071 = vpop.f32.mrb[0].mxu0
        %4072 = vmatprep.mubr.f32.mxu0 0.0
        %4073 = vmatmul.mubr.f32.gmra.mrb[0].mxu0 %v4001
        %v4074 = vpop.f32.mrb[0].mxu0
        %v4075 = vadd.f32 %v3995, %v4074
        %v4076 = vpop.f32.mrb[0].mxu0
        %4077 = vdwg.mxu0
        %v4078 = vmax.f32 %v4070, 0.0
        %v4079 = vmax.f32 %v4075, 0.0
        %v4080 = vld [vmem:[%s1097] sm:$0xff]
        %v4081 = vld [vmem:[%s1097 + $0x8] sm:$0xff]
        %v4082 = vld [vmem:[%s1097 + $0x10] sm:$0xff]
        %v4083 = vld [vmem:[%s1097 + $0x18] sm:$0xff]
        %v4084 = vld [vmem:[%s1097 + $0x20] sm:$0xff]
        %v4085 = vld [vmem:[%s1097 + $0x28] sm:$0xff]
        %v4086 = vld [vmem:[%s1097 + $0x30] sm:$0xff]
        %v4087 = vld [vmem:[%s1097 + $0x38] sm:$0xff]
        %v4089 = vsel %vm2762, %v4078, 0
        %v4092 = vsel %vm2762, %v4079, 0
        %4094 = vmatprep.subr.mxu0 0.0
        %4095 = vmatpush1.msra.mxu0 %v4080
        %4096 = vmatprep.subr.mxu0 0.0
        %4097 = vmatpush1.msra.mxu0 %v4081
        %4098 = vmatprep.subr.mxu0 0.0
        %4099 = vmatpush1.msra.mxu0 %v4082
        %4100 = vmatprep.subr.mxu0 0.0
        %4101 = vmatpush1.msra.mxu0 %v4083
        %4102 = vmatprep.subr.mxu0 0.0
        %4103 = vmatpush1.msra.mxu0 %v4084
        %4104 = vmatprep.subr.mxu0 0.0
        %4105 = vmatpush1.msra.mxu0 %v4085
        %4106 = vmatprep.subr.mxu0 0.0
        %4107 = vmatpush1.msra.mxu0 %v4086
        %4108 = vmatprep.subr.mxu0 0.0
        %4109 = vmatpush1.msra.mxu0 %v4087
        %4110 = vmatprep.subr.mxu0 0.0
        %4111 = vmatpush1.msra.mxu0 0.0
        %4112 = vmatprep.subr.mxu0 0.0
        %4113 = vmatpush1.msra.mxu0 0.0
        %4114 = vmatprep.subr.mxu0 0.0
        %4115 = vmatpush1.msra.mxu0 0.0
        %4116 = vmatprep.subr.mxu0 0.0
        %4117 = vmatpush1.msra.mxu0 0.0
        %4118 = vmatprep.subr.mxu0 0.0
        %4119 = vmatpush1.msra.mxu0 0.0
        %4120 = vmatprep.subr.mxu0 0.0
        %4121 = vmatpush1.msra.mxu0 0.0
        %4122 = vmatprep.subr.mxu0 0.0
        %4123 = vmatpush1.msra.mxu0 0.0
        %4124 = vmatprep.subr.mxu0 0.0
        %4125 = vmatpush1.msra.mxu0 0.0
        %4126 = vmatprep.subr.mxu0 0.0
        %4127 = vmatpush1.msra.mxu0 0.0
        %4128 = vmatprep.subr.mxu0 0.0
        %4129 = vmatpush1.msra.mxu0 0.0
        %4130 = vmatprep.subr.mxu0 0.0
        %4131 = vmatpush1.msra.mxu0 0.0
        %4132 = vmatprep.subr.mxu0 0.0
        %4133 = vmatpush1.msra.mxu0 0.0
        %4134 = vmatprep.subr.mxu0 0.0
        %4135 = vmatpush1.msra.mxu0 0.0
        %4136 = vmatprep.subr.mxu0 0.0
        %4137 = vmatpush1.msra.mxu0 0.0
        %4138 = vmatprep.subr.mxu0 0.0
        %4139 = vmatpush1.msra.mxu0 0.0
        %4140 = vmatprep.subr.mxu0 0.0
        %4141 = vmatpush1.msra.mxu0 0.0
        %4142 = vmatprep.subr.mxu0 0.0
        %4143 = vmatpush1.msra.mxu0 0.0
        %4144 = vmatprep.subr.mxu0 0.0
        %4145 = vmatpush1.msra.mxu0 0.0
        %4146 = vmatprep.subr.mxu0 0.0
        %4147 = vmatpush1.msra.mxu0 0.0
        %4148 = vmatprep.subr.mxu0 0.0
        %4149 = vmatpush1.msra.mxu0 0.0
        %4150 = vmatprep.subr.mxu0 0.0
        %4151 = vmatpush1.msra.mxu0 0.0
        %4152 = vmatprep.subr.mxu0 0.0
        %4153 = vmatpush1.msra.mxu0 0.0
        %4154 = vmatprep.subr.mxu0 0.0
        %4155 = vmatpush1.msra.mxu0 0.0
        %4156 = vmatprep.subr.mxu0 0.0
        %4157 = vmatpush1.msra.mxu0 0.0
        %4158 = vmatprep.mubr.f32.mxu0 0.0
        %4159 = vmatmul.mubr.f32.gmra.mrb[0].mxu0 %v4089
        %v4160 = vpop.f32.mrb[0].mxu0
        %v4161 = vadd.f32 0.0, %v4160
        %v4162 = vpop.f32.mrb[0].mxu0
        %4163 = vmatprep.mubr.f32.mxu0 0.0
        %4164 = vmatmul.mubr.f32.gmra.mrb[0].mxu0 %v4092
        %v4165 = vpop.f32.mrb[0].mxu0
        %v4166 = vadd.f32 0.0, %v4165
        %v4167 = vpop.f32.mrb[0].mxu0
        %4168 = vdwg.mxu0
        %v4169 = vadd.f32 %v3984, %v4161
        %v4170 = vadd.f32 %v3985, %v4166
        %v4171 = vld [vmem:[%s1100] sm:$0x1]
        %v4173 = vlaneseq
        %v4174 = vshrl.u32 %v4173, 7
        %v4175 = vsub.s32 0, %v4174
        %v4176 = vrot.slane %v4171, %v4175
        %v4178 = vadd.f32 %v4169, %v4176
        %v4179 = vadd.f32 %v4170, %v4176
        %v4180 = vsel %vm1146, %v4178, 0.0
        %4181 = vadd.xlane.f32.xlu0 %v4180
        %v4182 = vpop.xlane.xlu0 %4181
        %v4183 = vsel %vm1146, %v4179, 0.0
        %4184 = vadd.xlane.f32.xlu0 %v4183
        %v4185 = vpop.xlane.xlu0 %4184
        %v4186 = vmul.f32 %v4182, %v2379
        %v4187 = vmul.f32 %v4185, %v2379
        %v4188 = vsub.f32 %v4178, %v4186
        %v4189 = vsub.f32 %v4179, %v4187
        %v4190 = vmul.f32 %v4188, %v4188
        %v4191 = vmul.f32 %v4189, %v4189
        %v4192 = vsel %vm1146, %v4190, 0.0
        %4193 = vadd.xlane.f32.xlu0 %v4192
        %v4194 = vpop.xlane.xlu0 %4193
        %v4195 = vsel %vm1146, %v4191, 0.0
        %4196 = vadd.xlane.f32.xlu0 %v4195
        %v4197 = vpop.xlane.xlu0 %4196
        %v4198 = vmul.f32 %v4194, %v2379
        %v4199 = vmul.f32 %v4197, %v2379
        %v4200 = vadd.f32 %v4198, 1e-05
        %v4201 = vadd.f32 %v4199, 1e-05
        %v4202 = vrsqrt.pop %v4200
        %v4203 = vrsqrt.pop %v4201
        %v4204 = vmul.f32 %v4188, %v4202
        %v4205 = vmul.f32 %v4189, %v4203
        %v4206 = vlaneseq
        %v4207 = vshrl.u32 %v4206, 7
        %v4208 = vsub.s32 2, %v4207
        %v4209 = vrot.slane %v1133, %v4208
        %v4210 = vmul.f32 %v4204, %v4209
        %v4211 = vmul.f32 %v4205, %v4209
        %v4212 = vlaneseq
        %v4213 = vshrl.u32 %v4212, 7
        %v4214 = vsub.s32 2, %v4213
        %v4215 = vrot.slane %v1134, %v4214
        %v4216 = vadd.f32 %v4210, %v4215
        %v4217 = vadd.f32 %v4211, %v4215
        %p4218 = scmp.lt.s32.totalorder %s47, 1
        // Predicated region
        $region129: #{detr_forward.5} parent=123 // pred_check
          %p4219 = pneg %p4218
        $region130: #{detr_forward.5} parent=123 // pred_check_branch
          %4221 = sbr.rel (%p4219) target = $region132
        $region131: #{detr_forward.5} parent=123 // pred_region
          %4222 = vst.msk [vmem:[#allocation2] sm:$0xff] %vm1146, %v4216
          %4223 = vst.msk [vmem:[#allocation2 + $0x8] sm:$0xff] %vm1146, %v4217
        $region132: #{detr_forward.5} parent=123 // pred_fallthru
          _
        %p4224 = scmp.eq.s32.totalorder %s47, 1
        // Predicated region
        $region133: #{detr_forward.5} parent=123 // pred_check
          %p4225 = pneg %p4224
        $region134: #{detr_forward.5} parent=123 // pred_check_branch
          %4227 = sbr.rel (%p4225) target = $region136
        $region135: #{detr_forward.5} parent=123 // pred_region
          %v4228 = vld [vmem:[%s18] sm:$0x1]
          %v4229 = vld [vmem:[%s19] sm:$0x1]
          %v4230 = vsel %vm1146, %v4216, 0.0
          %4231 = vadd.xlane.f32.xlu0 %v4230
          %v4232 = vpop.xlane.xlu0 %4231
          %v4233 = vsel %vm1146, %v4217, 0.0
          %4234 = vadd.xlane.f32.xlu0 %v4233
          %v4235 = vpop.xlane.xlu0 %4234
          %v4236 = vmul.f32 %v4232, %v2379
          %v4237 = vmul.f32 %v4235, %v2379
          %v4238 = vsub.f32 %v4216, %v4236
          %v4239 = vsub.f32 %v4217, %v4237
          %v4240 = vmul.f32 %v4238, %v4238
          %v4241 = vmul.f32 %v4239, %v4239
          %v4242 = vsel %vm1146, %v4240, 0.0
          %4243 = vadd.xlane.f32.xlu0 %v4242
          %v4244 = vpop.xlane.xlu0 %4243
          %v4245 = vsel %vm1146, %v4241, 0.0
          %4246 = vadd.xlane.f32.xlu0 %v4245
          %v4247 = vpop.xlane.xlu0 %4246
          %v4248 = vmul.f32 %v4244, %v2379
          %v4249 = vmul.f32 %v4247, %v2379
          %v4250 = vadd.f32 %v4248, 1e-05
          %v4251 = vadd.f32 %v4249, 1e-05
          %v4252 = vrsqrt.pop %v4250
          %v4253 = vrsqrt.pop %v4251
          %v4254 = vmul.f32 %v4238, %v4252
          %v4255 = vmul.f32 %v4239, %v4253
          %v4257 = vlaneseq
          %v4258 = vshrl.u32 %v4257, 7
          %v4259 = vsub.s32 0, %v4258
          %v4260 = vrot.slane %v4228, %v4259
          %v4262 = vmul.f32 %v4254, %v4260
          %v4263 = vmul.f32 %v4255, %v4260
          %v4265 = vlaneseq
          %v4266 = vshrl.u32 %v4265, 7
          %v4267 = vsub.s32 0, %v4266
          %v4268 = vrot.slane %v4229, %v4267
          %v4270 = vadd.f32 %v4262, %v4268
          %v4271 = vadd.f32 %v4263, %v4268
          %4272 = vst.msk [vmem:[%s1032] sm:$0xff] %vm1146, %v4270
          %4273 = vst.msk [vmem:[%s1032 + $0x8] sm:$0xff] %vm1146, %v4271
          %v4274 = vld [vmem:[%s20] sm:$0xff]
          %v4275 = vld [vmem:[%s20 + $0x8] sm:$0xff]
          %v4276 = vld [vmem:[%s20 + $0x10] sm:$0xff]
          %v4277 = vld [vmem:[%s20 + $0x18] sm:$0xff]
          %v4278 = vld [vmem:[%s21] sm:$0x1]
          %v4280 = vlaneseq
          %v4281 = vshrl.u32 %v4280, 7
          %v4282 = vsub.s32 0, %v4281
          %v4283 = vrot.slane %v4278, %v4282
          %v4286 = vsel %vm1146, %v4270, 0
          %v4289 = vsel %vm1146, %v4271, 0
          %4291 = vmatprep.subr.mxu0 0.0
          %4292 = vmatpush1.msra.mxu0 %v4274
          %4293 = vmatprep.subr.mxu0 0.0
          %4294 = vmatpush1.msra.mxu0 %v4275
          %4295 = vmatprep.subr.mxu0 0.0
          %4296 = vmatpush1.msra.mxu0 %v4276
          %4297 = vmatprep.subr.mxu0 0.0
          %4298 = vmatpush1.msra.mxu0 %v4277
          %4299 = vmatprep.subr.mxu0 0.0
          %4300 = vmatpush1.msra.mxu0 0.0
          %4301 = vmatprep.subr.mxu0 0.0
          %4302 = vmatpush1.msra.mxu0 0.0
          %4303 = vmatprep.subr.mxu0 0.0
          %4304 = vmatpush1.msra.mxu0 0.0
          %4305 = vmatprep.subr.mxu0 0.0
          %4306 = vmatpush1.msra.mxu0 0.0
          %4307 = vmatprep.subr.mxu0 0.0
          %4308 = vmatpush1.msra.mxu0 0.0
          %4309 = vmatprep.subr.mxu0 0.0
          %4310 = vmatpush1.msra.mxu0 0.0
          %4311 = vmatprep.subr.mxu0 0.0
          %4312 = vmatpush1.msra.mxu0 0.0
          %4313 = vmatprep.subr.mxu0 0.0
          %4314 = vmatpush1.msra.mxu0 0.0
          %4315 = vmatprep.subr.mxu0 0.0
          %4316 = vmatpush1.msra.mxu0 0.0
          %4317 = vmatprep.subr.mxu0 0.0
          %4318 = vmatpush1.msra.mxu0 0.0
          %4319 = vmatprep.subr.mxu0 0.0
          %4320 = vmatpush1.msra.mxu0 0.0
          %4321 = vmatprep.subr.mxu0 0.0
          %4322 = vmatpush1.msra.mxu0 0.0
          %4323 = vmatprep.subr.mxu0 0.0
          %4324 = vmatpush1.msra.mxu0 0.0
          %4325 = vmatprep.subr.mxu0 0.0
          %4326 = vmatpush1.msra.mxu0 0.0
          %4327 = vmatprep.subr.mxu0 0.0
          %4328 = vmatpush1.msra.mxu0 0.0
          %4329 = vmatprep.subr.mxu0 0.0
          %4330 = vmatpush1.msra.mxu0 0.0
          %4331 = vmatprep.subr.mxu0 0.0
          %4332 = vmatpush1.msra.mxu0 0.0
          %4333 = vmatprep.subr.mxu0 0.0
          %4334 = vmatpush1.msra.mxu0 0.0
          %4335 = vmatprep.subr.mxu0 0.0
          %4336 = vmatpush1.msra.mxu0 0.0
          %4337 = vmatprep.subr.mxu0 0.0
          %4338 = vmatpush1.msra.mxu0 0.0
          %4339 = vmatprep.subr.mxu0 0.0
          %4340 = vmatpush1.msra.mxu0 0.0
          %4341 = vmatprep.subr.mxu0 0.0
          %4342 = vmatpush1.msra.mxu0 0.0
          %4343 = vmatprep.subr.mxu0 0.0
          %4344 = vmatpush1.msra.mxu0 0.0
          %4345 = vmatprep.subr.mxu0 0.0
          %4346 = vmatpush1.msra.mxu0 0.0
          %4347 = vmatprep.subr.mxu0 0.0
          %4348 = vmatpush1.msra.mxu0 0.0
          %4349 = vmatprep.subr.mxu0 0.0
          %4350 = vmatpush1.msra.mxu0 0.0
          %4351 = vmatprep.subr.mxu0 0.0
          %4352 = vmatpush1.msra.mxu0 0.0
          %4353 = vmatprep.subr.mxu0 0.0
          %4354 = vmatpush1.msra.mxu0 0.0
          %4355 = vmatprep.mubr.f32.mxu0 0.0
          %4356 = vmatmul.mubr.f32.gmra.mrb[0].mxu0 %v4286
          %v4357 = vpop.f32.mrb[0].mxu0
          %v4358 = vadd.f32 %v4283, %v4357
          %v4359 = vpop.f32.mrb[0].mxu0
          %4360 = vmatprep.mubr.f32.mxu0 0.0
          %4361 = vmatmul.mubr.f32.gmra.mrb[0].mxu0 %v4289
          %v4362 = vpop.f32.mrb[0].mxu0
          %v4363 = vadd.f32 %v4283, %v4362
          %v4364 = vpop.f32.mrb[0].mxu0
          %4365 = vdwg.mxu0
          %v4366 = vmax.f32 %v4358, 0.0
          %v4367 = vmax.f32 %v4363, 0.0
          %v4368 = vld [vmem:[%s22] sm:$0xff]
          %v4369 = vld [vmem:[%s22 + $0x8] sm:$0xff]
          %v4370 = vld [vmem:[%s22 + $0x10] sm:$0xff]
          %v4371 = vld [vmem:[%s22 + $0x18] sm:$0xff]
          %v4372 = vld [vmem:[%s23] sm:$0x1]
          %v4374 = vlaneseq
          %v4375 = vshrl.u32 %v4374, 7
          %v4376 = vsub.s32 0, %v4375
          %v4377 = vrot.slane %v4372, %v4376
          %v4380 = vsel %vm1146, %v4366, 0
          %v4383 = vsel %vm1146, %v4367, 0
          %4385 = vmatprep.subr.mxu0 0.0
          %4386 = vmatpush1.msra.mxu0 %v4368
          %4387 = vmatprep.subr.mxu0 0.0
          %4388 = vmatpush1.msra.mxu0 %v4369
          %4389 = vmatprep.subr.mxu0 0.0
          %4390 = vmatpush1.msra.mxu0 %v4370
          %4391 = vmatprep.subr.mxu0 0.0
          %4392 = vmatpush1.msra.mxu0 %v4371
          %4393 = vmatprep.subr.mxu0 0.0
          %4394 = vmatpush1.msra.mxu0 0.0
          %4395 = vmatprep.subr.mxu0 0.0
          %4396 = vmatpush1.msra.mxu0 0.0
          %4397 = vmatprep.subr.mxu0 0.0
          %4398 = vmatpush1.msra.mxu0 0.0
          %4399 = vmatprep.subr.mxu0 0.0
          %4400 = vmatpush1.msra.mxu0 0.0
          %4401 = vmatprep.subr.mxu0 0.0
          %4402 = vmatpush1.msra.mxu0 0.0
          %4403 = vmatprep.subr.mxu0 0.0
          %4404 = vmatpush1.msra.mxu0 0.0
          %4405 = vmatprep.subr.mxu0 0.0
          %4406 = vmatpush1.msra.mxu0 0.0
          %4407 = vmatprep.subr.mxu0 0.0
          %4408 = vmatpush1.msra.mxu0 0.0
          %4409 = vmatprep.subr.mxu0 0.0
          %4410 = vmatpush1.msra.mxu0 0.0
          %4411 = vmatprep.subr.mxu0 0.0
          %4412 = vmatpush1.msra.mxu0 0.0
          %4413 = vmatprep.subr.mxu0 0.0
          %4414 = vmatpush1.msra.mxu0 0.0
          %4415 = vmatprep.subr.mxu0 0.0
          %4416 = vmatpush1.msra.mxu0 0.0
          %4417 = vmatprep.subr.mxu0 0.0
          %4418 = vmatpush1.msra.mxu0 0.0
          %4419 = vmatprep.subr.mxu0 0.0
          %4420 = vmatpush1.msra.mxu0 0.0
          %4421 = vmatprep.subr.mxu0 0.0
          %4422 = vmatpush1.msra.mxu0 0.0
          %4423 = vmatprep.subr.mxu0 0.0
          %4424 = vmatpush1.msra.mxu0 0.0
          %4425 = vmatprep.subr.mxu0 0.0
          %4426 = vmatpush1.msra.mxu0 0.0
          %4427 = vmatprep.subr.mxu0 0.0
          %4428 = vmatpush1.msra.mxu0 0.0
          %4429 = vmatprep.subr.mxu0 0.0
          %4430 = vmatpush1.msra.mxu0 0.0
          %4431 = vmatprep.subr.mxu0 0.0
          %4432 = vmatpush1.msra.mxu0 0.0
          %4433 = vmatprep.subr.mxu0 0.0
          %4434 = vmatpush1.msra.mxu0 0.0
          %4435 = vmatprep.subr.mxu0 0.0
          %4436 = vmatpush1.msra.mxu0 0.0
          %4437 = vmatprep.subr.mxu0 0.0
          %4438 = vmatpush1.msra.mxu0 0.0
          %4439 = vmatprep.subr.mxu0 0.0
          %4440 = vmatpush1.msra.mxu0 0.0
          %4441 = vmatprep.subr.mxu0 0.0
          %4442 = vmatpush1.msra.mxu0 0.0
          %4443 = vmatprep.subr.mxu0 0.0
          %4444 = vmatpush1.msra.mxu0 0.0
          %4445 = vmatprep.subr.mxu0 0.0
          %4446 = vmatpush1.msra.mxu0 0.0
          %4447 = vmatprep.subr.mxu0 0.0
          %4448 = vmatpush1.msra.mxu0 0.0
          %4449 = vmatprep.mubr.f32.mxu0 0.0
          %4450 = vmatmul.mubr.f32.gmra.mrb[0].mxu0 %v4380
          %v4451 = vpop.f32.mrb[0].mxu0
          %v4452 = vadd.f32 %v4377, %v4451
          %v4453 = vpop.f32.mrb[0].mxu0
          %4454 = vmatprep.mubr.f32.mxu0 0.0
          %4455 = vmatmul.mubr.f32.gmra.mrb[0].mxu0 %v4383
          %v4456 = vpop.f32.mrb[0].mxu0
          %v4457 = vadd.f32 %v4377, %v4456
          %v4458 = vpop.f32.mrb[0].mxu0
          %4459 = vdwg.mxu0
          %v4460 = vmax.f32 %v4452, 0.0
          %v4461 = vmax.f32 %v4457, 0.0
          %v4462 = vld [vmem:[%s24] sm:$0xff]
          %v4463 = vld [vmem:[%s24 + $0x8] sm:$0xff]
          %v4464 = vld [vmem:[%s24 + $0x10] sm:$0xff]
          %v4465 = vld [vmem:[%s24 + $0x18] sm:$0xff]
          %v4466 = vld [vmem:[%s25] sm:$0x1]
          %v4468 = vlaneseq
          %v4469 = vshrl.u32 %v4468, 7
          %v4470 = vsub.s32 0, %v4469
          %v4471 = vrot.slane %v4466, %v4470
          %v4474 = vsel %vm1146, %v4460, 0
          %v4477 = vsel %vm1146, %v4461, 0
          %4479 = vmatprep.subr.mxu0 0.0
          %4480 = vmatpush1.msra.mxu0 %v4462
          %4481 = vmatprep.subr.mxu0 0.0
          %4482 = vmatpush1.msra.mxu0 %v4463
          %4483 = vmatprep.subr.mxu0 0.0
          %4484 = vmatpush1.msra.mxu0 %v4464
          %4485 = vmatprep.subr.mxu0 0.0
          %4486 = vmatpush1.msra.mxu0 %v4465
          %4487 = vmatprep.subr.mxu0 0.0
          %4488 = vmatpush1.msra.mxu0 0.0
          %4489 = vmatprep.subr.mxu0 0.0
          %4490 = vmatpush1.msra.mxu0 0.0
          %4491 = vmatprep.subr.mxu0 0.0
          %4492 = vmatpush1.msra.mxu0 0.0
          %4493 = vmatprep.subr.mxu0 0.0
          %4494 = vmatpush1.msra.mxu0 0.0
          %4495 = vmatprep.subr.mxu0 0.0
          %4496 = vmatpush1.msra.mxu0 0.0
          %4497 = vmatprep.subr.mxu0 0.0
          %4498 = vmatpush1.msra.mxu0 0.0
          %4499 = vmatprep.subr.mxu0 0.0
          %4500 = vmatpush1.msra.mxu0 0.0
          %4501 = vmatprep.subr.mxu0 0.0
          %4502 = vmatpush1.msra.mxu0 0.0
          %4503 = vmatprep.subr.mxu0 0.0
          %4504 = vmatpush1.msra.mxu0 0.0
          %4505 = vmatprep.subr.mxu0 0.0
          %4506 = vmatpush1.msra.mxu0 0.0
          %4507 = vmatprep.subr.mxu0 0.0
          %4508 = vmatpush1.msra.mxu0 0.0
          %4509 = vmatprep.subr.mxu0 0.0
          %4510 = vmatpush1.msra.mxu0 0.0
          %4511 = vmatprep.subr.mxu0 0.0
          %4512 = vmatpush1.msra.mxu0 0.0
          %4513 = vmatprep.subr.mxu0 0.0
          %4514 = vmatpush1.msra.mxu0 0.0
          %4515 = vmatprep.subr.mxu0 0.0
          %4516 = vmatpush1.msra.mxu0 0.0
          %4517 = vmatprep.subr.mxu0 0.0
          %4518 = vmatpush1.msra.mxu0 0.0
          %4519 = vmatprep.subr.mxu0 0.0
          %4520 = vmatpush1.msra.mxu0 0.0
          %4521 = vmatprep.subr.mxu0 0.0
          %4522 = vmatpush1.msra.mxu0 0.0
          %4523 = vmatprep.subr.mxu0 0.0
          %4524 = vmatpush1.msra.mxu0 0.0
          %4525 = vmatprep.subr.mxu0 0.0
          %4526 = vmatpush1.msra.mxu0 0.0
          %4527 = vmatprep.subr.mxu0 0.0
          %4528 = vmatpush1.msra.mxu0 0.0
          %4529 = vmatprep.subr.mxu0 0.0
          %4530 = vmatpush1.msra.mxu0 0.0
          %4531 = vmatprep.subr.mxu0 0.0
          %4532 = vmatpush1.msra.mxu0 0.0
          %4533 = vmatprep.subr.mxu0 0.0
          %4534 = vmatpush1.msra.mxu0 0.0
          %4535 = vmatprep.subr.mxu0 0.0
          %4536 = vmatpush1.msra.mxu0 0.0
          %4537 = vmatprep.subr.mxu0 0.0
          %4538 = vmatpush1.msra.mxu0 0.0
          %4539 = vmatprep.subr.mxu0 0.0
          %4540 = vmatpush1.msra.mxu0 0.0
          %4541 = vmatprep.subr.mxu0 0.0
          %4542 = vmatpush1.msra.mxu0 0.0
          %4543 = vmatprep.mubr.f32.mxu0 0.0
          %4544 = vmatmul.mubr.f32.gmra.mrb[0].mxu0 %v4474
          %v4545 = vpop.f32.mrb[0].mxu0
          %v4546 = vadd.f32 %v4471, %v4545
          %v4547 = vpop.f32.mrb[0].mxu0
          %4548 = vmatprep.mubr.f32.mxu0 0.0
          %4549 = vmatmul.mubr.f32.gmra.mrb[0].mxu0 %v4477
          %v4550 = vpop.f32.mrb[0].mxu0
          %v4551 = vadd.f32 %v4471, %v4550
          %v4552 = vpop.f32.mrb[0].mxu0
          %4553 = vdwg.mxu0
          %4554 = vst [vmem:[%s1113] sm:$0xff] %v4546
          %4555 = vst [vmem:[%s1113 + $0x8] sm:$0xff] %v4551
        $region136: #{detr_forward.5} parent=123 // pred_fallthru
          _
        %s4556 = sand.u32 %s693, 1
        %s4557 = scalar_lea.sflag [#allocation4], %s4556
        %s4558 = sand.u32 %s693, 1
        %s4559 = smul.addr %s4558, 16
        %s4560 = scalar_lea.vmem [#allocation3], %s4559
        %p4561 = scmp.lt.s32.totalorder %s46, 1
        %s4562 = scalar_select %p4561, %s46, 1
        %s4563 = smul.addr %s4562, 2
        %s4564 = smul.addr %s4563, 8
        %s4565 = scalar_lea.vmem %s27, %s4564
        // Predicated region
        $region137: #{detr_forward.5} parent=123 // pred_check
          %p4566 = pneg %p703
        $region138: #{detr_forward.5} parent=123 // pred_check_branch
          %4568 = sbr.rel (%p4566) target = $region140
        $region139: #{detr_forward.5} parent=123 // pred_region
          %s4570 = ssub.s32 256, 256
          %4571 = vsyncadd %s4557, %s4570
          %s4572 = smul.addr %s46, 2
          %s4573 = smul.addr %s4572, 128
          %s4574 = scalar_lea.hbm %s26, %s4573
          %s4575 = sshll.u32 %s4560, 4
          %s4576 = int_to_ptr.vmem [resolvable:$true] %s4575
          %4581 = dma.vmem_to_hbm [thread:$0]  %s4576, 256, %s4574, %s4557, 128, 128, 8
        $region140: #{detr_forward.5} parent=123 // pred_fallthru
          _
        // Predicated region
        $region141: #{detr_forward.5} parent=123 // pred_check
          %p4582 = pneg %p729
        $region142: #{detr_forward.5} parent=123 // pred_check_branch
          %4584 = sbr.rel (%p4582) target = $region144
        $region143: #{detr_forward.5} parent=123 // pred_region
          _
        $region144: #{detr_forward.5} parent=123 // pred_fallthru
          _
      $region124: #{detr_forward.5} parent=5 // pred_fallthru
        _
      %p4585 = scmp.le.s32.totalorder 2, %s37
      // Predicated region
      $region145: #{detr_forward.5} parent=5 // pred_check
        %p4586 = pneg %p4585
      $region146: #{detr_forward.5} parent=5 // pred_check_branch
        %4588 = sbr.rel (%p4586) target = $region148
      $region147: #{detr_forward.5} parent=5 // pred_region
        %s4589 = ssub.s32 %s37, 2
        // Predicated region
        $region149: #{detr_forward.5} parent=147 // pred_check
          %p4590 = pneg %p709
        $region150: #{detr_forward.5} parent=147 // pred_check_branch
          %4592 = sbr.rel (%p4590) target = $region152
        $region151: #{detr_forward.5} parent=147 // pred_region
          %s4593 = sand.u32 %s694, 1
          %s4594 = scalar_lea.sflag [#allocation4], %s4593
          %s4595 = sand.u32 %s694, 1
          %s4596 = smul.addr %s4595, 16
          %s4597 = scalar_lea.vmem [#allocation3], %s4596
          %4598 = dma.done %s4594, 256
        $region152: #{detr_forward.5} parent=147 // pred_fallthru
          _
        // Predicated region
        $region153: #{detr_forward.5} parent=147 // pred_check
          %p4599 = pneg %p735
        $region154: #{detr_forward.5} parent=147 // pred_check_branch
          %4601 = sbr.rel (%p4599) target = $region156
        $region155: #{detr_forward.5} parent=147 // pred_region
          %p4602 = scmp.lt.s32.totalorder %s48, 1
          %s4603 = scalar_select %p4602, %s48, 1
          %s4604 = smul.addr %s4603, 2
          %s4605 = smul.addr %s4604, 8
          %s4606 = scalar_lea.vmem %s27, %s4605
        $region156: #{detr_forward.5} parent=147 // pred_fallthru
          _
      $region148: #{detr_forward.5} parent=5 // pred_fallthru
        _
    $region6: #{detr_forward.5} parent=1 // loop_footer
      %s41 = sadd.s32 1, %s37
    $region7: #{detr_forward.5} parent=1 // loop_footer_branch
      %36 = sbr.rel target = $region3
    $region8: #{detr_forward.5} parent=1 // loop_exit
      _
    %4607 = vsyncpa [#allocation4], 1
    %s4608 = scalar_lea.sflag [#allocation4], 1
    %4609 = vsyncpa %s4608, 1

</llo_original>
